<compile_context>
chip_gen: v7x
topology: tpu7x:2x2x1
jax: 0.10.0
libtpu: 0.0.40
codegen_flags: <defaults>
</compile_context>

<pallas_src>
import numpy as np
import jax
import jax.numpy as jnp
from jax.experimental import pallas as pl
from jax.experimental.pallas import tpu as pltpu


# ----------------------------------------------------------------------------
# Parameter setup: collapse each Conv2d into a dense (flat_in, flat_out) matrix
# ----------------------------------------------------------------------------
def _conv_to_dense(W, b, H_in, W_in, stride, pad):
    W = np.asarray(W)
    b = np.asarray(b)
    C_out, C_in, kh, kw = W.shape
    H_out = (H_in + 2 * pad - kh) // stride + 1
    W_out = (W_in + 2 * pad - kw) // stride + 1
    M = np.zeros((C_in * H_in * W_in, C_out * H_out * W_out), np.float32)
    for ki in range(kh):
        for kj in range(kw):
            for oi in range(H_out):
                ii = oi * stride - pad + ki
                if not (0 <= ii < H_in):
                    continue
                for oj in range(W_out):
                    jj = oj * stride - pad + kj
                    if not (0 <= jj < W_in):
                        continue
                    rows = np.arange(C_in) * (H_in * W_in) + ii * W_in + jj
                    cols = np.arange(C_out) * (H_out * W_out) + oi * W_out + oj
                    M[np.ix_(rows, cols)] = W[:, :, ki, kj].T
    bflat = np.repeat(b, H_out * W_out).astype(np.float32)
    return jnp.asarray(M), jnp.asarray(bflat)[None, :]


def _init_conv(key, c_out, c_in, k):
    # torch default init: U(-1/sqrt(fan_in), 1/sqrt(fan_in))
    bound = 1.0 / np.sqrt(c_in * k * k)
    kw_, kb = jax.random.split(key)
    W = jax.random.uniform(kw_, (c_out, c_in, k, k), jnp.float32, -bound, bound)
    b = jax.random.uniform(kb, (c_out,), jnp.float32, -bound, bound)
    return W, b


def _patch_label_flat():
    # patch_label[0][i][j] = i, patch_label[1][i][j] = j, flattened (ch, i, j).
    lab_i = jnp.repeat(jnp.arange(8, dtype=jnp.float32), 8)
    lab_j = jnp.tile(jnp.arange(8, dtype=jnp.float32), 8)
    return jnp.concatenate([lab_i, lab_j])          # (128,)


def build_dense_weights(raw):
    """Collapse convs to dense matrices, fold constants, fuse shared-LHS pairs,
    cast weights to bf16 (biases stay f32)."""
    M1, B1 = _conv_to_dense(raw["W1"], raw["b1"], 8, 8, 2, 0)   # (320,1024)
    M2, B2 = _conv_to_dense(raw["W2"], raw["b2"], 4, 4, 2, 0)   # (1024,256)
    M3, B3 = _conv_to_dense(raw["W3"], raw["b3"], 4, 4, 1, 1)   # (1024,512)
    M4, B4 = _conv_to_dense(raw["W4"], raw["b4"], 4, 4, 2, 0)   # (512,256)
    M5, B5 = _conv_to_dense(raw["W5"], raw["b5"], 2, 2, 1, 1)   # (284,256)
    M6, B6 = _conv_to_dense(raw["W6"], raw["b6"], 2, 2, 1, 1)   # (284,128)
    M7, B7 = _conv_to_dense(raw["W7"], raw["b7"], 2, 2, 1, 1)   # (128,256)
    M8, B8 = _conv_to_dense(raw["W8"], raw["b8"], 2, 2, 1, 0)   # (256,64)

    # (a) The patch-label channels are identical for every patch: fold their
    #     contribution into the conv1 bias (f32) and drop 128 of 320 inputs.
    lab = _patch_label_flat()
    B1 = B1 + lab[None, :] @ M1[192:]
    M1 = M1[:192]

    # (b) v is tiled over the 2x2 map: fold the 4x tiling into the weights so
    #     the kernel only needs a K=8 matmul (7 channels + 1 zero pad lane).
    def fold_v(M):
        Mr, Mv = M[:256], M[256:]
        Mv = Mv.reshape(7, 4, M.shape[1]).sum(axis=1)
        Mv = jnp.concatenate([Mv, jnp.zeros((1, M.shape[1]), jnp.float32)], 0)
        return Mr, Mv
    M5r, M5v = fold_v(M5)
    M6r, M6v = fold_v(M6)

    # (c) Fuse matmuls that share an LHS by concatenating output columns:
    #     conv2||conv3 (LHS = skip_in) and conv5||conv6 (LHS = r and v).
    M23 = jnp.concatenate([M2, M3], axis=1)          # (1024, 256+512)
    B23 = jnp.concatenate([B2, B3], axis=1)          # (1, 768)
    M56r = jnp.concatenate([M5r, M6r], axis=1)       # (256, 256+128)
    M56v = jnp.concatenate([M5v, M6v], axis=1)       # (8, 384)
    B56 = jnp.concatenate([B5, B6], axis=1)          # (1, 384)

    # (d) Pad conv8 output to 128 columns -> lane-dense stores (sliced later).
    M8 = jnp.pad(M8, ((0, 0), (0, 64)))
    B8 = jnp.pad(B8, ((0, 0), (0, 64)))

    w = lambda m: m.astype(jnp.bfloat16)             # bf16 weights, f32 biases
    return [w(M1), B1, w(M23), B23, w(M4), B4,
            w(M56r), w(M56v), B56, w(M7), B7, w(M8), B8]


# ----------------------------------------------------------------------------
# Pallas kernel: the whole conv chain as a sequence of matmuls on a row tile
# ----------------------------------------------------------------------------
def _patcher_kernel(x_ref, v_ref,
                    m1, b1, m23, b23, m4, b4,
                    m56r, m56v, b56, m7, b7, m8, b8, o_ref):
    bf16 = jnp.bfloat16
    mm = lambda a, m: jnp.dot(a, m[...], preferred_element_type=jnp.float32)
    relu = lambda t: jnp.maximum(t, 0.0)

    x = x_ref[...]                                            # (T, 192) bf16
    vv = v_ref[...]                                           # (T, 8)   bf16

    # conv1 (bias already carries the folded patch-label contribution).
    skip_in = relu(mm(x, m1) + b1[...]).astype(bf16)          # (T, 1024)
    # conv2 || conv3 fused (shared LHS, one RHS staging pass).
    y23 = mm(skip_in, m23) + b23[...]                         # (T, 768) f32
    skip_out = relu(y23[:, :256])                             # conv2 (T, 256)
    r3 = relu(y23[:, 256:]).astype(bf16)                      # conv3 (T, 512)
    # conv4 + skip connection (skip add in f32, single bf16 cast).
    r = (relu(mm(r3, m4) + b4[...]) + skip_out).astype(bf16)  # (T, 256)
    # conv5 || conv6 fused; v contribution is a small K=8 matmul.
    y56 = mm(r, m56r) + mm(vv, m56v) + b56[...]               # (T, 384)
    skip_out2 = relu(y56[:, :256])                            # conv5 (T, 256)
    q6 = relu(y56[:, 256:]).astype(bf16)                      # conv6 (T, 128)
    # conv7 + skip connection.
    q = (relu(mm(q6, m7) + b7[...]) + skip_out2).astype(bf16)  # (T, 256)
    # conv8 (output padded to 128 lanes for lane-dense stores).
    o_ref[...] = relu(mm(q, m8) + b8[...])


def _vmem_limit_bytes():
    # Scoped-VMEM limit: 3/4 of the reported capacity, hard-capped at 48 MiB so
    # the request stays valid even if the query returns per-chip (not per-core)
    # capacity on 2-TensorCore v7x parts.  Conservative fallback otherwise.
    try:
        cap = int(pltpu.get_tpu_info().vmem_capacity_bytes)
    except Exception:
        cap = 64 * 1024 * 1024
    return min(cap * 3 // 4, 48 * 1024 * 1024)


def _choose_tile(n, tile_n):
    """Row-tile selection: default large tile (amortize per-step overhead and
    MXU weight staging), but clamp so the parallel grid has >= 2 steps when N
    allows — v7x shards the grid across its 2 TensorCores."""
    tile = min(tile_n, n)
    if 8 < n <= tile_n:
        tile = -(-n // 2)                   # ceil(n/2) -> 2-step grid
    tile = max(8, ((tile + 7) // 8) * 8)    # keep sublane-aligned rows
    return int(tile)


def patcher_pallas(x_flat, v_flat, dense_weights, tile_n=512):
    """x_flat: (N, 192) bf16, v_flat: (N, 8) bf16 -> (N, 64) f32."""
    n = x_flat.shape[0]
    tile = _choose_tile(n, tile_n)
    grid_n = pl.cdiv(n, tile)
    n_pad = grid_n * tile
    if n_pad != n:                                  # ragged N -> zero pad rows
        x_flat = jnp.pad(x_flat, ((0, n_pad - n), (0, 0)))
        v_flat = jnp.pad(v_flat, ((0, n_pad - n), (0, 0)))
    n_out = dense_weights[-1].shape[1]              # 128 (lane-dense, padded)

    in_specs = [
        pl.BlockSpec((tile, x_flat.shape[1]), lambda i: (i, 0)),
        pl.BlockSpec((tile, v_flat.shape[1]), lambda i: (i, 0)),
    ]
    # Grid-invariant weights: full-shape blocks with a constant index_map, so
    # the same resident copy is reused on every grid step (~2.5 MiB of bf16).
    for w in dense_weights:
        in_specs.append(pl.BlockSpec(w.shape, lambda i: (0, 0)))

    out = pl.pallas_call(
        _patcher_kernel,
        out_shape=jax.ShapeDtypeStruct((n_pad, n_out), jnp.float32),
        grid=(grid_n,),
        in_specs=in_specs,
        out_specs=pl.BlockSpec((tile, n_out), lambda i: (i, 0)),
        compiler_params=pltpu.CompilerParams(
            dimension_semantics=("parallel",),
            vmem_limit_bytes=_vmem_limit_bytes()),
    )(x_flat, v_flat, *dense_weights)
    return out[:n, :64]


# ----------------------------------------------------------------------------
# JAX glue: nn.Unfold, v selection and the final reshape/transpose
# ----------------------------------------------------------------------------
def build_flat_inputs(x, v):
    B, ctx, C, H, W = x.shape
    assert C == 3 and H == 32 and W == 32   # Unfold(k=8, p=2, s=4) -> 8x8 patch grid
    # Patch extraction via conv_general_dilated_patches (no gather / 7-D
    # transpose): output channels are (c, ki, kj)-major, matching nn.Unfold.
    xi = x.reshape(B * ctx, C, H, W)
    patches = jax.lax.conv_general_dilated_patches(
        xi, filter_shape=(8, 8), window_strides=(4, 4),
        padding=((2, 2), (2, 2)),
        dimension_numbers=("NCHW", "OIHW", "NCHW"),
        precision=jax.lax.Precision.HIGHEST)          # (B*ctx, 192, 8, 8)
    x_flat = jnp.transpose(patches, (0, 2, 3, 1)).reshape(B * ctx * 64, C * 64)

    # torch `.repeat` tiling quirk: patch n (within an example) gets v[i, n % ctx]
    n_idx = jnp.arange(ctx * 64)
    v_sel = v[:, n_idx % ctx, :].reshape(B * ctx * 64, 7)
    v_flat = jnp.pad(v_sel, ((0, 0), (0, 1)))         # 7 -> 8 lanes (zero pad)
    return x_flat.astype(jnp.bfloat16), v_flat.astype(jnp.bfloat16)


def finalize(out_flat, B, ctx):
    out = out_flat.reshape(B, ctx, 8, 8, 64)           # (b, c, pi, pj, ch)
    return jnp.transpose(out, (0, 1, 4, 3, 2))         # == torch .transpose(2, 4)


# ----------------------------------------------------------------------------
# References for correctness checking
# ----------------------------------------------------------------------------
def _conv2d(x, W, b, stride, pad):
    y = jax.lax.conv_general_dilated(
        x, W, window_strides=(stride, stride),
        padding=((pad, pad), (pad, pad)),
        dimension_numbers=("NCHW", "OIHW", "NCHW"),
        precision=jax.lax.Precision.HIGHEST)
    return y + b[None, :, None, None]


def conv_reference(x_img, v7, raw):
    """f32 lax.conv reference of the original conv chain (ground truth)."""
    N = x_img.shape[0]
    relu = lambda t: jnp.maximum(t, 0.0)
    p3 = x_img.reshape(N, 3, 8, 8)
    lab = _patch_label_flat().reshape(2, 8, 8)
    p = jnp.concatenate([p3, jnp.broadcast_to(lab[None], (N, 2, 8, 8))], axis=1)
    vr = jnp.broadcast_to(v7[:, :, None, None], (N, 7, 2, 2))
    skip_in = relu(_conv2d(p, raw["W1"], raw["b1"], 2, 0))
    skip_out = relu(_conv2d(skip_in, raw["W2"], raw["b2"], 2, 0))
    r = relu(_conv2d(skip_in, raw["W3"], raw["b3"], 1, 1))
    r = relu(_conv2d(r, raw["W4"], raw["b4"], 2, 0)) + skip_out
    si = jnp.concatenate([r, vr], axis=1)
    so = relu(_conv2d(si, raw["W5"], raw["b5"], 1, 1))
    q = relu(_conv2d(si, raw["W6"], raw["b6"], 1, 1))
    q = relu(_conv2d(q, raw["W7"], raw["b7"], 1, 1)) + so
    q = relu(_conv2d(q, raw["W8"], raw["b8"], 1, 0))
    return q.reshape(N, 64)


def dense_reference(x_flat, v_flat, dense):
    """Pure-jnp replica of the in-kernel bf16 math (validates the kernel itself)."""
    (m1, b1, m23, b23, m4, b4, m56r, m56v, b56, m7, b7, m8, b8) = dense
    bf16 = jnp.bfloat16
    mm = lambda a, m: jnp.dot(a, m, preferred_element_type=jnp.float32)
    relu = lambda t: jnp.maximum(t, 0.0)
    skip_in = relu(mm(x_flat, m1) + b1).astype(bf16)
    y23 = mm(skip_in, m23) + b23
    skip_out = relu(y23[:, :256])
    r3 = relu(y23[:, 256:]).astype(bf16)
    r = (relu(mm(r3, m4) + b4) + skip_out).astype(bf16)
    y56 = mm(r, m56r) + mm(v_flat, m56v) + b56
    so2 = relu(y56[:, :256])
    q6 = relu(y56[:, 256:]).astype(bf16)
    q = (relu(mm(q6, m7) + b7) + so2).astype(bf16)
    return relu(mm(q, m8) + b8)[:, :64]


# ----------------------------------------------------------------------------
if __name__ == "__main__":
    key = jax.random.PRNGKey(0)
    keys = jax.random.split(key, 10)

    conv_cfg = [("1", 64, 5, 2), ("2", 64, 64, 2), ("3", 32, 64, 3), ("4", 64, 32, 2),
                ("5", 64, 71, 3), ("6", 32, 71, 3), ("7", 64, 32, 3), ("8", 64, 64, 2)]
    raw = {}
    for kk, (name, co, ci, k) in zip(keys[:8], conv_cfg):
        W, b = _init_conv(kk, co, ci, k)
        raw["W" + name], raw["b" + name] = W, b

    dense = build_dense_weights(raw)

    # Small deterministic inputs: x (batch, context, 3, 32, 32), v (batch, context, 7)
    Bsz, ctx = 2, 4                  # N = 2*4*64 = 512 patch rows -> grid of 2 tiles
    x = jax.random.normal(keys[8], (Bsz, ctx, 3, 32, 32), jnp.float32)
    v = jax.random.normal(keys[9], (Bsz, ctx, 7), jnp.float32)

    x_flat, v_flat = build_flat_inputs(x, v)
    out_flat = patcher_pallas(x_flat, v_flat, dense, tile_n=512)
    out = finalize(out_flat, Bsz, ctx)
    out = jax.block_until_ready(out)
    assert out.shape == (Bsz, ctx, 64, 8, 8), out.shape

    # Check 1: Pallas kernel vs a pure-jnp replica of the same bf16 dense math.
    ref_dense = dense_reference(x_flat, v_flat, dense)
    err_d = float(jnp.max(jnp.abs(out_flat - ref_dense)) /
                  (jnp.max(jnp.abs(ref_dense)) + 1e-6))
    assert err_d < 1e-2, f"mismatch vs dense reference, rel err = {err_d}"

    # Check 2: vs an f32 lax.conv reference of the original conv chain
    # (validates the conv->dense collapse, the label/v foldings and the fused
    # column layout; tolerance is loose because the kernel runs single-pass
    # bf16 matmuls).
    ref_conv = conv_reference(x_flat.astype(jnp.float32),
                              v_flat[:, :7].astype(jnp.float32), raw)
    err_c = float(jnp.max(jnp.abs(out_flat - ref_conv)) /
                  (jnp.max(jnp.abs(ref_conv)) + 1e-6))
    assert err_c < 1e-1, f"mismatch vs conv reference, rel err = {err_c}"

    print("KERNEL_OK")
</pallas_src>

<mosaic_0001>
module attributes {stable_mosaic.version = 11 : i64} {
  func.func @_patcher_kernel(%arg0: i32, %arg1: memref<256x192xbf16, #tpu.memory_space<vmem>>, %arg2: memref<256x8xbf16, #tpu.memory_space<vmem>>, %arg3: memref<192x1024xbf16, #tpu.memory_space<vmem>>, %arg4: memref<1x1024xf32, #tpu.memory_space<vmem>>, %arg5: memref<1024x768xbf16, #tpu.memory_space<vmem>>, %arg6: memref<1x768xf32, #tpu.memory_space<vmem>>, %arg7: memref<512x256xbf16, #tpu.memory_space<vmem>>, %arg8: memref<1x256xf32, #tpu.memory_space<vmem>>, %arg9: memref<256x384xbf16, #tpu.memory_space<vmem>>, %arg10: memref<8x384xbf16, #tpu.memory_space<vmem>>, %arg11: memref<1x384xf32, #tpu.memory_space<vmem>>, %arg12: memref<128x256xbf16, #tpu.memory_space<vmem>>, %arg13: memref<1x256xf32, #tpu.memory_space<vmem>>, %arg14: memref<256x128xbf16, #tpu.memory_space<vmem>>, %arg15: memref<1x128xf32, #tpu.memory_space<vmem>>, %arg16: memref<256x128xf32, #tpu.memory_space<vmem>>) attributes {dimension_semantics = [#tpu.dimension_semantics<parallel>], iteration_bounds = array<i64: 2>, scalar_prefetch = 0 : i64, scratch_operands = 0 : i64, tpu.core_type = #tpu.core_type<tc>, window_params = [{transform_indices = @transform_0, window_bounds = array<i64: 256, 192>}, {transform_indices = @transform_1, window_bounds = array<i64: 256, 8>}, {pipeline_mode = #tpu.pipeline_mode<synchronous>, transform_indices = @transform_2, window_bounds = array<i64: 192, 1024>}, {pipeline_mode = #tpu.pipeline_mode<synchronous>, transform_indices = @transform_3, window_bounds = array<i64: 1, 1024>}, {pipeline_mode = #tpu.pipeline_mode<synchronous>, transform_indices = @transform_4, window_bounds = array<i64: 1024, 768>}, {pipeline_mode = #tpu.pipeline_mode<synchronous>, transform_indices = @transform_5, window_bounds = array<i64: 1, 768>}, {pipeline_mode = #tpu.pipeline_mode<synchronous>, transform_indices = @transform_6, window_bounds = array<i64: 512, 256>}, {pipeline_mode = #tpu.pipeline_mode<synchronous>, transform_indices = @transform_7, window_bounds = array<i64: 1, 256>}, {pipeline_mode = #tpu.pipeline_mode<synchronous>, transform_indices = @transform_8, window_bounds = array<i64: 256, 384>}, {pipeline_mode = #tpu.pipeline_mode<synchronous>, transform_indices = @transform_9, window_bounds = array<i64: 8, 384>}, {pipeline_mode = #tpu.pipeline_mode<synchronous>, transform_indices = @transform_10, window_bounds = array<i64: 1, 384>}, {pipeline_mode = #tpu.pipeline_mode<synchronous>, transform_indices = @transform_11, window_bounds = array<i64: 128, 256>}, {pipeline_mode = #tpu.pipeline_mode<synchronous>, transform_indices = @transform_12, window_bounds = array<i64: 1, 256>}, {pipeline_mode = #tpu.pipeline_mode<synchronous>, transform_indices = @transform_13, window_bounds = array<i64: 256, 128>}, {pipeline_mode = #tpu.pipeline_mode<synchronous>, transform_indices = @transform_14, window_bounds = array<i64: 1, 128>}, {transform_indices = @transform_15, window_bounds = array<i64: 256, 128>}]} {
    %c0 = arith.constant 0 : index
    %c0_0 = arith.constant 0 : index
    %0 = vector.load %arg1[%c0, %c0_0] : memref<256x192xbf16, #tpu.memory_space<vmem>>, vector<256x192xbf16>
    %c0_1 = arith.constant 0 : index
    %c0_2 = arith.constant 0 : index
    %1 = vector.load %arg2[%c0_1, %c0_2] : memref<256x8xbf16, #tpu.memory_space<vmem>>, vector<256x8xbf16>
    %c0_3 = arith.constant 0 : index
    %c0_4 = arith.constant 0 : index
    %2 = vector.load %arg3[%c0_3, %c0_4] : memref<192x1024xbf16, #tpu.memory_space<vmem>>, vector<192x1024xbf16>
    %cst = arith.constant dense<0.000000e+00> : vector<256x1024xf32>
    %3 = tpu.matmul %0, %2, %cst {dimension_numbers = #tpu.dot_dimension_numbers<[1], [0], [0], [1], [0, 0, 1, 1], [], []>} : vector<256x192xbf16>, vector<192x1024xbf16>, vector<256x1024xf32> -> vector<256x1024xf32>
    %c0_5 = arith.constant 0 : index
    %c0_6 = arith.constant 0 : index
    %4 = vector.load %arg4[%c0_5, %c0_6] : memref<1x1024xf32, #tpu.memory_space<vmem>>, vector<1x1024xf32>
    %5 = vector.broadcast %4 : vector<1x1024xf32> to vector<256x1024xf32>
    %6 = arith.addf %3, %5 : vector<256x1024xf32>
    %cst_7 = arith.constant 0.000000e+00 : f32
    %7 = vector.broadcast %cst_7 : f32 to vector<256x1024xf32>
    %8 = arith.maximumf %6, %7 : vector<256x1024xf32>
    %9 = arith.truncf %8 : vector<256x1024xf32> to vector<256x1024xbf16>
    %c0_8 = arith.constant 0 : index
    %c0_9 = arith.constant 0 : index
    %10 = vector.load %arg5[%c0_8, %c0_9] : memref<1024x768xbf16, #tpu.memory_space<vmem>>, vector<1024x768xbf16>
    %cst_10 = arith.constant dense<0.000000e+00> : vector<256x768xf32>
    %11 = tpu.matmul %9, %10, %cst_10 {dimension_numbers = #tpu.dot_dimension_numbers<[1], [0], [0], [1], [0, 0, 1, 1], [], []>} : vector<256x1024xbf16>, vector<1024x768xbf16>, vector<256x768xf32> -> vector<256x768xf32>
    %c0_11 = arith.constant 0 : index
    %c0_12 = arith.constant 0 : index
    %12 = vector.load %arg6[%c0_11, %c0_12] : memref<1x768xf32, #tpu.memory_space<vmem>>, vector<1x768xf32>
    %13 = vector.broadcast %12 : vector<1x768xf32> to vector<256x768xf32>
    %14 = arith.addf %11, %13 : vector<256x768xf32>
    %15 = vector.extract_strided_slice %14 {offsets = [0, 0], sizes = [256, 256], strides = [1, 1]} : vector<256x768xf32> to vector<256x256xf32>
    %cst_13 = arith.constant 0.000000e+00 : f32
    %16 = vector.broadcast %cst_13 : f32 to vector<256x256xf32>
    %17 = arith.maximumf %15, %16 : vector<256x256xf32>
    %18 = vector.extract_strided_slice %14 {offsets = [0, 256], sizes = [256, 512], strides = [1, 1]} : vector<256x768xf32> to vector<256x512xf32>
    %cst_14 = arith.constant 0.000000e+00 : f32
    %19 = vector.broadcast %cst_14 : f32 to vector<256x512xf32>
    %20 = arith.maximumf %18, %19 : vector<256x512xf32>
    %21 = arith.truncf %20 : vector<256x512xf32> to vector<256x512xbf16>
    %c0_15 = arith.constant 0 : index
    %c0_16 = arith.constant 0 : index
    %22 = vector.load %arg7[%c0_15, %c0_16] : memref<512x256xbf16, #tpu.memory_space<vmem>>, vector<512x256xbf16>
    %cst_17 = arith.constant dense<0.000000e+00> : vector<256x256xf32>
    %23 = tpu.matmul %21, %22, %cst_17 {dimension_numbers = #tpu.dot_dimension_numbers<[1], [0], [0], [1], [0, 0, 1, 1], [], []>} : vector<256x512xbf16>, vector<512x256xbf16>, vector<256x256xf32> -> vector<256x256xf32>
    %c0_18 = arith.constant 0 : index
    %c0_19 = arith.constant 0 : index
    %24 = vector.load %arg8[%c0_18, %c0_19] : memref<1x256xf32, #tpu.memory_space<vmem>>, vector<1x256xf32>
    %25 = vector.broadcast %24 : vector<1x256xf32> to vector<256x256xf32>
    %26 = arith.addf %23, %25 : vector<256x256xf32>
    %cst_20 = arith.constant 0.000000e+00 : f32
    %27 = vector.broadcast %cst_20 : f32 to vector<256x256xf32>
    %28 = arith.maximumf %26, %27 : vector<256x256xf32>
    %29 = arith.addf %28, %17 : vector<256x256xf32>
    %30 = arith.truncf %29 : vector<256x256xf32> to vector<256x256xbf16>
    %c0_21 = arith.constant 0 : index
    %c0_22 = arith.constant 0 : index
    %31 = vector.load %arg9[%c0_21, %c0_22] : memref<256x384xbf16, #tpu.memory_space<vmem>>, vector<256x384xbf16>
    %cst_23 = arith.constant dense<0.000000e+00> : vector<256x384xf32>
    %32 = tpu.matmul %30, %31, %cst_23 {dimension_numbers = #tpu.dot_dimension_numbers<[1], [0], [0], [1], [0, 0, 1, 1], [], []>} : vector<256x256xbf16>, vector<256x384xbf16>, vector<256x384xf32> -> vector<256x384xf32>
    %c0_24 = arith.constant 0 : index
    %c0_25 = arith.constant 0 : index
    %33 = vector.load %arg10[%c0_24, %c0_25] : memref<8x384xbf16, #tpu.memory_space<vmem>>, vector<8x384xbf16>
    %cst_26 = arith.constant dense<0.000000e+00> : vector<256x384xf32>
    %34 = tpu.matmul %1, %33, %cst_26 {dimension_numbers = #tpu.dot_dimension_numbers<[1], [0], [0], [1], [0, 0, 1, 1], [], []>} : vector<256x8xbf16>, vector<8x384xbf16>, vector<256x384xf32> -> vector<256x384xf32>
    %35 = arith.addf %32, %34 : vector<256x384xf32>
    %c0_27 = arith.constant 0 : index
    %c0_28 = arith.constant 0 : index
    %36 = vector.load %arg11[%c0_27, %c0_28] : memref<1x384xf32, #tpu.memory_space<vmem>>, vector<1x384xf32>
    %37 = vector.broadcast %36 : vector<1x384xf32> to vector<256x384xf32>
    %38 = arith.addf %35, %37 : vector<256x384xf32>
    %39 = vector.extract_strided_slice %38 {offsets = [0, 0], sizes = [256, 256], strides = [1, 1]} : vector<256x384xf32> to vector<256x256xf32>
    %cst_29 = arith.constant 0.000000e+00 : f32
    %40 = vector.broadcast %cst_29 : f32 to vector<256x256xf32>
    %41 = arith.maximumf %39, %40 : vector<256x256xf32>
    %42 = vector.extract_strided_slice %38 {offsets = [0, 256], sizes = [256, 128], strides = [1, 1]} : vector<256x384xf32> to vector<256x128xf32>
    %cst_30 = arith.constant 0.000000e+00 : f32
    %43 = vector.broadcast %cst_30 : f32 to vector<256x128xf32>
    %44 = arith.maximumf %42, %43 : vector<256x128xf32>
    %45 = arith.truncf %44 : vector<256x128xf32> to vector<256x128xbf16>
    %c0_31 = arith.constant 0 : index
    %c0_32 = arith.constant 0 : index
    %46 = vector.load %arg12[%c0_31, %c0_32] : memref<128x256xbf16, #tpu.memory_space<vmem>>, vector<128x256xbf16>
    %cst_33 = arith.constant dense<0.000000e+00> : vector<256x256xf32>
    %47 = tpu.matmul %45, %46, %cst_33 {dimension_numbers = #tpu.dot_dimension_numbers<[1], [0], [0], [1], [0, 0, 1, 1], [], []>} : vector<256x128xbf16>, vector<128x256xbf16>, vector<256x256xf32> -> vector<256x256xf32>
    %c0_34 = arith.constant 0 : index
    %c0_35 = arith.constant 0 : index
    %48 = vector.load %arg13[%c0_34, %c0_35] : memref<1x256xf32, #tpu.memory_space<vmem>>, vector<1x256xf32>
    %49 = vector.broadcast %48 : vector<1x256xf32> to vector<256x256xf32>
    %50 = arith.addf %47, %49 : vector<256x256xf32>
    %cst_36 = arith.constant 0.000000e+00 : f32
    %51 = vector.broadcast %cst_36 : f32 to vector<256x256xf32>
    %52 = arith.maximumf %50, %51 : vector<256x256xf32>
    %53 = arith.addf %52, %41 : vector<256x256xf32>
    %54 = arith.truncf %53 : vector<256x256xf32> to vector<256x256xbf16>
    %c0_37 = arith.constant 0 : index
    %c0_38 = arith.constant 0 : index
    %55 = vector.load %arg14[%c0_37, %c0_38] : memref<256x128xbf16, #tpu.memory_space<vmem>>, vector<256x128xbf16>
    %cst_39 = arith.constant dense<0.000000e+00> : vector<256x128xf32>
    %56 = tpu.matmul %54, %55, %cst_39 {dimension_numbers = #tpu.dot_dimension_numbers<[1], [0], [0], [1], [0, 0, 1, 1], [], []>} : vector<256x256xbf16>, vector<256x128xbf16>, vector<256x128xf32> -> vector<256x128xf32>
    %c0_40 = arith.constant 0 : index
    %c0_41 = arith.constant 0 : index
    %57 = vector.load %arg15[%c0_40, %c0_41] : memref<1x128xf32, #tpu.memory_space<vmem>>, vector<1x128xf32>
    %58 = vector.broadcast %57 : vector<1x128xf32> to vector<256x128xf32>
    %59 = arith.addf %56, %58 : vector<256x128xf32>
    %cst_42 = arith.constant 0.000000e+00 : f32
    %60 = vector.broadcast %cst_42 : f32 to vector<256x128xf32>
    %61 = arith.maximumf %59, %60 : vector<256x128xf32>
    %c0_43 = arith.constant 0 : index
    %c0_44 = arith.constant 0 : index
    %62 = vector.load %arg16[%c0_43, %c0_44] : memref<256x128xf32, #tpu.memory_space<vmem>>, vector<256x128xf32>
    tpu.vector_store %arg16[%c0_43, %c0_44], %61 {strides = array<i32>} : memref<256x128xf32, #tpu.memory_space<vmem>>, vector<256x128xf32>,
    return
  }
  func.func @transform_0(%arg0: i32) -> (i32, i32) {
    %c0_i32 = arith.constant 0 : i32
    %c0_i32_0 = arith.constant 0 : i32
    return %arg0, %c0_i32 : i32, i32
  }
  func.func @transform_1(%arg0: i32) -> (i32, i32) {
    %c0_i32 = arith.constant 0 : i32
    %c0_i32_0 = arith.constant 0 : i32
    return %arg0, %c0_i32 : i32, i32
  }
  func.func @transform_2(%arg0: i32) -> (i32, i32) {
    %c0_i32 = arith.constant 0 : i32
    %c0_i32_0 = arith.constant 0 : i32
    %c0_i32_1 = arith.constant 0 : i32
    return %c0_i32, %c0_i32_0 : i32, i32
  }
  func.func @transform_3(%arg0: i32) -> (i32, i32) {
    %c0_i32 = arith.constant 0 : i32
    %c0_i32_0 = arith.constant 0 : i32
    %c0_i32_1 = arith.constant 0 : i32
    return %c0_i32, %c0_i32_0 : i32, i32
  }
  func.func @transform_4(%arg0: i32) -> (i32, i32) {
    %c0_i32 = arith.constant 0 : i32
    %c0_i32_0 = arith.constant 0 : i32
    %c0_i32_1 = arith.constant 0 : i32
    return %c0_i32, %c0_i32_0 : i32, i32
  }
  func.func @transform_5(%arg0: i32) -> (i32, i32) {
    %c0_i32 = arith.constant 0 : i32
    %c0_i32_0 = arith.constant 0 : i32
    %c0_i32_1 = arith.constant 0 : i32
    return %c0_i32, %c0_i32_0 : i32, i32
  }
  func.func @transform_6(%arg0: i32) -> (i32, i32) {
    %c0_i32 = arith.constant 0 : i32
    %c0_i32_0 = arith.constant 0 : i32
    %c0_i32_1 = arith.constant 0 : i32
    return %c0_i32, %c0_i32_0 : i32, i32
  }
  func.func @transform_7(%arg0: i32) -> (i32, i32) {
    %c0_i32 = arith.constant 0 : i32
    %c0_i32_0 = arith.constant 0 : i32
    %c0_i32_1 = arith.constant 0 : i32
    return %c0_i32, %c0_i32_0 : i32, i32
  }
  func.func @transform_8(%arg0: i32) -> (i32, i32) {
    %c0_i32 = arith.constant 0 : i32
    %c0_i32_0 = arith.constant 0 : i32
    %c0_i32_1 = arith.constant 0 : i32
    return %c0_i32, %c0_i32_0 : i32, i32
  }
  func.func @transform_9(%arg0: i32) -> (i32, i32) {
    %c0_i32 = arith.constant 0 : i32
    %c0_i32_0 = arith.constant 0 : i32
    %c0_i32_1 = arith.constant 0 : i32
    return %c0_i32, %c0_i32_0 : i32, i32
  }
  func.func @transform_10(%arg0: i32) -> (i32, i32) {
    %c0_i32 = arith.constant 0 : i32
    %c0_i32_0 = arith.constant 0 : i32
    %c0_i32_1 = arith.constant 0 : i32
    return %c0_i32, %c0_i32_0 : i32, i32
  }
  func.func @transform_11(%arg0: i32) -> (i32, i32) {
    %c0_i32 = arith.constant 0 : i32
    %c0_i32_0 = arith.constant 0 : i32
    %c0_i32_1 = arith.constant 0 : i32
    return %c0_i32, %c0_i32_0 : i32, i32
  }
  func.func @transform_12(%arg0: i32) -> (i32, i32) {
    %c0_i32 = arith.constant 0 : i32
    %c0_i32_0 = arith.constant 0 : i32
    %c0_i32_1 = arith.constant 0 : i32
    return %c0_i32, %c0_i32_0 : i32, i32
  }
  func.func @transform_13(%arg0: i32) -> (i32, i32) {
    %c0_i32 = arith.constant 0 : i32
    %c0_i32_0 = arith.constant 0 : i32
    %c0_i32_1 = arith.constant 0 : i32
    return %c0_i32, %c0_i32_0 : i32, i32
  }
  func.func @transform_14(%arg0: i32) -> (i32, i32) {
    %c0_i32 = arith.constant 0 : i32
    %c0_i32_0 = arith.constant 0 : i32
    %c0_i32_1 = arith.constant 0 : i32
    return %c0_i32, %c0_i32_0 : i32, i32
  }
  func.func @transform_15(%arg0: i32) -> (i32, i32) {
    %c0_i32 = arith.constant 0 : i32
    %c0_i32_0 = arith.constant 0 : i32
    return %arg0, %c0_i32 : i32, i32
  }
}

</mosaic_0001>

<llo_original>
// kernel: tpu_custom_call.1
$region0: #{tpu_custom_call.1}
  #allocation0 [shape = 'u32[]', space=smem, size = 0x4, offset = 0x4, fixed_abs, tag = 'smem constant byte address 0x4 - core index']
  #allocation1 [shape = 'u32[144,128]{1,0:T(1,128)}', space=vmem, size = 0x12000, scoped, tag = 'internal scratch']
  %s0 = inlined_call_operand.vmem [shape: bf16[512,192], index: 0, kind: input, shape index: {}]
  %s1 = inlined_call_operand.vmem [shape: bf16[512,8], index: 1, kind: input, shape index: {}]
  %s2 = inlined_call_operand.hbm [shape: bf16[192,1024], index: 2, kind: input, shape index: {}]
  %s3 = inlined_call_operand.hbm [shape: f32[1,1024], index: 3, kind: input, shape index: {}]
  %s4 = inlined_call_operand.hbm [shape: bf16[1024,768], index: 4, kind: input, shape index: {}]
  %s5 = inlined_call_operand.hbm [shape: f32[1,768], index: 5, kind: input, shape index: {}]
  %s6 = inlined_call_operand.hbm [shape: bf16[512,256], index: 6, kind: input, shape index: {}]
  %s7 = inlined_call_operand.hbm [shape: f32[1,256], index: 7, kind: input, shape index: {}]
  %s8 = inlined_call_operand.hbm [shape: bf16[256,384], index: 8, kind: input, shape index: {}]
  %s9 = inlined_call_operand.hbm [shape: bf16[8,384], index: 9, kind: input, shape index: {}]
  %s10 = inlined_call_operand.hbm [shape: f32[1,384], index: 10, kind: input, shape index: {}]
  %s11 = inlined_call_operand.hbm [shape: bf16[128,256], index: 11, kind: input, shape index: {}]
  %s12 = inlined_call_operand.hbm [shape: f32[1,256], index: 12, kind: input, shape index: {}]
  %s13 = inlined_call_operand.hbm [shape: bf16[256,128], index: 13, kind: input, shape index: {}]
  %s14 = inlined_call_operand.hbm [shape: f32[1,128], index: 14, kind: input, shape index: {}]
  %s15 = inlined_call_operand.hbm [shape: f32[512,128], index: 15, kind: output, shape index: {}]
  %s16 = sld [smem:[#allocation0]]
  $region145: #{tpu_custom_call.1} parent=0
    _
  %s18 = ssub.s32 1, %s16
  %s19 = scalar_select 0, %s18, %s16
  $region1: #{tpu_custom_call.1} parent=0
    #allocation2 [shape = 'u8[393216]{0}', space=vmem, size = 0x60000, scoped, tag = 'input window, operand 2, single buffered']
    #allocation3 [shape = 's32[2]{0}', space=sflag, size = 0x8, scoped, tag = 'scoped memory for tpu_custom_call.1']
    #allocation4 [shape = 's32[2]{0}', space=sflag, size = 0x8, scoped, tag = 'scoped memory for tpu_custom_call.1']
    #allocation5 [shape = 'u8[4096]{0}', space=vmem, size = 0x1000, scoped, tag = 'input window, operand 3, single buffered']
    #allocation6 [shape = 's32[1]{0}', space=sflag, size = 0x4, scoped, tag = 'scoped memory for tpu_custom_call.1']
    #allocation7 [shape = 'u8[1572864]{0}', space=vmem, size = 0x180000, scoped, tag = 'input window, operand 4, single buffered']
    #allocation8 [shape = 'u8[3072]{0}', space=vmem, size = 0xc00, scoped, tag = 'input window, operand 5, single buffered']
    #allocation9 [shape = 's32[1]{0}', space=sflag, size = 0x4, scoped, tag = 'scoped memory for tpu_custom_call.1']
    #allocation10 [shape = 'u8[262144]{0}', space=vmem, size = 0x40000, scoped, tag = 'input window, operand 6, single buffered']
    #allocation11 [shape = 'u8[1024]{0}', space=vmem, size = 0x400, scoped, tag = 'input window, operand 7, single buffered']
    #allocation12 [shape = 's32[1]{0}', space=sflag, size = 0x4, scoped, tag = 'scoped memory for tpu_custom_call.1']
    #allocation13 [shape = 'u8[196608]{0}', space=vmem, size = 0x30000, scoped, tag = 'input window, operand 8, single buffered']
    #allocation14 [shape = 'u8[6144]{0}', space=vmem, size = 0x1800, scoped, tag = 'input window, operand 9, single buffered']
    #allocation15 [shape = 's32[1]{0}', space=sflag, size = 0x4, scoped, tag = 'scoped memory for tpu_custom_call.1']
    #allocation16 [shape = 'u8[1536]{0}', space=vmem, size = 0x800, scoped, tag = 'input window, operand 10, single buffered']
    #allocation17 [shape = 'u8[65536]{0}', space=vmem, size = 0x10000, scoped, tag = 'input window, operand 11, single buffered']
    #allocation18 [shape = 's32[1]{0}', space=sflag, size = 0x4, scoped, tag = 'scoped memory for tpu_custom_call.1']
    #allocation19 [shape = 'u8[1024]{0}', space=vmem, size = 0x400, scoped, tag = 'input window, operand 12, single buffered']
    #allocation20 [shape = 'u8[65536]{0}', space=vmem, size = 0x10000, scoped, tag = 'input window, operand 13, single buffered']
    #allocation21 [shape = 's32[1]{0}', space=sflag, size = 0x4, scoped, tag = 'scoped memory for tpu_custom_call.1']
    #allocation22 [shape = 'u8[512]{0}', space=vmem, size = 0x400, scoped, tag = 'input window, operand 14, single buffered']
    #allocation23 [shape = 'u8[262144]{0}', space=vmem, size = 0x40000, scoped, tag = 'output window, operand 0']
    %20 = vsyncpa [#allocation3], 0
    %21 = vsyncpa [#allocation6], 0
    %22 = vsyncpa [#allocation9], 0
    %23 = vsyncpa [#allocation12], 0
    %24 = vsyncpa [#allocation15], 0
    %25 = vsyncpa [#allocation18], 0
    %26 = vsyncpa [#allocation21], 0
    %27 = vsyncpa [#allocation4], 0
    %s28 = scalar_lea.sflag [#allocation4], 1
    %29 = vsyncpa %s28, 0
    loop: start=0, step=1, limit=4
    $region2: #{tpu_custom_call.1} parent=1 // loop_pre_header
      _
    $region3: #{tpu_custom_call.1} parent=1 // loop_header
      %s31 = sphi 0, %s35
      %p32 = scmp.ge.s32.totalorder %s31, 4
      %s41 = sphi 0, %s43
      %s44 = sphi 0, %s41
      %s45 = sphi 0, %s44
      %s61 = sphi 0, %s45
      %s67 = sphi 0, %s69
      %s70 = sphi 0, %s67
      %s71 = sphi 0, %s70
      %s87 = sphi 0, %s71
      %s91 = sphi 0, %s91
      %s93 = sphi 0, %s91
      %s94 = sphi 0, %s93
      %s108 = sphi 0, %s94
      %s112 = sphi 0, %s112
      %s114 = sphi 0, %s112
      %s115 = sphi 0, %s114
      %s129 = sphi 0, %s115
      %s133 = sphi 0, %s133
      %s135 = sphi 0, %s133
      %s136 = sphi 0, %s135
      %s150 = sphi 0, %s136
      %s154 = sphi 0, %s154
      %s156 = sphi 0, %s154
      %s157 = sphi 0, %s156
      %s171 = sphi 0, %s157
      %s175 = sphi 0, %s175
      %s177 = sphi 0, %s175
      %s178 = sphi 0, %s177
      %s192 = sphi 0, %s178
      %s196 = sphi 0, %s196
      %s198 = sphi 0, %s196
      %s199 = sphi 0, %s198
      %s213 = sphi 0, %s199
      %s217 = sphi 0, %s217
      %s219 = sphi 0, %s217
      %s220 = sphi 0, %s219
      %s234 = sphi 0, %s220
      %s238 = sphi 0, %s238
      %s240 = sphi 0, %s238
      %s241 = sphi 0, %s240
      %s255 = sphi 0, %s241
      %s259 = sphi 0, %s259
      %s261 = sphi 0, %s259
      %s262 = sphi 0, %s261
      %s276 = sphi 0, %s262
      %s280 = sphi 0, %s280
      %s282 = sphi 0, %s280
      %s283 = sphi 0, %s282
      %s297 = sphi 0, %s283
      %s301 = sphi 0, %s301
      %s303 = sphi 0, %s301
      %s304 = sphi 0, %s303
      %s318 = sphi 0, %s304
      %s322 = sphi 0, %s322
      %s324 = sphi 0, %s322
      %s325 = sphi 0, %s324
      %s339 = sphi 0, %s325
      %s343 = sphi 0, %s343
      %s345 = sphi 0, %s343
      %s346 = sphi 0, %s345
      %s360 = sphi 0, %s346
      %s366 = sphi 0, %s368
      %s369 = sphi 0, %s366
      %s370 = sphi 0, %s369
      %s386 = sphi 0, %s370
    $region4: #{tpu_custom_call.1} parent=1 // loop_header_branch
      %34 = sbr.rel (%p32) target = $region8
    $region5: #{tpu_custom_call.1} parent=1 // loop_body
      %s36 = ssub.s32 %s31, 1
      %s37 = ssub.s32 %s31, 2
      %s38 = sadd.s32 %s31, 1
      %s39 = ssub.s32 %s31, %s38
      %p40 = scmp.eq.s32.totalorder %s39, 0
      %s42 = sadd.s32 %s41, 1
      %s43 = scalar_select %p40, %s41, %s42
      %p46 = pneg %p40
      %p47 = scmp.eq.s32.totalorder %s31, 1
      %p48 = por %p46, %p47
      %p49 = scmp.ne.s32.totalorder %s41, %s44
      %p50 = scmp.eq.s32.totalorder %s31, 0
      %p51 = por %p49, %p50
      %p52 = scmp.ne.s32.totalorder %s41, %s44
      %p53 = scmp.eq.s32.totalorder %s36, 1
      %p54 = por %p52, %p53
      %p55 = scmp.ne.s32.totalorder %s44, %s45
      %p56 = scmp.eq.s32.totalorder %s36, 0
      %p57 = por %p55, %p56
      %p58 = scmp.ne.s32.totalorder %s44, %s45
      %p59 = scmp.eq.s32.totalorder %s37, 1
      %p60 = por %p58, %p59
      %p62 = scmp.ne.s32.totalorder %s45, %s61
      %p63 = scmp.eq.s32.totalorder %s37, 0
      %p64 = por %p62, %p63
      %s65 = ssub.s32 %s31, %s38
      %p66 = scmp.eq.s32.totalorder %s65, 0
      %s68 = sadd.s32 %s67, 1
      %s69 = scalar_select %p66, %s67, %s68
      %p72 = pneg %p66
      %p73 = scmp.eq.s32.totalorder %s31, 1
      %p74 = por %p72, %p73
      %p75 = scmp.ne.s32.totalorder %s67, %s70
      %p76 = scmp.eq.s32.totalorder %s31, 0
      %p77 = por %p75, %p76
      %p78 = scmp.ne.s32.totalorder %s67, %s70
      %p79 = scmp.eq.s32.totalorder %s36, 1
      %p80 = por %p78, %p79
      %p81 = scmp.ne.s32.totalorder %s70, %s71
      %p82 = scmp.eq.s32.totalorder %s36, 0
      %p83 = por %p81, %p82
      %p84 = scmp.ne.s32.totalorder %s70, %s71
      %p85 = scmp.eq.s32.totalorder %s37, 1
      %p86 = por %p84, %p85
      %p88 = scmp.ne.s32.totalorder %s71, %s87
      %p89 = scmp.eq.s32.totalorder %s37, 0
      %p90 = por %p88, %p89
      %s92 = sadd.s32 %s91, 1
      %p95 = scmp.eq.s32.totalorder %s31, 1
      %p96 = scmp.ne.s32.totalorder %s91, %s93
      %p97 = scmp.eq.s32.totalorder %s31, 0
      %p98 = por %p96, %p97
      %p99 = scmp.ne.s32.totalorder %s91, %s93
      %p100 = scmp.eq.s32.totalorder %s36, 1
      %p101 = por %p99, %p100
      %p102 = scmp.ne.s32.totalorder %s93, %s94
      %p103 = scmp.eq.s32.totalorder %s36, 0
      %p104 = por %p102, %p103
      %p105 = scmp.ne.s32.totalorder %s93, %s94
      %p106 = scmp.eq.s32.totalorder %s37, 1
      %p107 = por %p105, %p106
      %p109 = scmp.ne.s32.totalorder %s94, %s108
      %p110 = scmp.eq.s32.totalorder %s37, 0
      %p111 = por %p109, %p110
      %s113 = sadd.s32 %s112, 1
      %p116 = scmp.eq.s32.totalorder %s31, 1
      %p117 = scmp.ne.s32.totalorder %s112, %s114
      %p118 = scmp.eq.s32.totalorder %s31, 0
      %p119 = por %p117, %p118
      %p120 = scmp.ne.s32.totalorder %s112, %s114
      %p121 = scmp.eq.s32.totalorder %s36, 1
      %p122 = por %p120, %p121
      %p123 = scmp.ne.s32.totalorder %s114, %s115
      %p124 = scmp.eq.s32.totalorder %s36, 0
      %p125 = por %p123, %p124
      %p126 = scmp.ne.s32.totalorder %s114, %s115
      %p127 = scmp.eq.s32.totalorder %s37, 1
      %p128 = por %p126, %p127
      %p130 = scmp.ne.s32.totalorder %s115, %s129
      %p131 = scmp.eq.s32.totalorder %s37, 0
      %p132 = por %p130, %p131
      %s134 = sadd.s32 %s133, 1
      %p137 = scmp.eq.s32.totalorder %s31, 1
      %p138 = scmp.ne.s32.totalorder %s133, %s135
      %p139 = scmp.eq.s32.totalorder %s31, 0
      %p140 = por %p138, %p139
      %p141 = scmp.ne.s32.totalorder %s133, %s135
      %p142 = scmp.eq.s32.totalorder %s36, 1
      %p143 = por %p141, %p142
      %p144 = scmp.ne.s32.totalorder %s135, %s136
      %p145 = scmp.eq.s32.totalorder %s36, 0
      %p146 = por %p144, %p145
      %p147 = scmp.ne.s32.totalorder %s135, %s136
      %p148 = scmp.eq.s32.totalorder %s37, 1
      %p149 = por %p147, %p148
      %p151 = scmp.ne.s32.totalorder %s136, %s150
      %p152 = scmp.eq.s32.totalorder %s37, 0
      %p153 = por %p151, %p152
      %s155 = sadd.s32 %s154, 1
      %p158 = scmp.eq.s32.totalorder %s31, 1
      %p159 = scmp.ne.s32.totalorder %s154, %s156
      %p160 = scmp.eq.s32.totalorder %s31, 0
      %p161 = por %p159, %p160
      %p162 = scmp.ne.s32.totalorder %s154, %s156
      %p163 = scmp.eq.s32.totalorder %s36, 1
      %p164 = por %p162, %p163
      %p165 = scmp.ne.s32.totalorder %s156, %s157
      %p166 = scmp.eq.s32.totalorder %s36, 0
      %p167 = por %p165, %p166
      %p168 = scmp.ne.s32.totalorder %s156, %s157
      %p169 = scmp.eq.s32.totalorder %s37, 1
      %p170 = por %p168, %p169
      %p172 = scmp.ne.s32.totalorder %s157, %s171
      %p173 = scmp.eq.s32.totalorder %s37, 0
      %p174 = por %p172, %p173
      %s176 = sadd.s32 %s175, 1
      %p179 = scmp.eq.s32.totalorder %s31, 1
      %p180 = scmp.ne.s32.totalorder %s175, %s177
      %p181 = scmp.eq.s32.totalorder %s31, 0
      %p182 = por %p180, %p181
      %p183 = scmp.ne.s32.totalorder %s175, %s177
      %p184 = scmp.eq.s32.totalorder %s36, 1
      %p185 = por %p183, %p184
      %p186 = scmp.ne.s32.totalorder %s177, %s178
      %p187 = scmp.eq.s32.totalorder %s36, 0
      %p188 = por %p186, %p187
      %p189 = scmp.ne.s32.totalorder %s177, %s178
      %p190 = scmp.eq.s32.totalorder %s37, 1
      %p191 = por %p189, %p190
      %p193 = scmp.ne.s32.totalorder %s178, %s192
      %p194 = scmp.eq.s32.totalorder %s37, 0
      %p195 = por %p193, %p194
      %s197 = sadd.s32 %s196, 1
      %p200 = scmp.eq.s32.totalorder %s31, 1
      %p201 = scmp.ne.s32.totalorder %s196, %s198
      %p202 = scmp.eq.s32.totalorder %s31, 0
      %p203 = por %p201, %p202
      %p204 = scmp.ne.s32.totalorder %s196, %s198
      %p205 = scmp.eq.s32.totalorder %s36, 1
      %p206 = por %p204, %p205
      %p207 = scmp.ne.s32.totalorder %s198, %s199
      %p208 = scmp.eq.s32.totalorder %s36, 0
      %p209 = por %p207, %p208
      %p210 = scmp.ne.s32.totalorder %s198, %s199
      %p211 = scmp.eq.s32.totalorder %s37, 1
      %p212 = por %p210, %p211
      %p214 = scmp.ne.s32.totalorder %s199, %s213
      %p215 = scmp.eq.s32.totalorder %s37, 0
      %p216 = por %p214, %p215
      %s218 = sadd.s32 %s217, 1
      %p221 = scmp.eq.s32.totalorder %s31, 1
      %p222 = scmp.ne.s32.totalorder %s217, %s219
      %p223 = scmp.eq.s32.totalorder %s31, 0
      %p224 = por %p222, %p223
      %p225 = scmp.ne.s32.totalorder %s217, %s219
      %p226 = scmp.eq.s32.totalorder %s36, 1
      %p227 = por %p225, %p226
      %p228 = scmp.ne.s32.totalorder %s219, %s220
      %p229 = scmp.eq.s32.totalorder %s36, 0
      %p230 = por %p228, %p229
      %p231 = scmp.ne.s32.totalorder %s219, %s220
      %p232 = scmp.eq.s32.totalorder %s37, 1
      %p233 = por %p231, %p232
      %p235 = scmp.ne.s32.totalorder %s220, %s234
      %p236 = scmp.eq.s32.totalorder %s37, 0
      %p237 = por %p235, %p236
      %s239 = sadd.s32 %s238, 1
      %p242 = scmp.eq.s32.totalorder %s31, 1
      %p243 = scmp.ne.s32.totalorder %s238, %s240
      %p244 = scmp.eq.s32.totalorder %s31, 0
      %p245 = por %p243, %p244
      %p246 = scmp.ne.s32.totalorder %s238, %s240
      %p247 = scmp.eq.s32.totalorder %s36, 1
      %p248 = por %p246, %p247
      %p249 = scmp.ne.s32.totalorder %s240, %s241
      %p250 = scmp.eq.s32.totalorder %s36, 0
      %p251 = por %p249, %p250
      %p252 = scmp.ne.s32.totalorder %s240, %s241
      %p253 = scmp.eq.s32.totalorder %s37, 1
      %p254 = por %p252, %p253
      %p256 = scmp.ne.s32.totalorder %s241, %s255
      %p257 = scmp.eq.s32.totalorder %s37, 0
      %p258 = por %p256, %p257
      %s260 = sadd.s32 %s259, 1
      %p263 = scmp.eq.s32.totalorder %s31, 1
      %p264 = scmp.ne.s32.totalorder %s259, %s261
      %p265 = scmp.eq.s32.totalorder %s31, 0
      %p266 = por %p264, %p265
      %p267 = scmp.ne.s32.totalorder %s259, %s261
      %p268 = scmp.eq.s32.totalorder %s36, 1
      %p269 = por %p267, %p268
      %p270 = scmp.ne.s32.totalorder %s261, %s262
      %p271 = scmp.eq.s32.totalorder %s36, 0
      %p272 = por %p270, %p271
      %p273 = scmp.ne.s32.totalorder %s261, %s262
      %p274 = scmp.eq.s32.totalorder %s37, 1
      %p275 = por %p273, %p274
      %p277 = scmp.ne.s32.totalorder %s262, %s276
      %p278 = scmp.eq.s32.totalorder %s37, 0
      %p279 = por %p277, %p278
      %s281 = sadd.s32 %s280, 1
      %p284 = scmp.eq.s32.totalorder %s31, 1
      %p285 = scmp.ne.s32.totalorder %s280, %s282
      %p286 = scmp.eq.s32.totalorder %s31, 0
      %p287 = por %p285, %p286
      %p288 = scmp.ne.s32.totalorder %s280, %s282
      %p289 = scmp.eq.s32.totalorder %s36, 1
      %p290 = por %p288, %p289
      %p291 = scmp.ne.s32.totalorder %s282, %s283
      %p292 = scmp.eq.s32.totalorder %s36, 0
      %p293 = por %p291, %p292
      %p294 = scmp.ne.s32.totalorder %s282, %s283
      %p295 = scmp.eq.s32.totalorder %s37, 1
      %p296 = por %p294, %p295
      %p298 = scmp.ne.s32.totalorder %s283, %s297
      %p299 = scmp.eq.s32.totalorder %s37, 0
      %p300 = por %p298, %p299
      %s302 = sadd.s32 %s301, 1
      %p305 = scmp.eq.s32.totalorder %s31, 1
      %p306 = scmp.ne.s32.totalorder %s301, %s303
      %p307 = scmp.eq.s32.totalorder %s31, 0
      %p308 = por %p306, %p307
      %p309 = scmp.ne.s32.totalorder %s301, %s303
      %p310 = scmp.eq.s32.totalorder %s36, 1
      %p311 = por %p309, %p310
      %p312 = scmp.ne.s32.totalorder %s303, %s304
      %p313 = scmp.eq.s32.totalorder %s36, 0
      %p314 = por %p312, %p313
      %p315 = scmp.ne.s32.totalorder %s303, %s304
      %p316 = scmp.eq.s32.totalorder %s37, 1
      %p317 = por %p315, %p316
      %p319 = scmp.ne.s32.totalorder %s304, %s318
      %p320 = scmp.eq.s32.totalorder %s37, 0
      %p321 = por %p319, %p320
      %s323 = sadd.s32 %s322, 1
      %p326 = scmp.eq.s32.totalorder %s31, 1
      %p327 = scmp.ne.s32.totalorder %s322, %s324
      %p328 = scmp.eq.s32.totalorder %s31, 0
      %p329 = por %p327, %p328
      %p330 = scmp.ne.s32.totalorder %s322, %s324
      %p331 = scmp.eq.s32.totalorder %s36, 1
      %p332 = por %p330, %p331
      %p333 = scmp.ne.s32.totalorder %s324, %s325
      %p334 = scmp.eq.s32.totalorder %s36, 0
      %p335 = por %p333, %p334
      %p336 = scmp.ne.s32.totalorder %s324, %s325
      %p337 = scmp.eq.s32.totalorder %s37, 1
      %p338 = por %p336, %p337
      %p340 = scmp.ne.s32.totalorder %s325, %s339
      %p341 = scmp.eq.s32.totalorder %s37, 0
      %p342 = por %p340, %p341
      %s344 = sadd.s32 %s343, 1
      %p347 = scmp.eq.s32.totalorder %s31, 1
      %p348 = scmp.ne.s32.totalorder %s343, %s345
      %p349 = scmp.eq.s32.totalorder %s31, 0
      %p350 = por %p348, %p349
      %p351 = scmp.ne.s32.totalorder %s343, %s345
      %p352 = scmp.eq.s32.totalorder %s36, 1
      %p353 = por %p351, %p352
      %p354 = scmp.ne.s32.totalorder %s345, %s346
      %p355 = scmp.eq.s32.totalorder %s36, 0
      %p356 = por %p354, %p355
      %p357 = scmp.ne.s32.totalorder %s345, %s346
      %p358 = scmp.eq.s32.totalorder %s37, 1
      %p359 = por %p357, %p358
      %p361 = scmp.ne.s32.totalorder %s346, %s360
      %p362 = scmp.eq.s32.totalorder %s37, 0
      %p363 = por %p361, %p362
      %s364 = ssub.s32 %s31, %s38
      %p365 = scmp.eq.s32.totalorder %s364, 0
      %s367 = sadd.s32 %s366, 1
      %s368 = scalar_select %p365, %s366, %s367
      %p371 = pneg %p365
      %p372 = scmp.eq.s32.totalorder %s31, 1
      %p373 = por %p371, %p372
      %p374 = scmp.ne.s32.totalorder %s366, %s369
      %p375 = scmp.eq.s32.totalorder %s31, 0
      %p376 = por %p374, %p375
      %p377 = scmp.ne.s32.totalorder %s366, %s369
      %p378 = scmp.eq.s32.totalorder %s36, 1
      %p379 = por %p377, %p378
      %p380 = scmp.ne.s32.totalorder %s369, %s370
      %p381 = scmp.eq.s32.totalorder %s36, 0
      %p382 = por %p380, %p381
      %p383 = scmp.ne.s32.totalorder %s369, %s370
      %p384 = scmp.eq.s32.totalorder %s37, 1
      %p385 = por %p383, %p384
      %p387 = scmp.ne.s32.totalorder %s370, %s386
      %p388 = scmp.eq.s32.totalorder %s37, 0
      %p389 = por %p387, %p388
      %p390 = scmp.le.s32.totalorder 1, %s31
      %p391 = scmp.lt.s32.totalorder %s31, 3
      %p392 = pnand %p390, %p391
      %p393 = pneg %p392
      // Predicated region
      $region9: #{tpu_custom_call.1} parent=5 // pred_check
        _
      $region10: #{tpu_custom_call.1} parent=5 // pred_check_branch
        %395 = sbr.rel (%p392) target = $region12
      $region11: #{tpu_custom_call.1} parent=5 // pred_region
        %s396 = ssub.s32 %s31, 1
        // Predicated region
        $region13: #{tpu_custom_call.1} parent=11 // pred_check
          %p397 = pneg %p104
        $region14: #{tpu_custom_call.1} parent=11 // pred_check_branch
          %399 = sbr.rel (%p397) target = $region16
        $region15: #{tpu_custom_call.1} parent=11 // pred_region
          %s401 = ssub.s32 12288, 12288
          %402 = vsyncadd [#allocation3], %s401
          %s403 = sshll.u32 [#allocation2], 4
          %s404 = int_to_ptr.vmem [resolvable:$true] %s403
          %409 = dma.hbm_to_vmem [thread:$0]  %s2, 12288, %s404, [#allocation3], 512, 512, 32
        $region16: #{tpu_custom_call.1} parent=11 // pred_fallthru
          _
        // Predicated region
        $region17: #{tpu_custom_call.1} parent=11 // pred_check
          %p410 = pneg %p125
        $region18: #{tpu_custom_call.1} parent=11 // pred_check_branch
          %412 = sbr.rel (%p410) target = $region20
        $region19: #{tpu_custom_call.1} parent=11 // pred_region
          %s414 = ssub.s32 128, 128
          %415 = vsyncadd [#allocation6], %s414
          %s417 = sshll.u32 [#allocation5], 4
          %s418 = int_to_ptr.vmem [resolvable:$true] %s417
          %420 = dma.hbm_to_vmem [thread:$0]  %s3, 128, %s418, [#allocation6]
        $region20: #{tpu_custom_call.1} parent=11 // pred_fallthru
          _
        // Predicated region
        $region21: #{tpu_custom_call.1} parent=11 // pred_check
          %p421 = pneg %p146
        $region22: #{tpu_custom_call.1} parent=11 // pred_check_branch
          %423 = sbr.rel (%p421) target = $region24
        $region23: #{tpu_custom_call.1} parent=11 // pred_region
          %s425 = ssub.s32 49152, 49152
          %426 = vsyncadd [#allocation6], %s425
          %s427 = sshll.u32 [#allocation7], 4
          %s428 = int_to_ptr.vmem [resolvable:$true] %s427
          %433 = dma.hbm_to_vmem [thread:$0]  %s4, 49152, %s428, [#allocation6], 384, 384, 24
        $region24: #{tpu_custom_call.1} parent=11 // pred_fallthru
          _
        // Predicated region
        $region25: #{tpu_custom_call.1} parent=11 // pred_check
          %p434 = pneg %p167
        $region26: #{tpu_custom_call.1} parent=11 // pred_check_branch
          %436 = sbr.rel (%p434) target = $region28
        $region27: #{tpu_custom_call.1} parent=11 // pred_region
          %s438 = ssub.s32 96, 96
          %439 = vsyncadd [#allocation9], %s438
          %s441 = sshll.u32 [#allocation8], 4
          %s442 = int_to_ptr.vmem [resolvable:$true] %s441
          %444 = dma.hbm_to_vmem [thread:$0]  %s5, 96, %s442, [#allocation9]
        $region28: #{tpu_custom_call.1} parent=11 // pred_fallthru
          _
        // Predicated region
        $region29: #{tpu_custom_call.1} parent=11 // pred_check
          %p445 = pneg %p188
        $region30: #{tpu_custom_call.1} parent=11 // pred_check_branch
          %447 = sbr.rel (%p445) target = $region32
        $region31: #{tpu_custom_call.1} parent=11 // pred_region
          %s449 = ssub.s32 8192, 8192
          %450 = vsyncadd [#allocation9], %s449
          %s451 = sshll.u32 [#allocation10], 4
          %s452 = int_to_ptr.vmem [resolvable:$true] %s451
          %457 = dma.hbm_to_vmem [thread:$0]  %s6, 8192, %s452, [#allocation9], 128, 128, 8
        $region32: #{tpu_custom_call.1} parent=11 // pred_fallthru
          _
        // Predicated region
        $region33: #{tpu_custom_call.1} parent=11 // pred_check
          %p458 = pneg %p209
        $region34: #{tpu_custom_call.1} parent=11 // pred_check_branch
          %460 = sbr.rel (%p458) target = $region36
        $region35: #{tpu_custom_call.1} parent=11 // pred_region
          %s462 = ssub.s32 32, 32
          %463 = vsyncadd [#allocation12], %s462
          %s465 = sshll.u32 [#allocation11], 4
          %s466 = int_to_ptr.vmem [resolvable:$true] %s465
          %468 = dma.hbm_to_vmem [thread:$0]  %s7, 32, %s466, [#allocation12]
        $region36: #{tpu_custom_call.1} parent=11 // pred_fallthru
          _
        // Predicated region
        $region37: #{tpu_custom_call.1} parent=11 // pred_check
          %p469 = pneg %p230
        $region38: #{tpu_custom_call.1} parent=11 // pred_check_branch
          %471 = sbr.rel (%p469) target = $region40
        $region39: #{tpu_custom_call.1} parent=11 // pred_region
          %s473 = ssub.s32 6144, 6144
          %474 = vsyncadd [#allocation12], %s473
          %s475 = sshll.u32 [#allocation13], 4
          %s476 = int_to_ptr.vmem [resolvable:$true] %s475
          %481 = dma.hbm_to_vmem [thread:$0]  %s8, 6144, %s476, [#allocation12], 192, 192, 12
        $region40: #{tpu_custom_call.1} parent=11 // pred_fallthru
          _
        // Predicated region
        $region41: #{tpu_custom_call.1} parent=11 // pred_check
          %p482 = pneg %p251
        $region42: #{tpu_custom_call.1} parent=11 // pred_check_branch
          %484 = sbr.rel (%p482) target = $region44
        $region43: #{tpu_custom_call.1} parent=11 // pred_region
          %s486 = ssub.s32 192, 192
          %487 = vsyncadd [#allocation15], %s486
          %s489 = sshll.u32 [#allocation14], 4
          %s490 = int_to_ptr.vmem [resolvable:$true] %s489
          %492 = dma.hbm_to_vmem [thread:$0]  %s9, 192, %s490, [#allocation15]
        $region44: #{tpu_custom_call.1} parent=11 // pred_fallthru
          _
        // Predicated region
        $region45: #{tpu_custom_call.1} parent=11 // pred_check
          %p493 = pneg %p272
        $region46: #{tpu_custom_call.1} parent=11 // pred_check_branch
          %495 = sbr.rel (%p493) target = $region48
        $region47: #{tpu_custom_call.1} parent=11 // pred_region
          %s497 = ssub.s32 48, 48
          %498 = vsyncadd [#allocation15], %s497
          %s500 = sshll.u32 [#allocation16], 4
          %s501 = int_to_ptr.vmem [resolvable:$true] %s500
          %503 = dma.hbm_to_vmem [thread:$0]  %s10, 48, %s501, [#allocation15]
        $region48: #{tpu_custom_call.1} parent=11 // pred_fallthru
          _
        // Predicated region
        $region49: #{tpu_custom_call.1} parent=11 // pred_check
          %p504 = pneg %p293
        $region50: #{tpu_custom_call.1} parent=11 // pred_check_branch
          %506 = sbr.rel (%p504) target = $region52
        $region51: #{tpu_custom_call.1} parent=11 // pred_region
          %s508 = ssub.s32 2048, 2048
          %509 = vsyncadd [#allocation18], %s508
          %s510 = sshll.u32 [#allocation17], 4
          %s511 = int_to_ptr.vmem [resolvable:$true] %s510
          %516 = dma.hbm_to_vmem [thread:$0]  %s11, 2048, %s511, [#allocation18], 128, 128, 8
        $region52: #{tpu_custom_call.1} parent=11 // pred_fallthru
          _
        // Predicated region
        $region53: #{tpu_custom_call.1} parent=11 // pred_check
          %p517 = pneg %p314
        $region54: #{tpu_custom_call.1} parent=11 // pred_check_branch
          %519 = sbr.rel (%p517) target = $region56
        $region55: #{tpu_custom_call.1} parent=11 // pred_region
          %s521 = ssub.s32 32, 32
          %522 = vsyncadd [#allocation18], %s521
          %s524 = sshll.u32 [#allocation19], 4
          %s525 = int_to_ptr.vmem [resolvable:$true] %s524
          %527 = dma.hbm_to_vmem [thread:$0]  %s12, 32, %s525, [#allocation18]
        $region56: #{tpu_custom_call.1} parent=11 // pred_fallthru
          _
        // Predicated region
        $region57: #{tpu_custom_call.1} parent=11 // pred_check
          %p528 = pneg %p335
        $region58: #{tpu_custom_call.1} parent=11 // pred_check_branch
          %530 = sbr.rel (%p528) target = $region60
        $region59: #{tpu_custom_call.1} parent=11 // pred_region
          %s532 = ssub.s32 2048, 2048
          %533 = vsyncadd [#allocation21], %s532
          %s534 = sshll.u32 [#allocation20], 4
          %s535 = int_to_ptr.vmem [resolvable:$true] %s534
          %540 = dma.hbm_to_vmem [thread:$0]  %s13, 2048, %s535, [#allocation21], 64, 64, 4
        $region60: #{tpu_custom_call.1} parent=11 // pred_fallthru
          _
        // Predicated region
        $region61: #{tpu_custom_call.1} parent=11 // pred_check
          %p541 = pneg %p356
        $region62: #{tpu_custom_call.1} parent=11 // pred_check_branch
          %543 = sbr.rel (%p541) target = $region64
        $region63: #{tpu_custom_call.1} parent=11 // pred_region
          %s545 = ssub.s32 16, 16
          %546 = vsyncadd [#allocation21], %s545
          %s548 = sshll.u32 [#allocation22], 4
          %s549 = int_to_ptr.vmem [resolvable:$true] %s548
          %551 = dma.hbm_to_vmem [thread:$0]  %s14, 16, %s549, [#allocation21]
        $region64: #{tpu_custom_call.1} parent=11 // pred_fallthru
          _
      $region12: #{tpu_custom_call.1} parent=5 // pred_fallthru
        _
      %p552 = scmp.lt.s32.totalorder %s31, 2
      // Predicated region
      $region65: #{tpu_custom_call.1} parent=5 // pred_check
        %p553 = pneg %p552
      $region66: #{tpu_custom_call.1} parent=5 // pred_check_branch
        %555 = sbr.rel (%p553) target = $region68
      $region67: #{tpu_custom_call.1} parent=5 // pred_region
        // Predicated region
        $region69: #{tpu_custom_call.1} parent=67 // pred_check
          %p556 = pneg %p51
        $region70: #{tpu_custom_call.1} parent=67 // pred_check_branch
          %558 = sbr.rel (%p556) target = $region72
        $region71: #{tpu_custom_call.1} parent=67 // pred_region
          %s559 = smul.u32 32, %s31
          %p560 = scmp.lt.s32.totalorder %s559, 63
          %s561 = scalar_select %p560, %s559, 63
          %s562 = smul.addr %s561, 2
          %s563 = smul.addr %s562, 4
          %s564 = scalar_lea.vmem %s0, %s563
          %s565 = smul.u32 32, %s31
        $region72: #{tpu_custom_call.1} parent=67 // pred_fallthru
          _
        // Predicated region
        $region73: #{tpu_custom_call.1} parent=67 // pred_check
          %p566 = pneg %p77
        $region74: #{tpu_custom_call.1} parent=67 // pred_check_branch
          %568 = sbr.rel (%p566) target = $region76
        $region75: #{tpu_custom_call.1} parent=67 // pred_region
          %s569 = smul.u32 32, %s31
          %p570 = scmp.lt.s32.totalorder %s569, 63
          %s571 = scalar_select %p570, %s569, 63
          %s572 = smul.addr %s571, 4
          %s573 = scalar_lea.vmem %s1, %s572
          %s574 = smul.u32 32, %s31
        $region76: #{tpu_custom_call.1} parent=67 // pred_fallthru
          _
      $region68: #{tpu_custom_call.1} parent=5 // pred_fallthru
        _
      %p575 = scmp.le.s32.totalorder 1, %s31
      %p576 = scmp.lt.s32.totalorder %s31, 3
      %p577 = pnand %p575, %p576
      %p578 = pneg %p577
      // Predicated region
      $region77: #{tpu_custom_call.1} parent=5 // pred_check
        _
      $region78: #{tpu_custom_call.1} parent=5 // pred_check_branch
        %580 = sbr.rel (%p577) target = $region80
      $region79: #{tpu_custom_call.1} parent=5 // pred_region
        %s581 = ssub.s32 %s31, 1
        // Predicated region
        $region81: #{tpu_custom_call.1} parent=79 // pred_check
          %p582 = pneg %p104
        $region82: #{tpu_custom_call.1} parent=79 // pred_check_branch
          %584 = sbr.rel (%p582) target = $region84
        $region83: #{tpu_custom_call.1} parent=79 // pred_region
          %585 = dma.done [#allocation3], 12288
        $region84: #{tpu_custom_call.1} parent=79 // pred_fallthru
          _
        // Predicated region
        $region85: #{tpu_custom_call.1} parent=79 // pred_check
          %p586 = pneg %p125
        $region86: #{tpu_custom_call.1} parent=79 // pred_check_branch
          %588 = sbr.rel (%p586) target = $region88
        $region87: #{tpu_custom_call.1} parent=79 // pred_region
          %589 = dma.done [#allocation6], 128
        $region88: #{tpu_custom_call.1} parent=79 // pred_fallthru
          _
        // Predicated region
        $region89: #{tpu_custom_call.1} parent=79 // pred_check
          %p590 = pneg %p146
        $region90: #{tpu_custom_call.1} parent=79 // pred_check_branch
          %592 = sbr.rel (%p590) target = $region92
        $region91: #{tpu_custom_call.1} parent=79 // pred_region
          %593 = dma.done [#allocation6], 49152
        $region92: #{tpu_custom_call.1} parent=79 // pred_fallthru
          _
        // Predicated region
        $region93: #{tpu_custom_call.1} parent=79 // pred_check
          %p594 = pneg %p167
        $region94: #{tpu_custom_call.1} parent=79 // pred_check_branch
          %596 = sbr.rel (%p594) target = $region96
        $region95: #{tpu_custom_call.1} parent=79 // pred_region
          %597 = dma.done [#allocation9], 96
        $region96: #{tpu_custom_call.1} parent=79 // pred_fallthru
          _
        // Predicated region
        $region97: #{tpu_custom_call.1} parent=79 // pred_check
          %p598 = pneg %p188
        $region98: #{tpu_custom_call.1} parent=79 // pred_check_branch
          %600 = sbr.rel (%p598) target = $region100
        $region99: #{tpu_custom_call.1} parent=79 // pred_region
          %601 = dma.done [#allocation9], 8192
        $region100: #{tpu_custom_call.1} parent=79 // pred_fallthru
          _
        // Predicated region
        $region101: #{tpu_custom_call.1} parent=79 // pred_check
          %p602 = pneg %p209
        $region102: #{tpu_custom_call.1} parent=79 // pred_check_branch
          %604 = sbr.rel (%p602) target = $region104
        $region103: #{tpu_custom_call.1} parent=79 // pred_region
          %605 = dma.done [#allocation12], 32
        $region104: #{tpu_custom_call.1} parent=79 // pred_fallthru
          _
        // Predicated region
        $region105: #{tpu_custom_call.1} parent=79 // pred_check
          %p606 = pneg %p230
        $region106: #{tpu_custom_call.1} parent=79 // pred_check_branch
          %608 = sbr.rel (%p606) target = $region108
        $region107: #{tpu_custom_call.1} parent=79 // pred_region
          %609 = dma.done [#allocation12], 6144
        $region108: #{tpu_custom_call.1} parent=79 // pred_fallthru
          _
        // Predicated region
        $region109: #{tpu_custom_call.1} parent=79 // pred_check
          %p610 = pneg %p251
        $region110: #{tpu_custom_call.1} parent=79 // pred_check_branch
          %612 = sbr.rel (%p610) target = $region112
        $region111: #{tpu_custom_call.1} parent=79 // pred_region
          %613 = dma.done [#allocation15], 192
        $region112: #{tpu_custom_call.1} parent=79 // pred_fallthru
          _
        // Predicated region
        $region113: #{tpu_custom_call.1} parent=79 // pred_check
          %p614 = pneg %p272
        $region114: #{tpu_custom_call.1} parent=79 // pred_check_branch
          %616 = sbr.rel (%p614) target = $region116
        $region115: #{tpu_custom_call.1} parent=79 // pred_region
          %617 = dma.done [#allocation15], 48
        $region116: #{tpu_custom_call.1} parent=79 // pred_fallthru
          _
        // Predicated region
        $region117: #{tpu_custom_call.1} parent=79 // pred_check
          %p618 = pneg %p293
        $region118: #{tpu_custom_call.1} parent=79 // pred_check_branch
          %620 = sbr.rel (%p618) target = $region120
        $region119: #{tpu_custom_call.1} parent=79 // pred_region
          %621 = dma.done [#allocation18], 2048
        $region120: #{tpu_custom_call.1} parent=79 // pred_fallthru
          _
        // Predicated region
        $region121: #{tpu_custom_call.1} parent=79 // pred_check
          %p622 = pneg %p314
        $region122: #{tpu_custom_call.1} parent=79 // pred_check_branch
          %624 = sbr.rel (%p622) target = $region124
        $region123: #{tpu_custom_call.1} parent=79 // pred_region
          %625 = dma.done [#allocation18], 32
        $region124: #{tpu_custom_call.1} parent=79 // pred_fallthru
          _
        // Predicated region
        $region125: #{tpu_custom_call.1} parent=79 // pred_check
          %p626 = pneg %p335
        $region126: #{tpu_custom_call.1} parent=79 // pred_check_branch
          %628 = sbr.rel (%p626) target = $region128
        $region127: #{tpu_custom_call.1} parent=79 // pred_region
          %629 = dma.done [#allocation21], 2048
        $region128: #{tpu_custom_call.1} parent=79 // pred_fallthru
          _
        // Predicated region
        $region129: #{tpu_custom_call.1} parent=79 // pred_check
          %p630 = pneg %p356
        $region130: #{tpu_custom_call.1} parent=79 // pred_check_branch
          %632 = sbr.rel (%p630) target = $region132
        $region131: #{tpu_custom_call.1} parent=79 // pred_region
          %633 = dma.done [#allocation21], 16
        $region132: #{tpu_custom_call.1} parent=79 // pred_fallthru
          _
        %s634 = smul.u32 32, %s36
        %p635 = scmp.lt.s32.totalorder %s634, 63
        %s636 = scalar_select %p635, %s634, 63
        %s637 = smul.addr %s636, 2
        %s638 = smul.addr %s637, 4
        %s639 = scalar_lea.vmem %s0, %s638
        %p640 = pneg %p57
        %p641 = pneg %p54
        %s642 = smul.u32 32, %s36
        %p643 = scmp.lt.s32.totalorder %s642, 63
        %s644 = scalar_select %p643, %s642, 63
        %s645 = smul.addr %s644, 4
        %s646 = scalar_lea.vmem %s1, %s645
        %p647 = pneg %p83
        %p648 = pneg %p80
        %p649 = pneg %p104
        %p650 = pneg %p101
        %p651 = pneg %p125
        %p652 = pneg %p122
        %p653 = pneg %p146
        %p654 = pneg %p143
        %p655 = pneg %p167
        %p656 = pneg %p164
        %p657 = pneg %p188
        %p658 = pneg %p185
        %p659 = pneg %p209
        %p660 = pneg %p206
        %p661 = pneg %p230
        %p662 = pneg %p227
        %p663 = pneg %p251
        %p664 = pneg %p248
        %p665 = pneg %p272
        %p666 = pneg %p269
        %p667 = pneg %p293
        %p668 = pneg %p290
        %p669 = pneg %p314
        %p670 = pneg %p311
        %p671 = pneg %p335
        %p672 = pneg %p332
        %p673 = pneg %p356
        %p674 = pneg %p353
        %p675 = pneg %p382
        %p676 = pneg %p379
        %s677 = sand.u32 %s369, 1
        %s678 = scalar_lea.sflag [#allocation4], %s677
        %s679 = sand.u32 %s369, 1
        %s680 = smul.addr %s679, 256
        %s681 = scalar_lea.vmem [#allocation23], %s680
        %s682 = smul.u32 32, %s36
        %p683 = scmp.lt.s32.totalorder %s682, 63
        %s684 = scalar_select %p683, %s682, 63
        %s685 = smul.addr %s684, 2
        %s686 = smul.addr %s685, 4
        %s687 = scalar_lea.vmem %s0, %s686
        %s688 = smul.u32 32, %s36
        %s689 = smul.u32 32, %s36
        %p690 = scmp.lt.s32.totalorder %s689, 63
        %s691 = scalar_select %p690, %s689, 63
        %s692 = smul.addr %s691, 4
        %s693 = scalar_lea.vmem %s1, %s692
        %s694 = smul.u32 32, %s36
        %s695 = smul.u32 32, %s36
        %v697 = vld [vmem:[%s687] sm:$0xff]
        %v698 = vld [vmem:[%s687 + $0x8] sm:$0xff]
        %v699 = vld [vmem:[%s687 + $0x10] sm:$0xff]
        %v700 = vld [vmem:[%s687 + $0x18] sm:$0xff]
        %v701 = vld [vmem:[%s687 + $0x20] sm:$0xff]
        %v702 = vld [vmem:[%s687 + $0x28] sm:$0xff]
        %v703 = vld [vmem:[%s687 + $0x30] sm:$0xff]
        %v704 = vld [vmem:[%s687 + $0x38] sm:$0xff]
        %v705 = vld [vmem:[%s687 + $0x40] sm:$0xff]
        %v706 = vld [vmem:[%s687 + $0x48] sm:$0xff]
        %v707 = vld [vmem:[%s687 + $0x50] sm:$0xff]
        %v708 = vld [vmem:[%s687 + $0x58] sm:$0xff]
        %v709 = vld [vmem:[%s687 + $0x60] sm:$0xff]
        %v710 = vld [vmem:[%s687 + $0x68] sm:$0xff]
        %v711 = vld [vmem:[%s687 + $0x70] sm:$0xff]
        %v712 = vld [vmem:[%s687 + $0x78] sm:$0xff]
        %v713 = vld [vmem:[%s687 + $0x80] sm:$0xff]
        %v714 = vld [vmem:[%s687 + $0x88] sm:$0xff]
        %v715 = vld [vmem:[%s687 + $0x90] sm:$0xff]
        %v716 = vld [vmem:[%s687 + $0x98] sm:$0xff]
        %v717 = vld [vmem:[%s687 + $0xa0] sm:$0xff]
        %v718 = vld [vmem:[%s687 + $0xa8] sm:$0xff]
        %v719 = vld [vmem:[%s687 + $0xb0] sm:$0xff]
        %v720 = vld [vmem:[%s687 + $0xb8] sm:$0xff]
        %v721 = vld [vmem:[%s687 + $0xc0] sm:$0xff]
        %v722 = vld [vmem:[%s687 + $0xc8] sm:$0xff]
        %v723 = vld [vmem:[%s687 + $0xd0] sm:$0xff]
        %v724 = vld [vmem:[%s687 + $0xd8] sm:$0xff]
        %v725 = vld [vmem:[%s687 + $0xe0] sm:$0xff]
        %v726 = vld [vmem:[%s687 + $0xe8] sm:$0xff]
        %v727 = vld [vmem:[%s687 + $0xf0] sm:$0xff]
        %v728 = vld [vmem:[%s687 + $0xf8] sm:$0xff]
        %v729 = vld [vmem:[%s693] sm:$0xf]
        %v730 = vld [vmem:[%s693 + $0x4] sm:$0xf]
        %v731 = vld [vmem:[%s693 + $0x8] sm:$0xf]
        %v732 = vld [vmem:[%s693 + $0xc] sm:$0xf]
        %v733 = vld [vmem:[%s693 + $0x10] sm:$0xf]
        %v734 = vld [vmem:[%s693 + $0x14] sm:$0xf]
        %v735 = vld [vmem:[%s693 + $0x18] sm:$0xf]
        %v736 = vld [vmem:[%s693 + $0x1c] sm:$0xf]
        %v737 = vld [vmem:[%s693 + $0x20] sm:$0xf]
        %v738 = vld [vmem:[%s693 + $0x24] sm:$0xf]
        %v739 = vld [vmem:[%s693 + $0x28] sm:$0xf]
        %v740 = vld [vmem:[%s693 + $0x2c] sm:$0xf]
        %v741 = vld [vmem:[%s693 + $0x30] sm:$0xf]
        %v742 = vld [vmem:[%s693 + $0x34] sm:$0xf]
        %v743 = vld [vmem:[%s693 + $0x38] sm:$0xf]
        %v744 = vld [vmem:[%s693 + $0x3c] sm:$0xf]
        %v745 = vld [vmem:[%s693 + $0x40] sm:$0xf]
        %v746 = vld [vmem:[%s693 + $0x44] sm:$0xf]
        %v747 = vld [vmem:[%s693 + $0x48] sm:$0xf]
        %v748 = vld [vmem:[%s693 + $0x4c] sm:$0xf]
        %v749 = vld [vmem:[%s693 + $0x50] sm:$0xf]
        %v750 = vld [vmem:[%s693 + $0x54] sm:$0xf]
        %v751 = vld [vmem:[%s693 + $0x58] sm:$0xf]
        %v752 = vld [vmem:[%s693 + $0x5c] sm:$0xf]
        %v753 = vld [vmem:[%s693 + $0x60] sm:$0xf]
        %v754 = vld [vmem:[%s693 + $0x64] sm:$0xf]
        %v755 = vld [vmem:[%s693 + $0x68] sm:$0xf]
        %v756 = vld [vmem:[%s693 + $0x6c] sm:$0xf]
        %v757 = vld [vmem:[%s693 + $0x70] sm:$0xf]
        %v758 = vld [vmem:[%s693 + $0x74] sm:$0xf]
        %v759 = vld [vmem:[%s693 + $0x78] sm:$0xf]
        %v760 = vld [vmem:[%s693 + $0x7c] sm:$0xf]
        %v761 = vld [vmem:[#allocation2] sm:$0xff]
        %v762 = vld [vmem:[#allocation2 + $0x8] sm:$0xff]
        %v763 = vld [vmem:[#allocation2 + $0x10] sm:$0xff]
        %v764 = vld [vmem:[#allocation2 + $0x18] sm:$0xff]
        %v765 = vld [vmem:[#allocation2 + $0x20] sm:$0xff]
        %v766 = vld [vmem:[#allocation2 + $0x28] sm:$0xff]
        %v767 = vld [vmem:[#allocation2 + $0x30] sm:$0xff]
        %v768 = vld [vmem:[#allocation2 + $0x38] sm:$0xff]
        %v769 = vld [vmem:[#allocation2 + $0x40] sm:$0xff]
        %v770 = vld [vmem:[#allocation2 + $0x48] sm:$0xff]
        %v771 = vld [vmem:[#allocation2 + $0x50] sm:$0xff]
        %v772 = vld [vmem:[#allocation2 + $0x58] sm:$0xff]
        %v773 = vld [vmem:[#allocation2 + $0x60] sm:$0xff]
        %v774 = vld [vmem:[#allocation2 + $0x68] sm:$0xff]
        %v775 = vld [vmem:[#allocation2 + $0x70] sm:$0xff]
        %v776 = vld [vmem:[#allocation2 + $0x78] sm:$0xff]
        %v777 = vld [vmem:[#allocation2 + $0x80] sm:$0xff]
        %v778 = vld [vmem:[#allocation2 + $0x88] sm:$0xff]
        %v779 = vld [vmem:[#allocation2 + $0x90] sm:$0xff]
        %v780 = vld [vmem:[#allocation2 + $0x98] sm:$0xff]
        %v781 = vld [vmem:[#allocation2 + $0xa0] sm:$0xff]
        %v782 = vld [vmem:[#allocation2 + $0xa8] sm:$0xff]
        %v783 = vld [vmem:[#allocation2 + $0xb0] sm:$0xff]
        %v784 = vld [vmem:[#allocation2 + $0xb8] sm:$0xff]
        %v785 = vld [vmem:[#allocation2 + $0xc0] sm:$0xff]
        %v786 = vld [vmem:[#allocation2 + $0xc8] sm:$0xff]
        %v787 = vld [vmem:[#allocation2 + $0xd0] sm:$0xff]
        %v788 = vld [vmem:[#allocation2 + $0xd8] sm:$0xff]
        %v789 = vld [vmem:[#allocation2 + $0xe0] sm:$0xff]
        %v790 = vld [vmem:[#allocation2 + $0xe8] sm:$0xff]
        %v791 = vld [vmem:[#allocation2 + $0xf0] sm:$0xff]
        %v792 = vld [vmem:[#allocation2 + $0xf8] sm:$0xff]
        %v793 = vld [vmem:[#allocation2 + $0x100] sm:$0xff]
        %v794 = vld [vmem:[#allocation2 + $0x108] sm:$0xff]
        %v795 = vld [vmem:[#allocation2 + $0x110] sm:$0xff]
        %v796 = vld [vmem:[#allocation2 + $0x118] sm:$0xff]
        %v797 = vld [vmem:[#allocation2 + $0x120] sm:$0xff]
        %v798 = vld [vmem:[#allocation2 + $0x128] sm:$0xff]
        %v799 = vld [vmem:[#allocation2 + $0x130] sm:$0xff]
        %v800 = vld [vmem:[#allocation2 + $0x138] sm:$0xff]
        %v801 = vld [vmem:[#allocation2 + $0x140] sm:$0xff]
        %v802 = vld [vmem:[#allocation2 + $0x148] sm:$0xff]
        %v803 = vld [vmem:[#allocation2 + $0x150] sm:$0xff]
        %v804 = vld [vmem:[#allocation2 + $0x158] sm:$0xff]
        %v805 = vld [vmem:[#allocation2 + $0x160] sm:$0xff]
        %v806 = vld [vmem:[#allocation2 + $0x168] sm:$0xff]
        %v807 = vld [vmem:[#allocation2 + $0x170] sm:$0xff]
        %v808 = vld [vmem:[#allocation2 + $0x178] sm:$0xff]
        %v809 = vld [vmem:[#allocation2 + $0x180] sm:$0xff]
        %v810 = vld [vmem:[#allocation2 + $0x188] sm:$0xff]
        %v811 = vld [vmem:[#allocation2 + $0x190] sm:$0xff]
        %v812 = vld [vmem:[#allocation2 + $0x198] sm:$0xff]
        %v813 = vld [vmem:[#allocation2 + $0x1a0] sm:$0xff]
        %v814 = vld [vmem:[#allocation2 + $0x1a8] sm:$0xff]
        %v815 = vld [vmem:[#allocation2 + $0x1b0] sm:$0xff]
        %v816 = vld [vmem:[#allocation2 + $0x1b8] sm:$0xff]
        %v817 = vld [vmem:[#allocation2 + $0x1c0] sm:$0xff]
        %v818 = vld [vmem:[#allocation2 + $0x1c8] sm:$0xff]
        %v819 = vld [vmem:[#allocation2 + $0x1d0] sm:$0xff]
        %v820 = vld [vmem:[#allocation2 + $0x1d8] sm:$0xff]
        %v821 = vld [vmem:[#allocation2 + $0x1e0] sm:$0xff]
        %v822 = vld [vmem:[#allocation2 + $0x1e8] sm:$0xff]
        %v823 = vld [vmem:[#allocation2 + $0x1f0] sm:$0xff]
        %v824 = vld [vmem:[#allocation2 + $0x1f8] sm:$0xff]
        %v825 = vld [vmem:[#allocation2 + $0x200] sm:$0xff]
        %v826 = vld [vmem:[#allocation2 + $0x208] sm:$0xff]
        %v827 = vld [vmem:[#allocation2 + $0x210] sm:$0xff]
        %v828 = vld [vmem:[#allocation2 + $0x218] sm:$0xff]
        %v829 = vld [vmem:[#allocation2 + $0x220] sm:$0xff]
        %v830 = vld [vmem:[#allocation2 + $0x228] sm:$0xff]
        %v831 = vld [vmem:[#allocation2 + $0x230] sm:$0xff]
        %v832 = vld [vmem:[#allocation2 + $0x238] sm:$0xff]
        %v833 = vld [vmem:[#allocation2 + $0x240] sm:$0xff]
        %v834 = vld [vmem:[#allocation2 + $0x248] sm:$0xff]
        %v835 = vld [vmem:[#allocation2 + $0x250] sm:$0xff]
        %v836 = vld [vmem:[#allocation2 + $0x258] sm:$0xff]
        %v837 = vld [vmem:[#allocation2 + $0x260] sm:$0xff]
        %v838 = vld [vmem:[#allocation2 + $0x268] sm:$0xff]
        %v839 = vld [vmem:[#allocation2 + $0x270] sm:$0xff]
        %v840 = vld [vmem:[#allocation2 + $0x278] sm:$0xff]
        %v841 = vld [vmem:[#allocation2 + $0x280] sm:$0xff]
        %v842 = vld [vmem:[#allocation2 + $0x288] sm:$0xff]
        %v843 = vld [vmem:[#allocation2 + $0x290] sm:$0xff]
        %v844 = vld [vmem:[#allocation2 + $0x298] sm:$0xff]
        %v845 = vld [vmem:[#allocation2 + $0x2a0] sm:$0xff]
        %v846 = vld [vmem:[#allocation2 + $0x2a8] sm:$0xff]
        %v847 = vld [vmem:[#allocation2 + $0x2b0] sm:$0xff]
        %v848 = vld [vmem:[#allocation2 + $0x2b8] sm:$0xff]
        %v849 = vld [vmem:[#allocation2 + $0x2c0] sm:$0xff]
        %v850 = vld [vmem:[#allocation2 + $0x2c8] sm:$0xff]
        %v851 = vld [vmem:[#allocation2 + $0x2d0] sm:$0xff]
        %v852 = vld [vmem:[#allocation2 + $0x2d8] sm:$0xff]
        %v853 = vld [vmem:[#allocation2 + $0x2e0] sm:$0xff]
        %v854 = vld [vmem:[#allocation2 + $0x2e8] sm:$0xff]
        %v855 = vld [vmem:[#allocation2 + $0x2f0] sm:$0xff]
        %v856 = vld [vmem:[#allocation2 + $0x2f8] sm:$0xff]
        %v857 = vld [vmem:[#allocation5] sm:$0xff]
        %v859 = vlaneseq
        %v860 = vshrl.u32 %v859, 7
        %v861 = vsub.s32 0, %v860
        %v862 = vrot.slane %v857, %v861
        %v863 = vlaneseq
        %v864 = vshrl.u32 %v863, 7
        %v865 = vsub.s32 1, %v864
        %v866 = vrot.slane %v857, %v865
        %v867 = vlaneseq
        %v868 = vshrl.u32 %v867, 7
        %v869 = vsub.s32 2, %v868
        %v870 = vrot.slane %v857, %v869
        %v871 = vlaneseq
        %v872 = vshrl.u32 %v871, 7
        %v873 = vsub.s32 3, %v872
        %v874 = vrot.slane %v857, %v873
        %v875 = vlaneseq
        %v876 = vshrl.u32 %v875, 7
        %v877 = vsub.s32 4, %v876
        %v878 = vrot.slane %v857, %v877
        %v879 = vlaneseq
        %v880 = vshrl.u32 %v879, 7
        %v881 = vsub.s32 5, %v880
        %v882 = vrot.slane %v857, %v881
        %v883 = vlaneseq
        %v884 = vshrl.u32 %v883, 7
        %v885 = vsub.s32 6, %v884
        %v886 = vrot.slane %v857, %v885
        %v887 = vlaneseq
        %v888 = vshrl.u32 %v887, 7
        %v889 = vsub.s32 7, %v888
        %v890 = vrot.slane %v857, %v889
        %v931 = vunpack.c.l.b16 %v697
        %v932 = vunpack.c.h.b16 %v697
        %v933 = vunpack.c.l.b16 %v698
        %v934 = vunpack.c.h.b16 %v698
        %v935 = vunpack.c.l.b16 %v699
        %v936 = vunpack.c.h.b16 %v699
        %v937 = vunpack.c.l.b16 %v700
        %v938 = vunpack.c.h.b16 %v700
        %v939 = vunpack.c.l.b16 %v701
        %v940 = vunpack.c.h.b16 %v701
        %v941 = vunpack.c.l.b16 %v702
        %v942 = vunpack.c.h.b16 %v702
        %v943 = vunpack.c.l.b16 %v703
        %v944 = vunpack.c.h.b16 %v703
        %v945 = vunpack.c.l.b16 %v704
        %v946 = vunpack.c.h.b16 %v704
        %v947 = vunpack.c.l.b16 %v705
        %v948 = vunpack.c.h.b16 %v705
        %v949 = vunpack.c.l.b16 %v706
        %v950 = vunpack.c.h.b16 %v706
        %v951 = vunpack.c.l.b16 %v707
        %v952 = vunpack.c.h.b16 %v707
        %v953 = vunpack.c.l.b16 %v708
        %v954 = vunpack.c.h.b16 %v708
        %v955 = vunpack.c.l.b16 %v709
        %v956 = vunpack.c.h.b16 %v709
        %v957 = vunpack.c.l.b16 %v710
        %v958 = vunpack.c.h.b16 %v710
        %v959 = vunpack.c.l.b16 %v711
        %v960 = vunpack.c.h.b16 %v711
        %v961 = vunpack.c.l.b16 %v712
        %v962 = vunpack.c.h.b16 %v712
        %v963 = vunpack.c.l.b16 %v713
        %v964 = vunpack.c.h.b16 %v713
        %v965 = vunpack.c.l.b16 %v714
        %v966 = vunpack.c.h.b16 %v714
        %v967 = vunpack.c.l.b16 %v715
        %v968 = vunpack.c.h.b16 %v715
        %v969 = vunpack.c.l.b16 %v716
        %v970 = vunpack.c.h.b16 %v716
        %v971 = vunpack.c.l.b16 %v717
        %v972 = vunpack.c.h.b16 %v717
        %v973 = vunpack.c.l.b16 %v718
        %v974 = vunpack.c.h.b16 %v718
        %v975 = vunpack.c.l.b16 %v719
        %v976 = vunpack.c.h.b16 %v719
        %v977 = vunpack.c.l.b16 %v720
        %v978 = vunpack.c.h.b16 %v720
        %v979 = vunpack.c.l.b16 %v721
        %v980 = vunpack.c.h.b16 %v721
        %v981 = vunpack.c.l.b16 %v722
        %v982 = vunpack.c.h.b16 %v722
        %v983 = vunpack.c.l.b16 %v723
        %v984 = vunpack.c.h.b16 %v723
        %v985 = vunpack.c.l.b16 %v724
        %v986 = vunpack.c.h.b16 %v724
        %v987 = vunpack.c.l.b16 %v725
        %v988 = vunpack.c.h.b16 %v725
        %v989 = vunpack.c.l.b16 %v726
        %v990 = vunpack.c.h.b16 %v726
        %v991 = vunpack.c.l.b16 %v727
        %v992 = vunpack.c.h.b16 %v727
        %v993 = vunpack.c.l.b16 %v728
        %v994 = vunpack.c.h.b16 %v728
        %v995 = vpack.c.b16 %v933, %v931
        %v996 = vpack.c.b16 %v934, %v932
        %v997 = vpack.c.b16 %v937, %v935
        %v998 = vpack.c.b16 %v938, %v936
        %v999 = vpack.c.b16 %v941, %v939
        %v1000 = vpack.c.b16 %v942, %v940
        %v1001 = vpack.c.b16 %v945, %v943
        %v1002 = vpack.c.b16 %v946, %v944
        %v1003 = vpack.c.b16 %v949, %v947
        %v1004 = vpack.c.b16 %v950, %v948
        %v1005 = vpack.c.b16 %v953, %v951
        %v1006 = vpack.c.b16 %v954, %v952
        %v1007 = vpack.c.b16 %v957, %v955
        %v1008 = vpack.c.b16 %v958, %v956
        %v1009 = vpack.c.b16 %v961, %v959
        %v1010 = vpack.c.b16 %v962, %v960
        %v1011 = vpack.c.b16 %v965, %v963
        %v1012 = vpack.c.b16 %v966, %v964
        %v1013 = vpack.c.b16 %v969, %v967
        %v1014 = vpack.c.b16 %v970, %v968
        %v1015 = vpack.c.b16 %v973, %v971
        %v1016 = vpack.c.b16 %v974, %v972
        %v1017 = vpack.c.b16 %v977, %v975
        %v1018 = vpack.c.b16 %v978, %v976
        %v1019 = vpack.c.b16 %v981, %v979
        %v1020 = vpack.c.b16 %v982, %v980
        %v1021 = vpack.c.b16 %v985, %v983
        %v1022 = vpack.c.b16 %v986, %v984
        %v1023 = vpack.c.b16 %v989, %v987
        %v1024 = vpack.c.b16 %v990, %v988
        %v1025 = vpack.c.b16 %v993, %v991
        %v1026 = vpack.c.b16 %v994, %v992
        %v1139 = vunpack.c.l.b16 %v761
        %v1140 = vunpack.c.h.b16 %v761
        %v1141 = vunpack.c.l.b16 %v762
        %v1142 = vunpack.c.h.b16 %v762
        %v1143 = vunpack.c.l.b16 %v763
        %v1144 = vunpack.c.h.b16 %v763
        %v1145 = vunpack.c.l.b16 %v764
        %v1146 = vunpack.c.h.b16 %v764
        %v1147 = vunpack.c.l.b16 %v765
        %v1148 = vunpack.c.h.b16 %v765
        %v1149 = vunpack.c.l.b16 %v766
        %v1150 = vunpack.c.h.b16 %v766
        %v1151 = vunpack.c.l.b16 %v767
        %v1152 = vunpack.c.h.b16 %v767
        %v1153 = vunpack.c.l.b16 %v768
        %v1154 = vunpack.c.h.b16 %v768
        %v1155 = vunpack.c.l.b16 %v769
        %v1156 = vunpack.c.h.b16 %v769
        %v1157 = vunpack.c.l.b16 %v770
        %v1158 = vunpack.c.h.b16 %v770
        %v1159 = vunpack.c.l.b16 %v771
        %v1160 = vunpack.c.h.b16 %v771
        %v1161 = vunpack.c.l.b16 %v772
        %v1162 = vunpack.c.h.b16 %v772
        %v1163 = vunpack.c.l.b16 %v773
        %v1164 = vunpack.c.h.b16 %v773
        %v1165 = vunpack.c.l.b16 %v774
        %v1166 = vunpack.c.h.b16 %v774
        %v1167 = vunpack.c.l.b16 %v775
        %v1168 = vunpack.c.h.b16 %v775
        %v1169 = vunpack.c.l.b16 %v776
        %v1170 = vunpack.c.h.b16 %v776
        %v1171 = vunpack.c.l.b16 %v777
        %v1172 = vunpack.c.h.b16 %v777
        %v1173 = vunpack.c.l.b16 %v778
        %v1174 = vunpack.c.h.b16 %v778
        %v1175 = vunpack.c.l.b16 %v779
        %v1176 = vunpack.c.h.b16 %v779
        %v1177 = vunpack.c.l.b16 %v780
        %v1178 = vunpack.c.h.b16 %v780
        %v1179 = vunpack.c.l.b16 %v781
        %v1180 = vunpack.c.h.b16 %v781
        %v1181 = vunpack.c.l.b16 %v782
        %v1182 = vunpack.c.h.b16 %v782
        %v1183 = vunpack.c.l.b16 %v783
        %v1184 = vunpack.c.h.b16 %v783
        %v1185 = vunpack.c.l.b16 %v784
        %v1186 = vunpack.c.h.b16 %v784
        %v1187 = vunpack.c.l.b16 %v785
        %v1188 = vunpack.c.h.b16 %v785
        %v1189 = vunpack.c.l.b16 %v786
        %v1190 = vunpack.c.h.b16 %v786
        %v1191 = vunpack.c.l.b16 %v787
        %v1192 = vunpack.c.h.b16 %v787
        %v1193 = vunpack.c.l.b16 %v788
        %v1194 = vunpack.c.h.b16 %v788
        %v1195 = vunpack.c.l.b16 %v789
        %v1196 = vunpack.c.h.b16 %v789
        %v1197 = vunpack.c.l.b16 %v790
        %v1198 = vunpack.c.h.b16 %v790
        %v1199 = vunpack.c.l.b16 %v791
        %v1200 = vunpack.c.h.b16 %v791
        %v1201 = vunpack.c.l.b16 %v792
        %v1202 = vunpack.c.h.b16 %v792
        %v1203 = vunpack.c.l.b16 %v793
        %v1204 = vunpack.c.h.b16 %v793
        %v1205 = vunpack.c.l.b16 %v794
        %v1206 = vunpack.c.h.b16 %v794
        %v1207 = vunpack.c.l.b16 %v795
        %v1208 = vunpack.c.h.b16 %v795
        %v1209 = vunpack.c.l.b16 %v796
        %v1210 = vunpack.c.h.b16 %v796
        %v1211 = vunpack.c.l.b16 %v797
        %v1212 = vunpack.c.h.b16 %v797
        %v1213 = vunpack.c.l.b16 %v798
        %v1214 = vunpack.c.h.b16 %v798
        %v1215 = vunpack.c.l.b16 %v799
        %v1216 = vunpack.c.h.b16 %v799
        %v1217 = vunpack.c.l.b16 %v800
        %v1218 = vunpack.c.h.b16 %v800
        %v1219 = vunpack.c.l.b16 %v801
        %v1220 = vunpack.c.h.b16 %v801
        %v1221 = vunpack.c.l.b16 %v802
        %v1222 = vunpack.c.h.b16 %v802
        %v1223 = vunpack.c.l.b16 %v803
        %v1224 = vunpack.c.h.b16 %v803
        %v1225 = vunpack.c.l.b16 %v804
        %v1226 = vunpack.c.h.b16 %v804
        %v1227 = vunpack.c.l.b16 %v805
        %v1228 = vunpack.c.h.b16 %v805
        %v1229 = vunpack.c.l.b16 %v806
        %v1230 = vunpack.c.h.b16 %v806
        %v1231 = vunpack.c.l.b16 %v807
        %v1232 = vunpack.c.h.b16 %v807
        %v1233 = vunpack.c.l.b16 %v808
        %v1234 = vunpack.c.h.b16 %v808
        %v1235 = vunpack.c.l.b16 %v809
        %v1236 = vunpack.c.h.b16 %v809
        %v1237 = vunpack.c.l.b16 %v810
        %v1238 = vunpack.c.h.b16 %v810
        %v1239 = vunpack.c.l.b16 %v811
        %v1240 = vunpack.c.h.b16 %v811
        %v1241 = vunpack.c.l.b16 %v812
        %v1242 = vunpack.c.h.b16 %v812
        %v1243 = vunpack.c.l.b16 %v813
        %v1244 = vunpack.c.h.b16 %v813
        %v1245 = vunpack.c.l.b16 %v814
        %v1246 = vunpack.c.h.b16 %v814
        %v1247 = vunpack.c.l.b16 %v815
        %v1248 = vunpack.c.h.b16 %v815
        %v1249 = vunpack.c.l.b16 %v816
        %v1250 = vunpack.c.h.b16 %v816
        %v1251 = vunpack.c.l.b16 %v817
        %v1252 = vunpack.c.h.b16 %v817
        %v1253 = vunpack.c.l.b16 %v818
        %v1254 = vunpack.c.h.b16 %v818
        %v1255 = vunpack.c.l.b16 %v819
        %v1256 = vunpack.c.h.b16 %v819
        %v1257 = vunpack.c.l.b16 %v820
        %v1258 = vunpack.c.h.b16 %v820
        %v1259 = vunpack.c.l.b16 %v821
        %v1260 = vunpack.c.h.b16 %v821
        %v1261 = vunpack.c.l.b16 %v822
        %v1262 = vunpack.c.h.b16 %v822
        %v1263 = vunpack.c.l.b16 %v823
        %v1264 = vunpack.c.h.b16 %v823
        %v1265 = vunpack.c.l.b16 %v824
        %v1266 = vunpack.c.h.b16 %v824
        %v1267 = vunpack.c.l.b16 %v825
        %v1268 = vunpack.c.h.b16 %v825
        %v1269 = vunpack.c.l.b16 %v826
        %v1270 = vunpack.c.h.b16 %v826
        %v1271 = vunpack.c.l.b16 %v827
        %v1272 = vunpack.c.h.b16 %v827
        %v1273 = vunpack.c.l.b16 %v828
        %v1274 = vunpack.c.h.b16 %v828
        %v1275 = vunpack.c.l.b16 %v829
        %v1276 = vunpack.c.h.b16 %v829
        %v1277 = vunpack.c.l.b16 %v830
        %v1278 = vunpack.c.h.b16 %v830
        %v1279 = vunpack.c.l.b16 %v831
        %v1280 = vunpack.c.h.b16 %v831
        %v1281 = vunpack.c.l.b16 %v832
        %v1282 = vunpack.c.h.b16 %v832
        %v1283 = vunpack.c.l.b16 %v833
        %v1284 = vunpack.c.h.b16 %v833
        %v1285 = vunpack.c.l.b16 %v834
        %v1286 = vunpack.c.h.b16 %v834
        %v1287 = vunpack.c.l.b16 %v835
        %v1288 = vunpack.c.h.b16 %v835
        %v1289 = vunpack.c.l.b16 %v836
        %v1290 = vunpack.c.h.b16 %v836
        %v1291 = vunpack.c.l.b16 %v837
        %v1292 = vunpack.c.h.b16 %v837
        %v1293 = vunpack.c.l.b16 %v838
        %v1294 = vunpack.c.h.b16 %v838
        %v1295 = vunpack.c.l.b16 %v839
        %v1296 = vunpack.c.h.b16 %v839
        %v1297 = vunpack.c.l.b16 %v840
        %v1298 = vunpack.c.h.b16 %v840
        %v1299 = vunpack.c.l.b16 %v841
        %v1300 = vunpack.c.h.b16 %v841
        %v1301 = vunpack.c.l.b16 %v842
        %v1302 = vunpack.c.h.b16 %v842
        %v1303 = vunpack.c.l.b16 %v843
        %v1304 = vunpack.c.h.b16 %v843
        %v1305 = vunpack.c.l.b16 %v844
        %v1306 = vunpack.c.h.b16 %v844
        %v1307 = vunpack.c.l.b16 %v845
        %v1308 = vunpack.c.h.b16 %v845
        %v1309 = vunpack.c.l.b16 %v846
        %v1310 = vunpack.c.h.b16 %v846
        %v1311 = vunpack.c.l.b16 %v847
        %v1312 = vunpack.c.h.b16 %v847
        %v1313 = vunpack.c.l.b16 %v848
        %v1314 = vunpack.c.h.b16 %v848
        %v1315 = vunpack.c.l.b16 %v849
        %v1316 = vunpack.c.h.b16 %v849
        %v1317 = vunpack.c.l.b16 %v850
        %v1318 = vunpack.c.h.b16 %v850
        %v1319 = vunpack.c.l.b16 %v851
        %v1320 = vunpack.c.h.b16 %v851
        %v1321 = vunpack.c.l.b16 %v852
        %v1322 = vunpack.c.h.b16 %v852
        %v1323 = vunpack.c.l.b16 %v853
        %v1324 = vunpack.c.h.b16 %v853
        %v1325 = vunpack.c.l.b16 %v854
        %v1326 = vunpack.c.h.b16 %v854
        %v1327 = vunpack.c.l.b16 %v855
        %v1328 = vunpack.c.h.b16 %v855
        %v1329 = vunpack.c.l.b16 %v856
        %v1330 = vunpack.c.h.b16 %v856
        %v1331 = vpack.c.b16 %v1147, %v1139
        %v1332 = vpack.c.b16 %v1148, %v1140
        %v1333 = vpack.c.b16 %v1149, %v1141
        %v1334 = vpack.c.b16 %v1150, %v1142
        %v1335 = vpack.c.b16 %v1151, %v1143
        %v1336 = vpack.c.b16 %v1152, %v1144
        %v1337 = vpack.c.b16 %v1153, %v1145
        %v1338 = vpack.c.b16 %v1154, %v1146
        %v1339 = vpack.c.b16 %v1163, %v1155
        %v1340 = vpack.c.b16 %v1164, %v1156
        %v1341 = vpack.c.b16 %v1165, %v1157
        %v1342 = vpack.c.b16 %v1166, %v1158
        %v1343 = vpack.c.b16 %v1167, %v1159
        %v1344 = vpack.c.b16 %v1168, %v1160
        %v1345 = vpack.c.b16 %v1169, %v1161
        %v1346 = vpack.c.b16 %v1170, %v1162
        %v1347 = vpack.c.b16 %v1179, %v1171
        %v1348 = vpack.c.b16 %v1180, %v1172
        %v1349 = vpack.c.b16 %v1181, %v1173
        %v1350 = vpack.c.b16 %v1182, %v1174
        %v1351 = vpack.c.b16 %v1183, %v1175
        %v1352 = vpack.c.b16 %v1184, %v1176
        %v1353 = vpack.c.b16 %v1185, %v1177
        %v1354 = vpack.c.b16 %v1186, %v1178
        %v1355 = vpack.c.b16 %v1195, %v1187
        %v1356 = vpack.c.b16 %v1196, %v1188
        %v1357 = vpack.c.b16 %v1197, %v1189
        %v1358 = vpack.c.b16 %v1198, %v1190
        %v1359 = vpack.c.b16 %v1199, %v1191
        %v1360 = vpack.c.b16 %v1200, %v1192
        %v1361 = vpack.c.b16 %v1201, %v1193
        %v1362 = vpack.c.b16 %v1202, %v1194
        %v1363 = vpack.c.b16 %v1211, %v1203
        %v1364 = vpack.c.b16 %v1212, %v1204
        %v1365 = vpack.c.b16 %v1213, %v1205
        %v1366 = vpack.c.b16 %v1214, %v1206
        %v1367 = vpack.c.b16 %v1215, %v1207
        %v1368 = vpack.c.b16 %v1216, %v1208
        %v1369 = vpack.c.b16 %v1217, %v1209
        %v1370 = vpack.c.b16 %v1218, %v1210
        %v1371 = vpack.c.b16 %v1227, %v1219
        %v1372 = vpack.c.b16 %v1228, %v1220
        %v1373 = vpack.c.b16 %v1229, %v1221
        %v1374 = vpack.c.b16 %v1230, %v1222
        %v1375 = vpack.c.b16 %v1231, %v1223
        %v1376 = vpack.c.b16 %v1232, %v1224
        %v1377 = vpack.c.b16 %v1233, %v1225
        %v1378 = vpack.c.b16 %v1234, %v1226
        %v1379 = vpack.c.b16 %v1243, %v1235
        %v1380 = vpack.c.b16 %v1244, %v1236
        %v1381 = vpack.c.b16 %v1245, %v1237
        %v1382 = vpack.c.b16 %v1246, %v1238
        %v1383 = vpack.c.b16 %v1247, %v1239
        %v1384 = vpack.c.b16 %v1248, %v1240
        %v1385 = vpack.c.b16 %v1249, %v1241
        %v1386 = vpack.c.b16 %v1250, %v1242
        %v1387 = vpack.c.b16 %v1259, %v1251
        %v1388 = vpack.c.b16 %v1260, %v1252
        %v1389 = vpack.c.b16 %v1261, %v1253
        %v1390 = vpack.c.b16 %v1262, %v1254
        %v1391 = vpack.c.b16 %v1263, %v1255
        %v1392 = vpack.c.b16 %v1264, %v1256
        %v1393 = vpack.c.b16 %v1265, %v1257
        %v1394 = vpack.c.b16 %v1266, %v1258
        %v1395 = vpack.c.b16 %v1275, %v1267
        %v1396 = vpack.c.b16 %v1276, %v1268
        %v1397 = vpack.c.b16 %v1277, %v1269
        %v1398 = vpack.c.b16 %v1278, %v1270
        %v1399 = vpack.c.b16 %v1279, %v1271
        %v1400 = vpack.c.b16 %v1280, %v1272
        %v1401 = vpack.c.b16 %v1281, %v1273
        %v1402 = vpack.c.b16 %v1282, %v1274
        %v1403 = vpack.c.b16 %v1291, %v1283
        %v1404 = vpack.c.b16 %v1292, %v1284
        %v1405 = vpack.c.b16 %v1293, %v1285
        %v1406 = vpack.c.b16 %v1294, %v1286
        %v1407 = vpack.c.b16 %v1295, %v1287
        %v1408 = vpack.c.b16 %v1296, %v1288
        %v1409 = vpack.c.b16 %v1297, %v1289
        %v1410 = vpack.c.b16 %v1298, %v1290
        %v1411 = vpack.c.b16 %v1307, %v1299
        %v1412 = vpack.c.b16 %v1308, %v1300
        %v1413 = vpack.c.b16 %v1309, %v1301
        %v1414 = vpack.c.b16 %v1310, %v1302
        %v1415 = vpack.c.b16 %v1311, %v1303
        %v1416 = vpack.c.b16 %v1312, %v1304
        %v1417 = vpack.c.b16 %v1313, %v1305
        %v1418 = vpack.c.b16 %v1314, %v1306
        %v1419 = vpack.c.b16 %v1323, %v1315
        %v1420 = vpack.c.b16 %v1324, %v1316
        %v1421 = vpack.c.b16 %v1325, %v1317
        %v1422 = vpack.c.b16 %v1326, %v1318
        %v1423 = vpack.c.b16 %v1327, %v1319
        %v1424 = vpack.c.b16 %v1328, %v1320
        %v1425 = vpack.c.b16 %v1329, %v1321
        %v1426 = vpack.c.b16 %v1330, %v1322
        %vm1523 = vcmask 523264
        %v1525 = vsel %vm1523, %v996, 0
        %v1528 = vsel %vm1523, %v998, 0
        %v1531 = vsel %vm1523, %v1000, 0
        %v1534 = vsel %vm1523, %v1002, 0
        %v1537 = vsel %vm1523, %v1004, 0
        %v1540 = vsel %vm1523, %v1006, 0
        %v1543 = vsel %vm1523, %v1008, 0
        %v1546 = vsel %vm1523, %v1010, 0
        %v1549 = vsel %vm1523, %v1012, 0
        %v1552 = vsel %vm1523, %v1014, 0
        %v1555 = vsel %vm1523, %v1016, 0
        %v1558 = vsel %vm1523, %v1018, 0
        %v1561 = vsel %vm1523, %v1020, 0
        %v1564 = vsel %vm1523, %v1022, 0
        %v1567 = vsel %vm1523, %v1024, 0
        %v1570 = vsel %vm1523, %v1026, 0
        %1572 = vmatprep.subr.bf16.mxu0 %v1332
        %1573 = vmatpush1.bf16.msra.mxu0 %v1331
        %1574 = vmatprep.subr.bf16.mxu0 %v1340
        %1575 = vmatpush1.bf16.msra.mxu0 %v1339
        %1576 = vmatprep.subr.bf16.mxu0 %v1348
        %1577 = vmatpush1.bf16.msra.mxu0 %v1347
        %1578 = vmatprep.subr.bf16.mxu0 %v1356
        %1579 = vmatpush1.bf16.msra.mxu0 %v1355
        %1580 = vmatprep.subr.bf16.mxu0 %v1364
        %1581 = vmatpush1.bf16.msra.mxu0 %v1363
        %1582 = vmatprep.subr.bf16.mxu0 %v1372
        %1583 = vmatpush1.bf16.msra.mxu0 %v1371
        %1584 = vmatprep.subr.bf16.mxu0 %v1380
        %1585 = vmatpush1.bf16.msra.mxu0 %v1379
        %1586 = vmatprep.subr.bf16.mxu0 %v1388
        %1587 = vmatpush1.bf16.msra.mxu0 %v1387
        %1588 = vmatprep.subr.bf16.mxu0 %v1396
        %1589 = vmatpush1.bf16.msra.mxu0 %v1395
        %1590 = vmatprep.subr.bf16.mxu0 %v1404
        %1591 = vmatpush1.bf16.msra.mxu0 %v1403
        %1592 = vmatprep.subr.bf16.mxu0 %v1412
        %1593 = vmatpush1.bf16.msra.mxu0 %v1411
        %1594 = vmatprep.subr.bf16.mxu0 %v1420
        %1595 = vmatpush1.bf16.msra.mxu0 %v1419
        %1596 = vmatprep.subr.bf16.mxu0 0
        %1597 = vmatpush1.bf16.msra.mxu0 0
        %1598 = vmatprep.subr.bf16.mxu0 0
        %1599 = vmatpush1.bf16.msra.mxu0 0
        %1600 = vmatprep.subr.bf16.mxu0 0
        %1601 = vmatpush1.bf16.msra.mxu0 0
        %1602 = vmatprep.subr.bf16.mxu0 0
        %1603 = vmatpush1.bf16.msra.mxu0 0
        %1604 = vmatprep.mubr.bf16.mxu0 %v1525
        %1605 = vmatmul.mubr.bf16.gmra.mrb[0].mxu0 %v995
        %v1606 = vpop.f32.mrb[0].mxu0
        %v1607 = vadd.f32 %v862, %v1606
        %v1608 = vpop.f32.mrb[0].mxu0
        %v1609 = vadd.f32 %v866, %v1608
        %v1610 = vpop.f32.mrb[0].mxu0
        %v1611 = vadd.f32 %v862, %v1610
        %v1612 = vpop.f32.mrb[0].mxu0
        %v1613 = vadd.f32 %v866, %v1612
        %1614 = vmatprep.mubr.bf16.mxu0 %v1528
        %1615 = vmatmul.mubr.bf16.gmra.mrb[0].mxu0 %v997
        %v1616 = vpop.f32.mrb[0].mxu0
        %v1617 = vadd.f32 %v862, %v1616
        %v1618 = vpop.f32.mrb[0].mxu0
        %v1619 = vadd.f32 %v866, %v1618
        %v1620 = vpop.f32.mrb[0].mxu0
        %v1621 = vadd.f32 %v862, %v1620
        %v1622 = vpop.f32.mrb[0].mxu0
        %v1623 = vadd.f32 %v866, %v1622
        %1624 = vmatprep.mubr.bf16.mxu0 %v1531
        %1625 = vmatmul.mubr.bf16.gmra.mrb[0].mxu0 %v999
        %v1626 = vpop.f32.mrb[0].mxu0
        %v1627 = vadd.f32 %v862, %v1626
        %v1628 = vpop.f32.mrb[0].mxu0
        %v1629 = vadd.f32 %v866, %v1628
        %v1630 = vpop.f32.mrb[0].mxu0
        %v1631 = vadd.f32 %v862, %v1630
        %v1632 = vpop.f32.mrb[0].mxu0
        %v1633 = vadd.f32 %v866, %v1632
        %1634 = vmatprep.mubr.bf16.mxu0 %v1534
        %1635 = vmatmul.mubr.bf16.gmra.mrb[0].mxu0 %v1001
        %v1636 = vpop.f32.mrb[0].mxu0
        %v1637 = vadd.f32 %v862, %v1636
        %v1638 = vpop.f32.mrb[0].mxu0
        %v1639 = vadd.f32 %v866, %v1638
        %v1640 = vpop.f32.mrb[0].mxu0
        %v1641 = vadd.f32 %v862, %v1640
        %v1642 = vpop.f32.mrb[0].mxu0
        %v1643 = vadd.f32 %v866, %v1642
        %1644 = vmatprep.mubr.bf16.mxu0 %v1537
        %1645 = vmatmul.mubr.bf16.gmra.mrb[0].mxu0 %v1003
        %v1646 = vpop.f32.mrb[0].mxu0
        %v1647 = vadd.f32 %v862, %v1646
        %v1648 = vpop.f32.mrb[0].mxu0
        %v1649 = vadd.f32 %v866, %v1648
        %v1650 = vpop.f32.mrb[0].mxu0
        %v1651 = vadd.f32 %v862, %v1650
        %v1652 = vpop.f32.mrb[0].mxu0
        %v1653 = vadd.f32 %v866, %v1652
        %1654 = vmatprep.mubr.bf16.mxu0 %v1540
        %1655 = vmatmul.mubr.bf16.gmra.mrb[0].mxu0 %v1005
        %v1656 = vpop.f32.mrb[0].mxu0
        %v1657 = vadd.f32 %v862, %v1656
        %v1658 = vpop.f32.mrb[0].mxu0
        %v1659 = vadd.f32 %v866, %v1658
        %v1660 = vpop.f32.mrb[0].mxu0
        %v1661 = vadd.f32 %v862, %v1660
        %v1662 = vpop.f32.mrb[0].mxu0
        %v1663 = vadd.f32 %v866, %v1662
        %1664 = vmatprep.mubr.bf16.mxu0 %v1543
        %1665 = vmatmul.mubr.bf16.gmra.mrb[0].mxu0 %v1007
        %v1666 = vpop.f32.mrb[0].mxu0
        %v1667 = vadd.f32 %v862, %v1666
        %v1668 = vpop.f32.mrb[0].mxu0
        %v1669 = vadd.f32 %v866, %v1668
        %v1670 = vpop.f32.mrb[0].mxu0
        %v1671 = vadd.f32 %v862, %v1670
        %v1672 = vpop.f32.mrb[0].mxu0
        %v1673 = vadd.f32 %v866, %v1672
        %1674 = vmatprep.mubr.bf16.mxu0 %v1546
        %1675 = vmatmul.mubr.bf16.gmra.mrb[0].mxu0 %v1009
        %v1676 = vpop.f32.mrb[0].mxu0
        %v1677 = vadd.f32 %v862, %v1676
        %v1678 = vpop.f32.mrb[0].mxu0
        %v1679 = vadd.f32 %v866, %v1678
        %v1680 = vpop.f32.mrb[0].mxu0
        %v1681 = vadd.f32 %v862, %v1680
        %v1682 = vpop.f32.mrb[0].mxu0
        %v1683 = vadd.f32 %v866, %v1682
        %1684 = vmatprep.mubr.bf16.mxu0 %v1549
        %1685 = vmatmul.mubr.bf16.gmra.mrb[0].mxu0 %v1011
        %v1686 = vpop.f32.mrb[0].mxu0
        %v1687 = vadd.f32 %v862, %v1686
        %v1688 = vpop.f32.mrb[0].mxu0
        %v1689 = vadd.f32 %v866, %v1688
        %v1690 = vpop.f32.mrb[0].mxu0
        %v1691 = vadd.f32 %v862, %v1690
        %v1692 = vpop.f32.mrb[0].mxu0
        %v1693 = vadd.f32 %v866, %v1692
        %1694 = vmatprep.mubr.bf16.mxu0 %v1552
        %1695 = vmatmul.mubr.bf16.gmra.mrb[0].mxu0 %v1013
        %v1696 = vpop.f32.mrb[0].mxu0
        %v1697 = vadd.f32 %v862, %v1696
        %v1698 = vpop.f32.mrb[0].mxu0
        %v1699 = vadd.f32 %v866, %v1698
        %v1700 = vpop.f32.mrb[0].mxu0
        %v1701 = vadd.f32 %v862, %v1700
        %v1702 = vpop.f32.mrb[0].mxu0
        %v1703 = vadd.f32 %v866, %v1702
        %1704 = vmatprep.mubr.bf16.mxu0 %v1555
        %1705 = vmatmul.mubr.bf16.gmra.mrb[0].mxu0 %v1015
        %v1706 = vpop.f32.mrb[0].mxu0
        %v1707 = vadd.f32 %v862, %v1706
        %v1708 = vpop.f32.mrb[0].mxu0
        %v1709 = vadd.f32 %v866, %v1708
        %v1710 = vpop.f32.mrb[0].mxu0
        %v1711 = vadd.f32 %v862, %v1710
        %v1712 = vpop.f32.mrb[0].mxu0
        %v1713 = vadd.f32 %v866, %v1712
        %1714 = vmatprep.mubr.bf16.mxu0 %v1558
        %1715 = vmatmul.mubr.bf16.gmra.mrb[0].mxu0 %v1017
        %v1716 = vpop.f32.mrb[0].mxu0
        %v1717 = vadd.f32 %v862, %v1716
        %v1718 = vpop.f32.mrb[0].mxu0
        %v1719 = vadd.f32 %v866, %v1718
        %v1720 = vpop.f32.mrb[0].mxu0
        %v1721 = vadd.f32 %v862, %v1720
        %v1722 = vpop.f32.mrb[0].mxu0
        %v1723 = vadd.f32 %v866, %v1722
        %1724 = vmatprep.mubr.bf16.mxu0 %v1561
        %1725 = vmatmul.mubr.bf16.gmra.mrb[0].mxu0 %v1019
        %v1726 = vpop.f32.mrb[0].mxu0
        %v1727 = vadd.f32 %v862, %v1726
        %v1728 = vpop.f32.mrb[0].mxu0
        %v1729 = vadd.f32 %v866, %v1728
        %v1730 = vpop.f32.mrb[0].mxu0
        %v1731 = vadd.f32 %v862, %v1730
        %v1732 = vpop.f32.mrb[0].mxu0
        %v1733 = vadd.f32 %v866, %v1732
        %1734 = vmatprep.mubr.bf16.mxu0 %v1564
        %1735 = vmatmul.mubr.bf16.gmra.mrb[0].mxu0 %v1021
        %v1736 = vpop.f32.mrb[0].mxu0
        %v1737 = vadd.f32 %v862, %v1736
        %v1738 = vpop.f32.mrb[0].mxu0
        %v1739 = vadd.f32 %v866, %v1738
        %v1740 = vpop.f32.mrb[0].mxu0
        %v1741 = vadd.f32 %v862, %v1740
        %v1742 = vpop.f32.mrb[0].mxu0
        %v1743 = vadd.f32 %v866, %v1742
        %1744 = vmatprep.mubr.bf16.mxu0 %v1567
        %1745 = vmatmul.mubr.bf16.gmra.mrb[0].mxu0 %v1023
        %v1746 = vpop.f32.mrb[0].mxu0
        %v1747 = vadd.f32 %v862, %v1746
        %v1748 = vpop.f32.mrb[0].mxu0
        %v1749 = vadd.f32 %v866, %v1748
        %v1750 = vpop.f32.mrb[0].mxu0
        %v1751 = vadd.f32 %v862, %v1750
        %v1752 = vpop.f32.mrb[0].mxu0
        %v1753 = vadd.f32 %v866, %v1752
        %1754 = vmatprep.mubr.bf16.mxu0 %v1570
        %1755 = vmatmul.mubr.bf16.gmra.mrb[0].mxu0 %v1025
        %v1756 = vpop.f32.mrb[0].mxu0
        %v1757 = vadd.f32 %v862, %v1756
        %v1758 = vpop.f32.mrb[0].mxu0
        %v1759 = vadd.f32 %v866, %v1758
        %v1760 = vpop.f32.mrb[0].mxu0
        %v1761 = vadd.f32 %v862, %v1760
        %v1762 = vpop.f32.mrb[0].mxu0
        %v1763 = vadd.f32 %v866, %v1762
        %1764 = vdwg.mxu0
        %1765 = vmatprep.subr.bf16.mxu0 %v1334
        %1766 = vmatpush1.bf16.msra.mxu0 %v1333
        %1767 = vmatprep.subr.bf16.mxu0 %v1342
        %1768 = vmatpush1.bf16.msra.mxu0 %v1341
        %1769 = vmatprep.subr.bf16.mxu0 %v1350
        %1770 = vmatpush1.bf16.msra.mxu0 %v1349
        %1771 = vmatprep.subr.bf16.mxu0 %v1358
        %1772 = vmatpush1.bf16.msra.mxu0 %v1357
        %1773 = vmatprep.subr.bf16.mxu0 %v1366
        %1774 = vmatpush1.bf16.msra.mxu0 %v1365
        %1775 = vmatprep.subr.bf16.mxu0 %v1374
        %1776 = vmatpush1.bf16.msra.mxu0 %v1373
        %1777 = vmatprep.subr.bf16.mxu0 %v1382
        %1778 = vmatpush1.bf16.msra.mxu0 %v1381
        %1779 = vmatprep.subr.bf16.mxu0 %v1390
        %1780 = vmatpush1.bf16.msra.mxu0 %v1389
        %1781 = vmatprep.subr.bf16.mxu0 %v1398
        %1782 = vmatpush1.bf16.msra.mxu0 %v1397
        %1783 = vmatprep.subr.bf16.mxu0 %v1406
        %1784 = vmatpush1.bf16.msra.mxu0 %v1405
        %1785 = vmatprep.subr.bf16.mxu0 %v1414
        %1786 = vmatpush1.bf16.msra.mxu0 %v1413
        %1787 = vmatprep.subr.bf16.mxu0 %v1422
        %1788 = vmatpush1.bf16.msra.mxu0 %v1421
        %1789 = vmatprep.subr.bf16.mxu0 0
        %1790 = vmatpush1.bf16.msra.mxu0 0
        %1791 = vmatprep.subr.bf16.mxu0 0
        %1792 = vmatpush1.bf16.msra.mxu0 0
        %1793 = vmatprep.subr.bf16.mxu0 0
        %1794 = vmatpush1.bf16.msra.mxu0 0
        %1795 = vmatprep.subr.bf16.mxu0 0
        %1796 = vmatpush1.bf16.msra.mxu0 0
        %1797 = vmatprep.mubr.bf16.mxu0 %v1525
        %1798 = vmatmul.mubr.bf16.gmra.mrb[0].mxu0 %v995
        %v1799 = vpop.f32.mrb[0].mxu0
        %v1800 = vadd.f32 %v870, %v1799
        %v1801 = vpop.f32.mrb[0].mxu0
        %v1802 = vadd.f32 %v874, %v1801
        %v1803 = vpop.f32.mrb[0].mxu0
        %v1804 = vadd.f32 %v870, %v1803
        %v1805 = vpop.f32.mrb[0].mxu0
        %v1806 = vadd.f32 %v874, %v1805
        %1807 = vmatprep.mubr.bf16.mxu0 %v1528
        %1808 = vmatmul.mubr.bf16.gmra.mrb[0].mxu0 %v997
        %v1809 = vpop.f32.mrb[0].mxu0
        %v1810 = vadd.f32 %v870, %v1809
        %v1811 = vpop.f32.mrb[0].mxu0
        %v1812 = vadd.f32 %v874, %v1811
        %v1813 = vpop.f32.mrb[0].mxu0
        %v1814 = vadd.f32 %v870, %v1813
        %v1815 = vpop.f32.mrb[0].mxu0
        %v1816 = vadd.f32 %v874, %v1815
        %1817 = vmatprep.mubr.bf16.mxu0 %v1531
        %1818 = vmatmul.mubr.bf16.gmra.mrb[0].mxu0 %v999
        %v1819 = vpop.f32.mrb[0].mxu0
        %v1820 = vadd.f32 %v870, %v1819
        %v1821 = vpop.f32.mrb[0].mxu0
        %v1822 = vadd.f32 %v874, %v1821
        %v1823 = vpop.f32.mrb[0].mxu0
        %v1824 = vadd.f32 %v870, %v1823
        %v1825 = vpop.f32.mrb[0].mxu0
        %v1826 = vadd.f32 %v874, %v1825
        %1827 = vmatprep.mubr.bf16.mxu0 %v1534
        %1828 = vmatmul.mubr.bf16.gmra.mrb[0].mxu0 %v1001
        %v1829 = vpop.f32.mrb[0].mxu0
        %v1830 = vadd.f32 %v870, %v1829
        %v1831 = vpop.f32.mrb[0].mxu0
        %v1832 = vadd.f32 %v874, %v1831
        %v1833 = vpop.f32.mrb[0].mxu0
        %v1834 = vadd.f32 %v870, %v1833
        %v1835 = vpop.f32.mrb[0].mxu0
        %v1836 = vadd.f32 %v874, %v1835
        %1837 = vmatprep.mubr.bf16.mxu0 %v1537
        %1838 = vmatmul.mubr.bf16.gmra.mrb[0].mxu0 %v1003
        %v1839 = vpop.f32.mrb[0].mxu0
        %v1840 = vadd.f32 %v870, %v1839
        %v1841 = vpop.f32.mrb[0].mxu0
        %v1842 = vadd.f32 %v874, %v1841
        %v1843 = vpop.f32.mrb[0].mxu0
        %v1844 = vadd.f32 %v870, %v1843
        %v1845 = vpop.f32.mrb[0].mxu0
        %v1846 = vadd.f32 %v874, %v1845
        %1847 = vmatprep.mubr.bf16.mxu0 %v1540
        %1848 = vmatmul.mubr.bf16.gmra.mrb[0].mxu0 %v1005
        %v1849 = vpop.f32.mrb[0].mxu0
        %v1850 = vadd.f32 %v870, %v1849
        %v1851 = vpop.f32.mrb[0].mxu0
        %v1852 = vadd.f32 %v874, %v1851
        %v1853 = vpop.f32.mrb[0].mxu0
        %v1854 = vadd.f32 %v870, %v1853
        %v1855 = vpop.f32.mrb[0].mxu0
        %v1856 = vadd.f32 %v874, %v1855
        %1857 = vmatprep.mubr.bf16.mxu0 %v1543
        %1858 = vmatmul.mubr.bf16.gmra.mrb[0].mxu0 %v1007
        %v1859 = vpop.f32.mrb[0].mxu0
        %v1860 = vadd.f32 %v870, %v1859
        %v1861 = vpop.f32.mrb[0].mxu0
        %v1862 = vadd.f32 %v874, %v1861
        %v1863 = vpop.f32.mrb[0].mxu0
        %v1864 = vadd.f32 %v870, %v1863
        %v1865 = vpop.f32.mrb[0].mxu0
        %v1866 = vadd.f32 %v874, %v1865
        %1867 = vmatprep.mubr.bf16.mxu0 %v1546
        %1868 = vmatmul.mubr.bf16.gmra.mrb[0].mxu0 %v1009
        %v1869 = vpop.f32.mrb[0].mxu0
        %v1870 = vadd.f32 %v870, %v1869
        %v1871 = vpop.f32.mrb[0].mxu0
        %v1872 = vadd.f32 %v874, %v1871
        %v1873 = vpop.f32.mrb[0].mxu0
        %v1874 = vadd.f32 %v870, %v1873
        %v1875 = vpop.f32.mrb[0].mxu0
        %v1876 = vadd.f32 %v874, %v1875
        %1877 = vmatprep.mubr.bf16.mxu0 %v1549
        %1878 = vmatmul.mubr.bf16.gmra.mrb[0].mxu0 %v1011
        %v1879 = vpop.f32.mrb[0].mxu0
        %v1880 = vadd.f32 %v870, %v1879
        %v1881 = vpop.f32.mrb[0].mxu0
        %v1882 = vadd.f32 %v874, %v1881
        %v1883 = vpop.f32.mrb[0].mxu0
        %v1884 = vadd.f32 %v870, %v1883
        %v1885 = vpop.f32.mrb[0].mxu0
        %v1886 = vadd.f32 %v874, %v1885
        %1887 = vmatprep.mubr.bf16.mxu0 %v1552
        %1888 = vmatmul.mubr.bf16.gmra.mrb[0].mxu0 %v1013
        %v1889 = vpop.f32.mrb[0].mxu0
        %v1890 = vadd.f32 %v870, %v1889
        %v1891 = vpop.f32.mrb[0].mxu0
        %v1892 = vadd.f32 %v874, %v1891
        %v1893 = vpop.f32.mrb[0].mxu0
        %v1894 = vadd.f32 %v870, %v1893
        %v1895 = vpop.f32.mrb[0].mxu0
        %v1896 = vadd.f32 %v874, %v1895
        %1897 = vmatprep.mubr.bf16.mxu0 %v1555
        %1898 = vmatmul.mubr.bf16.gmra.mrb[0].mxu0 %v1015
        %v1899 = vpop.f32.mrb[0].mxu0
        %v1900 = vadd.f32 %v870, %v1899
        %v1901 = vpop.f32.mrb[0].mxu0
        %v1902 = vadd.f32 %v874, %v1901
        %v1903 = vpop.f32.mrb[0].mxu0
        %v1904 = vadd.f32 %v870, %v1903
        %v1905 = vpop.f32.mrb[0].mxu0
        %v1906 = vadd.f32 %v874, %v1905
        %1907 = vmatprep.mubr.bf16.mxu0 %v1558
        %1908 = vmatmul.mubr.bf16.gmra.mrb[0].mxu0 %v1017
        %v1909 = vpop.f32.mrb[0].mxu0
        %v1910 = vadd.f32 %v870, %v1909
        %v1911 = vpop.f32.mrb[0].mxu0
        %v1912 = vadd.f32 %v874, %v1911
        %v1913 = vpop.f32.mrb[0].mxu0
        %v1914 = vadd.f32 %v870, %v1913
        %v1915 = vpop.f32.mrb[0].mxu0
        %v1916 = vadd.f32 %v874, %v1915
        %1917 = vmatprep.mubr.bf16.mxu0 %v1561
        %1918 = vmatmul.mubr.bf16.gmra.mrb[0].mxu0 %v1019
        %v1919 = vpop.f32.mrb[0].mxu0
        %v1920 = vadd.f32 %v870, %v1919
        %v1921 = vpop.f32.mrb[0].mxu0
        %v1922 = vadd.f32 %v874, %v1921
        %v1923 = vpop.f32.mrb[0].mxu0
        %v1924 = vadd.f32 %v870, %v1923
        %v1925 = vpop.f32.mrb[0].mxu0
        %v1926 = vadd.f32 %v874, %v1925
        %1927 = vmatprep.mubr.bf16.mxu0 %v1564
        %1928 = vmatmul.mubr.bf16.gmra.mrb[0].mxu0 %v1021
        %v1929 = vpop.f32.mrb[0].mxu0
        %v1930 = vadd.f32 %v870, %v1929
        %v1931 = vpop.f32.mrb[0].mxu0
        %v1932 = vadd.f32 %v874, %v1931
        %v1933 = vpop.f32.mrb[0].mxu0
        %v1934 = vadd.f32 %v870, %v1933
        %v1935 = vpop.f32.mrb[0].mxu0
        %v1936 = vadd.f32 %v874, %v1935
        %1937 = vmatprep.mubr.bf16.mxu0 %v1567
        %1938 = vmatmul.mubr.bf16.gmra.mrb[0].mxu0 %v1023
        %v1939 = vpop.f32.mrb[0].mxu0
        %v1940 = vadd.f32 %v870, %v1939
        %v1941 = vpop.f32.mrb[0].mxu0
        %v1942 = vadd.f32 %v874, %v1941
        %v1943 = vpop.f32.mrb[0].mxu0
        %v1944 = vadd.f32 %v870, %v1943
        %v1945 = vpop.f32.mrb[0].mxu0
        %v1946 = vadd.f32 %v874, %v1945
        %1947 = vmatprep.mubr.bf16.mxu0 %v1570
        %1948 = vmatmul.mubr.bf16.gmra.mrb[0].mxu0 %v1025
        %v1949 = vpop.f32.mrb[0].mxu0
        %v1950 = vadd.f32 %v870, %v1949
        %v1951 = vpop.f32.mrb[0].mxu0
        %v1952 = vadd.f32 %v874, %v1951
        %v1953 = vpop.f32.mrb[0].mxu0
        %v1954 = vadd.f32 %v870, %v1953
        %v1955 = vpop.f32.mrb[0].mxu0
        %v1956 = vadd.f32 %v874, %v1955
        %1957 = vdwg.mxu0
        %1958 = vmatprep.subr.bf16.mxu0 %v1336
        %1959 = vmatpush1.bf16.msra.mxu0 %v1335
        %1960 = vmatprep.subr.bf16.mxu0 %v1344
        %1961 = vmatpush1.bf16.msra.mxu0 %v1343
        %1962 = vmatprep.subr.bf16.mxu0 %v1352
        %1963 = vmatpush1.bf16.msra.mxu0 %v1351
        %1964 = vmatprep.subr.bf16.mxu0 %v1360
        %1965 = vmatpush1.bf16.msra.mxu0 %v1359
        %1966 = vmatprep.subr.bf16.mxu0 %v1368
        %1967 = vmatpush1.bf16.msra.mxu0 %v1367
        %1968 = vmatprep.subr.bf16.mxu0 %v1376
        %1969 = vmatpush1.bf16.msra.mxu0 %v1375
        %1970 = vmatprep.subr.bf16.mxu0 %v1384
        %1971 = vmatpush1.bf16.msra.mxu0 %v1383
        %1972 = vmatprep.subr.bf16.mxu0 %v1392
        %1973 = vmatpush1.bf16.msra.mxu0 %v1391
        %1974 = vmatprep.subr.bf16.mxu0 %v1400
        %1975 = vmatpush1.bf16.msra.mxu0 %v1399
        %1976 = vmatprep.subr.bf16.mxu0 %v1408
        %1977 = vmatpush1.bf16.msra.mxu0 %v1407
        %1978 = vmatprep.subr.bf16.mxu0 %v1416
        %1979 = vmatpush1.bf16.msra.mxu0 %v1415
        %1980 = vmatprep.subr.bf16.mxu0 %v1424
        %1981 = vmatpush1.bf16.msra.mxu0 %v1423
        %1982 = vmatprep.subr.bf16.mxu0 0
        %1983 = vmatpush1.bf16.msra.mxu0 0
        %1984 = vmatprep.subr.bf16.mxu0 0
        %1985 = vmatpush1.bf16.msra.mxu0 0
        %1986 = vmatprep.subr.bf16.mxu0 0
        %1987 = vmatpush1.bf16.msra.mxu0 0
        %1988 = vmatprep.subr.bf16.mxu0 0
        %1989 = vmatpush1.bf16.msra.mxu0 0
        %1990 = vmatprep.mubr.bf16.mxu0 %v1525
        %1991 = vmatmul.mubr.bf16.gmra.mrb[0].mxu0 %v995
        %v1992 = vpop.f32.mrb[0].mxu0
        %v1993 = vadd.f32 %v878, %v1992
        %v1994 = vpop.f32.mrb[0].mxu0
        %v1995 = vadd.f32 %v882, %v1994
        %v1996 = vpop.f32.mrb[0].mxu0
        %v1997 = vadd.f32 %v878, %v1996
        %v1998 = vpop.f32.mrb[0].mxu0
        %v1999 = vadd.f32 %v882, %v1998
        %2000 = vmatprep.mubr.bf16.mxu0 %v1528
        %2001 = vmatmul.mubr.bf16.gmra.mrb[0].mxu0 %v997
        %v2002 = vpop.f32.mrb[0].mxu0
        %v2003 = vadd.f32 %v878, %v2002
        %v2004 = vpop.f32.mrb[0].mxu0
        %v2005 = vadd.f32 %v882, %v2004
        %v2006 = vpop.f32.mrb[0].mxu0
        %v2007 = vadd.f32 %v878, %v2006
        %v2008 = vpop.f32.mrb[0].mxu0
        %v2009 = vadd.f32 %v882, %v2008
        %2010 = vmatprep.mubr.bf16.mxu0 %v1531
        %2011 = vmatmul.mubr.bf16.gmra.mrb[0].mxu0 %v999
        %v2012 = vpop.f32.mrb[0].mxu0
        %v2013 = vadd.f32 %v878, %v2012
        %v2014 = vpop.f32.mrb[0].mxu0
        %v2015 = vadd.f32 %v882, %v2014
        %v2016 = vpop.f32.mrb[0].mxu0
        %v2017 = vadd.f32 %v878, %v2016
        %v2018 = vpop.f32.mrb[0].mxu0
        %v2019 = vadd.f32 %v882, %v2018
        %2020 = vmatprep.mubr.bf16.mxu0 %v1534
        %2021 = vmatmul.mubr.bf16.gmra.mrb[0].mxu0 %v1001
        %v2022 = vpop.f32.mrb[0].mxu0
        %v2023 = vadd.f32 %v878, %v2022
        %v2024 = vpop.f32.mrb[0].mxu0
        %v2025 = vadd.f32 %v882, %v2024
        %v2026 = vpop.f32.mrb[0].mxu0
        %v2027 = vadd.f32 %v878, %v2026
        %v2028 = vpop.f32.mrb[0].mxu0
        %v2029 = vadd.f32 %v882, %v2028
        %2030 = vmatprep.mubr.bf16.mxu0 %v1537
        %2031 = vmatmul.mubr.bf16.gmra.mrb[0].mxu0 %v1003
        %v2032 = vpop.f32.mrb[0].mxu0
        %v2033 = vadd.f32 %v878, %v2032
        %v2034 = vpop.f32.mrb[0].mxu0
        %v2035 = vadd.f32 %v882, %v2034
        %v2036 = vpop.f32.mrb[0].mxu0
        %v2037 = vadd.f32 %v878, %v2036
        %v2038 = vpop.f32.mrb[0].mxu0
        %v2039 = vadd.f32 %v882, %v2038
        %2040 = vmatprep.mubr.bf16.mxu0 %v1540
        %2041 = vmatmul.mubr.bf16.gmra.mrb[0].mxu0 %v1005
        %v2042 = vpop.f32.mrb[0].mxu0
        %v2043 = vadd.f32 %v878, %v2042
        %v2044 = vpop.f32.mrb[0].mxu0
        %v2045 = vadd.f32 %v882, %v2044
        %v2046 = vpop.f32.mrb[0].mxu0
        %v2047 = vadd.f32 %v878, %v2046
        %v2048 = vpop.f32.mrb[0].mxu0
        %v2049 = vadd.f32 %v882, %v2048
        %2050 = vmatprep.mubr.bf16.mxu0 %v1543
        %2051 = vmatmul.mubr.bf16.gmra.mrb[0].mxu0 %v1007
        %v2052 = vpop.f32.mrb[0].mxu0
        %v2053 = vadd.f32 %v878, %v2052
        %v2054 = vpop.f32.mrb[0].mxu0
        %v2055 = vadd.f32 %v882, %v2054
        %v2056 = vpop.f32.mrb[0].mxu0
        %v2057 = vadd.f32 %v878, %v2056
        %v2058 = vpop.f32.mrb[0].mxu0
        %v2059 = vadd.f32 %v882, %v2058
        %2060 = vmatprep.mubr.bf16.mxu0 %v1546
        %2061 = vmatmul.mubr.bf16.gmra.mrb[0].mxu0 %v1009
        %v2062 = vpop.f32.mrb[0].mxu0
        %v2063 = vadd.f32 %v878, %v2062
        %v2064 = vpop.f32.mrb[0].mxu0
        %v2065 = vadd.f32 %v882, %v2064
        %v2066 = vpop.f32.mrb[0].mxu0
        %v2067 = vadd.f32 %v878, %v2066
        %v2068 = vpop.f32.mrb[0].mxu0
        %v2069 = vadd.f32 %v882, %v2068
        %2070 = vmatprep.mubr.bf16.mxu0 %v1549
        %2071 = vmatmul.mubr.bf16.gmra.mrb[0].mxu0 %v1011
        %v2072 = vpop.f32.mrb[0].mxu0
        %v2073 = vadd.f32 %v878, %v2072
        %v2074 = vpop.f32.mrb[0].mxu0
        %v2075 = vadd.f32 %v882, %v2074
        %v2076 = vpop.f32.mrb[0].mxu0
        %v2077 = vadd.f32 %v878, %v2076
        %v2078 = vpop.f32.mrb[0].mxu0
        %v2079 = vadd.f32 %v882, %v2078
        %2080 = vmatprep.mubr.bf16.mxu0 %v1552
        %2081 = vmatmul.mubr.bf16.gmra.mrb[0].mxu0 %v1013
        %v2082 = vpop.f32.mrb[0].mxu0
        %v2083 = vadd.f32 %v878, %v2082
        %v2084 = vpop.f32.mrb[0].mxu0
        %v2085 = vadd.f32 %v882, %v2084
        %v2086 = vpop.f32.mrb[0].mxu0
        %v2087 = vadd.f32 %v878, %v2086
        %v2088 = vpop.f32.mrb[0].mxu0
        %v2089 = vadd.f32 %v882, %v2088
        %2090 = vmatprep.mubr.bf16.mxu0 %v1555
        %2091 = vmatmul.mubr.bf16.gmra.mrb[0].mxu0 %v1015
        %v2092 = vpop.f32.mrb[0].mxu0
        %v2093 = vadd.f32 %v878, %v2092
        %v2094 = vpop.f32.mrb[0].mxu0
        %v2095 = vadd.f32 %v882, %v2094
        %v2096 = vpop.f32.mrb[0].mxu0
        %v2097 = vadd.f32 %v878, %v2096
        %v2098 = vpop.f32.mrb[0].mxu0
        %v2099 = vadd.f32 %v882, %v2098
        %2100 = vmatprep.mubr.bf16.mxu0 %v1558
        %2101 = vmatmul.mubr.bf16.gmra.mrb[0].mxu0 %v1017
        %v2102 = vpop.f32.mrb[0].mxu0
        %v2103 = vadd.f32 %v878, %v2102
        %v2104 = vpop.f32.mrb[0].mxu0
        %v2105 = vadd.f32 %v882, %v2104
        %v2106 = vpop.f32.mrb[0].mxu0
        %v2107 = vadd.f32 %v878, %v2106
        %v2108 = vpop.f32.mrb[0].mxu0
        %v2109 = vadd.f32 %v882, %v2108
        %2110 = vmatprep.mubr.bf16.mxu0 %v1561
        %2111 = vmatmul.mubr.bf16.gmra.mrb[0].mxu0 %v1019
        %v2112 = vpop.f32.mrb[0].mxu0
        %v2113 = vadd.f32 %v878, %v2112
        %v2114 = vpop.f32.mrb[0].mxu0
        %v2115 = vadd.f32 %v882, %v2114
        %v2116 = vpop.f32.mrb[0].mxu0
        %v2117 = vadd.f32 %v878, %v2116
        %v2118 = vpop.f32.mrb[0].mxu0
        %v2119 = vadd.f32 %v882, %v2118
        %2120 = vmatprep.mubr.bf16.mxu0 %v1564
        %2121 = vmatmul.mubr.bf16.gmra.mrb[0].mxu0 %v1021
        %v2122 = vpop.f32.mrb[0].mxu0
        %v2123 = vadd.f32 %v878, %v2122
        %v2124 = vpop.f32.mrb[0].mxu0
        %v2125 = vadd.f32 %v882, %v2124
        %v2126 = vpop.f32.mrb[0].mxu0
        %v2127 = vadd.f32 %v878, %v2126
        %v2128 = vpop.f32.mrb[0].mxu0
        %v2129 = vadd.f32 %v882, %v2128
        %2130 = vmatprep.mubr.bf16.mxu0 %v1567
        %2131 = vmatmul.mubr.bf16.gmra.mrb[0].mxu0 %v1023
        %v2132 = vpop.f32.mrb[0].mxu0
        %v2133 = vadd.f32 %v878, %v2132
        %v2134 = vpop.f32.mrb[0].mxu0
        %v2135 = vadd.f32 %v882, %v2134
        %v2136 = vpop.f32.mrb[0].mxu0
        %v2137 = vadd.f32 %v878, %v2136
        %v2138 = vpop.f32.mrb[0].mxu0
        %v2139 = vadd.f32 %v882, %v2138
        %2140 = vmatprep.mubr.bf16.mxu0 %v1570
        %2141 = vmatmul.mubr.bf16.gmra.mrb[0].mxu0 %v1025
        %v2142 = vpop.f32.mrb[0].mxu0
        %v2143 = vadd.f32 %v878, %v2142
        %v2144 = vpop.f32.mrb[0].mxu0
        %v2145 = vadd.f32 %v882, %v2144
        %v2146 = vpop.f32.mrb[0].mxu0
        %v2147 = vadd.f32 %v878, %v2146
        %v2148 = vpop.f32.mrb[0].mxu0
        %v2149 = vadd.f32 %v882, %v2148
        %2150 = vdwg.mxu0
        %2151 = vmatprep.subr.bf16.mxu0 %v1338
        %2152 = vmatpush1.bf16.msra.mxu0 %v1337
        %2153 = vmatprep.subr.bf16.mxu0 %v1346
        %2154 = vmatpush1.bf16.msra.mxu0 %v1345
        %2155 = vmatprep.subr.bf16.mxu0 %v1354
        %2156 = vmatpush1.bf16.msra.mxu0 %v1353
        %2157 = vmatprep.subr.bf16.mxu0 %v1362
        %2158 = vmatpush1.bf16.msra.mxu0 %v1361
        %2159 = vmatprep.subr.bf16.mxu0 %v1370
        %2160 = vmatpush1.bf16.msra.mxu0 %v1369
        %2161 = vmatprep.subr.bf16.mxu0 %v1378
        %2162 = vmatpush1.bf16.msra.mxu0 %v1377
        %2163 = vmatprep.subr.bf16.mxu0 %v1386
        %2164 = vmatpush1.bf16.msra.mxu0 %v1385
        %2165 = vmatprep.subr.bf16.mxu0 %v1394
        %2166 = vmatpush1.bf16.msra.mxu0 %v1393
        %2167 = vmatprep.subr.bf16.mxu0 %v1402
        %2168 = vmatpush1.bf16.msra.mxu0 %v1401
        %2169 = vmatprep.subr.bf16.mxu0 %v1410
        %2170 = vmatpush1.bf16.msra.mxu0 %v1409
        %2171 = vmatprep.subr.bf16.mxu0 %v1418
        %2172 = vmatpush1.bf16.msra.mxu0 %v1417
        %2173 = vmatprep.subr.bf16.mxu0 %v1426
        %2174 = vmatpush1.bf16.msra.mxu0 %v1425
        %2175 = vmatprep.subr.bf16.mxu0 0
        %2176 = vmatpush1.bf16.msra.mxu0 0
        %2177 = vmatprep.subr.bf16.mxu0 0
        %2178 = vmatpush1.bf16.msra.mxu0 0
        %2179 = vmatprep.subr.bf16.mxu0 0
        %2180 = vmatpush1.bf16.msra.mxu0 0
        %2181 = vmatprep.subr.bf16.mxu0 0
        %2182 = vmatpush1.bf16.msra.mxu0 0
        %2183 = vmatprep.mubr.bf16.mxu0 %v1525
        %2184 = vmatmul.mubr.bf16.gmra.mrb[0].mxu0 %v995
        %v2185 = vpop.f32.mrb[0].mxu0
        %v2186 = vadd.f32 %v886, %v2185
        %v2187 = vpop.f32.mrb[0].mxu0
        %v2188 = vadd.f32 %v890, %v2187
        %v2189 = vpop.f32.mrb[0].mxu0
        %v2190 = vadd.f32 %v886, %v2189
        %v2191 = vpop.f32.mrb[0].mxu0
        %v2192 = vadd.f32 %v890, %v2191
        %2193 = vmatprep.mubr.bf16.mxu0 %v1528
        %2194 = vmatmul.mubr.bf16.gmra.mrb[0].mxu0 %v997
        %v2195 = vpop.f32.mrb[0].mxu0
        %v2196 = vadd.f32 %v886, %v2195
        %v2197 = vpop.f32.mrb[0].mxu0
        %v2198 = vadd.f32 %v890, %v2197
        %v2199 = vpop.f32.mrb[0].mxu0
        %v2200 = vadd.f32 %v886, %v2199
        %v2201 = vpop.f32.mrb[0].mxu0
        %v2202 = vadd.f32 %v890, %v2201
        %2203 = vmatprep.mubr.bf16.mxu0 %v1531
        %2204 = vmatmul.mubr.bf16.gmra.mrb[0].mxu0 %v999
        %v2205 = vpop.f32.mrb[0].mxu0
        %v2206 = vadd.f32 %v886, %v2205
        %v2207 = vpop.f32.mrb[0].mxu0
        %v2208 = vadd.f32 %v890, %v2207
        %v2209 = vpop.f32.mrb[0].mxu0
        %v2210 = vadd.f32 %v886, %v2209
        %v2211 = vpop.f32.mrb[0].mxu0
        %v2212 = vadd.f32 %v890, %v2211
        %2213 = vmatprep.mubr.bf16.mxu0 %v1534
        %2214 = vmatmul.mubr.bf16.gmra.mrb[0].mxu0 %v1001
        %v2215 = vpop.f32.mrb[0].mxu0
        %v2216 = vadd.f32 %v886, %v2215
        %v2217 = vpop.f32.mrb[0].mxu0
        %v2218 = vadd.f32 %v890, %v2217
        %v2219 = vpop.f32.mrb[0].mxu0
        %v2220 = vadd.f32 %v886, %v2219
        %v2221 = vpop.f32.mrb[0].mxu0
        %v2222 = vadd.f32 %v890, %v2221
        %2223 = vmatprep.mubr.bf16.mxu0 %v1537
        %2224 = vmatmul.mubr.bf16.gmra.mrb[0].mxu0 %v1003
        %v2225 = vpop.f32.mrb[0].mxu0
        %v2226 = vadd.f32 %v886, %v2225
        %v2227 = vpop.f32.mrb[0].mxu0
        %v2228 = vadd.f32 %v890, %v2227
        %v2229 = vpop.f32.mrb[0].mxu0
        %v2230 = vadd.f32 %v886, %v2229
        %v2231 = vpop.f32.mrb[0].mxu0
        %v2232 = vadd.f32 %v890, %v2231
        %2233 = vmatprep.mubr.bf16.mxu0 %v1540
        %2234 = vmatmul.mubr.bf16.gmra.mrb[0].mxu0 %v1005
        %v2235 = vpop.f32.mrb[0].mxu0
        %v2236 = vadd.f32 %v886, %v2235
        %v2237 = vpop.f32.mrb[0].mxu0
        %v2238 = vadd.f32 %v890, %v2237
        %v2239 = vpop.f32.mrb[0].mxu0
        %v2240 = vadd.f32 %v886, %v2239
        %v2241 = vpop.f32.mrb[0].mxu0
        %v2242 = vadd.f32 %v890, %v2241
        %2243 = vmatprep.mubr.bf16.mxu0 %v1543
        %2244 = vmatmul.mubr.bf16.gmra.mrb[0].mxu0 %v1007
        %v2245 = vpop.f32.mrb[0].mxu0
        %v2246 = vadd.f32 %v886, %v2245
        %v2247 = vpop.f32.mrb[0].mxu0
        %v2248 = vadd.f32 %v890, %v2247
        %v2249 = vpop.f32.mrb[0].mxu0
        %v2250 = vadd.f32 %v886, %v2249
        %v2251 = vpop.f32.mrb[0].mxu0
        %v2252 = vadd.f32 %v890, %v2251
        %2253 = vmatprep.mubr.bf16.mxu0 %v1546
        %2254 = vmatmul.mubr.bf16.gmra.mrb[0].mxu0 %v1009
        %v2255 = vpop.f32.mrb[0].mxu0
        %v2256 = vadd.f32 %v886, %v2255
        %v2257 = vpop.f32.mrb[0].mxu0
        %v2258 = vadd.f32 %v890, %v2257
        %v2259 = vpop.f32.mrb[0].mxu0
        %v2260 = vadd.f32 %v886, %v2259
        %v2261 = vpop.f32.mrb[0].mxu0
        %v2262 = vadd.f32 %v890, %v2261
        %2263 = vmatprep.mubr.bf16.mxu0 %v1549
        %2264 = vmatmul.mubr.bf16.gmra.mrb[0].mxu0 %v1011
        %v2265 = vpop.f32.mrb[0].mxu0
        %v2266 = vadd.f32 %v886, %v2265
        %v2267 = vpop.f32.mrb[0].mxu0
        %v2268 = vadd.f32 %v890, %v2267
        %v2269 = vpop.f32.mrb[0].mxu0
        %v2270 = vadd.f32 %v886, %v2269
        %v2271 = vpop.f32.mrb[0].mxu0
        %v2272 = vadd.f32 %v890, %v2271
        %2273 = vmatprep.mubr.bf16.mxu0 %v1552
        %2274 = vmatmul.mubr.bf16.gmra.mrb[0].mxu0 %v1013
        %v2275 = vpop.f32.mrb[0].mxu0
        %v2276 = vadd.f32 %v886, %v2275
        %v2277 = vpop.f32.mrb[0].mxu0
        %v2278 = vadd.f32 %v890, %v2277
        %v2279 = vpop.f32.mrb[0].mxu0
        %v2280 = vadd.f32 %v886, %v2279
        %v2281 = vpop.f32.mrb[0].mxu0
        %v2282 = vadd.f32 %v890, %v2281
        %2283 = vmatprep.mubr.bf16.mxu0 %v1555
        %2284 = vmatmul.mubr.bf16.gmra.mrb[0].mxu0 %v1015
        %v2285 = vpop.f32.mrb[0].mxu0
        %v2286 = vadd.f32 %v886, %v2285
        %v2287 = vpop.f32.mrb[0].mxu0
        %v2288 = vadd.f32 %v890, %v2287
        %v2289 = vpop.f32.mrb[0].mxu0
        %v2290 = vadd.f32 %v886, %v2289
        %v2291 = vpop.f32.mrb[0].mxu0
        %v2292 = vadd.f32 %v890, %v2291
        %2293 = vmatprep.mubr.bf16.mxu0 %v1558
        %2294 = vmatmul.mubr.bf16.gmra.mrb[0].mxu0 %v1017
        %v2295 = vpop.f32.mrb[0].mxu0
        %v2296 = vadd.f32 %v886, %v2295
        %v2297 = vpop.f32.mrb[0].mxu0
        %v2298 = vadd.f32 %v890, %v2297
        %v2299 = vpop.f32.mrb[0].mxu0
        %v2300 = vadd.f32 %v886, %v2299
        %v2301 = vpop.f32.mrb[0].mxu0
        %v2302 = vadd.f32 %v890, %v2301
        %2303 = vmatprep.mubr.bf16.mxu0 %v1561
        %2304 = vmatmul.mubr.bf16.gmra.mrb[0].mxu0 %v1019
        %v2305 = vpop.f32.mrb[0].mxu0
        %v2306 = vadd.f32 %v886, %v2305
        %v2307 = vpop.f32.mrb[0].mxu0
        %v2308 = vadd.f32 %v890, %v2307
        %v2309 = vpop.f32.mrb[0].mxu0
        %v2310 = vadd.f32 %v886, %v2309
        %v2311 = vpop.f32.mrb[0].mxu0
        %v2312 = vadd.f32 %v890, %v2311
        %2313 = vmatprep.mubr.bf16.mxu0 %v1564
        %2314 = vmatmul.mubr.bf16.gmra.mrb[0].mxu0 %v1021
        %v2315 = vpop.f32.mrb[0].mxu0
        %v2316 = vadd.f32 %v886, %v2315
        %v2317 = vpop.f32.mrb[0].mxu0
        %v2318 = vadd.f32 %v890, %v2317
        %v2319 = vpop.f32.mrb[0].mxu0
        %v2320 = vadd.f32 %v886, %v2319
        %v2321 = vpop.f32.mrb[0].mxu0
        %v2322 = vadd.f32 %v890, %v2321
        %2323 = vmatprep.mubr.bf16.mxu0 %v1567
        %2324 = vmatmul.mubr.bf16.gmra.mrb[0].mxu0 %v1023
        %v2325 = vpop.f32.mrb[0].mxu0
        %v2326 = vadd.f32 %v886, %v2325
        %v2327 = vpop.f32.mrb[0].mxu0
        %v2328 = vadd.f32 %v890, %v2327
        %v2329 = vpop.f32.mrb[0].mxu0
        %v2330 = vadd.f32 %v886, %v2329
        %v2331 = vpop.f32.mrb[0].mxu0
        %v2332 = vadd.f32 %v890, %v2331
        %2333 = vmatprep.mubr.bf16.mxu0 %v1570
        %2334 = vmatmul.mubr.bf16.gmra.mrb[0].mxu0 %v1025
        %v2335 = vpop.f32.mrb[0].mxu0
        %v2336 = vadd.f32 %v886, %v2335
        %v2337 = vpop.f32.mrb[0].mxu0
        %v2338 = vadd.f32 %v890, %v2337
        %v2339 = vpop.f32.mrb[0].mxu0
        %v2340 = vadd.f32 %v886, %v2339
        %v2341 = vpop.f32.mrb[0].mxu0
        %v2342 = vadd.f32 %v890, %v2341
        %2343 = vdwg.mxu0
        %v2344 = vmax.f32 %v1607, 0.0
        %v2345 = vmax.f32 %v1609, 0.0
        %v2346 = vmax.f32 %v1800, 0.0
        %v2347 = vmax.f32 %v1802, 0.0
        %v2348 = vmax.f32 %v1993, 0.0
        %v2349 = vmax.f32 %v1995, 0.0
        %v2350 = vmax.f32 %v2186, 0.0
        %v2351 = vmax.f32 %v2188, 0.0
        %v2352 = vmax.f32 %v1611, 0.0
        %v2353 = vmax.f32 %v1613, 0.0
        %v2354 = vmax.f32 %v1804, 0.0
        %v2355 = vmax.f32 %v1806, 0.0
        %v2356 = vmax.f32 %v1997, 0.0
        %v2357 = vmax.f32 %v1999, 0.0
        %v2358 = vmax.f32 %v2190, 0.0
        %v2359 = vmax.f32 %v2192, 0.0
        %v2360 = vmax.f32 %v1617, 0.0
        %v2361 = vmax.f32 %v1619, 0.0
        %v2362 = vmax.f32 %v1810, 0.0
        %v2363 = vmax.f32 %v1812, 0.0
        %v2364 = vmax.f32 %v2003, 0.0
        %v2365 = vmax.f32 %v2005, 0.0
        %v2366 = vmax.f32 %v2196, 0.0
        %v2367 = vmax.f32 %v2198, 0.0
        %v2368 = vmax.f32 %v1621, 0.0
        %v2369 = vmax.f32 %v1623, 0.0
        %v2370 = vmax.f32 %v1814, 0.0
        %v2371 = vmax.f32 %v1816, 0.0
        %v2372 = vmax.f32 %v2007, 0.0
        %v2373 = vmax.f32 %v2009, 0.0
        %v2374 = vmax.f32 %v2200, 0.0
        %v2375 = vmax.f32 %v2202, 0.0
        %v2376 = vmax.f32 %v1627, 0.0
        %v2377 = vmax.f32 %v1629, 0.0
        %v2378 = vmax.f32 %v1820, 0.0
        %v2379 = vmax.f32 %v1822, 0.0
        %v2380 = vmax.f32 %v2013, 0.0
        %v2381 = vmax.f32 %v2015, 0.0
        %v2382 = vmax.f32 %v2206, 0.0
        %v2383 = vmax.f32 %v2208, 0.0
        %v2384 = vmax.f32 %v1631, 0.0
        %v2385 = vmax.f32 %v1633, 0.0
        %v2386 = vmax.f32 %v1824, 0.0
        %v2387 = vmax.f32 %v1826, 0.0
        %v2388 = vmax.f32 %v2017, 0.0
        %v2389 = vmax.f32 %v2019, 0.0
        %v2390 = vmax.f32 %v2210, 0.0
        %v2391 = vmax.f32 %v2212, 0.0
        %v2392 = vmax.f32 %v1637, 0.0
        %v2393 = vmax.f32 %v1639, 0.0
        %v2394 = vmax.f32 %v1830, 0.0
        %v2395 = vmax.f32 %v1832, 0.0
        %v2396 = vmax.f32 %v2023, 0.0
        %v2397 = vmax.f32 %v2025, 0.0
        %v2398 = vmax.f32 %v2216, 0.0
        %v2399 = vmax.f32 %v2218, 0.0
        %v2400 = vmax.f32 %v1641, 0.0
        %v2401 = vmax.f32 %v1643, 0.0
        %v2402 = vmax.f32 %v1834, 0.0
        %v2403 = vmax.f32 %v1836, 0.0
        %v2404 = vmax.f32 %v2027, 0.0
        %v2405 = vmax.f32 %v2029, 0.0
        %v2406 = vmax.f32 %v2220, 0.0
        %v2407 = vmax.f32 %v2222, 0.0
        %v2408 = vmax.f32 %v1647, 0.0
        %v2409 = vmax.f32 %v1649, 0.0
        %v2410 = vmax.f32 %v1840, 0.0
        %v2411 = vmax.f32 %v1842, 0.0
        %v2412 = vmax.f32 %v2033, 0.0
        %v2413 = vmax.f32 %v2035, 0.0
        %v2414 = vmax.f32 %v2226, 0.0
        %v2415 = vmax.f32 %v2228, 0.0
        %v2416 = vmax.f32 %v1651, 0.0
        %v2417 = vmax.f32 %v1653, 0.0
        %v2418 = vmax.f32 %v1844, 0.0
        %v2419 = vmax.f32 %v1846, 0.0
        %v2420 = vmax.f32 %v2037, 0.0
        %v2421 = vmax.f32 %v2039, 0.0
        %v2422 = vmax.f32 %v2230, 0.0
        %v2423 = vmax.f32 %v2232, 0.0
        %v2424 = vmax.f32 %v1657, 0.0
        %v2425 = vmax.f32 %v1659, 0.0
        %v2426 = vmax.f32 %v1850, 0.0
        %v2427 = vmax.f32 %v1852, 0.0
        %v2428 = vmax.f32 %v2043, 0.0
        %v2429 = vmax.f32 %v2045, 0.0
        %v2430 = vmax.f32 %v2236, 0.0
        %v2431 = vmax.f32 %v2238, 0.0
        %v2432 = vmax.f32 %v1661, 0.0
        %v2433 = vmax.f32 %v1663, 0.0
        %v2434 = vmax.f32 %v1854, 0.0
        %v2435 = vmax.f32 %v1856, 0.0
        %v2436 = vmax.f32 %v2047, 0.0
        %v2437 = vmax.f32 %v2049, 0.0
        %v2438 = vmax.f32 %v2240, 0.0
        %v2439 = vmax.f32 %v2242, 0.0
        %v2440 = vmax.f32 %v1667, 0.0
        %v2441 = vmax.f32 %v1669, 0.0
        %v2442 = vmax.f32 %v1860, 0.0
        %v2443 = vmax.f32 %v1862, 0.0
        %v2444 = vmax.f32 %v2053, 0.0
        %v2445 = vmax.f32 %v2055, 0.0
        %v2446 = vmax.f32 %v2246, 0.0
        %v2447 = vmax.f32 %v2248, 0.0
        %v2448 = vmax.f32 %v1671, 0.0
        %v2449 = vmax.f32 %v1673, 0.0
        %v2450 = vmax.f32 %v1864, 0.0
        %v2451 = vmax.f32 %v1866, 0.0
        %v2452 = vmax.f32 %v2057, 0.0
        %v2453 = vmax.f32 %v2059, 0.0
        %v2454 = vmax.f32 %v2250, 0.0
        %v2455 = vmax.f32 %v2252, 0.0
        %v2456 = vmax.f32 %v1677, 0.0
        %v2457 = vmax.f32 %v1679, 0.0
        %v2458 = vmax.f32 %v1870, 0.0
        %v2459 = vmax.f32 %v1872, 0.0
        %v2460 = vmax.f32 %v2063, 0.0
        %v2461 = vmax.f32 %v2065, 0.0
        %v2462 = vmax.f32 %v2256, 0.0
        %v2463 = vmax.f32 %v2258, 0.0
        %v2464 = vmax.f32 %v1681, 0.0
        %v2465 = vmax.f32 %v1683, 0.0
        %v2466 = vmax.f32 %v1874, 0.0
        %v2467 = vmax.f32 %v1876, 0.0
        %v2468 = vmax.f32 %v2067, 0.0
        %v2469 = vmax.f32 %v2069, 0.0
        %v2470 = vmax.f32 %v2260, 0.0
        %v2471 = vmax.f32 %v2262, 0.0
        %v2472 = vmax.f32 %v1687, 0.0
        %v2473 = vmax.f32 %v1689, 0.0
        %v2474 = vmax.f32 %v1880, 0.0
        %v2475 = vmax.f32 %v1882, 0.0
        %v2476 = vmax.f32 %v2073, 0.0
        %v2477 = vmax.f32 %v2075, 0.0
        %v2478 = vmax.f32 %v2266, 0.0
        %v2479 = vmax.f32 %v2268, 0.0
        %v2480 = vmax.f32 %v1691, 0.0
        %v2481 = vmax.f32 %v1693, 0.0
        %v2482 = vmax.f32 %v1884, 0.0
        %v2483 = vmax.f32 %v1886, 0.0
        %v2484 = vmax.f32 %v2077, 0.0
        %v2485 = vmax.f32 %v2079, 0.0
        %v2486 = vmax.f32 %v2270, 0.0
        %v2487 = vmax.f32 %v2272, 0.0
        %v2488 = vmax.f32 %v1697, 0.0
        %v2489 = vmax.f32 %v1699, 0.0
        %v2490 = vmax.f32 %v1890, 0.0
        %v2491 = vmax.f32 %v1892, 0.0
        %v2492 = vmax.f32 %v2083, 0.0
        %v2493 = vmax.f32 %v2085, 0.0
        %v2494 = vmax.f32 %v2276, 0.0
        %v2495 = vmax.f32 %v2278, 0.0
        %v2496 = vmax.f32 %v1701, 0.0
        %v2497 = vmax.f32 %v1703, 0.0
        %v2498 = vmax.f32 %v1894, 0.0
        %v2499 = vmax.f32 %v1896, 0.0
        %v2500 = vmax.f32 %v2087, 0.0
        %v2501 = vmax.f32 %v2089, 0.0
        %v2502 = vmax.f32 %v2280, 0.0
        %v2503 = vmax.f32 %v2282, 0.0
        %v2504 = vmax.f32 %v1707, 0.0
        %v2505 = vmax.f32 %v1709, 0.0
        %v2506 = vmax.f32 %v1900, 0.0
        %v2507 = vmax.f32 %v1902, 0.0
        %v2508 = vmax.f32 %v2093, 0.0
        %v2509 = vmax.f32 %v2095, 0.0
        %v2510 = vmax.f32 %v2286, 0.0
        %v2511 = vmax.f32 %v2288, 0.0
        %v2512 = vmax.f32 %v1711, 0.0
        %v2513 = vmax.f32 %v1713, 0.0
        %v2514 = vmax.f32 %v1904, 0.0
        %v2515 = vmax.f32 %v1906, 0.0
        %v2516 = vmax.f32 %v2097, 0.0
        %v2517 = vmax.f32 %v2099, 0.0
        %v2518 = vmax.f32 %v2290, 0.0
        %v2519 = vmax.f32 %v2292, 0.0
        %v2520 = vmax.f32 %v1717, 0.0
        %v2521 = vmax.f32 %v1719, 0.0
        %v2522 = vmax.f32 %v1910, 0.0
        %v2523 = vmax.f32 %v1912, 0.0
        %v2524 = vmax.f32 %v2103, 0.0
        %v2525 = vmax.f32 %v2105, 0.0
        %v2526 = vmax.f32 %v2296, 0.0
        %v2527 = vmax.f32 %v2298, 0.0
        %v2528 = vmax.f32 %v1721, 0.0
        %v2529 = vmax.f32 %v1723, 0.0
        %v2530 = vmax.f32 %v1914, 0.0
        %v2531 = vmax.f32 %v1916, 0.0
        %v2532 = vmax.f32 %v2107, 0.0
        %v2533 = vmax.f32 %v2109, 0.0
        %v2534 = vmax.f32 %v2300, 0.0
        %v2535 = vmax.f32 %v2302, 0.0
        %v2536 = vmax.f32 %v1727, 0.0
        %v2537 = vmax.f32 %v1729, 0.0
        %v2538 = vmax.f32 %v1920, 0.0
        %v2539 = vmax.f32 %v1922, 0.0
        %v2540 = vmax.f32 %v2113, 0.0
        %v2541 = vmax.f32 %v2115, 0.0
        %v2542 = vmax.f32 %v2306, 0.0
        %v2543 = vmax.f32 %v2308, 0.0
        %v2544 = vmax.f32 %v1731, 0.0
        %v2545 = vmax.f32 %v1733, 0.0
        %v2546 = vmax.f32 %v1924, 0.0
        %v2547 = vmax.f32 %v1926, 0.0
        %v2548 = vmax.f32 %v2117, 0.0
        %v2549 = vmax.f32 %v2119, 0.0
        %v2550 = vmax.f32 %v2310, 0.0
        %v2551 = vmax.f32 %v2312, 0.0
        %v2552 = vmax.f32 %v1737, 0.0
        %v2553 = vmax.f32 %v1739, 0.0
        %v2554 = vmax.f32 %v1930, 0.0
        %v2555 = vmax.f32 %v1932, 0.0
        %v2556 = vmax.f32 %v2123, 0.0
        %v2557 = vmax.f32 %v2125, 0.0
        %v2558 = vmax.f32 %v2316, 0.0
        %v2559 = vmax.f32 %v2318, 0.0
        %v2560 = vmax.f32 %v1741, 0.0
        %v2561 = vmax.f32 %v1743, 0.0
        %v2562 = vmax.f32 %v1934, 0.0
        %v2563 = vmax.f32 %v1936, 0.0
        %v2564 = vmax.f32 %v2127, 0.0
        %v2565 = vmax.f32 %v2129, 0.0
        %v2566 = vmax.f32 %v2320, 0.0
        %v2567 = vmax.f32 %v2322, 0.0
        %v2568 = vmax.f32 %v1747, 0.0
        %v2569 = vmax.f32 %v1749, 0.0
        %v2570 = vmax.f32 %v1940, 0.0
        %v2571 = vmax.f32 %v1942, 0.0
        %v2572 = vmax.f32 %v2133, 0.0
        %v2573 = vmax.f32 %v2135, 0.0
        %v2574 = vmax.f32 %v2326, 0.0
        %v2575 = vmax.f32 %v2328, 0.0
        %v2576 = vmax.f32 %v1751, 0.0
        %v2577 = vmax.f32 %v1753, 0.0
        %v2578 = vmax.f32 %v1944, 0.0
        %v2579 = vmax.f32 %v1946, 0.0
        %v2580 = vmax.f32 %v2137, 0.0
        %v2581 = vmax.f32 %v2139, 0.0
        %v2582 = vmax.f32 %v2330, 0.0
        %v2583 = vmax.f32 %v2332, 0.0
        %v2584 = vmax.f32 %v1757, 0.0
        %v2585 = vmax.f32 %v1759, 0.0
        %v2586 = vmax.f32 %v1950, 0.0
        %v2587 = vmax.f32 %v1952, 0.0
        %v2588 = vmax.f32 %v2143, 0.0
        %v2589 = vmax.f32 %v2145, 0.0
        %v2590 = vmax.f32 %v2336, 0.0
        %v2591 = vmax.f32 %v2338, 0.0
        %v2592 = vmax.f32 %v1761, 0.0
        %v2593 = vmax.f32 %v1763, 0.0
        %v2594 = vmax.f32 %v1954, 0.0
        %v2595 = vmax.f32 %v1956, 0.0
        %v2596 = vmax.f32 %v2147, 0.0
        %v2597 = vmax.f32 %v2149, 0.0
        %v2598 = vmax.f32 %v2340, 0.0
        %v2599 = vmax.f32 %v2342, 0.0
        %v2600 = vpack.c.bf16 %v2352, %v2344
        %v2601 = vpack.c.bf16 %v2353, %v2345
        %v2602 = vpack.c.bf16 %v2354, %v2346
        %v2603 = vpack.c.bf16 %v2355, %v2347
        %v2604 = vpack.c.bf16 %v2356, %v2348
        %v2605 = vpack.c.bf16 %v2357, %v2349
        %v2606 = vpack.c.bf16 %v2358, %v2350
        %v2607 = vpack.c.bf16 %v2359, %v2351
        %v2608 = vpack.c.bf16 %v2368, %v2360
        %v2609 = vpack.c.bf16 %v2369, %v2361
        %v2610 = vpack.c.bf16 %v2370, %v2362
        %v2611 = vpack.c.bf16 %v2371, %v2363
        %v2612 = vpack.c.bf16 %v2372, %v2364
        %v2613 = vpack.c.bf16 %v2373, %v2365
        %v2614 = vpack.c.bf16 %v2374, %v2366
        %v2615 = vpack.c.bf16 %v2375, %v2367
        %v2616 = vpack.c.bf16 %v2384, %v2376
        %v2617 = vpack.c.bf16 %v2385, %v2377
        %v2618 = vpack.c.bf16 %v2386, %v2378
        %v2619 = vpack.c.bf16 %v2387, %v2379
        %v2620 = vpack.c.bf16 %v2388, %v2380
        %v2621 = vpack.c.bf16 %v2389, %v2381
        %v2622 = vpack.c.bf16 %v2390, %v2382
        %v2623 = vpack.c.bf16 %v2391, %v2383
        %v2624 = vpack.c.bf16 %v2400, %v2392
        %v2625 = vpack.c.bf16 %v2401, %v2393
        %v2626 = vpack.c.bf16 %v2402, %v2394
        %v2627 = vpack.c.bf16 %v2403, %v2395
        %v2628 = vpack.c.bf16 %v2404, %v2396
        %v2629 = vpack.c.bf16 %v2405, %v2397
        %v2630 = vpack.c.bf16 %v2406, %v2398
        %v2631 = vpack.c.bf16 %v2407, %v2399
        %v2632 = vpack.c.bf16 %v2416, %v2408
        %v2633 = vpack.c.bf16 %v2417, %v2409
        %v2634 = vpack.c.bf16 %v2418, %v2410
        %v2635 = vpack.c.bf16 %v2419, %v2411
        %v2636 = vpack.c.bf16 %v2420, %v2412
        %v2637 = vpack.c.bf16 %v2421, %v2413
        %v2638 = vpack.c.bf16 %v2422, %v2414
        %v2639 = vpack.c.bf16 %v2423, %v2415
        %v2640 = vpack.c.bf16 %v2432, %v2424
        %v2641 = vpack.c.bf16 %v2433, %v2425
        %v2642 = vpack.c.bf16 %v2434, %v2426
        %v2643 = vpack.c.bf16 %v2435, %v2427
        %v2644 = vpack.c.bf16 %v2436, %v2428
        %v2645 = vpack.c.bf16 %v2437, %v2429
        %v2646 = vpack.c.bf16 %v2438, %v2430
        %v2647 = vpack.c.bf16 %v2439, %v2431
        %v2648 = vpack.c.bf16 %v2448, %v2440
        %v2649 = vpack.c.bf16 %v2449, %v2441
        %v2650 = vpack.c.bf16 %v2450, %v2442
        %v2651 = vpack.c.bf16 %v2451, %v2443
        %v2652 = vpack.c.bf16 %v2452, %v2444
        %v2653 = vpack.c.bf16 %v2453, %v2445
        %v2654 = vpack.c.bf16 %v2454, %v2446
        %v2655 = vpack.c.bf16 %v2455, %v2447
        %v2656 = vpack.c.bf16 %v2464, %v2456
        %v2657 = vpack.c.bf16 %v2465, %v2457
        %v2658 = vpack.c.bf16 %v2466, %v2458
        %v2659 = vpack.c.bf16 %v2467, %v2459
        %v2660 = vpack.c.bf16 %v2468, %v2460
        %v2661 = vpack.c.bf16 %v2469, %v2461
        %v2662 = vpack.c.bf16 %v2470, %v2462
        %v2663 = vpack.c.bf16 %v2471, %v2463
        %v2664 = vpack.c.bf16 %v2480, %v2472
        %v2665 = vpack.c.bf16 %v2481, %v2473
        %v2666 = vpack.c.bf16 %v2482, %v2474
        %v2667 = vpack.c.bf16 %v2483, %v2475
        %v2668 = vpack.c.bf16 %v2484, %v2476
        %v2669 = vpack.c.bf16 %v2485, %v2477
        %v2670 = vpack.c.bf16 %v2486, %v2478
        %v2671 = vpack.c.bf16 %v2487, %v2479
        %v2672 = vpack.c.bf16 %v2496, %v2488
        %v2673 = vpack.c.bf16 %v2497, %v2489
        %v2674 = vpack.c.bf16 %v2498, %v2490
        %v2675 = vpack.c.bf16 %v2499, %v2491
        %v2676 = vpack.c.bf16 %v2500, %v2492
        %v2677 = vpack.c.bf16 %v2501, %v2493
        %v2678 = vpack.c.bf16 %v2502, %v2494
        %v2679 = vpack.c.bf16 %v2503, %v2495
        %v2680 = vpack.c.bf16 %v2512, %v2504
        %v2681 = vpack.c.bf16 %v2513, %v2505
        %v2682 = vpack.c.bf16 %v2514, %v2506
        %v2683 = vpack.c.bf16 %v2515, %v2507
        %v2684 = vpack.c.bf16 %v2516, %v2508
        %v2685 = vpack.c.bf16 %v2517, %v2509
        %v2686 = vpack.c.bf16 %v2518, %v2510
        %v2687 = vpack.c.bf16 %v2519, %v2511
        %v2688 = vpack.c.bf16 %v2528, %v2520
        %v2689 = vpack.c.bf16 %v2529, %v2521
        %v2690 = vpack.c.bf16 %v2530, %v2522
        %v2691 = vpack.c.bf16 %v2531, %v2523
        %v2692 = vpack.c.bf16 %v2532, %v2524
        %v2693 = vpack.c.bf16 %v2533, %v2525
        %v2694 = vpack.c.bf16 %v2534, %v2526
        %v2695 = vpack.c.bf16 %v2535, %v2527
        %v2696 = vpack.c.bf16 %v2544, %v2536
        %v2697 = vpack.c.bf16 %v2545, %v2537
        %v2698 = vpack.c.bf16 %v2546, %v2538
        %v2699 = vpack.c.bf16 %v2547, %v2539
        %v2700 = vpack.c.bf16 %v2548, %v2540
        %v2701 = vpack.c.bf16 %v2549, %v2541
        %v2702 = vpack.c.bf16 %v2550, %v2542
        %v2703 = vpack.c.bf16 %v2551, %v2543
        %v2704 = vpack.c.bf16 %v2560, %v2552
        %v2705 = vpack.c.bf16 %v2561, %v2553
        %v2706 = vpack.c.bf16 %v2562, %v2554
        %v2707 = vpack.c.bf16 %v2563, %v2555
        %v2708 = vpack.c.bf16 %v2564, %v2556
        %v2709 = vpack.c.bf16 %v2565, %v2557
        %v2710 = vpack.c.bf16 %v2566, %v2558
        %v2711 = vpack.c.bf16 %v2567, %v2559
        %v2712 = vpack.c.bf16 %v2576, %v2568
        %v2713 = vpack.c.bf16 %v2577, %v2569
        %v2714 = vpack.c.bf16 %v2578, %v2570
        %v2715 = vpack.c.bf16 %v2579, %v2571
        %v2716 = vpack.c.bf16 %v2580, %v2572
        %v2717 = vpack.c.bf16 %v2581, %v2573
        %v2718 = vpack.c.bf16 %v2582, %v2574
        %v2719 = vpack.c.bf16 %v2583, %v2575
        %v2720 = vpack.c.bf16 %v2592, %v2584
        %v2721 = vpack.c.bf16 %v2593, %v2585
        %v2722 = vpack.c.bf16 %v2594, %v2586
        %v2723 = vpack.c.bf16 %v2595, %v2587
        %v2724 = vpack.c.bf16 %v2596, %v2588
        %v2725 = vpack.c.bf16 %v2597, %v2589
        %v2726 = vpack.c.bf16 %v2598, %v2590
        %v2727 = vpack.c.bf16 %v2599, %v2591
        %v2728 = vld [vmem:[#allocation7] sm:$0xff]
        %v2729 = vld [vmem:[#allocation7 + $0x8] sm:$0xff]
        %v2730 = vld [vmem:[#allocation7 + $0x10] sm:$0xff]
        %v2731 = vld [vmem:[#allocation7 + $0x18] sm:$0xff]
        %v2732 = vld [vmem:[#allocation7 + $0x20] sm:$0xff]
        %v2733 = vld [vmem:[#allocation7 + $0x28] sm:$0xff]
        %v2734 = vld [vmem:[#allocation7 + $0x30] sm:$0xff]
        %v2735 = vld [vmem:[#allocation7 + $0x38] sm:$0xff]
        %v2736 = vld [vmem:[#allocation7 + $0x40] sm:$0xff]
        %v2737 = vld [vmem:[#allocation7 + $0x48] sm:$0xff]
        %v2738 = vld [vmem:[#allocation7 + $0x50] sm:$0xff]
        %v2739 = vld [vmem:[#allocation7 + $0x58] sm:$0xff]
        %v2740 = vld [vmem:[#allocation7 + $0x60] sm:$0xff]
        %v2741 = vld [vmem:[#allocation7 + $0x68] sm:$0xff]
        %v2742 = vld [vmem:[#allocation7 + $0x70] sm:$0xff]
        %v2743 = vld [vmem:[#allocation7 + $0x78] sm:$0xff]
        %v2744 = vld [vmem:[#allocation7 + $0x80] sm:$0xff]
        %v2745 = vld [vmem:[#allocation7 + $0x88] sm:$0xff]
        %v2746 = vld [vmem:[#allocation7 + $0x90] sm:$0xff]
        %v2747 = vld [vmem:[#allocation7 + $0x98] sm:$0xff]
        %v2748 = vld [vmem:[#allocation7 + $0xa0] sm:$0xff]
        %v2749 = vld [vmem:[#allocation7 + $0xa8] sm:$0xff]
        %v2750 = vld [vmem:[#allocation7 + $0xb0] sm:$0xff]
        %v2751 = vld [vmem:[#allocation7 + $0xb8] sm:$0xff]
        %v2752 = vld [vmem:[#allocation7 + $0xc0] sm:$0xff]
        %v2753 = vld [vmem:[#allocation7 + $0xc8] sm:$0xff]
        %v2754 = vld [vmem:[#allocation7 + $0xd0] sm:$0xff]
        %v2755 = vld [vmem:[#allocation7 + $0xd8] sm:$0xff]
        %v2756 = vld [vmem:[#allocation7 + $0xe0] sm:$0xff]
        %v2757 = vld [vmem:[#allocation7 + $0xe8] sm:$0xff]
        %v2758 = vld [vmem:[#allocation7 + $0xf0] sm:$0xff]
        %v2759 = vld [vmem:[#allocation7 + $0xf8] sm:$0xff]
        %v2760 = vld [vmem:[#allocation7 + $0x100] sm:$0xff]
        %v2761 = vld [vmem:[#allocation7 + $0x108] sm:$0xff]
        %v2762 = vld [vmem:[#allocation7 + $0x110] sm:$0xff]
        %v2763 = vld [vmem:[#allocation7 + $0x118] sm:$0xff]
        %v2764 = vld [vmem:[#allocation7 + $0x120] sm:$0xff]
        %v2765 = vld [vmem:[#allocation7 + $0x128] sm:$0xff]
        %v2766 = vld [vmem:[#allocation7 + $0x130] sm:$0xff]
        %v2767 = vld [vmem:[#allocation7 + $0x138] sm:$0xff]
        %v2768 = vld [vmem:[#allocation7 + $0x140] sm:$0xff]
        %v2769 = vld [vmem:[#allocation7 + $0x148] sm:$0xff]
        %v2770 = vld [vmem:[#allocation7 + $0x150] sm:$0xff]
        %v2771 = vld [vmem:[#allocation7 + $0x158] sm:$0xff]
        %v2772 = vld [vmem:[#allocation7 + $0x160] sm:$0xff]
        %v2773 = vld [vmem:[#allocation7 + $0x168] sm:$0xff]
        %v2774 = vld [vmem:[#allocation7 + $0x170] sm:$0xff]
        %v2775 = vld [vmem:[#allocation7 + $0x178] sm:$0xff]
        %v2776 = vld [vmem:[#allocation7 + $0x180] sm:$0xff]
        %v2777 = vld [vmem:[#allocation7 + $0x188] sm:$0xff]
        %v2778 = vld [vmem:[#allocation7 + $0x190] sm:$0xff]
        %v2779 = vld [vmem:[#allocation7 + $0x198] sm:$0xff]
        %v2780 = vld [vmem:[#allocation7 + $0x1a0] sm:$0xff]
        %v2781 = vld [vmem:[#allocation7 + $0x1a8] sm:$0xff]
        %v2782 = vld [vmem:[#allocation7 + $0x1b0] sm:$0xff]
        %v2783 = vld [vmem:[#allocation7 + $0x1b8] sm:$0xff]
        %v2784 = vld [vmem:[#allocation7 + $0x1c0] sm:$0xff]
        %v2785 = vld [vmem:[#allocation7 + $0x1c8] sm:$0xff]
        %v2786 = vld [vmem:[#allocation7 + $0x1d0] sm:$0xff]
        %v2787 = vld [vmem:[#allocation7 + $0x1d8] sm:$0xff]
        %v2788 = vld [vmem:[#allocation7 + $0x1e0] sm:$0xff]
        %v2789 = vld [vmem:[#allocation7 + $0x1e8] sm:$0xff]
        %v2790 = vld [vmem:[#allocation7 + $0x1f0] sm:$0xff]
        %v2791 = vld [vmem:[#allocation7 + $0x1f8] sm:$0xff]
        %v2792 = vld [vmem:[#allocation7 + $0x200] sm:$0xff]
        %v2793 = vld [vmem:[#allocation7 + $0x208] sm:$0xff]
        %v2794 = vld [vmem:[#allocation7 + $0x210] sm:$0xff]
        %v2795 = vld [vmem:[#allocation7 + $0x218] sm:$0xff]
        %v2796 = vld [vmem:[#allocation7 + $0x220] sm:$0xff]
        %v2797 = vld [vmem:[#allocation7 + $0x228] sm:$0xff]
        %v2798 = vld [vmem:[#allocation7 + $0x230] sm:$0xff]
        %v2799 = vld [vmem:[#allocation7 + $0x238] sm:$0xff]
        %v2800 = vld [vmem:[#allocation7 + $0x240] sm:$0xff]
        %v2801 = vld [vmem:[#allocation7 + $0x248] sm:$0xff]
        %v2802 = vld [vmem:[#allocation7 + $0x250] sm:$0xff]
        %v2803 = vld [vmem:[#allocation7 + $0x258] sm:$0xff]
        %v2804 = vld [vmem:[#allocation7 + $0x260] sm:$0xff]
        %v2805 = vld [vmem:[#allocation7 + $0x268] sm:$0xff]
        %v2806 = vld [vmem:[#allocation7 + $0x270] sm:$0xff]
        %v2807 = vld [vmem:[#allocation7 + $0x278] sm:$0xff]
        %v2808 = vld [vmem:[#allocation7 + $0x280] sm:$0xff]
        %v2809 = vld [vmem:[#allocation7 + $0x288] sm:$0xff]
        %v2810 = vld [vmem:[#allocation7 + $0x290] sm:$0xff]
        %v2811 = vld [vmem:[#allocation7 + $0x298] sm:$0xff]
        %v2812 = vld [vmem:[#allocation7 + $0x2a0] sm:$0xff]
        %v2813 = vld [vmem:[#allocation7 + $0x2a8] sm:$0xff]
        %v2814 = vld [vmem:[#allocation7 + $0x2b0] sm:$0xff]
        %v2815 = vld [vmem:[#allocation7 + $0x2b8] sm:$0xff]
        %v2816 = vld [vmem:[#allocation7 + $0x2c0] sm:$0xff]
        %v2817 = vld [vmem:[#allocation7 + $0x2c8] sm:$0xff]
        %v2818 = vld [vmem:[#allocation7 + $0x2d0] sm:$0xff]
        %v2819 = vld [vmem:[#allocation7 + $0x2d8] sm:$0xff]
        %v2820 = vld [vmem:[#allocation7 + $0x2e0] sm:$0xff]
        %v2821 = vld [vmem:[#allocation7 + $0x2e8] sm:$0xff]
        %v2822 = vld [vmem:[#allocation7 + $0x2f0] sm:$0xff]
        %v2823 = vld [vmem:[#allocation7 + $0x2f8] sm:$0xff]
        %v2824 = vld [vmem:[#allocation7 + $0x300] sm:$0xff]
        %v2825 = vld [vmem:[#allocation7 + $0x308] sm:$0xff]
        %v2826 = vld [vmem:[#allocation7 + $0x310] sm:$0xff]
        %v2827 = vld [vmem:[#allocation7 + $0x318] sm:$0xff]
        %v2828 = vld [vmem:[#allocation7 + $0x320] sm:$0xff]
        %v2829 = vld [vmem:[#allocation7 + $0x328] sm:$0xff]
        %v2830 = vld [vmem:[#allocation7 + $0x330] sm:$0xff]
        %v2831 = vld [vmem:[#allocation7 + $0x338] sm:$0xff]
        %v2832 = vld [vmem:[#allocation7 + $0x340] sm:$0xff]
        %v2833 = vld [vmem:[#allocation7 + $0x348] sm:$0xff]
        %v2834 = vld [vmem:[#allocation7 + $0x350] sm:$0xff]
        %v2835 = vld [vmem:[#allocation7 + $0x358] sm:$0xff]
        %v2836 = vld [vmem:[#allocation7 + $0x360] sm:$0xff]
        %v2837 = vld [vmem:[#allocation7 + $0x368] sm:$0xff]
        %v2838 = vld [vmem:[#allocation7 + $0x370] sm:$0xff]
        %v2839 = vld [vmem:[#allocation7 + $0x378] sm:$0xff]
        %v2840 = vld [vmem:[#allocation7 + $0x380] sm:$0xff]
        %v2841 = vld [vmem:[#allocation7 + $0x388] sm:$0xff]
        %v2842 = vld [vmem:[#allocation7 + $0x390] sm:$0xff]
        %v2843 = vld [vmem:[#allocation7 + $0x398] sm:$0xff]
        %v2844 = vld [vmem:[#allocation7 + $0x3a0] sm:$0xff]
        %v2845 = vld [vmem:[#allocation7 + $0x3a8] sm:$0xff]
        %v2846 = vld [vmem:[#allocation7 + $0x3b0] sm:$0xff]
        %v2847 = vld [vmem:[#allocation7 + $0x3b8] sm:$0xff]
        %v2848 = vld [vmem:[#allocation7 + $0x3c0] sm:$0xff]
        %v2849 = vld [vmem:[#allocation7 + $0x3c8] sm:$0xff]
        %v2850 = vld [vmem:[#allocation7 + $0x3d0] sm:$0xff]
        %v2851 = vld [vmem:[#allocation7 + $0x3d8] sm:$0xff]
        %v2852 = vld [vmem:[#allocation7 + $0x3e0] sm:$0xff]
        %v2853 = vld [vmem:[#allocation7 + $0x3e8] sm:$0xff]
        %v2854 = vld [vmem:[#allocation7 + $0x3f0] sm:$0xff]
        %v2855 = vld [vmem:[#allocation7 + $0x3f8] sm:$0xff]
        %v2856 = vld [vmem:[#allocation7 + $0x400] sm:$0xff]
        %v2857 = vld [vmem:[#allocation7 + $0x408] sm:$0xff]
        %v2858 = vld [vmem:[#allocation7 + $0x410] sm:$0xff]
        %v2859 = vld [vmem:[#allocation7 + $0x418] sm:$0xff]
        %v2860 = vld [vmem:[#allocation7 + $0x420] sm:$0xff]
        %v2861 = vld [vmem:[#allocation7 + $0x428] sm:$0xff]
        %v2862 = vld [vmem:[#allocation7 + $0x430] sm:$0xff]
        %v2863 = vld [vmem:[#allocation7 + $0x438] sm:$0xff]
        %v2864 = vld [vmem:[#allocation7 + $0x440] sm:$0xff]
        %v2865 = vld [vmem:[#allocation7 + $0x448] sm:$0xff]
        %v2866 = vld [vmem:[#allocation7 + $0x450] sm:$0xff]
        %v2867 = vld [vmem:[#allocation7 + $0x458] sm:$0xff]
        %v2868 = vld [vmem:[#allocation7 + $0x460] sm:$0xff]
        %v2869 = vld [vmem:[#allocation7 + $0x468] sm:$0xff]
        %v2870 = vld [vmem:[#allocation7 + $0x470] sm:$0xff]
        %v2871 = vld [vmem:[#allocation7 + $0x478] sm:$0xff]
        %v2872 = vld [vmem:[#allocation7 + $0x480] sm:$0xff]
        %v2873 = vld [vmem:[#allocation7 + $0x488] sm:$0xff]
        %v2874 = vld [vmem:[#allocation7 + $0x490] sm:$0xff]
        %v2875 = vld [vmem:[#allocation7 + $0x498] sm:$0xff]
        %v2876 = vld [vmem:[#allocation7 + $0x4a0] sm:$0xff]
        %v2877 = vld [vmem:[#allocation7 + $0x4a8] sm:$0xff]
        %v2878 = vld [vmem:[#allocation7 + $0x4b0] sm:$0xff]
        %v2879 = vld [vmem:[#allocation7 + $0x4b8] sm:$0xff]
        %v2880 = vld [vmem:[#allocation7 + $0x4c0] sm:$0xff]
        %v2881 = vld [vmem:[#allocation7 + $0x4c8] sm:$0xff]
        %v2882 = vld [vmem:[#allocation7 + $0x4d0] sm:$0xff]
        %v2883 = vld [vmem:[#allocation7 + $0x4d8] sm:$0xff]
        %v2884 = vld [vmem:[#allocation7 + $0x4e0] sm:$0xff]
        %v2885 = vld [vmem:[#allocation7 + $0x4e8] sm:$0xff]
        %v2886 = vld [vmem:[#allocation7 + $0x4f0] sm:$0xff]
        %v2887 = vld [vmem:[#allocation7 + $0x4f8] sm:$0xff]
        %v2888 = vld [vmem:[#allocation7 + $0x500] sm:$0xff]
        %v2889 = vld [vmem:[#allocation7 + $0x508] sm:$0xff]
        %v2890 = vld [vmem:[#allocation7 + $0x510] sm:$0xff]
        %v2891 = vld [vmem:[#allocation7 + $0x518] sm:$0xff]
        %v2892 = vld [vmem:[#allocation7 + $0x520] sm:$0xff]
        %v2893 = vld [vmem:[#allocation7 + $0x528] sm:$0xff]
        %v2894 = vld [vmem:[#allocation7 + $0x530] sm:$0xff]
        %v2895 = vld [vmem:[#allocation7 + $0x538] sm:$0xff]
        %v2896 = vld [vmem:[#allocation7 + $0x540] sm:$0xff]
        %v2897 = vld [vmem:[#allocation7 + $0x548] sm:$0xff]
        %v2898 = vld [vmem:[#allocation7 + $0x550] sm:$0xff]
        %v2899 = vld [vmem:[#allocation7 + $0x558] sm:$0xff]
        %v2900 = vld [vmem:[#allocation7 + $0x560] sm:$0xff]
        %v2901 = vld [vmem:[#allocation7 + $0x568] sm:$0xff]
        %v2902 = vld [vmem:[#allocation7 + $0x570] sm:$0xff]
        %v2903 = vld [vmem:[#allocation7 + $0x578] sm:$0xff]
        %v2904 = vld [vmem:[#allocation7 + $0x580] sm:$0xff]
        %v2905 = vld [vmem:[#allocation7 + $0x588] sm:$0xff]
        %v2906 = vld [vmem:[#allocation7 + $0x590] sm:$0xff]
        %v2907 = vld [vmem:[#allocation7 + $0x598] sm:$0xff]
        %v2908 = vld [vmem:[#allocation7 + $0x5a0] sm:$0xff]
        %v2909 = vld [vmem:[#allocation7 + $0x5a8] sm:$0xff]
        %v2910 = vld [vmem:[#allocation7 + $0x5b0] sm:$0xff]
        %v2911 = vld [vmem:[#allocation7 + $0x5b8] sm:$0xff]
        %v2912 = vld [vmem:[#allocation7 + $0x5c0] sm:$0xff]
        %v2913 = vld [vmem:[#allocation7 + $0x5c8] sm:$0xff]
        %v2914 = vld [vmem:[#allocation7 + $0x5d0] sm:$0xff]
        %v2915 = vld [vmem:[#allocation7 + $0x5d8] sm:$0xff]
        %v2916 = vld [vmem:[#allocation7 + $0x5e0] sm:$0xff]
        %v2917 = vld [vmem:[#allocation7 + $0x5e8] sm:$0xff]
        %v2918 = vld [vmem:[#allocation7 + $0x5f0] sm:$0xff]
        %v2919 = vld [vmem:[#allocation7 + $0x5f8] sm:$0xff]
        %v2920 = vld [vmem:[#allocation7 + $0x600] sm:$0xff]
        %v2921 = vld [vmem:[#allocation7 + $0x608] sm:$0xff]
        %v2922 = vld [vmem:[#allocation7 + $0x610] sm:$0xff]
        %v2923 = vld [vmem:[#allocation7 + $0x618] sm:$0xff]
        %v2924 = vld [vmem:[#allocation7 + $0x620] sm:$0xff]
        %v2925 = vld [vmem:[#allocation7 + $0x628] sm:$0xff]
        %v2926 = vld [vmem:[#allocation7 + $0x630] sm:$0xff]
        %v2927 = vld [vmem:[#allocation7 + $0x638] sm:$0xff]
        %v2928 = vld [vmem:[#allocation7 + $0x640] sm:$0xff]
        %v2929 = vld [vmem:[#allocation7 + $0x648] sm:$0xff]
        %v2930 = vld [vmem:[#allocation7 + $0x650] sm:$0xff]
        %v2931 = vld [vmem:[#allocation7 + $0x658] sm:$0xff]
        %v2932 = vld [vmem:[#allocation7 + $0x660] sm:$0xff]
        %v2933 = vld [vmem:[#allocation7 + $0x668] sm:$0xff]
        %v2934 = vld [vmem:[#allocation7 + $0x670] sm:$0xff]
        %v2935 = vld [vmem:[#allocation7 + $0x678] sm:$0xff]
        %v2936 = vld [vmem:[#allocation7 + $0x680] sm:$0xff]
        %v2937 = vld [vmem:[#allocation7 + $0x688] sm:$0xff]
        %v2938 = vld [vmem:[#allocation7 + $0x690] sm:$0xff]
        %v2939 = vld [vmem:[#allocation7 + $0x698] sm:$0xff]
        %v2940 = vld [vmem:[#allocation7 + $0x6a0] sm:$0xff]
        %v2941 = vld [vmem:[#allocation7 + $0x6a8] sm:$0xff]
        %v2942 = vld [vmem:[#allocation7 + $0x6b0] sm:$0xff]
        %v2943 = vld [vmem:[#allocation7 + $0x6b8] sm:$0xff]
        %v2944 = vld [vmem:[#allocation7 + $0x6c0] sm:$0xff]
        %v2945 = vld [vmem:[#allocation7 + $0x6c8] sm:$0xff]
        %v2946 = vld [vmem:[#allocation7 + $0x6d0] sm:$0xff]
        %v2947 = vld [vmem:[#allocation7 + $0x6d8] sm:$0xff]
        %v2948 = vld [vmem:[#allocation7 + $0x6e0] sm:$0xff]
        %v2949 = vld [vmem:[#allocation7 + $0x6e8] sm:$0xff]
        %v2950 = vld [vmem:[#allocation7 + $0x6f0] sm:$0xff]
        %v2951 = vld [vmem:[#allocation7 + $0x6f8] sm:$0xff]
        %v2952 = vld [vmem:[#allocation7 + $0x700] sm:$0xff]
        %v2953 = vld [vmem:[#allocation7 + $0x708] sm:$0xff]
        %v2954 = vld [vmem:[#allocation7 + $0x710] sm:$0xff]
        %v2955 = vld [vmem:[#allocation7 + $0x718] sm:$0xff]
        %v2956 = vld [vmem:[#allocation7 + $0x720] sm:$0xff]
        %v2957 = vld [vmem:[#allocation7 + $0x728] sm:$0xff]
        %v2958 = vld [vmem:[#allocation7 + $0x730] sm:$0xff]
        %v2959 = vld [vmem:[#allocation7 + $0x738] sm:$0xff]
        %v2960 = vld [vmem:[#allocation7 + $0x740] sm:$0xff]
        %v2961 = vld [vmem:[#allocation7 + $0x748] sm:$0xff]
        %v2962 = vld [vmem:[#allocation7 + $0x750] sm:$0xff]
        %v2963 = vld [vmem:[#allocation7 + $0x758] sm:$0xff]
        %v2964 = vld [vmem:[#allocation7 + $0x760] sm:$0xff]
        %v2965 = vld [vmem:[#allocation7 + $0x768] sm:$0xff]
        %v2966 = vld [vmem:[#allocation7 + $0x770] sm:$0xff]
        %v2967 = vld [vmem:[#allocation7 + $0x778] sm:$0xff]
        %v2968 = vld [vmem:[#allocation7 + $0x780] sm:$0xff]
        %v2969 = vld [vmem:[#allocation7 + $0x788] sm:$0xff]
        %v2970 = vld [vmem:[#allocation7 + $0x790] sm:$0xff]
        %v2971 = vld [vmem:[#allocation7 + $0x798] sm:$0xff]
        %v2972 = vld [vmem:[#allocation7 + $0x7a0] sm:$0xff]
        %v2973 = vld [vmem:[#allocation7 + $0x7a8] sm:$0xff]
        %v2974 = vld [vmem:[#allocation7 + $0x7b0] sm:$0xff]
        %v2975 = vld [vmem:[#allocation7 + $0x7b8] sm:$0xff]
        %v2976 = vld [vmem:[#allocation7 + $0x7c0] sm:$0xff]
        %v2977 = vld [vmem:[#allocation7 + $0x7c8] sm:$0xff]
        %v2978 = vld [vmem:[#allocation7 + $0x7d0] sm:$0xff]
        %v2979 = vld [vmem:[#allocation7 + $0x7d8] sm:$0xff]
        %v2980 = vld [vmem:[#allocation7 + $0x7e0] sm:$0xff]
        %v2981 = vld [vmem:[#allocation7 + $0x7e8] sm:$0xff]
        %v2982 = vld [vmem:[#allocation7 + $0x7f0] sm:$0xff]
        %v2983 = vld [vmem:[#allocation7 + $0x7f8] sm:$0xff]
        %v2984 = vld [vmem:[#allocation7 + $0x800] sm:$0xff]
        %v2985 = vld [vmem:[#allocation7 + $0x808] sm:$0xff]
        %v2986 = vld [vmem:[#allocation7 + $0x810] sm:$0xff]
        %v2987 = vld [vmem:[#allocation7 + $0x818] sm:$0xff]
        %v2988 = vld [vmem:[#allocation7 + $0x820] sm:$0xff]
        %v2989 = vld [vmem:[#allocation7 + $0x828] sm:$0xff]
        %v2990 = vld [vmem:[#allocation7 + $0x830] sm:$0xff]
        %v2991 = vld [vmem:[#allocation7 + $0x838] sm:$0xff]
        %v2992 = vld [vmem:[#allocation7 + $0x840] sm:$0xff]
        %v2993 = vld [vmem:[#allocation7 + $0x848] sm:$0xff]
        %v2994 = vld [vmem:[#allocation7 + $0x850] sm:$0xff]
        %v2995 = vld [vmem:[#allocation7 + $0x858] sm:$0xff]
        %v2996 = vld [vmem:[#allocation7 + $0x860] sm:$0xff]
        %v2997 = vld [vmem:[#allocation7 + $0x868] sm:$0xff]
        %v2998 = vld [vmem:[#allocation7 + $0x870] sm:$0xff]
        %v2999 = vld [vmem:[#allocation7 + $0x878] sm:$0xff]
        %v3000 = vld [vmem:[#allocation7 + $0x880] sm:$0xff]
        %v3001 = vld [vmem:[#allocation7 + $0x888] sm:$0xff]
        %v3002 = vld [vmem:[#allocation7 + $0x890] sm:$0xff]
        %v3003 = vld [vmem:[#allocation7 + $0x898] sm:$0xff]
        %v3004 = vld [vmem:[#allocation7 + $0x8a0] sm:$0xff]
        %v3005 = vld [vmem:[#allocation7 + $0x8a8] sm:$0xff]
        %v3006 = vld [vmem:[#allocation7 + $0x8b0] sm:$0xff]
        %v3007 = vld [vmem:[#allocation7 + $0x8b8] sm:$0xff]
        %v3008 = vld [vmem:[#allocation7 + $0x8c0] sm:$0xff]
        %v3009 = vld [vmem:[#allocation7 + $0x8c8] sm:$0xff]
        %v3010 = vld [vmem:[#allocation7 + $0x8d0] sm:$0xff]
        %v3011 = vld [vmem:[#allocation7 + $0x8d8] sm:$0xff]
        %v3012 = vld [vmem:[#allocation7 + $0x8e0] sm:$0xff]
        %v3013 = vld [vmem:[#allocation7 + $0x8e8] sm:$0xff]
        %v3014 = vld [vmem:[#allocation7 + $0x8f0] sm:$0xff]
        %v3015 = vld [vmem:[#allocation7 + $0x8f8] sm:$0xff]
        %v3016 = vld [vmem:[#allocation7 + $0x900] sm:$0xff]
        %v3017 = vld [vmem:[#allocation7 + $0x908] sm:$0xff]
        %v3018 = vld [vmem:[#allocation7 + $0x910] sm:$0xff]
        %v3019 = vld [vmem:[#allocation7 + $0x918] sm:$0xff]
        %v3020 = vld [vmem:[#allocation7 + $0x920] sm:$0xff]
        %v3021 = vld [vmem:[#allocation7 + $0x928] sm:$0xff]
        %v3022 = vld [vmem:[#allocation7 + $0x930] sm:$0xff]
        %v3023 = vld [vmem:[#allocation7 + $0x938] sm:$0xff]
        %v3024 = vld [vmem:[#allocation7 + $0x940] sm:$0xff]
        %v3025 = vld [vmem:[#allocation7 + $0x948] sm:$0xff]
        %v3026 = vld [vmem:[#allocation7 + $0x950] sm:$0xff]
        %v3027 = vld [vmem:[#allocation7 + $0x958] sm:$0xff]
        %v3028 = vld [vmem:[#allocation7 + $0x960] sm:$0xff]
        %v3029 = vld [vmem:[#allocation7 + $0x968] sm:$0xff]
        %v3030 = vld [vmem:[#allocation7 + $0x970] sm:$0xff]
        %v3031 = vld [vmem:[#allocation7 + $0x978] sm:$0xff]
        %v3032 = vld [vmem:[#allocation7 + $0x980] sm:$0xff]
        %v3033 = vld [vmem:[#allocation7 + $0x988] sm:$0xff]
        %v3034 = vld [vmem:[#allocation7 + $0x990] sm:$0xff]
        %v3035 = vld [vmem:[#allocation7 + $0x998] sm:$0xff]
        %v3036 = vld [vmem:[#allocation7 + $0x9a0] sm:$0xff]
        %v3037 = vld [vmem:[#allocation7 + $0x9a8] sm:$0xff]
        %v3038 = vld [vmem:[#allocation7 + $0x9b0] sm:$0xff]
        %v3039 = vld [vmem:[#allocation7 + $0x9b8] sm:$0xff]
        %v3040 = vld [vmem:[#allocation7 + $0x9c0] sm:$0xff]
        %v3041 = vld [vmem:[#allocation7 + $0x9c8] sm:$0xff]
        %v3042 = vld [vmem:[#allocation7 + $0x9d0] sm:$0xff]
        %v3043 = vld [vmem:[#allocation7 + $0x9d8] sm:$0xff]
        %v3044 = vld [vmem:[#allocation7 + $0x9e0] sm:$0xff]
        %v3045 = vld [vmem:[#allocation7 + $0x9e8] sm:$0xff]
        %v3046 = vld [vmem:[#allocation7 + $0x9f0] sm:$0xff]
        %v3047 = vld [vmem:[#allocation7 + $0x9f8] sm:$0xff]
        %v3048 = vld [vmem:[#allocation7 + $0xa00] sm:$0xff]
        %v3049 = vld [vmem:[#allocation7 + $0xa08] sm:$0xff]
        %v3050 = vld [vmem:[#allocation7 + $0xa10] sm:$0xff]
        %v3051 = vld [vmem:[#allocation7 + $0xa18] sm:$0xff]
        %v3052 = vld [vmem:[#allocation7 + $0xa20] sm:$0xff]
        %v3053 = vld [vmem:[#allocation7 + $0xa28] sm:$0xff]
        %v3054 = vld [vmem:[#allocation7 + $0xa30] sm:$0xff]
        %v3055 = vld [vmem:[#allocation7 + $0xa38] sm:$0xff]
        %v3056 = vld [vmem:[#allocation7 + $0xa40] sm:$0xff]
        %v3057 = vld [vmem:[#allocation7 + $0xa48] sm:$0xff]
        %v3058 = vld [vmem:[#allocation7 + $0xa50] sm:$0xff]
        %v3059 = vld [vmem:[#allocation7 + $0xa58] sm:$0xff]
        %v3060 = vld [vmem:[#allocation7 + $0xa60] sm:$0xff]
        %v3061 = vld [vmem:[#allocation7 + $0xa68] sm:$0xff]
        %v3062 = vld [vmem:[#allocation7 + $0xa70] sm:$0xff]
        %v3063 = vld [vmem:[#allocation7 + $0xa78] sm:$0xff]
        %v3064 = vld [vmem:[#allocation7 + $0xa80] sm:$0xff]
        %v3065 = vld [vmem:[#allocation7 + $0xa88] sm:$0xff]
        %v3066 = vld [vmem:[#allocation7 + $0xa90] sm:$0xff]
        %v3067 = vld [vmem:[#allocation7 + $0xa98] sm:$0xff]
        %v3068 = vld [vmem:[#allocation7 + $0xaa0] sm:$0xff]
        %v3069 = vld [vmem:[#allocation7 + $0xaa8] sm:$0xff]
        %v3070 = vld [vmem:[#allocation7 + $0xab0] sm:$0xff]
        %v3071 = vld [vmem:[#allocation7 + $0xab8] sm:$0xff]
        %v3072 = vld [vmem:[#allocation7 + $0xac0] sm:$0xff]
        %v3073 = vld [vmem:[#allocation7 + $0xac8] sm:$0xff]
        %v3074 = vld [vmem:[#allocation7 + $0xad0] sm:$0xff]
        %v3075 = vld [vmem:[#allocation7 + $0xad8] sm:$0xff]
        %v3076 = vld [vmem:[#allocation7 + $0xae0] sm:$0xff]
        %v3077 = vld [vmem:[#allocation7 + $0xae8] sm:$0xff]
        %v3078 = vld [vmem:[#allocation7 + $0xaf0] sm:$0xff]
        %v3079 = vld [vmem:[#allocation7 + $0xaf8] sm:$0xff]
        %v3080 = vld [vmem:[#allocation7 + $0xb00] sm:$0xff]
        %v3081 = vld [vmem:[#allocation7 + $0xb08] sm:$0xff]
        %v3082 = vld [vmem:[#allocation7 + $0xb10] sm:$0xff]
        %v3083 = vld [vmem:[#allocation7 + $0xb18] sm:$0xff]
        %v3084 = vld [vmem:[#allocation7 + $0xb20] sm:$0xff]
        %v3085 = vld [vmem:[#allocation7 + $0xb28] sm:$0xff]
        %v3086 = vld [vmem:[#allocation7 + $0xb30] sm:$0xff]
        %v3087 = vld [vmem:[#allocation7 + $0xb38] sm:$0xff]
        %v3088 = vld [vmem:[#allocation7 + $0xb40] sm:$0xff]
        %v3089 = vld [vmem:[#allocation7 + $0xb48] sm:$0xff]
        %v3090 = vld [vmem:[#allocation7 + $0xb50] sm:$0xff]
        %v3091 = vld [vmem:[#allocation7 + $0xb58] sm:$0xff]
        %v3092 = vld [vmem:[#allocation7 + $0xb60] sm:$0xff]
        %v3093 = vld [vmem:[#allocation7 + $0xb68] sm:$0xff]
        %v3094 = vld [vmem:[#allocation7 + $0xb70] sm:$0xff]
        %v3095 = vld [vmem:[#allocation7 + $0xb78] sm:$0xff]
        %v3096 = vld [vmem:[#allocation7 + $0xb80] sm:$0xff]
        %v3097 = vld [vmem:[#allocation7 + $0xb88] sm:$0xff]
        %v3098 = vld [vmem:[#allocation7 + $0xb90] sm:$0xff]
        %v3099 = vld [vmem:[#allocation7 + $0xb98] sm:$0xff]
        %v3100 = vld [vmem:[#allocation7 + $0xba0] sm:$0xff]
        %v3101 = vld [vmem:[#allocation7 + $0xba8] sm:$0xff]
        %v3102 = vld [vmem:[#allocation7 + $0xbb0] sm:$0xff]
        %v3103 = vld [vmem:[#allocation7 + $0xbb8] sm:$0xff]
        %v3104 = vld [vmem:[#allocation7 + $0xbc0] sm:$0xff]
        %v3105 = vld [vmem:[#allocation7 + $0xbc8] sm:$0xff]
        %v3106 = vld [vmem:[#allocation7 + $0xbd0] sm:$0xff]
        %v3107 = vld [vmem:[#allocation7 + $0xbd8] sm:$0xff]
        %v3108 = vld [vmem:[#allocation7 + $0xbe0] sm:$0xff]
        %v3109 = vld [vmem:[#allocation7 + $0xbe8] sm:$0xff]
        %v3110 = vld [vmem:[#allocation7 + $0xbf0] sm:$0xff]
        %v3111 = vld [vmem:[#allocation7 + $0xbf8] sm:$0xff]
        %v3112 = vld [vmem:[#allocation8] sm:$0x3f]
        %v3114 = vlaneseq
        %v3115 = vshrl.u32 %v3114, 7
        %v3116 = vsub.s32 0, %v3115
        %v3117 = vrot.slane %v3112, %v3116
        %v3118 = vlaneseq
        %v3119 = vshrl.u32 %v3118, 7
        %v3120 = vsub.s32 1, %v3119
        %v3121 = vrot.slane %v3112, %v3120
        %v3122 = vlaneseq
        %v3123 = vshrl.u32 %v3122, 7
        %v3124 = vsub.s32 2, %v3123
        %v3125 = vrot.slane %v3112, %v3124
        %v3126 = vlaneseq
        %v3127 = vshrl.u32 %v3126, 7
        %v3128 = vsub.s32 3, %v3127
        %v3129 = vrot.slane %v3112, %v3128
        %v3130 = vlaneseq
        %v3131 = vshrl.u32 %v3130, 7
        %v3132 = vsub.s32 4, %v3131
        %v3133 = vrot.slane %v3112, %v3132
        %v3134 = vlaneseq
        %v3135 = vshrl.u32 %v3134, 7
        %v3136 = vsub.s32 5, %v3135
        %v3137 = vrot.slane %v3112, %v3136
        %v3528 = vunpack.c.l.b16 %v2728
        %v3529 = vunpack.c.h.b16 %v2728
        %v3530 = vunpack.c.l.b16 %v2729
        %v3531 = vunpack.c.h.b16 %v2729
        %v3532 = vunpack.c.l.b16 %v2730
        %v3533 = vunpack.c.h.b16 %v2730
        %v3534 = vunpack.c.l.b16 %v2731
        %v3535 = vunpack.c.h.b16 %v2731
        %v3536 = vunpack.c.l.b16 %v2732
        %v3537 = vunpack.c.h.b16 %v2732
        %v3538 = vunpack.c.l.b16 %v2733
        %v3539 = vunpack.c.h.b16 %v2733
        %v3540 = vunpack.c.l.b16 %v2734
        %v3541 = vunpack.c.h.b16 %v2734
        %v3542 = vunpack.c.l.b16 %v2735
        %v3543 = vunpack.c.h.b16 %v2735
        %v3544 = vunpack.c.l.b16 %v2736
        %v3545 = vunpack.c.h.b16 %v2736
        %v3546 = vunpack.c.l.b16 %v2737
        %v3547 = vunpack.c.h.b16 %v2737
        %v3548 = vunpack.c.l.b16 %v2738
        %v3549 = vunpack.c.h.b16 %v2738
        %v3550 = vunpack.c.l.b16 %v2739
        %v3551 = vunpack.c.h.b16 %v2739
        %v3552 = vunpack.c.l.b16 %v2740
        %v3553 = vunpack.c.h.b16 %v2740
        %v3554 = vunpack.c.l.b16 %v2741
        %v3555 = vunpack.c.h.b16 %v2741
        %v3556 = vunpack.c.l.b16 %v2742
        %v3557 = vunpack.c.h.b16 %v2742
        %v3558 = vunpack.c.l.b16 %v2743
        %v3559 = vunpack.c.h.b16 %v2743
        %v3560 = vunpack.c.l.b16 %v2744
        %v3561 = vunpack.c.h.b16 %v2744
        %v3562 = vunpack.c.l.b16 %v2745
        %v3563 = vunpack.c.h.b16 %v2745
        %v3564 = vunpack.c.l.b16 %v2746
        %v3565 = vunpack.c.h.b16 %v2746
        %v3566 = vunpack.c.l.b16 %v2747
        %v3567 = vunpack.c.h.b16 %v2747
        %v3568 = vunpack.c.l.b16 %v2748
        %v3569 = vunpack.c.h.b16 %v2748
        %v3570 = vunpack.c.l.b16 %v2749
        %v3571 = vunpack.c.h.b16 %v2749
        %v3572 = vunpack.c.l.b16 %v2750
        %v3573 = vunpack.c.h.b16 %v2750
        %v3574 = vunpack.c.l.b16 %v2751
        %v3575 = vunpack.c.h.b16 %v2751
        %v3576 = vunpack.c.l.b16 %v2752
        %v3577 = vunpack.c.h.b16 %v2752
        %v3578 = vunpack.c.l.b16 %v2753
        %v3579 = vunpack.c.h.b16 %v2753
        %v3580 = vunpack.c.l.b16 %v2754
        %v3581 = vunpack.c.h.b16 %v2754
        %v3582 = vunpack.c.l.b16 %v2755
        %v3583 = vunpack.c.h.b16 %v2755
        %v3584 = vunpack.c.l.b16 %v2756
        %v3585 = vunpack.c.h.b16 %v2756
        %v3586 = vunpack.c.l.b16 %v2757
        %v3587 = vunpack.c.h.b16 %v2757
        %v3588 = vunpack.c.l.b16 %v2758
        %v3589 = vunpack.c.h.b16 %v2758
        %v3590 = vunpack.c.l.b16 %v2759
        %v3591 = vunpack.c.h.b16 %v2759
        %v3592 = vunpack.c.l.b16 %v2760
        %v3593 = vunpack.c.h.b16 %v2760
        %v3594 = vunpack.c.l.b16 %v2761
        %v3595 = vunpack.c.h.b16 %v2761
        %v3596 = vunpack.c.l.b16 %v2762
        %v3597 = vunpack.c.h.b16 %v2762
        %v3598 = vunpack.c.l.b16 %v2763
        %v3599 = vunpack.c.h.b16 %v2763
        %v3600 = vunpack.c.l.b16 %v2764
        %v3601 = vunpack.c.h.b16 %v2764
        %v3602 = vunpack.c.l.b16 %v2765
        %v3603 = vunpack.c.h.b16 %v2765
        %v3604 = vunpack.c.l.b16 %v2766
        %v3605 = vunpack.c.h.b16 %v2766
        %v3606 = vunpack.c.l.b16 %v2767
        %v3607 = vunpack.c.h.b16 %v2767
        %v3608 = vunpack.c.l.b16 %v2768
        %v3609 = vunpack.c.h.b16 %v2768
        %v3610 = vunpack.c.l.b16 %v2769
        %v3611 = vunpack.c.h.b16 %v2769
        %v3612 = vunpack.c.l.b16 %v2770
        %v3613 = vunpack.c.h.b16 %v2770
        %v3614 = vunpack.c.l.b16 %v2771
        %v3615 = vunpack.c.h.b16 %v2771
        %v3616 = vunpack.c.l.b16 %v2772
        %v3617 = vunpack.c.h.b16 %v2772
        %v3618 = vunpack.c.l.b16 %v2773
        %v3619 = vunpack.c.h.b16 %v2773
        %v3620 = vunpack.c.l.b16 %v2774
        %v3621 = vunpack.c.h.b16 %v2774
        %v3622 = vunpack.c.l.b16 %v2775
        %v3623 = vunpack.c.h.b16 %v2775
        %v3624 = vunpack.c.l.b16 %v2776
        %v3625 = vunpack.c.h.b16 %v2776
        %v3626 = vunpack.c.l.b16 %v2777
        %v3627 = vunpack.c.h.b16 %v2777
        %v3628 = vunpack.c.l.b16 %v2778
        %v3629 = vunpack.c.h.b16 %v2778
        %v3630 = vunpack.c.l.b16 %v2779
        %v3631 = vunpack.c.h.b16 %v2779
        %v3632 = vunpack.c.l.b16 %v2780
        %v3633 = vunpack.c.h.b16 %v2780
        %v3634 = vunpack.c.l.b16 %v2781
        %v3635 = vunpack.c.h.b16 %v2781
        %v3636 = vunpack.c.l.b16 %v2782
        %v3637 = vunpack.c.h.b16 %v2782
        %v3638 = vunpack.c.l.b16 %v2783
        %v3639 = vunpack.c.h.b16 %v2783
        %v3640 = vunpack.c.l.b16 %v2784
        %v3641 = vunpack.c.h.b16 %v2784
        %v3642 = vunpack.c.l.b16 %v2785
        %v3643 = vunpack.c.h.b16 %v2785
        %v3644 = vunpack.c.l.b16 %v2786
        %v3645 = vunpack.c.h.b16 %v2786
        %v3646 = vunpack.c.l.b16 %v2787
        %v3647 = vunpack.c.h.b16 %v2787
        %v3648 = vunpack.c.l.b16 %v2788
        %v3649 = vunpack.c.h.b16 %v2788
        %v3650 = vunpack.c.l.b16 %v2789
        %v3651 = vunpack.c.h.b16 %v2789
        %v3652 = vunpack.c.l.b16 %v2790
        %v3653 = vunpack.c.h.b16 %v2790
        %v3654 = vunpack.c.l.b16 %v2791
        %v3655 = vunpack.c.h.b16 %v2791
        %v3656 = vunpack.c.l.b16 %v2792
        %v3657 = vunpack.c.h.b16 %v2792
        %v3658 = vunpack.c.l.b16 %v2793
        %v3659 = vunpack.c.h.b16 %v2793
        %v3660 = vunpack.c.l.b16 %v2794
        %v3661 = vunpack.c.h.b16 %v2794
        %v3662 = vunpack.c.l.b16 %v2795
        %v3663 = vunpack.c.h.b16 %v2795
        %v3664 = vunpack.c.l.b16 %v2796
        %v3665 = vunpack.c.h.b16 %v2796
        %v3666 = vunpack.c.l.b16 %v2797
        %v3667 = vunpack.c.h.b16 %v2797
        %v3668 = vunpack.c.l.b16 %v2798
        %v3669 = vunpack.c.h.b16 %v2798
        %v3670 = vunpack.c.l.b16 %v2799
        %v3671 = vunpack.c.h.b16 %v2799
        %v3672 = vunpack.c.l.b16 %v2800
        %v3673 = vunpack.c.h.b16 %v2800
        %v3674 = vunpack.c.l.b16 %v2801
        %v3675 = vunpack.c.h.b16 %v2801
        %v3676 = vunpack.c.l.b16 %v2802
        %v3677 = vunpack.c.h.b16 %v2802
        %v3678 = vunpack.c.l.b16 %v2803
        %v3679 = vunpack.c.h.b16 %v2803
        %v3680 = vunpack.c.l.b16 %v2804
        %v3681 = vunpack.c.h.b16 %v2804
        %v3682 = vunpack.c.l.b16 %v2805
        %v3683 = vunpack.c.h.b16 %v2805
        %v3684 = vunpack.c.l.b16 %v2806
        %v3685 = vunpack.c.h.b16 %v2806
        %v3686 = vunpack.c.l.b16 %v2807
        %v3687 = vunpack.c.h.b16 %v2807
        %v3688 = vunpack.c.l.b16 %v2808
        %v3689 = vunpack.c.h.b16 %v2808
        %v3690 = vunpack.c.l.b16 %v2809
        %v3691 = vunpack.c.h.b16 %v2809
        %v3692 = vunpack.c.l.b16 %v2810
        %v3693 = vunpack.c.h.b16 %v2810
        %v3694 = vunpack.c.l.b16 %v2811
        %v3695 = vunpack.c.h.b16 %v2811
        %v3696 = vunpack.c.l.b16 %v2812
        %v3697 = vunpack.c.h.b16 %v2812
        %v3698 = vunpack.c.l.b16 %v2813
        %v3699 = vunpack.c.h.b16 %v2813
        %v3700 = vunpack.c.l.b16 %v2814
        %v3701 = vunpack.c.h.b16 %v2814
        %v3702 = vunpack.c.l.b16 %v2815
        %v3703 = vunpack.c.h.b16 %v2815
        %v3704 = vunpack.c.l.b16 %v2816
        %v3705 = vunpack.c.h.b16 %v2816
        %v3706 = vunpack.c.l.b16 %v2817
        %v3707 = vunpack.c.h.b16 %v2817
        %v3708 = vunpack.c.l.b16 %v2818
        %v3709 = vunpack.c.h.b16 %v2818
        %v3710 = vunpack.c.l.b16 %v2819
        %v3711 = vunpack.c.h.b16 %v2819
        %v3712 = vunpack.c.l.b16 %v2820
        %v3713 = vunpack.c.h.b16 %v2820
        %v3714 = vunpack.c.l.b16 %v2821
        %v3715 = vunpack.c.h.b16 %v2821
        %v3716 = vunpack.c.l.b16 %v2822
        %v3717 = vunpack.c.h.b16 %v2822
        %v3718 = vunpack.c.l.b16 %v2823
        %v3719 = vunpack.c.h.b16 %v2823
        %v3720 = vunpack.c.l.b16 %v2824
        %v3721 = vunpack.c.h.b16 %v2824
        %v3722 = vunpack.c.l.b16 %v2825
        %v3723 = vunpack.c.h.b16 %v2825
        %v3724 = vunpack.c.l.b16 %v2826
        %v3725 = vunpack.c.h.b16 %v2826
        %v3726 = vunpack.c.l.b16 %v2827
        %v3727 = vunpack.c.h.b16 %v2827
        %v3728 = vunpack.c.l.b16 %v2828
        %v3729 = vunpack.c.h.b16 %v2828
        %v3730 = vunpack.c.l.b16 %v2829
        %v3731 = vunpack.c.h.b16 %v2829
        %v3732 = vunpack.c.l.b16 %v2830
        %v3733 = vunpack.c.h.b16 %v2830
        %v3734 = vunpack.c.l.b16 %v2831
        %v3735 = vunpack.c.h.b16 %v2831
        %v3736 = vunpack.c.l.b16 %v2832
        %v3737 = vunpack.c.h.b16 %v2832
        %v3738 = vunpack.c.l.b16 %v2833
        %v3739 = vunpack.c.h.b16 %v2833
        %v3740 = vunpack.c.l.b16 %v2834
        %v3741 = vunpack.c.h.b16 %v2834
        %v3742 = vunpack.c.l.b16 %v2835
        %v3743 = vunpack.c.h.b16 %v2835
        %v3744 = vunpack.c.l.b16 %v2836
        %v3745 = vunpack.c.h.b16 %v2836
        %v3746 = vunpack.c.l.b16 %v2837
        %v3747 = vunpack.c.h.b16 %v2837
        %v3748 = vunpack.c.l.b16 %v2838
        %v3749 = vunpack.c.h.b16 %v2838
        %v3750 = vunpack.c.l.b16 %v2839
        %v3751 = vunpack.c.h.b16 %v2839
        %v3752 = vunpack.c.l.b16 %v2840
        %v3753 = vunpack.c.h.b16 %v2840
        %v3754 = vunpack.c.l.b16 %v2841
        %v3755 = vunpack.c.h.b16 %v2841
        %v3756 = vunpack.c.l.b16 %v2842
        %v3757 = vunpack.c.h.b16 %v2842
        %v3758 = vunpack.c.l.b16 %v2843
        %v3759 = vunpack.c.h.b16 %v2843
        %v3760 = vunpack.c.l.b16 %v2844
        %v3761 = vunpack.c.h.b16 %v2844
        %v3762 = vunpack.c.l.b16 %v2845
        %v3763 = vunpack.c.h.b16 %v2845
        %v3764 = vunpack.c.l.b16 %v2846
        %v3765 = vunpack.c.h.b16 %v2846
        %v3766 = vunpack.c.l.b16 %v2847
        %v3767 = vunpack.c.h.b16 %v2847
        %v3768 = vunpack.c.l.b16 %v2848
        %v3769 = vunpack.c.h.b16 %v2848
        %v3770 = vunpack.c.l.b16 %v2849
        %v3771 = vunpack.c.h.b16 %v2849
        %v3772 = vunpack.c.l.b16 %v2850
        %v3773 = vunpack.c.h.b16 %v2850
        %v3774 = vunpack.c.l.b16 %v2851
        %v3775 = vunpack.c.h.b16 %v2851
        %v3776 = vunpack.c.l.b16 %v2852
        %v3777 = vunpack.c.h.b16 %v2852
        %v3778 = vunpack.c.l.b16 %v2853
        %v3779 = vunpack.c.h.b16 %v2853
        %v3780 = vunpack.c.l.b16 %v2854
        %v3781 = vunpack.c.h.b16 %v2854
        %v3782 = vunpack.c.l.b16 %v2855
        %v3783 = vunpack.c.h.b16 %v2855
        %v3784 = vunpack.c.l.b16 %v2856
        %v3785 = vunpack.c.h.b16 %v2856
        %v3786 = vunpack.c.l.b16 %v2857
        %v3787 = vunpack.c.h.b16 %v2857
        %v3788 = vunpack.c.l.b16 %v2858
        %v3789 = vunpack.c.h.b16 %v2858
        %v3790 = vunpack.c.l.b16 %v2859
        %v3791 = vunpack.c.h.b16 %v2859
        %v3792 = vunpack.c.l.b16 %v2860
        %v3793 = vunpack.c.h.b16 %v2860
        %v3794 = vunpack.c.l.b16 %v2861
        %v3795 = vunpack.c.h.b16 %v2861
        %v3796 = vunpack.c.l.b16 %v2862
        %v3797 = vunpack.c.h.b16 %v2862
        %v3798 = vunpack.c.l.b16 %v2863
        %v3799 = vunpack.c.h.b16 %v2863
        %v3800 = vunpack.c.l.b16 %v2864
        %v3801 = vunpack.c.h.b16 %v2864
        %v3802 = vunpack.c.l.b16 %v2865
        %v3803 = vunpack.c.h.b16 %v2865
        %v3804 = vunpack.c.l.b16 %v2866
        %v3805 = vunpack.c.h.b16 %v2866
        %v3806 = vunpack.c.l.b16 %v2867
        %v3807 = vunpack.c.h.b16 %v2867
        %v3808 = vunpack.c.l.b16 %v2868
        %v3809 = vunpack.c.h.b16 %v2868
        %v3810 = vunpack.c.l.b16 %v2869
        %v3811 = vunpack.c.h.b16 %v2869
        %v3812 = vunpack.c.l.b16 %v2870
        %v3813 = vunpack.c.h.b16 %v2870
        %v3814 = vunpack.c.l.b16 %v2871
        %v3815 = vunpack.c.h.b16 %v2871
        %v3816 = vunpack.c.l.b16 %v2872
        %v3817 = vunpack.c.h.b16 %v2872
        %v3818 = vunpack.c.l.b16 %v2873
        %v3819 = vunpack.c.h.b16 %v2873
        %v3820 = vunpack.c.l.b16 %v2874
        %v3821 = vunpack.c.h.b16 %v2874
        %v3822 = vunpack.c.l.b16 %v2875
        %v3823 = vunpack.c.h.b16 %v2875
        %v3824 = vunpack.c.l.b16 %v2876
        %v3825 = vunpack.c.h.b16 %v2876
        %v3826 = vunpack.c.l.b16 %v2877
        %v3827 = vunpack.c.h.b16 %v2877
        %v3828 = vunpack.c.l.b16 %v2878
        %v3829 = vunpack.c.h.b16 %v2878
        %v3830 = vunpack.c.l.b16 %v2879
        %v3831 = vunpack.c.h.b16 %v2879
        %v3832 = vunpack.c.l.b16 %v2880
        %v3833 = vunpack.c.h.b16 %v2880
        %v3834 = vunpack.c.l.b16 %v2881
        %v3835 = vunpack.c.h.b16 %v2881
        %v3836 = vunpack.c.l.b16 %v2882
        %v3837 = vunpack.c.h.b16 %v2882
        %v3838 = vunpack.c.l.b16 %v2883
        %v3839 = vunpack.c.h.b16 %v2883
        %v3840 = vunpack.c.l.b16 %v2884
        %v3841 = vunpack.c.h.b16 %v2884
        %v3842 = vunpack.c.l.b16 %v2885
        %v3843 = vunpack.c.h.b16 %v2885
        %v3844 = vunpack.c.l.b16 %v2886
        %v3845 = vunpack.c.h.b16 %v2886
        %v3846 = vunpack.c.l.b16 %v2887
        %v3847 = vunpack.c.h.b16 %v2887
        %v3848 = vunpack.c.l.b16 %v2888
        %v3849 = vunpack.c.h.b16 %v2888
        %v3850 = vunpack.c.l.b16 %v2889
        %v3851 = vunpack.c.h.b16 %v2889
        %v3852 = vunpack.c.l.b16 %v2890
        %v3853 = vunpack.c.h.b16 %v2890
        %v3854 = vunpack.c.l.b16 %v2891
        %v3855 = vunpack.c.h.b16 %v2891
        %v3856 = vunpack.c.l.b16 %v2892
        %v3857 = vunpack.c.h.b16 %v2892
        %v3858 = vunpack.c.l.b16 %v2893
        %v3859 = vunpack.c.h.b16 %v2893
        %v3860 = vunpack.c.l.b16 %v2894
        %v3861 = vunpack.c.h.b16 %v2894
        %v3862 = vunpack.c.l.b16 %v2895
        %v3863 = vunpack.c.h.b16 %v2895
        %v3864 = vunpack.c.l.b16 %v2896
        %v3865 = vunpack.c.h.b16 %v2896
        %v3866 = vunpack.c.l.b16 %v2897
        %v3867 = vunpack.c.h.b16 %v2897
        %v3868 = vunpack.c.l.b16 %v2898
        %v3869 = vunpack.c.h.b16 %v2898
        %v3870 = vunpack.c.l.b16 %v2899
        %v3871 = vunpack.c.h.b16 %v2899
        %v3872 = vunpack.c.l.b16 %v2900
        %v3873 = vunpack.c.h.b16 %v2900
        %v3874 = vunpack.c.l.b16 %v2901
        %v3875 = vunpack.c.h.b16 %v2901
        %v3876 = vunpack.c.l.b16 %v2902
        %v3877 = vunpack.c.h.b16 %v2902
        %v3878 = vunpack.c.l.b16 %v2903
        %v3879 = vunpack.c.h.b16 %v2903
        %v3880 = vunpack.c.l.b16 %v2904
        %v3881 = vunpack.c.h.b16 %v2904
        %v3882 = vunpack.c.l.b16 %v2905
        %v3883 = vunpack.c.h.b16 %v2905
        %v3884 = vunpack.c.l.b16 %v2906
        %v3885 = vunpack.c.h.b16 %v2906
        %v3886 = vunpack.c.l.b16 %v2907
        %v3887 = vunpack.c.h.b16 %v2907
        %v3888 = vunpack.c.l.b16 %v2908
        %v3889 = vunpack.c.h.b16 %v2908
        %v3890 = vunpack.c.l.b16 %v2909
        %v3891 = vunpack.c.h.b16 %v2909
        %v3892 = vunpack.c.l.b16 %v2910
        %v3893 = vunpack.c.h.b16 %v2910
        %v3894 = vunpack.c.l.b16 %v2911
        %v3895 = vunpack.c.h.b16 %v2911
        %v3896 = vunpack.c.l.b16 %v2912
        %v3897 = vunpack.c.h.b16 %v2912
        %v3898 = vunpack.c.l.b16 %v2913
        %v3899 = vunpack.c.h.b16 %v2913
        %v3900 = vunpack.c.l.b16 %v2914
        %v3901 = vunpack.c.h.b16 %v2914
        %v3902 = vunpack.c.l.b16 %v2915
        %v3903 = vunpack.c.h.b16 %v2915
        %v3904 = vunpack.c.l.b16 %v2916
        %v3905 = vunpack.c.h.b16 %v2916
        %v3906 = vunpack.c.l.b16 %v2917
        %v3907 = vunpack.c.h.b16 %v2917
        %v3908 = vunpack.c.l.b16 %v2918
        %v3909 = vunpack.c.h.b16 %v2918
        %v3910 = vunpack.c.l.b16 %v2919
        %v3911 = vunpack.c.h.b16 %v2919
        %v3912 = vunpack.c.l.b16 %v2920
        %v3913 = vunpack.c.h.b16 %v2920
        %v3914 = vunpack.c.l.b16 %v2921
        %v3915 = vunpack.c.h.b16 %v2921
        %v3916 = vunpack.c.l.b16 %v2922
        %v3917 = vunpack.c.h.b16 %v2922
        %v3918 = vunpack.c.l.b16 %v2923
        %v3919 = vunpack.c.h.b16 %v2923
        %v3920 = vunpack.c.l.b16 %v2924
        %v3921 = vunpack.c.h.b16 %v2924
        %v3922 = vunpack.c.l.b16 %v2925
        %v3923 = vunpack.c.h.b16 %v2925
        %v3924 = vunpack.c.l.b16 %v2926
        %v3925 = vunpack.c.h.b16 %v2926
        %v3926 = vunpack.c.l.b16 %v2927
        %v3927 = vunpack.c.h.b16 %v2927
        %v3928 = vunpack.c.l.b16 %v2928
        %v3929 = vunpack.c.h.b16 %v2928
        %v3930 = vunpack.c.l.b16 %v2929
        %v3931 = vunpack.c.h.b16 %v2929
        %v3932 = vunpack.c.l.b16 %v2930
        %v3933 = vunpack.c.h.b16 %v2930
        %v3934 = vunpack.c.l.b16 %v2931
        %v3935 = vunpack.c.h.b16 %v2931
        %v3936 = vunpack.c.l.b16 %v2932
        %v3937 = vunpack.c.h.b16 %v2932
        %v3938 = vunpack.c.l.b16 %v2933
        %v3939 = vunpack.c.h.b16 %v2933
        %v3940 = vunpack.c.l.b16 %v2934
        %v3941 = vunpack.c.h.b16 %v2934
        %v3942 = vunpack.c.l.b16 %v2935
        %v3943 = vunpack.c.h.b16 %v2935
        %v3944 = vunpack.c.l.b16 %v2936
        %v3945 = vunpack.c.h.b16 %v2936
        %v3946 = vunpack.c.l.b16 %v2937
        %v3947 = vunpack.c.h.b16 %v2937
        %v3948 = vunpack.c.l.b16 %v2938
        %v3949 = vunpack.c.h.b16 %v2938
        %v3950 = vunpack.c.l.b16 %v2939
        %v3951 = vunpack.c.h.b16 %v2939
        %v3952 = vunpack.c.l.b16 %v2940
        %v3953 = vunpack.c.h.b16 %v2940
        %v3954 = vunpack.c.l.b16 %v2941
        %v3955 = vunpack.c.h.b16 %v2941
        %v3956 = vunpack.c.l.b16 %v2942
        %v3957 = vunpack.c.h.b16 %v2942
        %v3958 = vunpack.c.l.b16 %v2943
        %v3959 = vunpack.c.h.b16 %v2943
        %v3960 = vunpack.c.l.b16 %v2944
        %v3961 = vunpack.c.h.b16 %v2944
        %v3962 = vunpack.c.l.b16 %v2945
        %v3963 = vunpack.c.h.b16 %v2945
        %v3964 = vunpack.c.l.b16 %v2946
        %v3965 = vunpack.c.h.b16 %v2946
        %v3966 = vunpack.c.l.b16 %v2947
        %v3967 = vunpack.c.h.b16 %v2947
        %v3968 = vunpack.c.l.b16 %v2948
        %v3969 = vunpack.c.h.b16 %v2948
        %v3970 = vunpack.c.l.b16 %v2949
        %v3971 = vunpack.c.h.b16 %v2949
        %v3972 = vunpack.c.l.b16 %v2950
        %v3973 = vunpack.c.h.b16 %v2950
        %v3974 = vunpack.c.l.b16 %v2951
        %v3975 = vunpack.c.h.b16 %v2951
        %v3976 = vunpack.c.l.b16 %v2952
        %v3977 = vunpack.c.h.b16 %v2952
        %v3978 = vunpack.c.l.b16 %v2953
        %v3979 = vunpack.c.h.b16 %v2953
        %v3980 = vunpack.c.l.b16 %v2954
        %v3981 = vunpack.c.h.b16 %v2954
        %v3982 = vunpack.c.l.b16 %v2955
        %v3983 = vunpack.c.h.b16 %v2955
        %v3984 = vunpack.c.l.b16 %v2956
        %v3985 = vunpack.c.h.b16 %v2956
        %v3986 = vunpack.c.l.b16 %v2957
        %v3987 = vunpack.c.h.b16 %v2957
        %v3988 = vunpack.c.l.b16 %v2958
        %v3989 = vunpack.c.h.b16 %v2958
        %v3990 = vunpack.c.l.b16 %v2959
        %v3991 = vunpack.c.h.b16 %v2959
        %v3992 = vunpack.c.l.b16 %v2960
        %v3993 = vunpack.c.h.b16 %v2960
        %v3994 = vunpack.c.l.b16 %v2961
        %v3995 = vunpack.c.h.b16 %v2961
        %v3996 = vunpack.c.l.b16 %v2962
        %v3997 = vunpack.c.h.b16 %v2962
        %v3998 = vunpack.c.l.b16 %v2963
        %v3999 = vunpack.c.h.b16 %v2963
        %v4000 = vunpack.c.l.b16 %v2964
        %v4001 = vunpack.c.h.b16 %v2964
        %v4002 = vunpack.c.l.b16 %v2965
        %v4003 = vunpack.c.h.b16 %v2965
        %v4004 = vunpack.c.l.b16 %v2966
        %v4005 = vunpack.c.h.b16 %v2966
        %v4006 = vunpack.c.l.b16 %v2967
        %v4007 = vunpack.c.h.b16 %v2967
        %v4008 = vunpack.c.l.b16 %v2968
        %v4009 = vunpack.c.h.b16 %v2968
        %v4010 = vunpack.c.l.b16 %v2969
        %v4011 = vunpack.c.h.b16 %v2969
        %v4012 = vunpack.c.l.b16 %v2970
        %v4013 = vunpack.c.h.b16 %v2970
        %v4014 = vunpack.c.l.b16 %v2971
        %v4015 = vunpack.c.h.b16 %v2971
        %v4016 = vunpack.c.l.b16 %v2972
        %v4017 = vunpack.c.h.b16 %v2972
        %v4018 = vunpack.c.l.b16 %v2973
        %v4019 = vunpack.c.h.b16 %v2973
        %v4020 = vunpack.c.l.b16 %v2974
        %v4021 = vunpack.c.h.b16 %v2974
        %v4022 = vunpack.c.l.b16 %v2975
        %v4023 = vunpack.c.h.b16 %v2975
        %v4024 = vunpack.c.l.b16 %v2976
        %v4025 = vunpack.c.h.b16 %v2976
        %v4026 = vunpack.c.l.b16 %v2977
        %v4027 = vunpack.c.h.b16 %v2977
        %v4028 = vunpack.c.l.b16 %v2978
        %v4029 = vunpack.c.h.b16 %v2978
        %v4030 = vunpack.c.l.b16 %v2979
        %v4031 = vunpack.c.h.b16 %v2979
        %v4032 = vunpack.c.l.b16 %v2980
        %v4033 = vunpack.c.h.b16 %v2980
        %v4034 = vunpack.c.l.b16 %v2981
        %v4035 = vunpack.c.h.b16 %v2981
        %v4036 = vunpack.c.l.b16 %v2982
        %v4037 = vunpack.c.h.b16 %v2982
        %v4038 = vunpack.c.l.b16 %v2983
        %v4039 = vunpack.c.h.b16 %v2983
        %v4040 = vunpack.c.l.b16 %v2984
        %v4041 = vunpack.c.h.b16 %v2984
        %v4042 = vunpack.c.l.b16 %v2985
        %v4043 = vunpack.c.h.b16 %v2985
        %v4044 = vunpack.c.l.b16 %v2986
        %v4045 = vunpack.c.h.b16 %v2986
        %v4046 = vunpack.c.l.b16 %v2987
        %v4047 = vunpack.c.h.b16 %v2987
        %v4048 = vunpack.c.l.b16 %v2988
        %v4049 = vunpack.c.h.b16 %v2988
        %v4050 = vunpack.c.l.b16 %v2989
        %v4051 = vunpack.c.h.b16 %v2989
        %v4052 = vunpack.c.l.b16 %v2990
        %v4053 = vunpack.c.h.b16 %v2990
        %v4054 = vunpack.c.l.b16 %v2991
        %v4055 = vunpack.c.h.b16 %v2991
        %v4056 = vunpack.c.l.b16 %v2992
        %v4057 = vunpack.c.h.b16 %v2992
        %v4058 = vunpack.c.l.b16 %v2993
        %v4059 = vunpack.c.h.b16 %v2993
        %v4060 = vunpack.c.l.b16 %v2994
        %v4061 = vunpack.c.h.b16 %v2994
        %v4062 = vunpack.c.l.b16 %v2995
        %v4063 = vunpack.c.h.b16 %v2995
        %v4064 = vunpack.c.l.b16 %v2996
        %v4065 = vunpack.c.h.b16 %v2996
        %v4066 = vunpack.c.l.b16 %v2997
        %v4067 = vunpack.c.h.b16 %v2997
        %v4068 = vunpack.c.l.b16 %v2998
        %v4069 = vunpack.c.h.b16 %v2998
        %v4070 = vunpack.c.l.b16 %v2999
        %v4071 = vunpack.c.h.b16 %v2999
        %v4072 = vunpack.c.l.b16 %v3000
        %v4073 = vunpack.c.h.b16 %v3000
        %v4074 = vunpack.c.l.b16 %v3001
        %v4075 = vunpack.c.h.b16 %v3001
        %v4076 = vunpack.c.l.b16 %v3002
        %v4077 = vunpack.c.h.b16 %v3002
        %v4078 = vunpack.c.l.b16 %v3003
        %v4079 = vunpack.c.h.b16 %v3003
        %v4080 = vunpack.c.l.b16 %v3004
        %v4081 = vunpack.c.h.b16 %v3004
        %v4082 = vunpack.c.l.b16 %v3005
        %v4083 = vunpack.c.h.b16 %v3005
        %v4084 = vunpack.c.l.b16 %v3006
        %v4085 = vunpack.c.h.b16 %v3006
        %v4086 = vunpack.c.l.b16 %v3007
        %v4087 = vunpack.c.h.b16 %v3007
        %v4088 = vunpack.c.l.b16 %v3008
        %v4089 = vunpack.c.h.b16 %v3008
        %v4090 = vunpack.c.l.b16 %v3009
        %v4091 = vunpack.c.h.b16 %v3009
        %v4092 = vunpack.c.l.b16 %v3010
        %v4093 = vunpack.c.h.b16 %v3010
        %v4094 = vunpack.c.l.b16 %v3011
        %v4095 = vunpack.c.h.b16 %v3011
        %v4096 = vunpack.c.l.b16 %v3012
        %v4097 = vunpack.c.h.b16 %v3012
        %v4098 = vunpack.c.l.b16 %v3013
        %v4099 = vunpack.c.h.b16 %v3013
        %v4100 = vunpack.c.l.b16 %v3014
        %v4101 = vunpack.c.h.b16 %v3014
        %v4102 = vunpack.c.l.b16 %v3015
        %v4103 = vunpack.c.h.b16 %v3015
        %v4104 = vunpack.c.l.b16 %v3016
        %v4105 = vunpack.c.h.b16 %v3016
        %v4106 = vunpack.c.l.b16 %v3017
        %v4107 = vunpack.c.h.b16 %v3017
        %v4108 = vunpack.c.l.b16 %v3018
        %v4109 = vunpack.c.h.b16 %v3018
        %v4110 = vunpack.c.l.b16 %v3019
        %v4111 = vunpack.c.h.b16 %v3019
        %v4112 = vunpack.c.l.b16 %v3020
        %v4113 = vunpack.c.h.b16 %v3020
        %v4114 = vunpack.c.l.b16 %v3021
        %v4115 = vunpack.c.h.b16 %v3021
        %v4116 = vunpack.c.l.b16 %v3022
        %v4117 = vunpack.c.h.b16 %v3022
        %v4118 = vunpack.c.l.b16 %v3023
        %v4119 = vunpack.c.h.b16 %v3023
        %v4120 = vunpack.c.l.b16 %v3024
        %v4121 = vunpack.c.h.b16 %v3024
        %v4122 = vunpack.c.l.b16 %v3025
        %v4123 = vunpack.c.h.b16 %v3025
        %v4124 = vunpack.c.l.b16 %v3026
        %v4125 = vunpack.c.h.b16 %v3026
        %v4126 = vunpack.c.l.b16 %v3027
        %v4127 = vunpack.c.h.b16 %v3027
        %v4128 = vunpack.c.l.b16 %v3028
        %v4129 = vunpack.c.h.b16 %v3028
        %v4130 = vunpack.c.l.b16 %v3029
        %v4131 = vunpack.c.h.b16 %v3029
        %v4132 = vunpack.c.l.b16 %v3030
        %v4133 = vunpack.c.h.b16 %v3030
        %v4134 = vunpack.c.l.b16 %v3031
        %v4135 = vunpack.c.h.b16 %v3031
        %v4136 = vunpack.c.l.b16 %v3032
        %v4137 = vunpack.c.h.b16 %v3032
        %v4138 = vunpack.c.l.b16 %v3033
        %v4139 = vunpack.c.h.b16 %v3033
        %v4140 = vunpack.c.l.b16 %v3034
        %v4141 = vunpack.c.h.b16 %v3034
        %v4142 = vunpack.c.l.b16 %v3035
        %v4143 = vunpack.c.h.b16 %v3035
        %v4144 = vunpack.c.l.b16 %v3036
        %v4145 = vunpack.c.h.b16 %v3036
        %v4146 = vunpack.c.l.b16 %v3037
        %v4147 = vunpack.c.h.b16 %v3037
        %v4148 = vunpack.c.l.b16 %v3038
        %v4149 = vunpack.c.h.b16 %v3038
        %v4150 = vunpack.c.l.b16 %v3039
        %v4151 = vunpack.c.h.b16 %v3039
        %v4152 = vunpack.c.l.b16 %v3040
        %v4153 = vunpack.c.h.b16 %v3040
        %v4154 = vunpack.c.l.b16 %v3041
        %v4155 = vunpack.c.h.b16 %v3041
        %v4156 = vunpack.c.l.b16 %v3042
        %v4157 = vunpack.c.h.b16 %v3042
        %v4158 = vunpack.c.l.b16 %v3043
        %v4159 = vunpack.c.h.b16 %v3043
        %v4160 = vunpack.c.l.b16 %v3044
        %v4161 = vunpack.c.h.b16 %v3044
        %v4162 = vunpack.c.l.b16 %v3045
        %v4163 = vunpack.c.h.b16 %v3045
        %v4164 = vunpack.c.l.b16 %v3046
        %v4165 = vunpack.c.h.b16 %v3046
        %v4166 = vunpack.c.l.b16 %v3047
        %v4167 = vunpack.c.h.b16 %v3047
        %v4168 = vunpack.c.l.b16 %v3048
        %v4169 = vunpack.c.h.b16 %v3048
        %v4170 = vunpack.c.l.b16 %v3049
        %v4171 = vunpack.c.h.b16 %v3049
        %v4172 = vunpack.c.l.b16 %v3050
        %v4173 = vunpack.c.h.b16 %v3050
        %v4174 = vunpack.c.l.b16 %v3051
        %v4175 = vunpack.c.h.b16 %v3051
        %v4176 = vunpack.c.l.b16 %v3052
        %v4177 = vunpack.c.h.b16 %v3052
        %v4178 = vunpack.c.l.b16 %v3053
        %v4179 = vunpack.c.h.b16 %v3053
        %v4180 = vunpack.c.l.b16 %v3054
        %v4181 = vunpack.c.h.b16 %v3054
        %v4182 = vunpack.c.l.b16 %v3055
        %v4183 = vunpack.c.h.b16 %v3055
        %v4184 = vunpack.c.l.b16 %v3056
        %v4185 = vunpack.c.h.b16 %v3056
        %v4186 = vunpack.c.l.b16 %v3057
        %v4187 = vunpack.c.h.b16 %v3057
        %v4188 = vunpack.c.l.b16 %v3058
        %v4189 = vunpack.c.h.b16 %v3058
        %v4190 = vunpack.c.l.b16 %v3059
        %v4191 = vunpack.c.h.b16 %v3059
        %v4192 = vunpack.c.l.b16 %v3060
        %v4193 = vunpack.c.h.b16 %v3060
        %v4194 = vunpack.c.l.b16 %v3061
        %v4195 = vunpack.c.h.b16 %v3061
        %v4196 = vunpack.c.l.b16 %v3062
        %v4197 = vunpack.c.h.b16 %v3062
        %v4198 = vunpack.c.l.b16 %v3063
        %v4199 = vunpack.c.h.b16 %v3063
        %v4200 = vunpack.c.l.b16 %v3064
        %v4201 = vunpack.c.h.b16 %v3064
        %v4202 = vunpack.c.l.b16 %v3065
        %v4203 = vunpack.c.h.b16 %v3065
        %v4204 = vunpack.c.l.b16 %v3066
        %v4205 = vunpack.c.h.b16 %v3066
        %v4206 = vunpack.c.l.b16 %v3067
        %v4207 = vunpack.c.h.b16 %v3067
        %v4208 = vunpack.c.l.b16 %v3068
        %v4209 = vunpack.c.h.b16 %v3068
        %v4210 = vunpack.c.l.b16 %v3069
        %v4211 = vunpack.c.h.b16 %v3069
        %v4212 = vunpack.c.l.b16 %v3070
        %v4213 = vunpack.c.h.b16 %v3070
        %v4214 = vunpack.c.l.b16 %v3071
        %v4215 = vunpack.c.h.b16 %v3071
        %v4216 = vunpack.c.l.b16 %v3072
        %v4217 = vunpack.c.h.b16 %v3072
        %v4218 = vunpack.c.l.b16 %v3073
        %v4219 = vunpack.c.h.b16 %v3073
        %v4220 = vunpack.c.l.b16 %v3074
        %v4221 = vunpack.c.h.b16 %v3074
        %v4222 = vunpack.c.l.b16 %v3075
        %v4223 = vunpack.c.h.b16 %v3075
        %v4224 = vunpack.c.l.b16 %v3076
        %v4225 = vunpack.c.h.b16 %v3076
        %v4226 = vunpack.c.l.b16 %v3077
        %v4227 = vunpack.c.h.b16 %v3077
        %v4228 = vunpack.c.l.b16 %v3078
        %v4229 = vunpack.c.h.b16 %v3078
        %v4230 = vunpack.c.l.b16 %v3079
        %v4231 = vunpack.c.h.b16 %v3079
        %v4232 = vunpack.c.l.b16 %v3080
        %v4233 = vunpack.c.h.b16 %v3080
        %v4234 = vunpack.c.l.b16 %v3081
        %v4235 = vunpack.c.h.b16 %v3081
        %v4236 = vunpack.c.l.b16 %v3082
        %v4237 = vunpack.c.h.b16 %v3082
        %v4238 = vunpack.c.l.b16 %v3083
        %v4239 = vunpack.c.h.b16 %v3083
        %v4240 = vunpack.c.l.b16 %v3084
        %v4241 = vunpack.c.h.b16 %v3084
        %v4242 = vunpack.c.l.b16 %v3085
        %v4243 = vunpack.c.h.b16 %v3085
        %v4244 = vunpack.c.l.b16 %v3086
        %v4245 = vunpack.c.h.b16 %v3086
        %v4246 = vunpack.c.l.b16 %v3087
        %v4247 = vunpack.c.h.b16 %v3087
        %v4248 = vunpack.c.l.b16 %v3088
        %v4249 = vunpack.c.h.b16 %v3088
        %v4250 = vunpack.c.l.b16 %v3089
        %v4251 = vunpack.c.h.b16 %v3089
        %v4252 = vunpack.c.l.b16 %v3090
        %v4253 = vunpack.c.h.b16 %v3090
        %v4254 = vunpack.c.l.b16 %v3091
        %v4255 = vunpack.c.h.b16 %v3091
        %v4256 = vunpack.c.l.b16 %v3092
        %v4257 = vunpack.c.h.b16 %v3092
        %v4258 = vunpack.c.l.b16 %v3093
        %v4259 = vunpack.c.h.b16 %v3093
        %v4260 = vunpack.c.l.b16 %v3094
        %v4261 = vunpack.c.h.b16 %v3094
        %v4262 = vunpack.c.l.b16 %v3095
        %v4263 = vunpack.c.h.b16 %v3095
        %v4264 = vunpack.c.l.b16 %v3096
        %v4265 = vunpack.c.h.b16 %v3096
        %v4266 = vunpack.c.l.b16 %v3097
        %v4267 = vunpack.c.h.b16 %v3097
        %v4268 = vunpack.c.l.b16 %v3098
        %v4269 = vunpack.c.h.b16 %v3098
        %v4270 = vunpack.c.l.b16 %v3099
        %v4271 = vunpack.c.h.b16 %v3099
        %v4272 = vunpack.c.l.b16 %v3100
        %v4273 = vunpack.c.h.b16 %v3100
        %v4274 = vunpack.c.l.b16 %v3101
        %v4275 = vunpack.c.h.b16 %v3101
        %v4276 = vunpack.c.l.b16 %v3102
        %v4277 = vunpack.c.h.b16 %v3102
        %v4278 = vunpack.c.l.b16 %v3103
        %v4279 = vunpack.c.h.b16 %v3103
        %v4280 = vunpack.c.l.b16 %v3104
        %v4281 = vunpack.c.h.b16 %v3104
        %v4282 = vunpack.c.l.b16 %v3105
        %v4283 = vunpack.c.h.b16 %v3105
        %v4284 = vunpack.c.l.b16 %v3106
        %v4285 = vunpack.c.h.b16 %v3106
        %v4286 = vunpack.c.l.b16 %v3107
        %v4287 = vunpack.c.h.b16 %v3107
        %v4288 = vunpack.c.l.b16 %v3108
        %v4289 = vunpack.c.h.b16 %v3108
        %v4290 = vunpack.c.l.b16 %v3109
        %v4291 = vunpack.c.h.b16 %v3109
        %v4292 = vunpack.c.l.b16 %v3110
        %v4293 = vunpack.c.h.b16 %v3110
        %v4294 = vunpack.c.l.b16 %v3111
        %v4295 = vunpack.c.h.b16 %v3111
        %v4296 = vpack.c.b16 %v3534, %v3528
        %v4297 = vpack.c.b16 %v3535, %v3529
        %v4298 = vpack.c.b16 %v3536, %v3530
        %v4299 = vpack.c.b16 %v3537, %v3531
        %v4300 = vpack.c.b16 %v3538, %v3532
        %v4301 = vpack.c.b16 %v3539, %v3533
        %v4302 = vpack.c.b16 %v3546, %v3540
        %v4303 = vpack.c.b16 %v3547, %v3541
        %v4304 = vpack.c.b16 %v3548, %v3542
        %v4305 = vpack.c.b16 %v3549, %v3543
        %v4306 = vpack.c.b16 %v3550, %v3544
        %v4307 = vpack.c.b16 %v3551, %v3545
        %v4308 = vpack.c.b16 %v3558, %v3552
        %v4309 = vpack.c.b16 %v3559, %v3553
        %v4310 = vpack.c.b16 %v3560, %v3554
        %v4311 = vpack.c.b16 %v3561, %v3555
        %v4312 = vpack.c.b16 %v3562, %v3556
        %v4313 = vpack.c.b16 %v3563, %v3557
        %v4314 = vpack.c.b16 %v3570, %v3564
        %v4315 = vpack.c.b16 %v3571, %v3565
        %v4316 = vpack.c.b16 %v3572, %v3566
        %v4317 = vpack.c.b16 %v3573, %v3567
        %v4318 = vpack.c.b16 %v3574, %v3568
        %v4319 = vpack.c.b16 %v3575, %v3569
        %v4320 = vpack.c.b16 %v3582, %v3576
        %v4321 = vpack.c.b16 %v3583, %v3577
        %v4322 = vpack.c.b16 %v3584, %v3578
        %v4323 = vpack.c.b16 %v3585, %v3579
        %v4324 = vpack.c.b16 %v3586, %v3580
        %v4325 = vpack.c.b16 %v3587, %v3581
        %v4326 = vpack.c.b16 %v3594, %v3588
        %v4327 = vpack.c.b16 %v3595, %v3589
        %v4328 = vpack.c.b16 %v3596, %v3590
        %v4329 = vpack.c.b16 %v3597, %v3591
        %v4330 = vpack.c.b16 %v3598, %v3592
        %v4331 = vpack.c.b16 %v3599, %v3593
        %v4332 = vpack.c.b16 %v3606, %v3600
        %v4333 = vpack.c.b16 %v3607, %v3601
        %v4334 = vpack.c.b16 %v3608, %v3602
        %v4335 = vpack.c.b16 %v3609, %v3603
        %v4336 = vpack.c.b16 %v3610, %v3604
        %v4337 = vpack.c.b16 %v3611, %v3605
        %v4338 = vpack.c.b16 %v3618, %v3612
        %v4339 = vpack.c.b16 %v3619, %v3613
        %v4340 = vpack.c.b16 %v3620, %v3614
        %v4341 = vpack.c.b16 %v3621, %v3615
        %v4342 = vpack.c.b16 %v3622, %v3616
        %v4343 = vpack.c.b16 %v3623, %v3617
        %v4344 = vpack.c.b16 %v3630, %v3624
        %v4345 = vpack.c.b16 %v3631, %v3625
        %v4346 = vpack.c.b16 %v3632, %v3626
        %v4347 = vpack.c.b16 %v3633, %v3627
        %v4348 = vpack.c.b16 %v3634, %v3628
        %v4349 = vpack.c.b16 %v3635, %v3629
        %v4350 = vpack.c.b16 %v3642, %v3636
        %v4351 = vpack.c.b16 %v3643, %v3637
        %v4352 = vpack.c.b16 %v3644, %v3638
        %v4353 = vpack.c.b16 %v3645, %v3639
        %v4354 = vpack.c.b16 %v3646, %v3640
        %v4355 = vpack.c.b16 %v3647, %v3641
        %v4356 = vpack.c.b16 %v3654, %v3648
        %v4357 = vpack.c.b16 %v3655, %v3649
        %v4358 = vpack.c.b16 %v3656, %v3650
        %v4359 = vpack.c.b16 %v3657, %v3651
        %v4360 = vpack.c.b16 %v3658, %v3652
        %v4361 = vpack.c.b16 %v3659, %v3653
        %v4362 = vpack.c.b16 %v3666, %v3660
        %v4363 = vpack.c.b16 %v3667, %v3661
        %v4364 = vpack.c.b16 %v3668, %v3662
        %v4365 = vpack.c.b16 %v3669, %v3663
        %v4366 = vpack.c.b16 %v3670, %v3664
        %v4367 = vpack.c.b16 %v3671, %v3665
        %v4368 = vpack.c.b16 %v3678, %v3672
        %v4369 = vpack.c.b16 %v3679, %v3673
        %v4370 = vpack.c.b16 %v3680, %v3674
        %v4371 = vpack.c.b16 %v3681, %v3675
        %v4372 = vpack.c.b16 %v3682, %v3676
        %v4373 = vpack.c.b16 %v3683, %v3677
        %v4374 = vpack.c.b16 %v3690, %v3684
        %v4375 = vpack.c.b16 %v3691, %v3685
        %v4376 = vpack.c.b16 %v3692, %v3686
        %v4377 = vpack.c.b16 %v3693, %v3687
        %v4378 = vpack.c.b16 %v3694, %v3688
        %v4379 = vpack.c.b16 %v3695, %v3689
        %v4380 = vpack.c.b16 %v3702, %v3696
        %v4381 = vpack.c.b16 %v3703, %v3697
        %v4382 = vpack.c.b16 %v3704, %v3698
        %v4383 = vpack.c.b16 %v3705, %v3699
        %v4384 = vpack.c.b16 %v3706, %v3700
        %v4385 = vpack.c.b16 %v3707, %v3701
        %v4386 = vpack.c.b16 %v3714, %v3708
        %v4387 = vpack.c.b16 %v3715, %v3709
        %v4388 = vpack.c.b16 %v3716, %v3710
        %v4389 = vpack.c.b16 %v3717, %v3711
        %v4390 = vpack.c.b16 %v3718, %v3712
        %v4391 = vpack.c.b16 %v3719, %v3713
        %v4392 = vpack.c.b16 %v3726, %v3720
        %v4393 = vpack.c.b16 %v3727, %v3721
        %v4394 = vpack.c.b16 %v3728, %v3722
        %v4395 = vpack.c.b16 %v3729, %v3723
        %v4396 = vpack.c.b16 %v3730, %v3724
        %v4397 = vpack.c.b16 %v3731, %v3725
        %v4398 = vpack.c.b16 %v3738, %v3732
        %v4399 = vpack.c.b16 %v3739, %v3733
        %v4400 = vpack.c.b16 %v3740, %v3734
        %v4401 = vpack.c.b16 %v3741, %v3735
        %v4402 = vpack.c.b16 %v3742, %v3736
        %v4403 = vpack.c.b16 %v3743, %v3737
        %v4404 = vpack.c.b16 %v3750, %v3744
        %v4405 = vpack.c.b16 %v3751, %v3745
        %v4406 = vpack.c.b16 %v3752, %v3746
        %v4407 = vpack.c.b16 %v3753, %v3747
        %v4408 = vpack.c.b16 %v3754, %v3748
        %v4409 = vpack.c.b16 %v3755, %v3749
        %v4410 = vpack.c.b16 %v3762, %v3756
        %v4411 = vpack.c.b16 %v3763, %v3757
        %v4412 = vpack.c.b16 %v3764, %v3758
        %v4413 = vpack.c.b16 %v3765, %v3759
        %v4414 = vpack.c.b16 %v3766, %v3760
        %v4415 = vpack.c.b16 %v3767, %v3761
        %v4416 = vpack.c.b16 %v3774, %v3768
        %v4417 = vpack.c.b16 %v3775, %v3769
        %v4418 = vpack.c.b16 %v3776, %v3770
        %v4419 = vpack.c.b16 %v3777, %v3771
        %v4420 = vpack.c.b16 %v3778, %v3772
        %v4421 = vpack.c.b16 %v3779, %v3773
        %v4422 = vpack.c.b16 %v3786, %v3780
        %v4423 = vpack.c.b16 %v3787, %v3781
        %v4424 = vpack.c.b16 %v3788, %v3782
        %v4425 = vpack.c.b16 %v3789, %v3783
        %v4426 = vpack.c.b16 %v3790, %v3784
        %v4427 = vpack.c.b16 %v3791, %v3785
        %v4428 = vpack.c.b16 %v3798, %v3792
        %v4429 = vpack.c.b16 %v3799, %v3793
        %v4430 = vpack.c.b16 %v3800, %v3794
        %v4431 = vpack.c.b16 %v3801, %v3795
        %v4432 = vpack.c.b16 %v3802, %v3796
        %v4433 = vpack.c.b16 %v3803, %v3797
        %v4434 = vpack.c.b16 %v3810, %v3804
        %v4435 = vpack.c.b16 %v3811, %v3805
        %v4436 = vpack.c.b16 %v3812, %v3806
        %v4437 = vpack.c.b16 %v3813, %v3807
        %v4438 = vpack.c.b16 %v3814, %v3808
        %v4439 = vpack.c.b16 %v3815, %v3809
        %v4440 = vpack.c.b16 %v3822, %v3816
        %v4441 = vpack.c.b16 %v3823, %v3817
        %v4442 = vpack.c.b16 %v3824, %v3818
        %v4443 = vpack.c.b16 %v3825, %v3819
        %v4444 = vpack.c.b16 %v3826, %v3820
        %v4445 = vpack.c.b16 %v3827, %v3821
        %v4446 = vpack.c.b16 %v3834, %v3828
        %v4447 = vpack.c.b16 %v3835, %v3829
        %v4448 = vpack.c.b16 %v3836, %v3830
        %v4449 = vpack.c.b16 %v3837, %v3831
        %v4450 = vpack.c.b16 %v3838, %v3832
        %v4451 = vpack.c.b16 %v3839, %v3833
        %v4452 = vpack.c.b16 %v3846, %v3840
        %v4453 = vpack.c.b16 %v3847, %v3841
        %v4454 = vpack.c.b16 %v3848, %v3842
        %v4455 = vpack.c.b16 %v3849, %v3843
        %v4456 = vpack.c.b16 %v3850, %v3844
        %v4457 = vpack.c.b16 %v3851, %v3845
        %v4458 = vpack.c.b16 %v3858, %v3852
        %v4459 = vpack.c.b16 %v3859, %v3853
        %v4460 = vpack.c.b16 %v3860, %v3854
        %v4461 = vpack.c.b16 %v3861, %v3855
        %v4462 = vpack.c.b16 %v3862, %v3856
        %v4463 = vpack.c.b16 %v3863, %v3857
        %v4464 = vpack.c.b16 %v3870, %v3864
        %v4465 = vpack.c.b16 %v3871, %v3865
        %v4466 = vpack.c.b16 %v3872, %v3866
        %v4467 = vpack.c.b16 %v3873, %v3867
        %v4468 = vpack.c.b16 %v3874, %v3868
        %v4469 = vpack.c.b16 %v3875, %v3869
        %v4470 = vpack.c.b16 %v3882, %v3876
        %v4471 = vpack.c.b16 %v3883, %v3877
        %v4472 = vpack.c.b16 %v3884, %v3878
        %v4473 = vpack.c.b16 %v3885, %v3879
        %v4474 = vpack.c.b16 %v3886, %v3880
        %v4475 = vpack.c.b16 %v3887, %v3881
        %v4476 = vpack.c.b16 %v3894, %v3888
        %v4477 = vpack.c.b16 %v3895, %v3889
        %v4478 = vpack.c.b16 %v3896, %v3890
        %v4479 = vpack.c.b16 %v3897, %v3891
        %v4480 = vpack.c.b16 %v3898, %v3892
        %v4481 = vpack.c.b16 %v3899, %v3893
        %v4482 = vpack.c.b16 %v3906, %v3900
        %v4483 = vpack.c.b16 %v3907, %v3901
        %v4484 = vpack.c.b16 %v3908, %v3902
        %v4485 = vpack.c.b16 %v3909, %v3903
        %v4486 = vpack.c.b16 %v3910, %v3904
        %v4487 = vpack.c.b16 %v3911, %v3905
        %v4488 = vpack.c.b16 %v3918, %v3912
        %v4489 = vpack.c.b16 %v3919, %v3913
        %v4490 = vpack.c.b16 %v3920, %v3914
        %v4491 = vpack.c.b16 %v3921, %v3915
        %v4492 = vpack.c.b16 %v3922, %v3916
        %v4493 = vpack.c.b16 %v3923, %v3917
        %v4494 = vpack.c.b16 %v3930, %v3924
        %v4495 = vpack.c.b16 %v3931, %v3925
        %v4496 = vpack.c.b16 %v3932, %v3926
        %v4497 = vpack.c.b16 %v3933, %v3927
        %v4498 = vpack.c.b16 %v3934, %v3928
        %v4499 = vpack.c.b16 %v3935, %v3929
        %v4500 = vpack.c.b16 %v3942, %v3936
        %v4501 = vpack.c.b16 %v3943, %v3937
        %v4502 = vpack.c.b16 %v3944, %v3938
        %v4503 = vpack.c.b16 %v3945, %v3939
        %v4504 = vpack.c.b16 %v3946, %v3940
        %v4505 = vpack.c.b16 %v3947, %v3941
        %v4506 = vpack.c.b16 %v3954, %v3948
        %v4507 = vpack.c.b16 %v3955, %v3949
        %v4508 = vpack.c.b16 %v3956, %v3950
        %v4509 = vpack.c.b16 %v3957, %v3951
        %v4510 = vpack.c.b16 %v3958, %v3952
        %v4511 = vpack.c.b16 %v3959, %v3953
        %v4512 = vpack.c.b16 %v3966, %v3960
        %v4513 = vpack.c.b16 %v3967, %v3961
        %v4514 = vpack.c.b16 %v3968, %v3962
        %v4515 = vpack.c.b16 %v3969, %v3963
        %v4516 = vpack.c.b16 %v3970, %v3964
        %v4517 = vpack.c.b16 %v3971, %v3965
        %v4518 = vpack.c.b16 %v3978, %v3972
        %v4519 = vpack.c.b16 %v3979, %v3973
        %v4520 = vpack.c.b16 %v3980, %v3974
        %v4521 = vpack.c.b16 %v3981, %v3975
        %v4522 = vpack.c.b16 %v3982, %v3976
        %v4523 = vpack.c.b16 %v3983, %v3977
        %v4524 = vpack.c.b16 %v3990, %v3984
        %v4525 = vpack.c.b16 %v3991, %v3985
        %v4526 = vpack.c.b16 %v3992, %v3986
        %v4527 = vpack.c.b16 %v3993, %v3987
        %v4528 = vpack.c.b16 %v3994, %v3988
        %v4529 = vpack.c.b16 %v3995, %v3989
        %v4530 = vpack.c.b16 %v4002, %v3996
        %v4531 = vpack.c.b16 %v4003, %v3997
        %v4532 = vpack.c.b16 %v4004, %v3998
        %v4533 = vpack.c.b16 %v4005, %v3999
        %v4534 = vpack.c.b16 %v4006, %v4000
        %v4535 = vpack.c.b16 %v4007, %v4001
        %v4536 = vpack.c.b16 %v4014, %v4008
        %v4537 = vpack.c.b16 %v4015, %v4009
        %v4538 = vpack.c.b16 %v4016, %v4010
        %v4539 = vpack.c.b16 %v4017, %v4011
        %v4540 = vpack.c.b16 %v4018, %v4012
        %v4541 = vpack.c.b16 %v4019, %v4013
        %v4542 = vpack.c.b16 %v4026, %v4020
        %v4543 = vpack.c.b16 %v4027, %v4021
        %v4544 = vpack.c.b16 %v4028, %v4022
        %v4545 = vpack.c.b16 %v4029, %v4023
        %v4546 = vpack.c.b16 %v4030, %v4024
        %v4547 = vpack.c.b16 %v4031, %v4025
        %v4548 = vpack.c.b16 %v4038, %v4032
        %v4549 = vpack.c.b16 %v4039, %v4033
        %v4550 = vpack.c.b16 %v4040, %v4034
        %v4551 = vpack.c.b16 %v4041, %v4035
        %v4552 = vpack.c.b16 %v4042, %v4036
        %v4553 = vpack.c.b16 %v4043, %v4037
        %v4554 = vpack.c.b16 %v4050, %v4044
        %v4555 = vpack.c.b16 %v4051, %v4045
        %v4556 = vpack.c.b16 %v4052, %v4046
        %v4557 = vpack.c.b16 %v4053, %v4047
        %v4558 = vpack.c.b16 %v4054, %v4048
        %v4559 = vpack.c.b16 %v4055, %v4049
        %v4560 = vpack.c.b16 %v4062, %v4056
        %v4561 = vpack.c.b16 %v4063, %v4057
        %v4562 = vpack.c.b16 %v4064, %v4058
        %v4563 = vpack.c.b16 %v4065, %v4059
        %v4564 = vpack.c.b16 %v4066, %v4060
        %v4565 = vpack.c.b16 %v4067, %v4061
        %v4566 = vpack.c.b16 %v4074, %v4068
        %v4567 = vpack.c.b16 %v4075, %v4069
        %v4568 = vpack.c.b16 %v4076, %v4070
        %v4569 = vpack.c.b16 %v4077, %v4071
        %v4570 = vpack.c.b16 %v4078, %v4072
        %v4571 = vpack.c.b16 %v4079, %v4073
        %v4572 = vpack.c.b16 %v4086, %v4080
        %v4573 = vpack.c.b16 %v4087, %v4081
        %v4574 = vpack.c.b16 %v4088, %v4082
        %v4575 = vpack.c.b16 %v4089, %v4083
        %v4576 = vpack.c.b16 %v4090, %v4084
        %v4577 = vpack.c.b16 %v4091, %v4085
        %v4578 = vpack.c.b16 %v4098, %v4092
        %v4579 = vpack.c.b16 %v4099, %v4093
        %v4580 = vpack.c.b16 %v4100, %v4094
        %v4581 = vpack.c.b16 %v4101, %v4095
        %v4582 = vpack.c.b16 %v4102, %v4096
        %v4583 = vpack.c.b16 %v4103, %v4097
        %v4584 = vpack.c.b16 %v4110, %v4104
        %v4585 = vpack.c.b16 %v4111, %v4105
        %v4586 = vpack.c.b16 %v4112, %v4106
        %v4587 = vpack.c.b16 %v4113, %v4107
        %v4588 = vpack.c.b16 %v4114, %v4108
        %v4589 = vpack.c.b16 %v4115, %v4109
        %v4590 = vpack.c.b16 %v4122, %v4116
        %v4591 = vpack.c.b16 %v4123, %v4117
        %v4592 = vpack.c.b16 %v4124, %v4118
        %v4593 = vpack.c.b16 %v4125, %v4119
        %v4594 = vpack.c.b16 %v4126, %v4120
        %v4595 = vpack.c.b16 %v4127, %v4121
        %v4596 = vpack.c.b16 %v4134, %v4128
        %v4597 = vpack.c.b16 %v4135, %v4129
        %v4598 = vpack.c.b16 %v4136, %v4130
        %v4599 = vpack.c.b16 %v4137, %v4131
        %v4600 = vpack.c.b16 %v4138, %v4132
        %v4601 = vpack.c.b16 %v4139, %v4133
        %v4602 = vpack.c.b16 %v4146, %v4140
        %v4603 = vpack.c.b16 %v4147, %v4141
        %v4604 = vpack.c.b16 %v4148, %v4142
        %v4605 = vpack.c.b16 %v4149, %v4143
        %v4606 = vpack.c.b16 %v4150, %v4144
        %v4607 = vpack.c.b16 %v4151, %v4145
        %v4608 = vpack.c.b16 %v4158, %v4152
        %v4609 = vpack.c.b16 %v4159, %v4153
        %v4610 = vpack.c.b16 %v4160, %v4154
        %v4611 = vpack.c.b16 %v4161, %v4155
        %v4612 = vpack.c.b16 %v4162, %v4156
        %v4613 = vpack.c.b16 %v4163, %v4157
        %v4614 = vpack.c.b16 %v4170, %v4164
        %v4615 = vpack.c.b16 %v4171, %v4165
        %v4616 = vpack.c.b16 %v4172, %v4166
        %v4617 = vpack.c.b16 %v4173, %v4167
        %v4618 = vpack.c.b16 %v4174, %v4168
        %v4619 = vpack.c.b16 %v4175, %v4169
        %v4620 = vpack.c.b16 %v4182, %v4176
        %v4621 = vpack.c.b16 %v4183, %v4177
        %v4622 = vpack.c.b16 %v4184, %v4178
        %v4623 = vpack.c.b16 %v4185, %v4179
        %v4624 = vpack.c.b16 %v4186, %v4180
        %v4625 = vpack.c.b16 %v4187, %v4181
        %v4626 = vpack.c.b16 %v4194, %v4188
        %v4627 = vpack.c.b16 %v4195, %v4189
        %v4628 = vpack.c.b16 %v4196, %v4190
        %v4629 = vpack.c.b16 %v4197, %v4191
        %v4630 = vpack.c.b16 %v4198, %v4192
        %v4631 = vpack.c.b16 %v4199, %v4193
        %v4632 = vpack.c.b16 %v4206, %v4200
        %v4633 = vpack.c.b16 %v4207, %v4201
        %v4634 = vpack.c.b16 %v4208, %v4202
        %v4635 = vpack.c.b16 %v4209, %v4203
        %v4636 = vpack.c.b16 %v4210, %v4204
        %v4637 = vpack.c.b16 %v4211, %v4205
        %v4638 = vpack.c.b16 %v4218, %v4212
        %v4639 = vpack.c.b16 %v4219, %v4213
        %v4640 = vpack.c.b16 %v4220, %v4214
        %v4641 = vpack.c.b16 %v4221, %v4215
        %v4642 = vpack.c.b16 %v4222, %v4216
        %v4643 = vpack.c.b16 %v4223, %v4217
        %v4644 = vpack.c.b16 %v4230, %v4224
        %v4645 = vpack.c.b16 %v4231, %v4225
        %v4646 = vpack.c.b16 %v4232, %v4226
        %v4647 = vpack.c.b16 %v4233, %v4227
        %v4648 = vpack.c.b16 %v4234, %v4228
        %v4649 = vpack.c.b16 %v4235, %v4229
        %v4650 = vpack.c.b16 %v4242, %v4236
        %v4651 = vpack.c.b16 %v4243, %v4237
        %v4652 = vpack.c.b16 %v4244, %v4238
        %v4653 = vpack.c.b16 %v4245, %v4239
        %v4654 = vpack.c.b16 %v4246, %v4240
        %v4655 = vpack.c.b16 %v4247, %v4241
        %v4656 = vpack.c.b16 %v4254, %v4248
        %v4657 = vpack.c.b16 %v4255, %v4249
        %v4658 = vpack.c.b16 %v4256, %v4250
        %v4659 = vpack.c.b16 %v4257, %v4251
        %v4660 = vpack.c.b16 %v4258, %v4252
        %v4661 = vpack.c.b16 %v4259, %v4253
        %v4662 = vpack.c.b16 %v4266, %v4260
        %v4663 = vpack.c.b16 %v4267, %v4261
        %v4664 = vpack.c.b16 %v4268, %v4262
        %v4665 = vpack.c.b16 %v4269, %v4263
        %v4666 = vpack.c.b16 %v4270, %v4264
        %v4667 = vpack.c.b16 %v4271, %v4265
        %v4668 = vpack.c.b16 %v4278, %v4272
        %v4669 = vpack.c.b16 %v4279, %v4273
        %v4670 = vpack.c.b16 %v4280, %v4274
        %v4671 = vpack.c.b16 %v4281, %v4275
        %v4672 = vpack.c.b16 %v4282, %v4276
        %v4673 = vpack.c.b16 %v4283, %v4277
        %v4674 = vpack.c.b16 %v4290, %v4284
        %v4675 = vpack.c.b16 %v4291, %v4285
        %v4676 = vpack.c.b16 %v4292, %v4286
        %v4677 = vpack.c.b16 %v4293, %v4287
        %v4678 = vpack.c.b16 %v4294, %v4288
        %v4679 = vpack.c.b16 %v4295, %v4289
        %5064 = vmatprep.subr.bf16.mxu0 %v4297
        %5065 = vmatpush1.bf16.msra.mxu0 %v4296
        %5066 = vmatprep.subr.bf16.mxu0 %v4303
        %5067 = vmatpush1.bf16.msra.mxu0 %v4302
        %5068 = vmatprep.subr.bf16.mxu0 %v4309
        %5069 = vmatpush1.bf16.msra.mxu0 %v4308
        %5070 = vmatprep.subr.bf16.mxu0 %v4315
        %5071 = vmatpush1.bf16.msra.mxu0 %v4314
        %5072 = vmatprep.subr.bf16.mxu0 %v4321
        %5073 = vmatpush1.bf16.msra.mxu0 %v4320
        %5074 = vmatprep.subr.bf16.mxu0 %v4327
        %5075 = vmatpush1.bf16.msra.mxu0 %v4326
        %5076 = vmatprep.subr.bf16.mxu0 %v4333
        %5077 = vmatpush1.bf16.msra.mxu0 %v4332
        %5078 = vmatprep.subr.bf16.mxu0 %v4339
        %5079 = vmatpush1.bf16.msra.mxu0 %v4338
        %5080 = vmatprep.subr.bf16.mxu0 %v4345
        %5081 = vmatpush1.bf16.msra.mxu0 %v4344
        %5082 = vmatprep.subr.bf16.mxu0 %v4351
        %5083 = vmatpush1.bf16.msra.mxu0 %v4350
        %5084 = vmatprep.subr.bf16.mxu0 %v4357
        %5085 = vmatpush1.bf16.msra.mxu0 %v4356
        %5086 = vmatprep.subr.bf16.mxu0 %v4363
        %5087 = vmatpush1.bf16.msra.mxu0 %v4362
        %5088 = vmatprep.subr.bf16.mxu0 %v4369
        %5089 = vmatpush1.bf16.msra.mxu0 %v4368
        %5090 = vmatprep.subr.bf16.mxu0 %v4375
        %5091 = vmatpush1.bf16.msra.mxu0 %v4374
        %5092 = vmatprep.subr.bf16.mxu0 %v4381
        %5093 = vmatpush1.bf16.msra.mxu0 %v4380
        %5094 = vmatprep.subr.bf16.mxu0 %v4387
        %5095 = vmatpush1.bf16.msra.mxu0 %v4386
        %5096 = vmatprep.mubr.bf16.mxu0 %v2601
        %5097 = vmatmul.mubr.bf16.gmra.mrb[0].mxu0 %v2600
        %v5098 = vpop.f32.mrb[0].mxu0
        %v5099 = vadd.f32 %v3117, %v5098
        %v5100 = vpop.f32.mrb[0].mxu0
        %v5101 = vadd.f32 %v3121, %v5100
        %v5102 = vpop.f32.mrb[0].mxu0
        %v5103 = vadd.f32 %v3117, %v5102
        %v5104 = vpop.f32.mrb[0].mxu0
        %v5105 = vadd.f32 %v3121, %v5104
        %5106 = vmatprep.mubr.bf16.mxu0 %v2609
        %5107 = vmatmul.mubr.bf16.gmra.mrb[0].mxu0 %v2608
        %v5108 = vpop.f32.mrb[0].mxu0
        %v5109 = vadd.f32 %v3117, %v5108
        %v5110 = vpop.f32.mrb[0].mxu0
        %v5111 = vadd.f32 %v3121, %v5110
        %v5112 = vpop.f32.mrb[0].mxu0
        %v5113 = vadd.f32 %v3117, %v5112
        %v5114 = vpop.f32.mrb[0].mxu0
        %v5115 = vadd.f32 %v3121, %v5114
        %5116 = vmatprep.mubr.bf16.mxu0 %v2617
        %5117 = vmatmul.mubr.bf16.gmra.mrb[0].mxu0 %v2616
        %v5118 = vpop.f32.mrb[0].mxu0
        %v5119 = vadd.f32 %v3117, %v5118
        %v5120 = vpop.f32.mrb[0].mxu0
        %v5121 = vadd.f32 %v3121, %v5120
        %v5122 = vpop.f32.mrb[0].mxu0
        %v5123 = vadd.f32 %v3117, %v5122
        %v5124 = vpop.f32.mrb[0].mxu0
        %v5125 = vadd.f32 %v3121, %v5124
        %5126 = vmatprep.mubr.bf16.mxu0 %v2625
        %5127 = vmatmul.mubr.bf16.gmra.mrb[0].mxu0 %v2624
        %v5128 = vpop.f32.mrb[0].mxu0
        %v5129 = vadd.f32 %v3117, %v5128
        %v5130 = vpop.f32.mrb[0].mxu0
        %v5131 = vadd.f32 %v3121, %v5130
        %v5132 = vpop.f32.mrb[0].mxu0
        %v5133 = vadd.f32 %v3117, %v5132
        %v5134 = vpop.f32.mrb[0].mxu0
        %v5135 = vadd.f32 %v3121, %v5134
        %5136 = vmatprep.mubr.bf16.mxu0 %v2633
        %5137 = vmatmul.mubr.bf16.gmra.mrb[0].mxu0 %v2632
        %v5138 = vpop.f32.mrb[0].mxu0
        %v5139 = vadd.f32 %v3117, %v5138
        %v5140 = vpop.f32.mrb[0].mxu0
        %v5141 = vadd.f32 %v3121, %v5140
        %v5142 = vpop.f32.mrb[0].mxu0
        %v5143 = vadd.f32 %v3117, %v5142
        %v5144 = vpop.f32.mrb[0].mxu0
        %v5145 = vadd.f32 %v3121, %v5144
        %5146 = vmatprep.mubr.bf16.mxu0 %v2641
        %5147 = vmatmul.mubr.bf16.gmra.mrb[0].mxu0 %v2640
        %v5148 = vpop.f32.mrb[0].mxu0
        %v5149 = vadd.f32 %v3117, %v5148
        %v5150 = vpop.f32.mrb[0].mxu0
        %v5151 = vadd.f32 %v3121, %v5150
        %v5152 = vpop.f32.mrb[0].mxu0
        %v5153 = vadd.f32 %v3117, %v5152
        %v5154 = vpop.f32.mrb[0].mxu0
        %v5155 = vadd.f32 %v3121, %v5154
        %5156 = vmatprep.mubr.bf16.mxu0 %v2649
        %5157 = vmatmul.mubr.bf16.gmra.mrb[0].mxu0 %v2648
        %v5158 = vpop.f32.mrb[0].mxu0
        %v5159 = vadd.f32 %v3117, %v5158
        %v5160 = vpop.f32.mrb[0].mxu0
        %v5161 = vadd.f32 %v3121, %v5160
        %v5162 = vpop.f32.mrb[0].mxu0
        %v5163 = vadd.f32 %v3117, %v5162
        %v5164 = vpop.f32.mrb[0].mxu0
        %v5165 = vadd.f32 %v3121, %v5164
        %5166 = vmatprep.mubr.bf16.mxu0 %v2657
        %5167 = vmatmul.mubr.bf16.gmra.mrb[0].mxu0 %v2656
        %v5168 = vpop.f32.mrb[0].mxu0
        %v5169 = vadd.f32 %v3117, %v5168
        %v5170 = vpop.f32.mrb[0].mxu0
        %v5171 = vadd.f32 %v3121, %v5170
        %v5172 = vpop.f32.mrb[0].mxu0
        %v5173 = vadd.f32 %v3117, %v5172
        %v5174 = vpop.f32.mrb[0].mxu0
        %v5175 = vadd.f32 %v3121, %v5174
        %5176 = vmatprep.mubr.bf16.mxu0 %v2665
        %5177 = vmatmul.mubr.bf16.gmra.mrb[0].mxu0 %v2664
        %v5178 = vpop.f32.mrb[0].mxu0
        %v5179 = vadd.f32 %v3117, %v5178
        %v5180 = vpop.f32.mrb[0].mxu0
        %v5181 = vadd.f32 %v3121, %v5180
        %v5182 = vpop.f32.mrb[0].mxu0
        %v5183 = vadd.f32 %v3117, %v5182
        %v5184 = vpop.f32.mrb[0].mxu0
        %v5185 = vadd.f32 %v3121, %v5184
        %5186 = vmatprep.mubr.bf16.mxu0 %v2673
        %5187 = vmatmul.mubr.bf16.gmra.mrb[0].mxu0 %v2672
        %v5188 = vpop.f32.mrb[0].mxu0
        %v5189 = vadd.f32 %v3117, %v5188
        %v5190 = vpop.f32.mrb[0].mxu0
        %v5191 = vadd.f32 %v3121, %v5190
        %v5192 = vpop.f32.mrb[0].mxu0
        %v5193 = vadd.f32 %v3117, %v5192
        %v5194 = vpop.f32.mrb[0].mxu0
        %v5195 = vadd.f32 %v3121, %v5194
        %5196 = vmatprep.mubr.bf16.mxu0 %v2681
        %5197 = vmatmul.mubr.bf16.gmra.mrb[0].mxu0 %v2680
        %v5198 = vpop.f32.mrb[0].mxu0
        %v5199 = vadd.f32 %v3117, %v5198
        %v5200 = vpop.f32.mrb[0].mxu0
        %v5201 = vadd.f32 %v3121, %v5200
        %v5202 = vpop.f32.mrb[0].mxu0
        %v5203 = vadd.f32 %v3117, %v5202
        %v5204 = vpop.f32.mrb[0].mxu0
        %v5205 = vadd.f32 %v3121, %v5204
        %5206 = vmatprep.mubr.bf16.mxu0 %v2689
        %5207 = vmatmul.mubr.bf16.gmra.mrb[0].mxu0 %v2688
        %v5208 = vpop.f32.mrb[0].mxu0
        %v5209 = vadd.f32 %v3117, %v5208
        %v5210 = vpop.f32.mrb[0].mxu0
        %v5211 = vadd.f32 %v3121, %v5210
        %v5212 = vpop.f32.mrb[0].mxu0
        %v5213 = vadd.f32 %v3117, %v5212
        %v5214 = vpop.f32.mrb[0].mxu0
        %v5215 = vadd.f32 %v3121, %v5214
        %5216 = vmatprep.mubr.bf16.mxu0 %v2697
        %5217 = vmatmul.mubr.bf16.gmra.mrb[0].mxu0 %v2696
        %v5218 = vpop.f32.mrb[0].mxu0
        %v5219 = vadd.f32 %v3117, %v5218
        %v5220 = vpop.f32.mrb[0].mxu0
        %v5221 = vadd.f32 %v3121, %v5220
        %v5222 = vpop.f32.mrb[0].mxu0
        %v5223 = vadd.f32 %v3117, %v5222
        %v5224 = vpop.f32.mrb[0].mxu0
        %v5225 = vadd.f32 %v3121, %v5224
        %5226 = vmatprep.mubr.bf16.mxu0 %v2705
        %5227 = vmatmul.mubr.bf16.gmra.mrb[0].mxu0 %v2704
        %v5228 = vpop.f32.mrb[0].mxu0
        %v5229 = vadd.f32 %v3117, %v5228
        %v5230 = vpop.f32.mrb[0].mxu0
        %v5231 = vadd.f32 %v3121, %v5230
        %v5232 = vpop.f32.mrb[0].mxu0
        %v5233 = vadd.f32 %v3117, %v5232
        %v5234 = vpop.f32.mrb[0].mxu0
        %v5235 = vadd.f32 %v3121, %v5234
        %5236 = vmatprep.mubr.bf16.mxu0 %v2713
        %5237 = vmatmul.mubr.bf16.gmra.mrb[0].mxu0 %v2712
        %v5238 = vpop.f32.mrb[0].mxu0
        %v5239 = vadd.f32 %v3117, %v5238
        %v5240 = vpop.f32.mrb[0].mxu0
        %v5241 = vadd.f32 %v3121, %v5240
        %v5242 = vpop.f32.mrb[0].mxu0
        %v5243 = vadd.f32 %v3117, %v5242
        %v5244 = vpop.f32.mrb[0].mxu0
        %v5245 = vadd.f32 %v3121, %v5244
        %5246 = vmatprep.mubr.bf16.mxu0 %v2721
        %5247 = vmatmul.mubr.bf16.gmra.mrb[0].mxu0 %v2720
        %v5248 = vpop.f32.mrb[0].mxu0
        %v5249 = vadd.f32 %v3117, %v5248
        %v5250 = vpop.f32.mrb[0].mxu0
        %v5251 = vadd.f32 %v3121, %v5250
        %v5252 = vpop.f32.mrb[0].mxu0
        %v5253 = vadd.f32 %v3117, %v5252
        %v5254 = vpop.f32.mrb[0].mxu0
        %v5255 = vadd.f32 %v3121, %v5254
        %5256 = vdwg.mxu0
        %5257 = vmatprep.subr.bf16.mxu0 %v4393
        %5258 = vmatpush1.bf16.msra.mxu0 %v4392
        %5259 = vmatprep.subr.bf16.mxu0 %v4399
        %5260 = vmatpush1.bf16.msra.mxu0 %v4398
        %5261 = vmatprep.subr.bf16.mxu0 %v4405
        %5262 = vmatpush1.bf16.msra.mxu0 %v4404
        %5263 = vmatprep.subr.bf16.mxu0 %v4411
        %5264 = vmatpush1.bf16.msra.mxu0 %v4410
        %5265 = vmatprep.subr.bf16.mxu0 %v4417
        %5266 = vmatpush1.bf16.msra.mxu0 %v4416
        %5267 = vmatprep.subr.bf16.mxu0 %v4423
        %5268 = vmatpush1.bf16.msra.mxu0 %v4422
        %5269 = vmatprep.subr.bf16.mxu0 %v4429
        %5270 = vmatpush1.bf16.msra.mxu0 %v4428
        %5271 = vmatprep.subr.bf16.mxu0 %v4435
        %5272 = vmatpush1.bf16.msra.mxu0 %v4434
        %5273 = vmatprep.subr.bf16.mxu0 %v4441
        %5274 = vmatpush1.bf16.msra.mxu0 %v4440
        %5275 = vmatprep.subr.bf16.mxu0 %v4447
        %5276 = vmatpush1.bf16.msra.mxu0 %v4446
        %5277 = vmatprep.subr.bf16.mxu0 %v4453
        %5278 = vmatpush1.bf16.msra.mxu0 %v4452
        %5279 = vmatprep.subr.bf16.mxu0 %v4459
        %5280 = vmatpush1.bf16.msra.mxu0 %v4458
        %5281 = vmatprep.subr.bf16.mxu0 %v4465
        %5282 = vmatpush1.bf16.msra.mxu0 %v4464
        %5283 = vmatprep.subr.bf16.mxu0 %v4471
        %5284 = vmatpush1.bf16.msra.mxu0 %v4470
        %5285 = vmatprep.subr.bf16.mxu0 %v4477
        %5286 = vmatpush1.bf16.msra.mxu0 %v4476
        %5287 = vmatprep.subr.bf16.mxu0 %v4483
        %5288 = vmatpush1.bf16.msra.mxu0 %v4482
        %5289 = vmatprep.mubr.bf16.mxu0 %v2603
        %5290 = vmatmul.mubr.bf16.gmra.mrb[0].mxu0 %v2602
        %v5291 = vpop.f32.mrb[0].mxu0
        %v5292 = vadd.f32 %v5099, %v5291
        %v5293 = vpop.f32.mrb[0].mxu0
        %v5294 = vadd.f32 %v5101, %v5293
        %v5295 = vpop.f32.mrb[0].mxu0
        %v5296 = vadd.f32 %v5103, %v5295
        %v5297 = vpop.f32.mrb[0].mxu0
        %v5298 = vadd.f32 %v5105, %v5297
        %5299 = vmatprep.mubr.bf16.mxu0 %v2611
        %5300 = vmatmul.mubr.bf16.gmra.mrb[0].mxu0 %v2610
        %v5301 = vpop.f32.mrb[0].mxu0
        %v5302 = vadd.f32 %v5109, %v5301
        %v5303 = vpop.f32.mrb[0].mxu0
        %v5304 = vadd.f32 %v5111, %v5303
        %v5305 = vpop.f32.mrb[0].mxu0
        %v5306 = vadd.f32 %v5113, %v5305
        %v5307 = vpop.f32.mrb[0].mxu0
        %v5308 = vadd.f32 %v5115, %v5307
        %5309 = vmatprep.mubr.bf16.mxu0 %v2619
        %5310 = vmatmul.mubr.bf16.gmra.mrb[0].mxu0 %v2618
        %v5311 = vpop.f32.mrb[0].mxu0
        %v5312 = vadd.f32 %v5119, %v5311
        %v5313 = vpop.f32.mrb[0].mxu0
        %v5314 = vadd.f32 %v5121, %v5313
        %v5315 = vpop.f32.mrb[0].mxu0
        %v5316 = vadd.f32 %v5123, %v5315
        %v5317 = vpop.f32.mrb[0].mxu0
        %v5318 = vadd.f32 %v5125, %v5317
        %5319 = vmatprep.mubr.bf16.mxu0 %v2627
        %5320 = vmatmul.mubr.bf16.gmra.mrb[0].mxu0 %v2626
        %v5321 = vpop.f32.mrb[0].mxu0
        %v5322 = vadd.f32 %v5129, %v5321
        %v5323 = vpop.f32.mrb[0].mxu0
        %v5324 = vadd.f32 %v5131, %v5323
        %v5325 = vpop.f32.mrb[0].mxu0
        %v5326 = vadd.f32 %v5133, %v5325
        %v5327 = vpop.f32.mrb[0].mxu0
        %v5328 = vadd.f32 %v5135, %v5327
        %5329 = vmatprep.mubr.bf16.mxu0 %v2635
        %5330 = vmatmul.mubr.bf16.gmra.mrb[0].mxu0 %v2634
        %v5331 = vpop.f32.mrb[0].mxu0
        %v5332 = vadd.f32 %v5139, %v5331
        %v5333 = vpop.f32.mrb[0].mxu0
        %v5334 = vadd.f32 %v5141, %v5333
        %v5335 = vpop.f32.mrb[0].mxu0
        %v5336 = vadd.f32 %v5143, %v5335
        %v5337 = vpop.f32.mrb[0].mxu0
        %v5338 = vadd.f32 %v5145, %v5337
        %5339 = vmatprep.mubr.bf16.mxu0 %v2643
        %5340 = vmatmul.mubr.bf16.gmra.mrb[0].mxu0 %v2642
        %v5341 = vpop.f32.mrb[0].mxu0
        %v5342 = vadd.f32 %v5149, %v5341
        %v5343 = vpop.f32.mrb[0].mxu0
        %v5344 = vadd.f32 %v5151, %v5343
        %v5345 = vpop.f32.mrb[0].mxu0
        %v5346 = vadd.f32 %v5153, %v5345
        %v5347 = vpop.f32.mrb[0].mxu0
        %v5348 = vadd.f32 %v5155, %v5347
        %5349 = vmatprep.mubr.bf16.mxu0 %v2651
        %5350 = vmatmul.mubr.bf16.gmra.mrb[0].mxu0 %v2650
        %v5351 = vpop.f32.mrb[0].mxu0
        %v5352 = vadd.f32 %v5159, %v5351
        %v5353 = vpop.f32.mrb[0].mxu0
        %v5354 = vadd.f32 %v5161, %v5353
        %v5355 = vpop.f32.mrb[0].mxu0
        %v5356 = vadd.f32 %v5163, %v5355
        %v5357 = vpop.f32.mrb[0].mxu0
        %v5358 = vadd.f32 %v5165, %v5357
        %5359 = vmatprep.mubr.bf16.mxu0 %v2659
        %5360 = vmatmul.mubr.bf16.gmra.mrb[0].mxu0 %v2658
        %v5361 = vpop.f32.mrb[0].mxu0
        %v5362 = vadd.f32 %v5169, %v5361
        %v5363 = vpop.f32.mrb[0].mxu0
        %v5364 = vadd.f32 %v5171, %v5363
        %v5365 = vpop.f32.mrb[0].mxu0
        %v5366 = vadd.f32 %v5173, %v5365
        %v5367 = vpop.f32.mrb[0].mxu0
        %v5368 = vadd.f32 %v5175, %v5367
        %5369 = vmatprep.mubr.bf16.mxu0 %v2667
        %5370 = vmatmul.mubr.bf16.gmra.mrb[0].mxu0 %v2666
        %v5371 = vpop.f32.mrb[0].mxu0
        %v5372 = vadd.f32 %v5179, %v5371
        %v5373 = vpop.f32.mrb[0].mxu0
        %v5374 = vadd.f32 %v5181, %v5373
        %v5375 = vpop.f32.mrb[0].mxu0
        %v5376 = vadd.f32 %v5183, %v5375
        %v5377 = vpop.f32.mrb[0].mxu0
        %v5378 = vadd.f32 %v5185, %v5377
        %5379 = vmatprep.mubr.bf16.mxu0 %v2675
        %5380 = vmatmul.mubr.bf16.gmra.mrb[0].mxu0 %v2674
        %v5381 = vpop.f32.mrb[0].mxu0
        %v5382 = vadd.f32 %v5189, %v5381
        %v5383 = vpop.f32.mrb[0].mxu0
        %v5384 = vadd.f32 %v5191, %v5383
        %v5385 = vpop.f32.mrb[0].mxu0
        %v5386 = vadd.f32 %v5193, %v5385
        %v5387 = vpop.f32.mrb[0].mxu0
        %v5388 = vadd.f32 %v5195, %v5387
        %5389 = vmatprep.mubr.bf16.mxu0 %v2683
        %5390 = vmatmul.mubr.bf16.gmra.mrb[0].mxu0 %v2682
        %v5391 = vpop.f32.mrb[0].mxu0
        %v5392 = vadd.f32 %v5199, %v5391
        %v5393 = vpop.f32.mrb[0].mxu0
        %v5394 = vadd.f32 %v5201, %v5393
        %v5395 = vpop.f32.mrb[0].mxu0
        %v5396 = vadd.f32 %v5203, %v5395
        %v5397 = vpop.f32.mrb[0].mxu0
        %v5398 = vadd.f32 %v5205, %v5397
        %5399 = vmatprep.mubr.bf16.mxu0 %v2691
        %5400 = vmatmul.mubr.bf16.gmra.mrb[0].mxu0 %v2690
        %v5401 = vpop.f32.mrb[0].mxu0
        %v5402 = vadd.f32 %v5209, %v5401
        %v5403 = vpop.f32.mrb[0].mxu0
        %v5404 = vadd.f32 %v5211, %v5403
        %v5405 = vpop.f32.mrb[0].mxu0
        %v5406 = vadd.f32 %v5213, %v5405
        %v5407 = vpop.f32.mrb[0].mxu0
        %v5408 = vadd.f32 %v5215, %v5407
        %5409 = vmatprep.mubr.bf16.mxu0 %v2699
        %5410 = vmatmul.mubr.bf16.gmra.mrb[0].mxu0 %v2698
        %v5411 = vpop.f32.mrb[0].mxu0
        %v5412 = vadd.f32 %v5219, %v5411
        %v5413 = vpop.f32.mrb[0].mxu0
        %v5414 = vadd.f32 %v5221, %v5413
        %v5415 = vpop.f32.mrb[0].mxu0
        %v5416 = vadd.f32 %v5223, %v5415
        %v5417 = vpop.f32.mrb[0].mxu0
        %v5418 = vadd.f32 %v5225, %v5417
        %5419 = vmatprep.mubr.bf16.mxu0 %v2707
        %5420 = vmatmul.mubr.bf16.gmra.mrb[0].mxu0 %v2706
        %v5421 = vpop.f32.mrb[0].mxu0
        %v5422 = vadd.f32 %v5229, %v5421
        %v5423 = vpop.f32.mrb[0].mxu0
        %v5424 = vadd.f32 %v5231, %v5423
        %v5425 = vpop.f32.mrb[0].mxu0
        %v5426 = vadd.f32 %v5233, %v5425
        %v5427 = vpop.f32.mrb[0].mxu0
        %v5428 = vadd.f32 %v5235, %v5427
        %5429 = vmatprep.mubr.bf16.mxu0 %v2715
        %5430 = vmatmul.mubr.bf16.gmra.mrb[0].mxu0 %v2714
        %v5431 = vpop.f32.mrb[0].mxu0
        %v5432 = vadd.f32 %v5239, %v5431
        %v5433 = vpop.f32.mrb[0].mxu0
        %v5434 = vadd.f32 %v5241, %v5433
        %v5435 = vpop.f32.mrb[0].mxu0
        %v5436 = vadd.f32 %v5243, %v5435
        %v5437 = vpop.f32.mrb[0].mxu0
        %v5438 = vadd.f32 %v5245, %v5437
        %5439 = vmatprep.mubr.bf16.mxu0 %v2723
        %5440 = vmatmul.mubr.bf16.gmra.mrb[0].mxu0 %v2722
        %v5441 = vpop.f32.mrb[0].mxu0
        %v5442 = vadd.f32 %v5249, %v5441
        %v5443 = vpop.f32.mrb[0].mxu0
        %v5444 = vadd.f32 %v5251, %v5443
        %v5445 = vpop.f32.mrb[0].mxu0
        %v5446 = vadd.f32 %v5253, %v5445
        %v5447 = vpop.f32.mrb[0].mxu0
        %v5448 = vadd.f32 %v5255, %v5447
        %5449 = vdwg.mxu0
        %5450 = vmatprep.subr.bf16.mxu0 %v4489
        %5451 = vmatpush1.bf16.msra.mxu0 %v4488
        %5452 = vmatprep.subr.bf16.mxu0 %v4495
        %5453 = vmatpush1.bf16.msra.mxu0 %v4494
        %5454 = vmatprep.subr.bf16.mxu0 %v4501
        %5455 = vmatpush1.bf16.msra.mxu0 %v4500
        %5456 = vmatprep.subr.bf16.mxu0 %v4507
        %5457 = vmatpush1.bf16.msra.mxu0 %v4506
        %5458 = vmatprep.subr.bf16.mxu0 %v4513
        %5459 = vmatpush1.bf16.msra.mxu0 %v4512
        %5460 = vmatprep.subr.bf16.mxu0 %v4519
        %5461 = vmatpush1.bf16.msra.mxu0 %v4518
        %5462 = vmatprep.subr.bf16.mxu0 %v4525
        %5463 = vmatpush1.bf16.msra.mxu0 %v4524
        %5464 = vmatprep.subr.bf16.mxu0 %v4531
        %5465 = vmatpush1.bf16.msra.mxu0 %v4530
        %5466 = vmatprep.subr.bf16.mxu0 %v4537
        %5467 = vmatpush1.bf16.msra.mxu0 %v4536
        %5468 = vmatprep.subr.bf16.mxu0 %v4543
        %5469 = vmatpush1.bf16.msra.mxu0 %v4542
        %5470 = vmatprep.subr.bf16.mxu0 %v4549
        %5471 = vmatpush1.bf16.msra.mxu0 %v4548
        %5472 = vmatprep.subr.bf16.mxu0 %v4555
        %5473 = vmatpush1.bf16.msra.mxu0 %v4554
        %5474 = vmatprep.subr.bf16.mxu0 %v4561
        %5475 = vmatpush1.bf16.msra.mxu0 %v4560
        %5476 = vmatprep.subr.bf16.mxu0 %v4567
        %5477 = vmatpush1.bf16.msra.mxu0 %v4566
        %5478 = vmatprep.subr.bf16.mxu0 %v4573
        %5479 = vmatpush1.bf16.msra.mxu0 %v4572
        %5480 = vmatprep.subr.bf16.mxu0 %v4579
        %5481 = vmatpush1.bf16.msra.mxu0 %v4578
        %5482 = vmatprep.mubr.bf16.mxu0 %v2605
        %5483 = vmatmul.mubr.bf16.gmra.mrb[0].mxu0 %v2604
        %v5484 = vpop.f32.mrb[0].mxu0
        %v5485 = vadd.f32 %v5292, %v5484
        %v5486 = vpop.f32.mrb[0].mxu0
        %v5487 = vadd.f32 %v5294, %v5486
        %v5488 = vpop.f32.mrb[0].mxu0
        %v5489 = vadd.f32 %v5296, %v5488
        %v5490 = vpop.f32.mrb[0].mxu0
        %v5491 = vadd.f32 %v5298, %v5490
        %5492 = vmatprep.mubr.bf16.mxu0 %v2613
        %5493 = vmatmul.mubr.bf16.gmra.mrb[0].mxu0 %v2612
        %v5494 = vpop.f32.mrb[0].mxu0
        %v5495 = vadd.f32 %v5302, %v5494
        %v5496 = vpop.f32.mrb[0].mxu0
        %v5497 = vadd.f32 %v5304, %v5496
        %v5498 = vpop.f32.mrb[0].mxu0
        %v5499 = vadd.f32 %v5306, %v5498
        %v5500 = vpop.f32.mrb[0].mxu0
        %v5501 = vadd.f32 %v5308, %v5500
        %5502 = vmatprep.mubr.bf16.mxu0 %v2621
        %5503 = vmatmul.mubr.bf16.gmra.mrb[0].mxu0 %v2620
        %v5504 = vpop.f32.mrb[0].mxu0
        %v5505 = vadd.f32 %v5312, %v5504
        %v5506 = vpop.f32.mrb[0].mxu0
        %v5507 = vadd.f32 %v5314, %v5506
        %v5508 = vpop.f32.mrb[0].mxu0
        %v5509 = vadd.f32 %v5316, %v5508
        %v5510 = vpop.f32.mrb[0].mxu0
        %v5511 = vadd.f32 %v5318, %v5510
        %5512 = vmatprep.mubr.bf16.mxu0 %v2629
        %5513 = vmatmul.mubr.bf16.gmra.mrb[0].mxu0 %v2628
        %v5514 = vpop.f32.mrb[0].mxu0
        %v5515 = vadd.f32 %v5322, %v5514
        %v5516 = vpop.f32.mrb[0].mxu0
        %v5517 = vadd.f32 %v5324, %v5516
        %v5518 = vpop.f32.mrb[0].mxu0
        %v5519 = vadd.f32 %v5326, %v5518
        %v5520 = vpop.f32.mrb[0].mxu0
        %v5521 = vadd.f32 %v5328, %v5520
        %5522 = vmatprep.mubr.bf16.mxu0 %v2637
        %5523 = vmatmul.mubr.bf16.gmra.mrb[0].mxu0 %v2636
        %v5524 = vpop.f32.mrb[0].mxu0
        %v5525 = vadd.f32 %v5332, %v5524
        %v5526 = vpop.f32.mrb[0].mxu0
        %v5527 = vadd.f32 %v5334, %v5526
        %v5528 = vpop.f32.mrb[0].mxu0
        %v5529 = vadd.f32 %v5336, %v5528
        %v5530 = vpop.f32.mrb[0].mxu0
        %v5531 = vadd.f32 %v5338, %v5530
        %5532 = vmatprep.mubr.bf16.mxu0 %v2645
        %5533 = vmatmul.mubr.bf16.gmra.mrb[0].mxu0 %v2644
        %v5534 = vpop.f32.mrb[0].mxu0
        %v5535 = vadd.f32 %v5342, %v5534
        %v5536 = vpop.f32.mrb[0].mxu0
        %v5537 = vadd.f32 %v5344, %v5536
        %v5538 = vpop.f32.mrb[0].mxu0
        %v5539 = vadd.f32 %v5346, %v5538
        %v5540 = vpop.f32.mrb[0].mxu0
        %v5541 = vadd.f32 %v5348, %v5540
        %5542 = vmatprep.mubr.bf16.mxu0 %v2653
        %5543 = vmatmul.mubr.bf16.gmra.mrb[0].mxu0 %v2652
        %v5544 = vpop.f32.mrb[0].mxu0
        %v5545 = vadd.f32 %v5352, %v5544
        %v5546 = vpop.f32.mrb[0].mxu0
        %v5547 = vadd.f32 %v5354, %v5546
        %v5548 = vpop.f32.mrb[0].mxu0
        %v5549 = vadd.f32 %v5356, %v5548
        %v5550 = vpop.f32.mrb[0].mxu0
        %v5551 = vadd.f32 %v5358, %v5550
        %5552 = vmatprep.mubr.bf16.mxu0 %v2661
        %5553 = vmatmul.mubr.bf16.gmra.mrb[0].mxu0 %v2660
        %v5554 = vpop.f32.mrb[0].mxu0
        %v5555 = vadd.f32 %v5362, %v5554
        %v5556 = vpop.f32.mrb[0].mxu0
        %v5557 = vadd.f32 %v5364, %v5556
        %v5558 = vpop.f32.mrb[0].mxu0
        %v5559 = vadd.f32 %v5366, %v5558
        %v5560 = vpop.f32.mrb[0].mxu0
        %v5561 = vadd.f32 %v5368, %v5560
        %5562 = vmatprep.mubr.bf16.mxu0 %v2669
        %5563 = vmatmul.mubr.bf16.gmra.mrb[0].mxu0 %v2668
        %v5564 = vpop.f32.mrb[0].mxu0
        %v5565 = vadd.f32 %v5372, %v5564
        %v5566 = vpop.f32.mrb[0].mxu0
        %v5567 = vadd.f32 %v5374, %v5566
        %v5568 = vpop.f32.mrb[0].mxu0
        %v5569 = vadd.f32 %v5376, %v5568
        %v5570 = vpop.f32.mrb[0].mxu0
        %v5571 = vadd.f32 %v5378, %v5570
        %5572 = vmatprep.mubr.bf16.mxu0 %v2677
        %5573 = vmatmul.mubr.bf16.gmra.mrb[0].mxu0 %v2676
        %v5574 = vpop.f32.mrb[0].mxu0
        %v5575 = vadd.f32 %v5382, %v5574
        %v5576 = vpop.f32.mrb[0].mxu0
        %v5577 = vadd.f32 %v5384, %v5576
        %v5578 = vpop.f32.mrb[0].mxu0
        %v5579 = vadd.f32 %v5386, %v5578
        %v5580 = vpop.f32.mrb[0].mxu0
        %v5581 = vadd.f32 %v5388, %v5580
        %5582 = vmatprep.mubr.bf16.mxu0 %v2685
        %5583 = vmatmul.mubr.bf16.gmra.mrb[0].mxu0 %v2684
        %v5584 = vpop.f32.mrb[0].mxu0
        %v5585 = vadd.f32 %v5392, %v5584
        %v5586 = vpop.f32.mrb[0].mxu0
        %v5587 = vadd.f32 %v5394, %v5586
        %v5588 = vpop.f32.mrb[0].mxu0
        %v5589 = vadd.f32 %v5396, %v5588
        %v5590 = vpop.f32.mrb[0].mxu0
        %v5591 = vadd.f32 %v5398, %v5590
        %5592 = vmatprep.mubr.bf16.mxu0 %v2693
        %5593 = vmatmul.mubr.bf16.gmra.mrb[0].mxu0 %v2692
        %v5594 = vpop.f32.mrb[0].mxu0
        %v5595 = vadd.f32 %v5402, %v5594
        %v5596 = vpop.f32.mrb[0].mxu0
        %v5597 = vadd.f32 %v5404, %v5596
        %v5598 = vpop.f32.mrb[0].mxu0
        %v5599 = vadd.f32 %v5406, %v5598
        %v5600 = vpop.f32.mrb[0].mxu0
        %v5601 = vadd.f32 %v5408, %v5600
        %5602 = vmatprep.mubr.bf16.mxu0 %v2701
        %5603 = vmatmul.mubr.bf16.gmra.mrb[0].mxu0 %v2700
        %v5604 = vpop.f32.mrb[0].mxu0
        %v5605 = vadd.f32 %v5412, %v5604
        %v5606 = vpop.f32.mrb[0].mxu0
        %v5607 = vadd.f32 %v5414, %v5606
        %v5608 = vpop.f32.mrb[0].mxu0
        %v5609 = vadd.f32 %v5416, %v5608
        %v5610 = vpop.f32.mrb[0].mxu0
        %v5611 = vadd.f32 %v5418, %v5610
        %5612 = vmatprep.mubr.bf16.mxu0 %v2709
        %5613 = vmatmul.mubr.bf16.gmra.mrb[0].mxu0 %v2708
        %v5614 = vpop.f32.mrb[0].mxu0
        %v5615 = vadd.f32 %v5422, %v5614
        %v5616 = vpop.f32.mrb[0].mxu0
        %v5617 = vadd.f32 %v5424, %v5616
        %v5618 = vpop.f32.mrb[0].mxu0
        %v5619 = vadd.f32 %v5426, %v5618
        %v5620 = vpop.f32.mrb[0].mxu0
        %v5621 = vadd.f32 %v5428, %v5620
        %5622 = vmatprep.mubr.bf16.mxu0 %v2717
        %5623 = vmatmul.mubr.bf16.gmra.mrb[0].mxu0 %v2716
        %v5624 = vpop.f32.mrb[0].mxu0
        %v5625 = vadd.f32 %v5432, %v5624
        %v5626 = vpop.f32.mrb[0].mxu0
        %v5627 = vadd.f32 %v5434, %v5626
        %v5628 = vpop.f32.mrb[0].mxu0
        %v5629 = vadd.f32 %v5436, %v5628
        %v5630 = vpop.f32.mrb[0].mxu0
        %v5631 = vadd.f32 %v5438, %v5630
        %5632 = vmatprep.mubr.bf16.mxu0 %v2725
        %5633 = vmatmul.mubr.bf16.gmra.mrb[0].mxu0 %v2724
        %v5634 = vpop.f32.mrb[0].mxu0
        %v5635 = vadd.f32 %v5442, %v5634
        %v5636 = vpop.f32.mrb[0].mxu0
        %v5637 = vadd.f32 %v5444, %v5636
        %v5638 = vpop.f32.mrb[0].mxu0
        %v5639 = vadd.f32 %v5446, %v5638
        %v5640 = vpop.f32.mrb[0].mxu0
        %v5641 = vadd.f32 %v5448, %v5640
        %5642 = vdwg.mxu0
        %5643 = vmatprep.subr.bf16.mxu0 %v4585
        %5644 = vmatpush1.bf16.msra.mxu0 %v4584
        %5645 = vmatprep.subr.bf16.mxu0 %v4591
        %5646 = vmatpush1.bf16.msra.mxu0 %v4590
        %5647 = vmatprep.subr.bf16.mxu0 %v4597
        %5648 = vmatpush1.bf16.msra.mxu0 %v4596
        %5649 = vmatprep.subr.bf16.mxu0 %v4603
        %5650 = vmatpush1.bf16.msra.mxu0 %v4602
        %5651 = vmatprep.subr.bf16.mxu0 %v4609
        %5652 = vmatpush1.bf16.msra.mxu0 %v4608
        %5653 = vmatprep.subr.bf16.mxu0 %v4615
        %5654 = vmatpush1.bf16.msra.mxu0 %v4614
        %5655 = vmatprep.subr.bf16.mxu0 %v4621
        %5656 = vmatpush1.bf16.msra.mxu0 %v4620
        %5657 = vmatprep.subr.bf16.mxu0 %v4627
        %5658 = vmatpush1.bf16.msra.mxu0 %v4626
        %5659 = vmatprep.subr.bf16.mxu0 %v4633
        %5660 = vmatpush1.bf16.msra.mxu0 %v4632
        %5661 = vmatprep.subr.bf16.mxu0 %v4639
        %5662 = vmatpush1.bf16.msra.mxu0 %v4638
        %5663 = vmatprep.subr.bf16.mxu0 %v4645
        %5664 = vmatpush1.bf16.msra.mxu0 %v4644
        %5665 = vmatprep.subr.bf16.mxu0 %v4651
        %5666 = vmatpush1.bf16.msra.mxu0 %v4650
        %5667 = vmatprep.subr.bf16.mxu0 %v4657
        %5668 = vmatpush1.bf16.msra.mxu0 %v4656
        %5669 = vmatprep.subr.bf16.mxu0 %v4663
        %5670 = vmatpush1.bf16.msra.mxu0 %v4662
        %5671 = vmatprep.subr.bf16.mxu0 %v4669
        %5672 = vmatpush1.bf16.msra.mxu0 %v4668
        %5673 = vmatprep.subr.bf16.mxu0 %v4675
        %5674 = vmatpush1.bf16.msra.mxu0 %v4674
        %5675 = vmatprep.mubr.bf16.mxu0 %v2607
        %5676 = vmatmul.mubr.bf16.gmra.mrb[0].mxu0 %v2606
        %v5677 = vpop.f32.mrb[0].mxu0
        %v5678 = vadd.f32 %v5485, %v5677
        %v5679 = vpop.f32.mrb[0].mxu0
        %v5680 = vadd.f32 %v5487, %v5679
        %v5681 = vpop.f32.mrb[0].mxu0
        %v5682 = vadd.f32 %v5489, %v5681
        %v5683 = vpop.f32.mrb[0].mxu0
        %v5684 = vadd.f32 %v5491, %v5683
        %5685 = vmatprep.mubr.bf16.mxu0 %v2615
        %5686 = vmatmul.mubr.bf16.gmra.mrb[0].mxu0 %v2614
        %v5687 = vpop.f32.mrb[0].mxu0
        %v5688 = vadd.f32 %v5495, %v5687
        %v5689 = vpop.f32.mrb[0].mxu0
        %v5690 = vadd.f32 %v5497, %v5689
        %v5691 = vpop.f32.mrb[0].mxu0
        %v5692 = vadd.f32 %v5499, %v5691
        %v5693 = vpop.f32.mrb[0].mxu0
        %v5694 = vadd.f32 %v5501, %v5693
        %5695 = vmatprep.mubr.bf16.mxu0 %v2623
        %5696 = vmatmul.mubr.bf16.gmra.mrb[0].mxu0 %v2622
        %v5697 = vpop.f32.mrb[0].mxu0
        %v5698 = vadd.f32 %v5505, %v5697
        %v5699 = vpop.f32.mrb[0].mxu0
        %v5700 = vadd.f32 %v5507, %v5699
        %v5701 = vpop.f32.mrb[0].mxu0
        %v5702 = vadd.f32 %v5509, %v5701
        %v5703 = vpop.f32.mrb[0].mxu0
        %v5704 = vadd.f32 %v5511, %v5703
        %5705 = vmatprep.mubr.bf16.mxu0 %v2631
        %5706 = vmatmul.mubr.bf16.gmra.mrb[0].mxu0 %v2630
        %v5707 = vpop.f32.mrb[0].mxu0
        %v5708 = vadd.f32 %v5515, %v5707
        %v5709 = vpop.f32.mrb[0].mxu0
        %v5710 = vadd.f32 %v5517, %v5709
        %v5711 = vpop.f32.mrb[0].mxu0
        %v5712 = vadd.f32 %v5519, %v5711
        %v5713 = vpop.f32.mrb[0].mxu0
        %v5714 = vadd.f32 %v5521, %v5713
        %5715 = vmatprep.mubr.bf16.mxu0 %v2639
        %5716 = vmatmul.mubr.bf16.gmra.mrb[0].mxu0 %v2638
        %v5717 = vpop.f32.mrb[0].mxu0
        %v5718 = vadd.f32 %v5525, %v5717
        %v5719 = vpop.f32.mrb[0].mxu0
        %v5720 = vadd.f32 %v5527, %v5719
        %v5721 = vpop.f32.mrb[0].mxu0
        %v5722 = vadd.f32 %v5529, %v5721
        %v5723 = vpop.f32.mrb[0].mxu0
        %v5724 = vadd.f32 %v5531, %v5723
        %5725 = vmatprep.mubr.bf16.mxu0 %v2647
        %5726 = vmatmul.mubr.bf16.gmra.mrb[0].mxu0 %v2646
        %v5727 = vpop.f32.mrb[0].mxu0
        %v5728 = vadd.f32 %v5535, %v5727
        %v5729 = vpop.f32.mrb[0].mxu0
        %v5730 = vadd.f32 %v5537, %v5729
        %v5731 = vpop.f32.mrb[0].mxu0
        %v5732 = vadd.f32 %v5539, %v5731
        %v5733 = vpop.f32.mrb[0].mxu0
        %v5734 = vadd.f32 %v5541, %v5733
        %5735 = vmatprep.mubr.bf16.mxu0 %v2655
        %5736 = vmatmul.mubr.bf16.gmra.mrb[0].mxu0 %v2654
        %v5737 = vpop.f32.mrb[0].mxu0
        %v5738 = vadd.f32 %v5545, %v5737
        %v5739 = vpop.f32.mrb[0].mxu0
        %v5740 = vadd.f32 %v5547, %v5739
        %v5741 = vpop.f32.mrb[0].mxu0
        %v5742 = vadd.f32 %v5549, %v5741
        %v5743 = vpop.f32.mrb[0].mxu0
        %v5744 = vadd.f32 %v5551, %v5743
        %5745 = vmatprep.mubr.bf16.mxu0 %v2663
        %5746 = vmatmul.mubr.bf16.gmra.mrb[0].mxu0 %v2662
        %v5747 = vpop.f32.mrb[0].mxu0
        %v5748 = vadd.f32 %v5555, %v5747
        %v5749 = vpop.f32.mrb[0].mxu0
        %v5750 = vadd.f32 %v5557, %v5749
        %v5751 = vpop.f32.mrb[0].mxu0
        %v5752 = vadd.f32 %v5559, %v5751
        %v5753 = vpop.f32.mrb[0].mxu0
        %v5754 = vadd.f32 %v5561, %v5753
        %5755 = vmatprep.mubr.bf16.mxu0 %v2671
        %5756 = vmatmul.mubr.bf16.gmra.mrb[0].mxu0 %v2670
        %v5757 = vpop.f32.mrb[0].mxu0
        %v5758 = vadd.f32 %v5565, %v5757
        %v5759 = vpop.f32.mrb[0].mxu0
        %v5760 = vadd.f32 %v5567, %v5759
        %v5761 = vpop.f32.mrb[0].mxu0
        %v5762 = vadd.f32 %v5569, %v5761
        %v5763 = vpop.f32.mrb[0].mxu0
        %v5764 = vadd.f32 %v5571, %v5763
        %5765 = vmatprep.mubr.bf16.mxu0 %v2679
        %5766 = vmatmul.mubr.bf16.gmra.mrb[0].mxu0 %v2678
        %v5767 = vpop.f32.mrb[0].mxu0
        %v5768 = vadd.f32 %v5575, %v5767
        %v5769 = vpop.f32.mrb[0].mxu0
        %v5770 = vadd.f32 %v5577, %v5769
        %v5771 = vpop.f32.mrb[0].mxu0
        %v5772 = vadd.f32 %v5579, %v5771
        %v5773 = vpop.f32.mrb[0].mxu0
        %v5774 = vadd.f32 %v5581, %v5773
        %5775 = vmatprep.mubr.bf16.mxu0 %v2687
        %5776 = vmatmul.mubr.bf16.gmra.mrb[0].mxu0 %v2686
        %v5777 = vpop.f32.mrb[0].mxu0
        %v5778 = vadd.f32 %v5585, %v5777
        %v5779 = vpop.f32.mrb[0].mxu0
        %v5780 = vadd.f32 %v5587, %v5779
        %v5781 = vpop.f32.mrb[0].mxu0
        %v5782 = vadd.f32 %v5589, %v5781
        %v5783 = vpop.f32.mrb[0].mxu0
        %v5784 = vadd.f32 %v5591, %v5783
        %5785 = vmatprep.mubr.bf16.mxu0 %v2695
        %5786 = vmatmul.mubr.bf16.gmra.mrb[0].mxu0 %v2694
        %v5787 = vpop.f32.mrb[0].mxu0
        %v5788 = vadd.f32 %v5595, %v5787
        %v5789 = vpop.f32.mrb[0].mxu0
        %v5790 = vadd.f32 %v5597, %v5789
        %v5791 = vpop.f32.mrb[0].mxu0
        %v5792 = vadd.f32 %v5599, %v5791
        %v5793 = vpop.f32.mrb[0].mxu0
        %v5794 = vadd.f32 %v5601, %v5793
        %5795 = vmatprep.mubr.bf16.mxu0 %v2703
        %5796 = vmatmul.mubr.bf16.gmra.mrb[0].mxu0 %v2702
        %v5797 = vpop.f32.mrb[0].mxu0
        %v5798 = vadd.f32 %v5605, %v5797
        %v5799 = vpop.f32.mrb[0].mxu0
        %v5800 = vadd.f32 %v5607, %v5799
        %v5801 = vpop.f32.mrb[0].mxu0
        %v5802 = vadd.f32 %v5609, %v5801
        %v5803 = vpop.f32.mrb[0].mxu0
        %v5804 = vadd.f32 %v5611, %v5803
        %5805 = vmatprep.mubr.bf16.mxu0 %v2711
        %5806 = vmatmul.mubr.bf16.gmra.mrb[0].mxu0 %v2710
        %v5807 = vpop.f32.mrb[0].mxu0
        %v5808 = vadd.f32 %v5615, %v5807
        %v5809 = vpop.f32.mrb[0].mxu0
        %v5810 = vadd.f32 %v5617, %v5809
        %v5811 = vpop.f32.mrb[0].mxu0
        %v5812 = vadd.f32 %v5619, %v5811
        %v5813 = vpop.f32.mrb[0].mxu0
        %v5814 = vadd.f32 %v5621, %v5813
        %5815 = vmatprep.mubr.bf16.mxu0 %v2719
        %5816 = vmatmul.mubr.bf16.gmra.mrb[0].mxu0 %v2718
        %v5817 = vpop.f32.mrb[0].mxu0
        %v5818 = vadd.f32 %v5625, %v5817
        %v5819 = vpop.f32.mrb[0].mxu0
        %v5820 = vadd.f32 %v5627, %v5819
        %v5821 = vpop.f32.mrb[0].mxu0
        %v5822 = vadd.f32 %v5629, %v5821
        %v5823 = vpop.f32.mrb[0].mxu0
        %v5824 = vadd.f32 %v5631, %v5823
        %5825 = vmatprep.mubr.bf16.mxu0 %v2727
        %5826 = vmatmul.mubr.bf16.gmra.mrb[0].mxu0 %v2726
        %v5827 = vpop.f32.mrb[0].mxu0
        %v5828 = vadd.f32 %v5635, %v5827
        %v5829 = vpop.f32.mrb[0].mxu0
        %v5830 = vadd.f32 %v5637, %v5829
        %v5831 = vpop.f32.mrb[0].mxu0
        %v5832 = vadd.f32 %v5639, %v5831
        %v5833 = vpop.f32.mrb[0].mxu0
        %v5834 = vadd.f32 %v5641, %v5833
        %5835 = vdwg.mxu0
        %5836 = vmatprep.subr.bf16.mxu0 %v4299
        %5837 = vmatpush1.bf16.msra.mxu0 %v4298
        %5838 = vmatprep.subr.bf16.mxu0 %v4305
        %5839 = vmatpush1.bf16.msra.mxu0 %v4304
        %5840 = vmatprep.subr.bf16.mxu0 %v4311
        %5841 = vmatpush1.bf16.msra.mxu0 %v4310
        %5842 = vmatprep.subr.bf16.mxu0 %v4317
        %5843 = vmatpush1.bf16.msra.mxu0 %v4316
        %5844 = vmatprep.subr.bf16.mxu0 %v4323
        %5845 = vmatpush1.bf16.msra.mxu0 %v4322
        %5846 = vmatprep.subr.bf16.mxu0 %v4329
        %5847 = vmatpush1.bf16.msra.mxu0 %v4328
        %5848 = vmatprep.subr.bf16.mxu0 %v4335
        %5849 = vmatpush1.bf16.msra.mxu0 %v4334
        %5850 = vmatprep.subr.bf16.mxu0 %v4341
        %5851 = vmatpush1.bf16.msra.mxu0 %v4340
        %5852 = vmatprep.subr.bf16.mxu0 %v4347
        %5853 = vmatpush1.bf16.msra.mxu0 %v4346
        %5854 = vmatprep.subr.bf16.mxu0 %v4353
        %5855 = vmatpush1.bf16.msra.mxu0 %v4352
        %5856 = vmatprep.subr.bf16.mxu0 %v4359
        %5857 = vmatpush1.bf16.msra.mxu0 %v4358
        %5858 = vmatprep.subr.bf16.mxu0 %v4365
        %5859 = vmatpush1.bf16.msra.mxu0 %v4364
        %5860 = vmatprep.subr.bf16.mxu0 %v4371
        %5861 = vmatpush1.bf16.msra.mxu0 %v4370
        %5862 = vmatprep.subr.bf16.mxu0 %v4377
        %5863 = vmatpush1.bf16.msra.mxu0 %v4376
        %5864 = vmatprep.subr.bf16.mxu0 %v4383
        %5865 = vmatpush1.bf16.msra.mxu0 %v4382
        %5866 = vmatprep.subr.bf16.mxu0 %v4389
        %5867 = vmatpush1.bf16.msra.mxu0 %v4388
        %5868 = vmatprep.mubr.bf16.mxu0 %v2601
        %5869 = vmatmul.mubr.bf16.gmra.mrb[0].mxu0 %v2600
        %v5870 = vpop.f32.mrb[0].mxu0
        %v5871 = vadd.f32 %v3125, %v5870
        %v5872 = vpop.f32.mrb[0].mxu0
        %v5873 = vadd.f32 %v3129, %v5872
        %v5874 = vpop.f32.mrb[0].mxu0
        %v5875 = vadd.f32 %v3125, %v5874
        %v5876 = vpop.f32.mrb[0].mxu0
        %v5877 = vadd.f32 %v3129, %v5876
        %5878 = vmatprep.mubr.bf16.mxu0 %v2609
        %5879 = vmatmul.mubr.bf16.gmra.mrb[0].mxu0 %v2608
        %v5880 = vpop.f32.mrb[0].mxu0
        %v5881 = vadd.f32 %v3125, %v5880
        %v5882 = vpop.f32.mrb[0].mxu0
        %v5883 = vadd.f32 %v3129, %v5882
        %v5884 = vpop.f32.mrb[0].mxu0
        %v5885 = vadd.f32 %v3125, %v5884
        %v5886 = vpop.f32.mrb[0].mxu0
        %v5887 = vadd.f32 %v3129, %v5886
        %5888 = vmatprep.mubr.bf16.mxu0 %v2617
        %5889 = vmatmul.mubr.bf16.gmra.mrb[0].mxu0 %v2616
        %v5890 = vpop.f32.mrb[0].mxu0
        %v5891 = vadd.f32 %v3125, %v5890
        %v5892 = vpop.f32.mrb[0].mxu0
        %v5893 = vadd.f32 %v3129, %v5892
        %v5894 = vpop.f32.mrb[0].mxu0
        %v5895 = vadd.f32 %v3125, %v5894
        %v5896 = vpop.f32.mrb[0].mxu0
        %v5897 = vadd.f32 %v3129, %v5896
        %5898 = vmatprep.mubr.bf16.mxu0 %v2625
        %5899 = vmatmul.mubr.bf16.gmra.mrb[0].mxu0 %v2624
        %v5900 = vpop.f32.mrb[0].mxu0
        %v5901 = vadd.f32 %v3125, %v5900
        %v5902 = vpop.f32.mrb[0].mxu0
        %v5903 = vadd.f32 %v3129, %v5902
        %v5904 = vpop.f32.mrb[0].mxu0
        %v5905 = vadd.f32 %v3125, %v5904
        %v5906 = vpop.f32.mrb[0].mxu0
        %v5907 = vadd.f32 %v3129, %v5906
        %5908 = vmatprep.mubr.bf16.mxu0 %v2633
        %5909 = vmatmul.mubr.bf16.gmra.mrb[0].mxu0 %v2632
        %v5910 = vpop.f32.mrb[0].mxu0
        %v5911 = vadd.f32 %v3125, %v5910
        %v5912 = vpop.f32.mrb[0].mxu0
        %v5913 = vadd.f32 %v3129, %v5912
        %v5914 = vpop.f32.mrb[0].mxu0
        %v5915 = vadd.f32 %v3125, %v5914
        %v5916 = vpop.f32.mrb[0].mxu0
        %v5917 = vadd.f32 %v3129, %v5916
        %5918 = vmatprep.mubr.bf16.mxu0 %v2641
        %5919 = vmatmul.mubr.bf16.gmra.mrb[0].mxu0 %v2640
        %v5920 = vpop.f32.mrb[0].mxu0
        %v5921 = vadd.f32 %v3125, %v5920
        %v5922 = vpop.f32.mrb[0].mxu0
        %v5923 = vadd.f32 %v3129, %v5922
        %v5924 = vpop.f32.mrb[0].mxu0
        %v5925 = vadd.f32 %v3125, %v5924
        %v5926 = vpop.f32.mrb[0].mxu0
        %v5927 = vadd.f32 %v3129, %v5926
        %5928 = vmatprep.mubr.bf16.mxu0 %v2649
        %5929 = vmatmul.mubr.bf16.gmra.mrb[0].mxu0 %v2648
        %v5930 = vpop.f32.mrb[0].mxu0
        %v5931 = vadd.f32 %v3125, %v5930
        %v5932 = vpop.f32.mrb[0].mxu0
        %v5933 = vadd.f32 %v3129, %v5932
        %v5934 = vpop.f32.mrb[0].mxu0
        %v5935 = vadd.f32 %v3125, %v5934
        %v5936 = vpop.f32.mrb[0].mxu0
        %v5937 = vadd.f32 %v3129, %v5936
        %5938 = vmatprep.mubr.bf16.mxu0 %v2657
        %5939 = vmatmul.mubr.bf16.gmra.mrb[0].mxu0 %v2656
        %v5940 = vpop.f32.mrb[0].mxu0
        %v5941 = vadd.f32 %v3125, %v5940
        %v5942 = vpop.f32.mrb[0].mxu0
        %v5943 = vadd.f32 %v3129, %v5942
        %v5944 = vpop.f32.mrb[0].mxu0
        %v5945 = vadd.f32 %v3125, %v5944
        %v5946 = vpop.f32.mrb[0].mxu0
        %v5947 = vadd.f32 %v3129, %v5946
        %5948 = vmatprep.mubr.bf16.mxu0 %v2665
        %5949 = vmatmul.mubr.bf16.gmra.mrb[0].mxu0 %v2664
        %v5950 = vpop.f32.mrb[0].mxu0
        %v5951 = vadd.f32 %v3125, %v5950
        %v5952 = vpop.f32.mrb[0].mxu0
        %v5953 = vadd.f32 %v3129, %v5952
        %v5954 = vpop.f32.mrb[0].mxu0
        %v5955 = vadd.f32 %v3125, %v5954
        %v5956 = vpop.f32.mrb[0].mxu0
        %v5957 = vadd.f32 %v3129, %v5956
        %5958 = vmatprep.mubr.bf16.mxu0 %v2673
        %5959 = vmatmul.mubr.bf16.gmra.mrb[0].mxu0 %v2672
        %v5960 = vpop.f32.mrb[0].mxu0
        %v5961 = vadd.f32 %v3125, %v5960
        %v5962 = vpop.f32.mrb[0].mxu0
        %v5963 = vadd.f32 %v3129, %v5962
        %v5964 = vpop.f32.mrb[0].mxu0
        %v5965 = vadd.f32 %v3125, %v5964
        %v5966 = vpop.f32.mrb[0].mxu0
        %v5967 = vadd.f32 %v3129, %v5966
        %5968 = vmatprep.mubr.bf16.mxu0 %v2681
        %5969 = vmatmul.mubr.bf16.gmra.mrb[0].mxu0 %v2680
        %v5970 = vpop.f32.mrb[0].mxu0
        %v5971 = vadd.f32 %v3125, %v5970
        %v5972 = vpop.f32.mrb[0].mxu0
        %v5973 = vadd.f32 %v3129, %v5972
        %v5974 = vpop.f32.mrb[0].mxu0
        %v5975 = vadd.f32 %v3125, %v5974
        %v5976 = vpop.f32.mrb[0].mxu0
        %v5977 = vadd.f32 %v3129, %v5976
        %5978 = vmatprep.mubr.bf16.mxu0 %v2689
        %5979 = vmatmul.mubr.bf16.gmra.mrb[0].mxu0 %v2688
        %v5980 = vpop.f32.mrb[0].mxu0
        %v5981 = vadd.f32 %v3125, %v5980
        %v5982 = vpop.f32.mrb[0].mxu0
        %v5983 = vadd.f32 %v3129, %v5982
        %v5984 = vpop.f32.mrb[0].mxu0
        %v5985 = vadd.f32 %v3125, %v5984
        %v5986 = vpop.f32.mrb[0].mxu0
        %v5987 = vadd.f32 %v3129, %v5986
        %5988 = vmatprep.mubr.bf16.mxu0 %v2697
        %5989 = vmatmul.mubr.bf16.gmra.mrb[0].mxu0 %v2696
        %v5990 = vpop.f32.mrb[0].mxu0
        %v5991 = vadd.f32 %v3125, %v5990
        %v5992 = vpop.f32.mrb[0].mxu0
        %v5993 = vadd.f32 %v3129, %v5992
        %v5994 = vpop.f32.mrb[0].mxu0
        %v5995 = vadd.f32 %v3125, %v5994
        %v5996 = vpop.f32.mrb[0].mxu0
        %v5997 = vadd.f32 %v3129, %v5996
        %5998 = vmatprep.mubr.bf16.mxu0 %v2705
        %5999 = vmatmul.mubr.bf16.gmra.mrb[0].mxu0 %v2704
        %v6000 = vpop.f32.mrb[0].mxu0
        %v6001 = vadd.f32 %v3125, %v6000
        %v6002 = vpop.f32.mrb[0].mxu0
        %v6003 = vadd.f32 %v3129, %v6002
        %v6004 = vpop.f32.mrb[0].mxu0
        %v6005 = vadd.f32 %v3125, %v6004
        %v6006 = vpop.f32.mrb[0].mxu0
        %v6007 = vadd.f32 %v3129, %v6006
        %6008 = vmatprep.mubr.bf16.mxu0 %v2713
        %6009 = vmatmul.mubr.bf16.gmra.mrb[0].mxu0 %v2712
        %v6010 = vpop.f32.mrb[0].mxu0
        %v6011 = vadd.f32 %v3125, %v6010
        %v6012 = vpop.f32.mrb[0].mxu0
        %v6013 = vadd.f32 %v3129, %v6012
        %v6014 = vpop.f32.mrb[0].mxu0
        %v6015 = vadd.f32 %v3125, %v6014
        %v6016 = vpop.f32.mrb[0].mxu0
        %v6017 = vadd.f32 %v3129, %v6016
        %6018 = vmatprep.mubr.bf16.mxu0 %v2721
        %6019 = vmatmul.mubr.bf16.gmra.mrb[0].mxu0 %v2720
        %v6020 = vpop.f32.mrb[0].mxu0
        %v6021 = vadd.f32 %v3125, %v6020
        %v6022 = vpop.f32.mrb[0].mxu0
        %v6023 = vadd.f32 %v3129, %v6022
        %v6024 = vpop.f32.mrb[0].mxu0
        %v6025 = vadd.f32 %v3125, %v6024
        %v6026 = vpop.f32.mrb[0].mxu0
        %v6027 = vadd.f32 %v3129, %v6026
        %6028 = vdwg.mxu0
        %6029 = vmatprep.subr.bf16.mxu0 %v4395
        %6030 = vmatpush1.bf16.msra.mxu0 %v4394
        %6031 = vmatprep.subr.bf16.mxu0 %v4401
        %6032 = vmatpush1.bf16.msra.mxu0 %v4400
        %6033 = vmatprep.subr.bf16.mxu0 %v4407
        %6034 = vmatpush1.bf16.msra.mxu0 %v4406
        %6035 = vmatprep.subr.bf16.mxu0 %v4413
        %6036 = vmatpush1.bf16.msra.mxu0 %v4412
        %6037 = vmatprep.subr.bf16.mxu0 %v4419
        %6038 = vmatpush1.bf16.msra.mxu0 %v4418
        %6039 = vmatprep.subr.bf16.mxu0 %v4425
        %6040 = vmatpush1.bf16.msra.mxu0 %v4424
        %6041 = vmatprep.subr.bf16.mxu0 %v4431
        %6042 = vmatpush1.bf16.msra.mxu0 %v4430
        %6043 = vmatprep.subr.bf16.mxu0 %v4437
        %6044 = vmatpush1.bf16.msra.mxu0 %v4436
        %6045 = vmatprep.subr.bf16.mxu0 %v4443
        %6046 = vmatpush1.bf16.msra.mxu0 %v4442
        %6047 = vmatprep.subr.bf16.mxu0 %v4449
        %6048 = vmatpush1.bf16.msra.mxu0 %v4448
        %6049 = vmatprep.subr.bf16.mxu0 %v4455
        %6050 = vmatpush1.bf16.msra.mxu0 %v4454
        %6051 = vmatprep.subr.bf16.mxu0 %v4461
        %6052 = vmatpush1.bf16.msra.mxu0 %v4460
        %6053 = vmatprep.subr.bf16.mxu0 %v4467
        %6054 = vmatpush1.bf16.msra.mxu0 %v4466
        %6055 = vmatprep.subr.bf16.mxu0 %v4473
        %6056 = vmatpush1.bf16.msra.mxu0 %v4472
        %6057 = vmatprep.subr.bf16.mxu0 %v4479
        %6058 = vmatpush1.bf16.msra.mxu0 %v4478
        %6059 = vmatprep.subr.bf16.mxu0 %v4485
        %6060 = vmatpush1.bf16.msra.mxu0 %v4484
        %6061 = vmatprep.mubr.bf16.mxu0 %v2603
        %6062 = vmatmul.mubr.bf16.gmra.mrb[0].mxu0 %v2602
        %v6063 = vpop.f32.mrb[0].mxu0
        %v6064 = vadd.f32 %v5871, %v6063
        %v6065 = vpop.f32.mrb[0].mxu0
        %v6066 = vadd.f32 %v5873, %v6065
        %v6067 = vpop.f32.mrb[0].mxu0
        %v6068 = vadd.f32 %v5875, %v6067
        %v6069 = vpop.f32.mrb[0].mxu0
        %v6070 = vadd.f32 %v5877, %v6069
        %6071 = vmatprep.mubr.bf16.mxu0 %v2611
        %6072 = vmatmul.mubr.bf16.gmra.mrb[0].mxu0 %v2610
        %v6073 = vpop.f32.mrb[0].mxu0
        %v6074 = vadd.f32 %v5881, %v6073
        %v6075 = vpop.f32.mrb[0].mxu0
        %v6076 = vadd.f32 %v5883, %v6075
        %v6077 = vpop.f32.mrb[0].mxu0
        %v6078 = vadd.f32 %v5885, %v6077
        %v6079 = vpop.f32.mrb[0].mxu0
        %v6080 = vadd.f32 %v5887, %v6079
        %6081 = vmatprep.mubr.bf16.mxu0 %v2619
        %6082 = vmatmul.mubr.bf16.gmra.mrb[0].mxu0 %v2618
        %v6083 = vpop.f32.mrb[0].mxu0
        %v6084 = vadd.f32 %v5891, %v6083
        %v6085 = vpop.f32.mrb[0].mxu0
        %v6086 = vadd.f32 %v5893, %v6085
        %v6087 = vpop.f32.mrb[0].mxu0
        %v6088 = vadd.f32 %v5895, %v6087
        %v6089 = vpop.f32.mrb[0].mxu0
        %v6090 = vadd.f32 %v5897, %v6089
        %6091 = vmatprep.mubr.bf16.mxu0 %v2627
        %6092 = vmatmul.mubr.bf16.gmra.mrb[0].mxu0 %v2626
        %v6093 = vpop.f32.mrb[0].mxu0
        %v6094 = vadd.f32 %v5901, %v6093
        %v6095 = vpop.f32.mrb[0].mxu0
        %v6096 = vadd.f32 %v5903, %v6095
        %v6097 = vpop.f32.mrb[0].mxu0
        %v6098 = vadd.f32 %v5905, %v6097
        %v6099 = vpop.f32.mrb[0].mxu0
        %v6100 = vadd.f32 %v5907, %v6099
        %6101 = vmatprep.mubr.bf16.mxu0 %v2635
        %6102 = vmatmul.mubr.bf16.gmra.mrb[0].mxu0 %v2634
        %v6103 = vpop.f32.mrb[0].mxu0
        %v6104 = vadd.f32 %v5911, %v6103
        %v6105 = vpop.f32.mrb[0].mxu0
        %v6106 = vadd.f32 %v5913, %v6105
        %v6107 = vpop.f32.mrb[0].mxu0
        %v6108 = vadd.f32 %v5915, %v6107
        %v6109 = vpop.f32.mrb[0].mxu0
        %v6110 = vadd.f32 %v5917, %v6109
        %6111 = vmatprep.mubr.bf16.mxu0 %v2643
        %6112 = vmatmul.mubr.bf16.gmra.mrb[0].mxu0 %v2642
        %v6113 = vpop.f32.mrb[0].mxu0
        %v6114 = vadd.f32 %v5921, %v6113
        %v6115 = vpop.f32.mrb[0].mxu0
        %v6116 = vadd.f32 %v5923, %v6115
        %v6117 = vpop.f32.mrb[0].mxu0
        %v6118 = vadd.f32 %v5925, %v6117
        %v6119 = vpop.f32.mrb[0].mxu0
        %v6120 = vadd.f32 %v5927, %v6119
        %6121 = vmatprep.mubr.bf16.mxu0 %v2651
        %6122 = vmatmul.mubr.bf16.gmra.mrb[0].mxu0 %v2650
        %v6123 = vpop.f32.mrb[0].mxu0
        %v6124 = vadd.f32 %v5931, %v6123
        %v6125 = vpop.f32.mrb[0].mxu0
        %v6126 = vadd.f32 %v5933, %v6125
        %v6127 = vpop.f32.mrb[0].mxu0
        %v6128 = vadd.f32 %v5935, %v6127
        %v6129 = vpop.f32.mrb[0].mxu0
        %v6130 = vadd.f32 %v5937, %v6129
        %6131 = vmatprep.mubr.bf16.mxu0 %v2659
        %6132 = vmatmul.mubr.bf16.gmra.mrb[0].mxu0 %v2658
        %v6133 = vpop.f32.mrb[0].mxu0
        %v6134 = vadd.f32 %v5941, %v6133
        %v6135 = vpop.f32.mrb[0].mxu0
        %v6136 = vadd.f32 %v5943, %v6135
        %v6137 = vpop.f32.mrb[0].mxu0
        %v6138 = vadd.f32 %v5945, %v6137
        %v6139 = vpop.f32.mrb[0].mxu0
        %v6140 = vadd.f32 %v5947, %v6139
        %6141 = vmatprep.mubr.bf16.mxu0 %v2667
        %6142 = vmatmul.mubr.bf16.gmra.mrb[0].mxu0 %v2666
        %v6143 = vpop.f32.mrb[0].mxu0
        %v6144 = vadd.f32 %v5951, %v6143
        %v6145 = vpop.f32.mrb[0].mxu0
        %v6146 = vadd.f32 %v5953, %v6145
        %v6147 = vpop.f32.mrb[0].mxu0
        %v6148 = vadd.f32 %v5955, %v6147
        %v6149 = vpop.f32.mrb[0].mxu0
        %v6150 = vadd.f32 %v5957, %v6149
        %6151 = vmatprep.mubr.bf16.mxu0 %v2675
        %6152 = vmatmul.mubr.bf16.gmra.mrb[0].mxu0 %v2674
        %v6153 = vpop.f32.mrb[0].mxu0
        %v6154 = vadd.f32 %v5961, %v6153
        %v6155 = vpop.f32.mrb[0].mxu0
        %v6156 = vadd.f32 %v5963, %v6155
        %v6157 = vpop.f32.mrb[0].mxu0
        %v6158 = vadd.f32 %v5965, %v6157
        %v6159 = vpop.f32.mrb[0].mxu0
        %v6160 = vadd.f32 %v5967, %v6159
        %6161 = vmatprep.mubr.bf16.mxu0 %v2683
        %6162 = vmatmul.mubr.bf16.gmra.mrb[0].mxu0 %v2682
        %v6163 = vpop.f32.mrb[0].mxu0
        %v6164 = vadd.f32 %v5971, %v6163
        %v6165 = vpop.f32.mrb[0].mxu0
        %v6166 = vadd.f32 %v5973, %v6165
        %v6167 = vpop.f32.mrb[0].mxu0
        %v6168 = vadd.f32 %v5975, %v6167
        %v6169 = vpop.f32.mrb[0].mxu0
        %v6170 = vadd.f32 %v5977, %v6169
        %6171 = vmatprep.mubr.bf16.mxu0 %v2691
        %6172 = vmatmul.mubr.bf16.gmra.mrb[0].mxu0 %v2690
        %v6173 = vpop.f32.mrb[0].mxu0
        %v6174 = vadd.f32 %v5981, %v6173
        %v6175 = vpop.f32.mrb[0].mxu0
        %v6176 = vadd.f32 %v5983, %v6175
        %v6177 = vpop.f32.mrb[0].mxu0
        %v6178 = vadd.f32 %v5985, %v6177
        %v6179 = vpop.f32.mrb[0].mxu0
        %v6180 = vadd.f32 %v5987, %v6179
        %6181 = vmatprep.mubr.bf16.mxu0 %v2699
        %6182 = vmatmul.mubr.bf16.gmra.mrb[0].mxu0 %v2698
        %v6183 = vpop.f32.mrb[0].mxu0
        %v6184 = vadd.f32 %v5991, %v6183
        %v6185 = vpop.f32.mrb[0].mxu0
        %v6186 = vadd.f32 %v5993, %v6185
        %v6187 = vpop.f32.mrb[0].mxu0
        %v6188 = vadd.f32 %v5995, %v6187
        %v6189 = vpop.f32.mrb[0].mxu0
        %v6190 = vadd.f32 %v5997, %v6189
        %6191 = vmatprep.mubr.bf16.mxu0 %v2707
        %6192 = vmatmul.mubr.bf16.gmra.mrb[0].mxu0 %v2706
        %v6193 = vpop.f32.mrb[0].mxu0
        %v6194 = vadd.f32 %v6001, %v6193
        %v6195 = vpop.f32.mrb[0].mxu0
        %v6196 = vadd.f32 %v6003, %v6195
        %v6197 = vpop.f32.mrb[0].mxu0
        %v6198 = vadd.f32 %v6005, %v6197
        %v6199 = vpop.f32.mrb[0].mxu0
        %v6200 = vadd.f32 %v6007, %v6199
        %6201 = vmatprep.mubr.bf16.mxu0 %v2715
        %6202 = vmatmul.mubr.bf16.gmra.mrb[0].mxu0 %v2714
        %v6203 = vpop.f32.mrb[0].mxu0
        %v6204 = vadd.f32 %v6011, %v6203
        %v6205 = vpop.f32.mrb[0].mxu0
        %v6206 = vadd.f32 %v6013, %v6205
        %v6207 = vpop.f32.mrb[0].mxu0
        %v6208 = vadd.f32 %v6015, %v6207
        %v6209 = vpop.f32.mrb[0].mxu0
        %v6210 = vadd.f32 %v6017, %v6209
        %6211 = vmatprep.mubr.bf16.mxu0 %v2723
        %6212 = vmatmul.mubr.bf16.gmra.mrb[0].mxu0 %v2722
        %v6213 = vpop.f32.mrb[0].mxu0
        %v6214 = vadd.f32 %v6021, %v6213
        %v6215 = vpop.f32.mrb[0].mxu0
        %v6216 = vadd.f32 %v6023, %v6215
        %v6217 = vpop.f32.mrb[0].mxu0
        %v6218 = vadd.f32 %v6025, %v6217
        %v6219 = vpop.f32.mrb[0].mxu0
        %v6220 = vadd.f32 %v6027, %v6219
        %6221 = vdwg.mxu0
        %6222 = vmatprep.subr.bf16.mxu0 %v4491
        %6223 = vmatpush1.bf16.msra.mxu0 %v4490
        %6224 = vmatprep.subr.bf16.mxu0 %v4497
        %6225 = vmatpush1.bf16.msra.mxu0 %v4496
        %6226 = vmatprep.subr.bf16.mxu0 %v4503
        %6227 = vmatpush1.bf16.msra.mxu0 %v4502
        %6228 = vmatprep.subr.bf16.mxu0 %v4509
        %6229 = vmatpush1.bf16.msra.mxu0 %v4508
        %6230 = vmatprep.subr.bf16.mxu0 %v4515
        %6231 = vmatpush1.bf16.msra.mxu0 %v4514
        %6232 = vmatprep.subr.bf16.mxu0 %v4521
        %6233 = vmatpush1.bf16.msra.mxu0 %v4520
        %6234 = vmatprep.subr.bf16.mxu0 %v4527
        %6235 = vmatpush1.bf16.msra.mxu0 %v4526
        %6236 = vmatprep.subr.bf16.mxu0 %v4533
        %6237 = vmatpush1.bf16.msra.mxu0 %v4532
        %6238 = vmatprep.subr.bf16.mxu0 %v4539
        %6239 = vmatpush1.bf16.msra.mxu0 %v4538
        %6240 = vmatprep.subr.bf16.mxu0 %v4545
        %6241 = vmatpush1.bf16.msra.mxu0 %v4544
        %6242 = vmatprep.subr.bf16.mxu0 %v4551
        %6243 = vmatpush1.bf16.msra.mxu0 %v4550
        %6244 = vmatprep.subr.bf16.mxu0 %v4557
        %6245 = vmatpush1.bf16.msra.mxu0 %v4556
        %6246 = vmatprep.subr.bf16.mxu0 %v4563
        %6247 = vmatpush1.bf16.msra.mxu0 %v4562
        %6248 = vmatprep.subr.bf16.mxu0 %v4569
        %6249 = vmatpush1.bf16.msra.mxu0 %v4568
        %6250 = vmatprep.subr.bf16.mxu0 %v4575
        %6251 = vmatpush1.bf16.msra.mxu0 %v4574
        %6252 = vmatprep.subr.bf16.mxu0 %v4581
        %6253 = vmatpush1.bf16.msra.mxu0 %v4580
        %6254 = vmatprep.mubr.bf16.mxu0 %v2605
        %6255 = vmatmul.mubr.bf16.gmra.mrb[0].mxu0 %v2604
        %v6256 = vpop.f32.mrb[0].mxu0
        %v6257 = vadd.f32 %v6064, %v6256
        %v6258 = vpop.f32.mrb[0].mxu0
        %v6259 = vadd.f32 %v6066, %v6258
        %v6260 = vpop.f32.mrb[0].mxu0
        %v6261 = vadd.f32 %v6068, %v6260
        %v6262 = vpop.f32.mrb[0].mxu0
        %v6263 = vadd.f32 %v6070, %v6262
        %6264 = vmatprep.mubr.bf16.mxu0 %v2613
        %6265 = vmatmul.mubr.bf16.gmra.mrb[0].mxu0 %v2612
        %v6266 = vpop.f32.mrb[0].mxu0
        %v6267 = vadd.f32 %v6074, %v6266
        %v6268 = vpop.f32.mrb[0].mxu0
        %v6269 = vadd.f32 %v6076, %v6268
        %v6270 = vpop.f32.mrb[0].mxu0
        %v6271 = vadd.f32 %v6078, %v6270
        %v6272 = vpop.f32.mrb[0].mxu0
        %v6273 = vadd.f32 %v6080, %v6272
        %6274 = vmatprep.mubr.bf16.mxu0 %v2621
        %6275 = vmatmul.mubr.bf16.gmra.mrb[0].mxu0 %v2620
        %v6276 = vpop.f32.mrb[0].mxu0
        %v6277 = vadd.f32 %v6084, %v6276
        %v6278 = vpop.f32.mrb[0].mxu0
        %v6279 = vadd.f32 %v6086, %v6278
        %v6280 = vpop.f32.mrb[0].mxu0
        %v6281 = vadd.f32 %v6088, %v6280
        %v6282 = vpop.f32.mrb[0].mxu0
        %v6283 = vadd.f32 %v6090, %v6282
        %6284 = vmatprep.mubr.bf16.mxu0 %v2629
        %6285 = vmatmul.mubr.bf16.gmra.mrb[0].mxu0 %v2628
        %v6286 = vpop.f32.mrb[0].mxu0
        %v6287 = vadd.f32 %v6094, %v6286
        %v6288 = vpop.f32.mrb[0].mxu0
        %v6289 = vadd.f32 %v6096, %v6288
        %v6290 = vpop.f32.mrb[0].mxu0
        %v6291 = vadd.f32 %v6098, %v6290
        %v6292 = vpop.f32.mrb[0].mxu0
        %v6293 = vadd.f32 %v6100, %v6292
        %6294 = vmatprep.mubr.bf16.mxu0 %v2637
        %6295 = vmatmul.mubr.bf16.gmra.mrb[0].mxu0 %v2636
        %v6296 = vpop.f32.mrb[0].mxu0
        %v6297 = vadd.f32 %v6104, %v6296
        %v6298 = vpop.f32.mrb[0].mxu0
        %v6299 = vadd.f32 %v6106, %v6298
        %v6300 = vpop.f32.mrb[0].mxu0
        %v6301 = vadd.f32 %v6108, %v6300
        %v6302 = vpop.f32.mrb[0].mxu0
        %v6303 = vadd.f32 %v6110, %v6302
        %6304 = vmatprep.mubr.bf16.mxu0 %v2645
        %6305 = vmatmul.mubr.bf16.gmra.mrb[0].mxu0 %v2644
        %v6306 = vpop.f32.mrb[0].mxu0
        %v6307 = vadd.f32 %v6114, %v6306
        %v6308 = vpop.f32.mrb[0].mxu0
        %v6309 = vadd.f32 %v6116, %v6308
        %v6310 = vpop.f32.mrb[0].mxu0
        %v6311 = vadd.f32 %v6118, %v6310
        %v6312 = vpop.f32.mrb[0].mxu0
        %v6313 = vadd.f32 %v6120, %v6312
        %6314 = vmatprep.mubr.bf16.mxu0 %v2653
        %6315 = vmatmul.mubr.bf16.gmra.mrb[0].mxu0 %v2652
        %v6316 = vpop.f32.mrb[0].mxu0
        %v6317 = vadd.f32 %v6124, %v6316
        %v6318 = vpop.f32.mrb[0].mxu0
        %v6319 = vadd.f32 %v6126, %v6318
        %v6320 = vpop.f32.mrb[0].mxu0
        %v6321 = vadd.f32 %v6128, %v6320
        %v6322 = vpop.f32.mrb[0].mxu0
        %v6323 = vadd.f32 %v6130, %v6322
        %6324 = vmatprep.mubr.bf16.mxu0 %v2661
        %6325 = vmatmul.mubr.bf16.gmra.mrb[0].mxu0 %v2660
        %v6326 = vpop.f32.mrb[0].mxu0
        %v6327 = vadd.f32 %v6134, %v6326
        %v6328 = vpop.f32.mrb[0].mxu0
        %v6329 = vadd.f32 %v6136, %v6328
        %v6330 = vpop.f32.mrb[0].mxu0
        %v6331 = vadd.f32 %v6138, %v6330
        %v6332 = vpop.f32.mrb[0].mxu0
        %v6333 = vadd.f32 %v6140, %v6332
        %6334 = vmatprep.mubr.bf16.mxu0 %v2669
        %6335 = vmatmul.mubr.bf16.gmra.mrb[0].mxu0 %v2668
        %v6336 = vpop.f32.mrb[0].mxu0
        %v6337 = vadd.f32 %v6144, %v6336
        %v6338 = vpop.f32.mrb[0].mxu0
        %v6339 = vadd.f32 %v6146, %v6338
        %v6340 = vpop.f32.mrb[0].mxu0
        %v6341 = vadd.f32 %v6148, %v6340
        %v6342 = vpop.f32.mrb[0].mxu0
        %v6343 = vadd.f32 %v6150, %v6342
        %6344 = vmatprep.mubr.bf16.mxu0 %v2677
        %6345 = vmatmul.mubr.bf16.gmra.mrb[0].mxu0 %v2676
        %v6346 = vpop.f32.mrb[0].mxu0
        %v6347 = vadd.f32 %v6154, %v6346
        %v6348 = vpop.f32.mrb[0].mxu0
        %v6349 = vadd.f32 %v6156, %v6348
        %v6350 = vpop.f32.mrb[0].mxu0
        %v6351 = vadd.f32 %v6158, %v6350
        %v6352 = vpop.f32.mrb[0].mxu0
        %v6353 = vadd.f32 %v6160, %v6352
        %6354 = vmatprep.mubr.bf16.mxu0 %v2685
        %6355 = vmatmul.mubr.bf16.gmra.mrb[0].mxu0 %v2684
        %v6356 = vpop.f32.mrb[0].mxu0
        %v6357 = vadd.f32 %v6164, %v6356
        %v6358 = vpop.f32.mrb[0].mxu0
        %v6359 = vadd.f32 %v6166, %v6358
        %v6360 = vpop.f32.mrb[0].mxu0
        %v6361 = vadd.f32 %v6168, %v6360
        %v6362 = vpop.f32.mrb[0].mxu0
        %v6363 = vadd.f32 %v6170, %v6362
        %6364 = vmatprep.mubr.bf16.mxu0 %v2693
        %6365 = vmatmul.mubr.bf16.gmra.mrb[0].mxu0 %v2692
        %v6366 = vpop.f32.mrb[0].mxu0
        %v6367 = vadd.f32 %v6174, %v6366
        %v6368 = vpop.f32.mrb[0].mxu0
        %v6369 = vadd.f32 %v6176, %v6368
        %v6370 = vpop.f32.mrb[0].mxu0
        %v6371 = vadd.f32 %v6178, %v6370
        %v6372 = vpop.f32.mrb[0].mxu0
        %v6373 = vadd.f32 %v6180, %v6372
        %6374 = vmatprep.mubr.bf16.mxu0 %v2701
        %6375 = vmatmul.mubr.bf16.gmra.mrb[0].mxu0 %v2700
        %v6376 = vpop.f32.mrb[0].mxu0
        %v6377 = vadd.f32 %v6184, %v6376
        %v6378 = vpop.f32.mrb[0].mxu0
        %v6379 = vadd.f32 %v6186, %v6378
        %v6380 = vpop.f32.mrb[0].mxu0
        %v6381 = vadd.f32 %v6188, %v6380
        %v6382 = vpop.f32.mrb[0].mxu0
        %v6383 = vadd.f32 %v6190, %v6382
        %6384 = vmatprep.mubr.bf16.mxu0 %v2709
        %6385 = vmatmul.mubr.bf16.gmra.mrb[0].mxu0 %v2708
        %v6386 = vpop.f32.mrb[0].mxu0
        %v6387 = vadd.f32 %v6194, %v6386
        %v6388 = vpop.f32.mrb[0].mxu0
        %v6389 = vadd.f32 %v6196, %v6388
        %v6390 = vpop.f32.mrb[0].mxu0
        %v6391 = vadd.f32 %v6198, %v6390
        %v6392 = vpop.f32.mrb[0].mxu0
        %v6393 = vadd.f32 %v6200, %v6392
        %6394 = vmatprep.mubr.bf16.mxu0 %v2717
        %6395 = vmatmul.mubr.bf16.gmra.mrb[0].mxu0 %v2716
        %v6396 = vpop.f32.mrb[0].mxu0
        %v6397 = vadd.f32 %v6204, %v6396
        %v6398 = vpop.f32.mrb[0].mxu0
        %v6399 = vadd.f32 %v6206, %v6398
        %v6400 = vpop.f32.mrb[0].mxu0
        %v6401 = vadd.f32 %v6208, %v6400
        %v6402 = vpop.f32.mrb[0].mxu0
        %v6403 = vadd.f32 %v6210, %v6402
        %6404 = vmatprep.mubr.bf16.mxu0 %v2725
        %6405 = vmatmul.mubr.bf16.gmra.mrb[0].mxu0 %v2724
        %v6406 = vpop.f32.mrb[0].mxu0
        %v6407 = vadd.f32 %v6214, %v6406
        %v6408 = vpop.f32.mrb[0].mxu0
        %v6409 = vadd.f32 %v6216, %v6408
        %v6410 = vpop.f32.mrb[0].mxu0
        %v6411 = vadd.f32 %v6218, %v6410
        %v6412 = vpop.f32.mrb[0].mxu0
        %v6413 = vadd.f32 %v6220, %v6412
        %6414 = vdwg.mxu0
        %6415 = vmatprep.subr.bf16.mxu0 %v4587
        %6416 = vmatpush1.bf16.msra.mxu0 %v4586
        %6417 = vmatprep.subr.bf16.mxu0 %v4593
        %6418 = vmatpush1.bf16.msra.mxu0 %v4592
        %6419 = vmatprep.subr.bf16.mxu0 %v4599
        %6420 = vmatpush1.bf16.msra.mxu0 %v4598
        %6421 = vmatprep.subr.bf16.mxu0 %v4605
        %6422 = vmatpush1.bf16.msra.mxu0 %v4604
        %6423 = vmatprep.subr.bf16.mxu0 %v4611
        %6424 = vmatpush1.bf16.msra.mxu0 %v4610
        %6425 = vmatprep.subr.bf16.mxu0 %v4617
        %6426 = vmatpush1.bf16.msra.mxu0 %v4616
        %6427 = vmatprep.subr.bf16.mxu0 %v4623
        %6428 = vmatpush1.bf16.msra.mxu0 %v4622
        %6429 = vmatprep.subr.bf16.mxu0 %v4629
        %6430 = vmatpush1.bf16.msra.mxu0 %v4628
        %6431 = vmatprep.subr.bf16.mxu0 %v4635
        %6432 = vmatpush1.bf16.msra.mxu0 %v4634
        %6433 = vmatprep.subr.bf16.mxu0 %v4641
        %6434 = vmatpush1.bf16.msra.mxu0 %v4640
        %6435 = vmatprep.subr.bf16.mxu0 %v4647
        %6436 = vmatpush1.bf16.msra.mxu0 %v4646
        %6437 = vmatprep.subr.bf16.mxu0 %v4653
        %6438 = vmatpush1.bf16.msra.mxu0 %v4652
        %6439 = vmatprep.subr.bf16.mxu0 %v4659
        %6440 = vmatpush1.bf16.msra.mxu0 %v4658
        %6441 = vmatprep.subr.bf16.mxu0 %v4665
        %6442 = vmatpush1.bf16.msra.mxu0 %v4664
        %6443 = vmatprep.subr.bf16.mxu0 %v4671
        %6444 = vmatpush1.bf16.msra.mxu0 %v4670
        %6445 = vmatprep.subr.bf16.mxu0 %v4677
        %6446 = vmatpush1.bf16.msra.mxu0 %v4676
        %6447 = vmatprep.mubr.bf16.mxu0 %v2607
        %6448 = vmatmul.mubr.bf16.gmra.mrb[0].mxu0 %v2606
        %v6449 = vpop.f32.mrb[0].mxu0
        %v6450 = vadd.f32 %v6257, %v6449
        %v6451 = vpop.f32.mrb[0].mxu0
        %v6452 = vadd.f32 %v6259, %v6451
        %v6453 = vpop.f32.mrb[0].mxu0
        %v6454 = vadd.f32 %v6261, %v6453
        %v6455 = vpop.f32.mrb[0].mxu0
        %v6456 = vadd.f32 %v6263, %v6455
        %6457 = vmatprep.mubr.bf16.mxu0 %v2615
        %6458 = vmatmul.mubr.bf16.gmra.mrb[0].mxu0 %v2614
        %v6459 = vpop.f32.mrb[0].mxu0
        %v6460 = vadd.f32 %v6267, %v6459
        %v6461 = vpop.f32.mrb[0].mxu0
        %v6462 = vadd.f32 %v6269, %v6461
        %v6463 = vpop.f32.mrb[0].mxu0
        %v6464 = vadd.f32 %v6271, %v6463
        %v6465 = vpop.f32.mrb[0].mxu0
        %v6466 = vadd.f32 %v6273, %v6465
        %6467 = vmatprep.mubr.bf16.mxu0 %v2623
        %6468 = vmatmul.mubr.bf16.gmra.mrb[0].mxu0 %v2622
        %v6469 = vpop.f32.mrb[0].mxu0
        %v6470 = vadd.f32 %v6277, %v6469
        %v6471 = vpop.f32.mrb[0].mxu0
        %v6472 = vadd.f32 %v6279, %v6471
        %v6473 = vpop.f32.mrb[0].mxu0
        %v6474 = vadd.f32 %v6281, %v6473
        %v6475 = vpop.f32.mrb[0].mxu0
        %v6476 = vadd.f32 %v6283, %v6475
        %6477 = vmatprep.mubr.bf16.mxu0 %v2631
        %6478 = vmatmul.mubr.bf16.gmra.mrb[0].mxu0 %v2630
        %v6479 = vpop.f32.mrb[0].mxu0
        %v6480 = vadd.f32 %v6287, %v6479
        %v6481 = vpop.f32.mrb[0].mxu0
        %v6482 = vadd.f32 %v6289, %v6481
        %v6483 = vpop.f32.mrb[0].mxu0
        %v6484 = vadd.f32 %v6291, %v6483
        %v6485 = vpop.f32.mrb[0].mxu0
        %v6486 = vadd.f32 %v6293, %v6485
        %6487 = vmatprep.mubr.bf16.mxu0 %v2639
        %6488 = vmatmul.mubr.bf16.gmra.mrb[0].mxu0 %v2638
        %v6489 = vpop.f32.mrb[0].mxu0
        %v6490 = vadd.f32 %v6297, %v6489
        %v6491 = vpop.f32.mrb[0].mxu0
        %v6492 = vadd.f32 %v6299, %v6491
        %v6493 = vpop.f32.mrb[0].mxu0
        %v6494 = vadd.f32 %v6301, %v6493
        %v6495 = vpop.f32.mrb[0].mxu0
        %v6496 = vadd.f32 %v6303, %v6495
        %6497 = vmatprep.mubr.bf16.mxu0 %v2647
        %6498 = vmatmul.mubr.bf16.gmra.mrb[0].mxu0 %v2646
        %v6499 = vpop.f32.mrb[0].mxu0
        %v6500 = vadd.f32 %v6307, %v6499
        %v6501 = vpop.f32.mrb[0].mxu0
        %v6502 = vadd.f32 %v6309, %v6501
        %v6503 = vpop.f32.mrb[0].mxu0
        %v6504 = vadd.f32 %v6311, %v6503
        %v6505 = vpop.f32.mrb[0].mxu0
        %v6506 = vadd.f32 %v6313, %v6505
        %6507 = vmatprep.mubr.bf16.mxu0 %v2655
        %6508 = vmatmul.mubr.bf16.gmra.mrb[0].mxu0 %v2654
        %v6509 = vpop.f32.mrb[0].mxu0
        %v6510 = vadd.f32 %v6317, %v6509
        %v6511 = vpop.f32.mrb[0].mxu0
        %v6512 = vadd.f32 %v6319, %v6511
        %v6513 = vpop.f32.mrb[0].mxu0
        %v6514 = vadd.f32 %v6321, %v6513
        %v6515 = vpop.f32.mrb[0].mxu0
        %v6516 = vadd.f32 %v6323, %v6515
        %6517 = vmatprep.mubr.bf16.mxu0 %v2663
        %6518 = vmatmul.mubr.bf16.gmra.mrb[0].mxu0 %v2662
        %v6519 = vpop.f32.mrb[0].mxu0
        %v6520 = vadd.f32 %v6327, %v6519
        %v6521 = vpop.f32.mrb[0].mxu0
        %v6522 = vadd.f32 %v6329, %v6521
        %v6523 = vpop.f32.mrb[0].mxu0
        %v6524 = vadd.f32 %v6331, %v6523
        %v6525 = vpop.f32.mrb[0].mxu0
        %v6526 = vadd.f32 %v6333, %v6525
        %6527 = vmatprep.mubr.bf16.mxu0 %v2671
        %6528 = vmatmul.mubr.bf16.gmra.mrb[0].mxu0 %v2670
        %v6529 = vpop.f32.mrb[0].mxu0
        %v6530 = vadd.f32 %v6337, %v6529
        %v6531 = vpop.f32.mrb[0].mxu0
        %v6532 = vadd.f32 %v6339, %v6531
        %v6533 = vpop.f32.mrb[0].mxu0
        %v6534 = vadd.f32 %v6341, %v6533
        %v6535 = vpop.f32.mrb[0].mxu0
        %v6536 = vadd.f32 %v6343, %v6535
        %6537 = vmatprep.mubr.bf16.mxu0 %v2679
        %6538 = vmatmul.mubr.bf16.gmra.mrb[0].mxu0 %v2678
        %v6539 = vpop.f32.mrb[0].mxu0
        %v6540 = vadd.f32 %v6347, %v6539
        %v6541 = vpop.f32.mrb[0].mxu0
        %v6542 = vadd.f32 %v6349, %v6541
        %v6543 = vpop.f32.mrb[0].mxu0
        %v6544 = vadd.f32 %v6351, %v6543
        %v6545 = vpop.f32.mrb[0].mxu0
        %v6546 = vadd.f32 %v6353, %v6545
        %6547 = vmatprep.mubr.bf16.mxu0 %v2687
        %6548 = vmatmul.mubr.bf16.gmra.mrb[0].mxu0 %v2686
        %v6549 = vpop.f32.mrb[0].mxu0
        %v6550 = vadd.f32 %v6357, %v6549
        %v6551 = vpop.f32.mrb[0].mxu0
        %v6552 = vadd.f32 %v6359, %v6551
        %v6553 = vpop.f32.mrb[0].mxu0
        %v6554 = vadd.f32 %v6361, %v6553
        %v6555 = vpop.f32.mrb[0].mxu0
        %v6556 = vadd.f32 %v6363, %v6555
        %6557 = vmatprep.mubr.bf16.mxu0 %v2695
        %6558 = vmatmul.mubr.bf16.gmra.mrb[0].mxu0 %v2694
        %v6559 = vpop.f32.mrb[0].mxu0
        %v6560 = vadd.f32 %v6367, %v6559
        %v6561 = vpop.f32.mrb[0].mxu0
        %v6562 = vadd.f32 %v6369, %v6561
        %v6563 = vpop.f32.mrb[0].mxu0
        %v6564 = vadd.f32 %v6371, %v6563
        %v6565 = vpop.f32.mrb[0].mxu0
        %v6566 = vadd.f32 %v6373, %v6565
        %6567 = vmatprep.mubr.bf16.mxu0 %v2703
        %6568 = vmatmul.mubr.bf16.gmra.mrb[0].mxu0 %v2702
        %v6569 = vpop.f32.mrb[0].mxu0
        %v6570 = vadd.f32 %v6377, %v6569
        %v6571 = vpop.f32.mrb[0].mxu0
        %v6572 = vadd.f32 %v6379, %v6571
        %v6573 = vpop.f32.mrb[0].mxu0
        %v6574 = vadd.f32 %v6381, %v6573
        %v6575 = vpop.f32.mrb[0].mxu0
        %v6576 = vadd.f32 %v6383, %v6575
        %6577 = vmatprep.mubr.bf16.mxu0 %v2711
        %6578 = vmatmul.mubr.bf16.gmra.mrb[0].mxu0 %v2710
        %v6579 = vpop.f32.mrb[0].mxu0
        %v6580 = vadd.f32 %v6387, %v6579
        %v6581 = vpop.f32.mrb[0].mxu0
        %v6582 = vadd.f32 %v6389, %v6581
        %v6583 = vpop.f32.mrb[0].mxu0
        %v6584 = vadd.f32 %v6391, %v6583
        %v6585 = vpop.f32.mrb[0].mxu0
        %v6586 = vadd.f32 %v6393, %v6585
        %6587 = vmatprep.mubr.bf16.mxu0 %v2719
        %6588 = vmatmul.mubr.bf16.gmra.mrb[0].mxu0 %v2718
        %v6589 = vpop.f32.mrb[0].mxu0
        %v6590 = vadd.f32 %v6397, %v6589
        %v6591 = vpop.f32.mrb[0].mxu0
        %v6592 = vadd.f32 %v6399, %v6591
        %v6593 = vpop.f32.mrb[0].mxu0
        %v6594 = vadd.f32 %v6401, %v6593
        %v6595 = vpop.f32.mrb[0].mxu0
        %v6596 = vadd.f32 %v6403, %v6595
        %6597 = vmatprep.mubr.bf16.mxu0 %v2727
        %6598 = vmatmul.mubr.bf16.gmra.mrb[0].mxu0 %v2726
        %v6599 = vpop.f32.mrb[0].mxu0
        %v6600 = vadd.f32 %v6407, %v6599
        %v6601 = vpop.f32.mrb[0].mxu0
        %v6602 = vadd.f32 %v6409, %v6601
        %v6603 = vpop.f32.mrb[0].mxu0
        %v6604 = vadd.f32 %v6411, %v6603
        %v6605 = vpop.f32.mrb[0].mxu0
        %v6606 = vadd.f32 %v6413, %v6605
        %6607 = vdwg.mxu0
        %6608 = vmatprep.subr.bf16.mxu0 %v4301
        %6609 = vmatpush1.bf16.msra.mxu0 %v4300
        %6610 = vmatprep.subr.bf16.mxu0 %v4307
        %6611 = vmatpush1.bf16.msra.mxu0 %v4306
        %6612 = vmatprep.subr.bf16.mxu0 %v4313
        %6613 = vmatpush1.bf16.msra.mxu0 %v4312
        %6614 = vmatprep.subr.bf16.mxu0 %v4319
        %6615 = vmatpush1.bf16.msra.mxu0 %v4318
        %6616 = vmatprep.subr.bf16.mxu0 %v4325
        %6617 = vmatpush1.bf16.msra.mxu0 %v4324
        %6618 = vmatprep.subr.bf16.mxu0 %v4331
        %6619 = vmatpush1.bf16.msra.mxu0 %v4330
        %6620 = vmatprep.subr.bf16.mxu0 %v4337
        %6621 = vmatpush1.bf16.msra.mxu0 %v4336
        %6622 = vmatprep.subr.bf16.mxu0 %v4343
        %6623 = vmatpush1.bf16.msra.mxu0 %v4342
        %6624 = vmatprep.subr.bf16.mxu0 %v4349
        %6625 = vmatpush1.bf16.msra.mxu0 %v4348
        %6626 = vmatprep.subr.bf16.mxu0 %v4355
        %6627 = vmatpush1.bf16.msra.mxu0 %v4354
        %6628 = vmatprep.subr.bf16.mxu0 %v4361
        %6629 = vmatpush1.bf16.msra.mxu0 %v4360
        %6630 = vmatprep.subr.bf16.mxu0 %v4367
        %6631 = vmatpush1.bf16.msra.mxu0 %v4366
        %6632 = vmatprep.subr.bf16.mxu0 %v4373
        %6633 = vmatpush1.bf16.msra.mxu0 %v4372
        %6634 = vmatprep.subr.bf16.mxu0 %v4379
        %6635 = vmatpush1.bf16.msra.mxu0 %v4378
        %6636 = vmatprep.subr.bf16.mxu0 %v4385
        %6637 = vmatpush1.bf16.msra.mxu0 %v4384
        %6638 = vmatprep.subr.bf16.mxu0 %v4391
        %6639 = vmatpush1.bf16.msra.mxu0 %v4390
        %6640 = vmatprep.mubr.bf16.mxu0 %v2601
        %6641 = vmatmul.mubr.bf16.gmra.mrb[0].mxu0 %v2600
        %v6642 = vpop.f32.mrb[0].mxu0
        %v6643 = vadd.f32 %v3133, %v6642
        %v6644 = vpop.f32.mrb[0].mxu0
        %v6645 = vadd.f32 %v3137, %v6644
        %v6646 = vpop.f32.mrb[0].mxu0
        %v6647 = vadd.f32 %v3133, %v6646
        %v6648 = vpop.f32.mrb[0].mxu0
        %v6649 = vadd.f32 %v3137, %v6648
        %6650 = vmatprep.mubr.bf16.mxu0 %v2609
        %6651 = vmatmul.mubr.bf16.gmra.mrb[0].mxu0 %v2608
        %v6652 = vpop.f32.mrb[0].mxu0
        %v6653 = vadd.f32 %v3133, %v6652
        %v6654 = vpop.f32.mrb[0].mxu0
        %v6655 = vadd.f32 %v3137, %v6654
        %v6656 = vpop.f32.mrb[0].mxu0
        %v6657 = vadd.f32 %v3133, %v6656
        %v6658 = vpop.f32.mrb[0].mxu0
        %v6659 = vadd.f32 %v3137, %v6658
        %6660 = vmatprep.mubr.bf16.mxu0 %v2617
        %6661 = vmatmul.mubr.bf16.gmra.mrb[0].mxu0 %v2616
        %v6662 = vpop.f32.mrb[0].mxu0
        %v6663 = vadd.f32 %v3133, %v6662
        %v6664 = vpop.f32.mrb[0].mxu0
        %v6665 = vadd.f32 %v3137, %v6664
        %v6666 = vpop.f32.mrb[0].mxu0
        %v6667 = vadd.f32 %v3133, %v6666
        %v6668 = vpop.f32.mrb[0].mxu0
        %v6669 = vadd.f32 %v3137, %v6668
        %6670 = vmatprep.mubr.bf16.mxu0 %v2625
        %6671 = vmatmul.mubr.bf16.gmra.mrb[0].mxu0 %v2624
        %v6672 = vpop.f32.mrb[0].mxu0
        %v6673 = vadd.f32 %v3133, %v6672
        %v6674 = vpop.f32.mrb[0].mxu0
        %v6675 = vadd.f32 %v3137, %v6674
        %v6676 = vpop.f32.mrb[0].mxu0
        %v6677 = vadd.f32 %v3133, %v6676
        %v6678 = vpop.f32.mrb[0].mxu0
        %v6679 = vadd.f32 %v3137, %v6678
        %6680 = vmatprep.mubr.bf16.mxu0 %v2633
        %6681 = vmatmul.mubr.bf16.gmra.mrb[0].mxu0 %v2632
        %v6682 = vpop.f32.mrb[0].mxu0
        %v6683 = vadd.f32 %v3133, %v6682
        %v6684 = vpop.f32.mrb[0].mxu0
        %v6685 = vadd.f32 %v3137, %v6684
        %v6686 = vpop.f32.mrb[0].mxu0
        %v6687 = vadd.f32 %v3133, %v6686
        %v6688 = vpop.f32.mrb[0].mxu0
        %v6689 = vadd.f32 %v3137, %v6688
        %6690 = vmatprep.mubr.bf16.mxu0 %v2641
        %6691 = vmatmul.mubr.bf16.gmra.mrb[0].mxu0 %v2640
        %v6692 = vpop.f32.mrb[0].mxu0
        %v6693 = vadd.f32 %v3133, %v6692
        %v6694 = vpop.f32.mrb[0].mxu0
        %v6695 = vadd.f32 %v3137, %v6694
        %v6696 = vpop.f32.mrb[0].mxu0
        %v6697 = vadd.f32 %v3133, %v6696
        %v6698 = vpop.f32.mrb[0].mxu0
        %v6699 = vadd.f32 %v3137, %v6698
        %6700 = vmatprep.mubr.bf16.mxu0 %v2649
        %6701 = vmatmul.mubr.bf16.gmra.mrb[0].mxu0 %v2648
        %v6702 = vpop.f32.mrb[0].mxu0
        %v6703 = vadd.f32 %v3133, %v6702
        %v6704 = vpop.f32.mrb[0].mxu0
        %v6705 = vadd.f32 %v3137, %v6704
        %v6706 = vpop.f32.mrb[0].mxu0
        %v6707 = vadd.f32 %v3133, %v6706
        %v6708 = vpop.f32.mrb[0].mxu0
        %v6709 = vadd.f32 %v3137, %v6708
        %6710 = vmatprep.mubr.bf16.mxu0 %v2657
        %6711 = vmatmul.mubr.bf16.gmra.mrb[0].mxu0 %v2656
        %v6712 = vpop.f32.mrb[0].mxu0
        %v6713 = vadd.f32 %v3133, %v6712
        %v6714 = vpop.f32.mrb[0].mxu0
        %v6715 = vadd.f32 %v3137, %v6714
        %v6716 = vpop.f32.mrb[0].mxu0
        %v6717 = vadd.f32 %v3133, %v6716
        %v6718 = vpop.f32.mrb[0].mxu0
        %v6719 = vadd.f32 %v3137, %v6718
        %6720 = vmatprep.mubr.bf16.mxu0 %v2665
        %6721 = vmatmul.mubr.bf16.gmra.mrb[0].mxu0 %v2664
        %v6722 = vpop.f32.mrb[0].mxu0
        %v6723 = vadd.f32 %v3133, %v6722
        %v6724 = vpop.f32.mrb[0].mxu0
        %v6725 = vadd.f32 %v3137, %v6724
        %v6726 = vpop.f32.mrb[0].mxu0
        %v6727 = vadd.f32 %v3133, %v6726
        %v6728 = vpop.f32.mrb[0].mxu0
        %v6729 = vadd.f32 %v3137, %v6728
        %6730 = vmatprep.mubr.bf16.mxu0 %v2673
        %6731 = vmatmul.mubr.bf16.gmra.mrb[0].mxu0 %v2672
        %v6732 = vpop.f32.mrb[0].mxu0
        %v6733 = vadd.f32 %v3133, %v6732
        %v6734 = vpop.f32.mrb[0].mxu0
        %v6735 = vadd.f32 %v3137, %v6734
        %v6736 = vpop.f32.mrb[0].mxu0
        %v6737 = vadd.f32 %v3133, %v6736
        %v6738 = vpop.f32.mrb[0].mxu0
        %v6739 = vadd.f32 %v3137, %v6738
        %6740 = vmatprep.mubr.bf16.mxu0 %v2681
        %6741 = vmatmul.mubr.bf16.gmra.mrb[0].mxu0 %v2680
        %v6742 = vpop.f32.mrb[0].mxu0
        %v6743 = vadd.f32 %v3133, %v6742
        %v6744 = vpop.f32.mrb[0].mxu0
        %v6745 = vadd.f32 %v3137, %v6744
        %v6746 = vpop.f32.mrb[0].mxu0
        %v6747 = vadd.f32 %v3133, %v6746
        %v6748 = vpop.f32.mrb[0].mxu0
        %v6749 = vadd.f32 %v3137, %v6748
        %6750 = vmatprep.mubr.bf16.mxu0 %v2689
        %6751 = vmatmul.mubr.bf16.gmra.mrb[0].mxu0 %v2688
        %v6752 = vpop.f32.mrb[0].mxu0
        %v6753 = vadd.f32 %v3133, %v6752
        %v6754 = vpop.f32.mrb[0].mxu0
        %v6755 = vadd.f32 %v3137, %v6754
        %v6756 = vpop.f32.mrb[0].mxu0
        %v6757 = vadd.f32 %v3133, %v6756
        %v6758 = vpop.f32.mrb[0].mxu0
        %v6759 = vadd.f32 %v3137, %v6758
        %6760 = vmatprep.mubr.bf16.mxu0 %v2697
        %6761 = vmatmul.mubr.bf16.gmra.mrb[0].mxu0 %v2696
        %v6762 = vpop.f32.mrb[0].mxu0
        %v6763 = vadd.f32 %v3133, %v6762
        %v6764 = vpop.f32.mrb[0].mxu0
        %v6765 = vadd.f32 %v3137, %v6764
        %v6766 = vpop.f32.mrb[0].mxu0
        %v6767 = vadd.f32 %v3133, %v6766
        %v6768 = vpop.f32.mrb[0].mxu0
        %v6769 = vadd.f32 %v3137, %v6768
        %6770 = vmatprep.mubr.bf16.mxu0 %v2705
        %6771 = vmatmul.mubr.bf16.gmra.mrb[0].mxu0 %v2704
        %v6772 = vpop.f32.mrb[0].mxu0
        %v6773 = vadd.f32 %v3133, %v6772
        %v6774 = vpop.f32.mrb[0].mxu0
        %v6775 = vadd.f32 %v3137, %v6774
        %v6776 = vpop.f32.mrb[0].mxu0
        %v6777 = vadd.f32 %v3133, %v6776
        %v6778 = vpop.f32.mrb[0].mxu0
        %v6779 = vadd.f32 %v3137, %v6778
        %6780 = vmatprep.mubr.bf16.mxu0 %v2713
        %6781 = vmatmul.mubr.bf16.gmra.mrb[0].mxu0 %v2712
        %v6782 = vpop.f32.mrb[0].mxu0
        %v6783 = vadd.f32 %v3133, %v6782
        %v6784 = vpop.f32.mrb[0].mxu0
        %v6785 = vadd.f32 %v3137, %v6784
        %v6786 = vpop.f32.mrb[0].mxu0
        %v6787 = vadd.f32 %v3133, %v6786
        %v6788 = vpop.f32.mrb[0].mxu0
        %v6789 = vadd.f32 %v3137, %v6788
        %6790 = vmatprep.mubr.bf16.mxu0 %v2721
        %6791 = vmatmul.mubr.bf16.gmra.mrb[0].mxu0 %v2720
        %v6792 = vpop.f32.mrb[0].mxu0
        %v6793 = vadd.f32 %v3133, %v6792
        %v6794 = vpop.f32.mrb[0].mxu0
        %v6795 = vadd.f32 %v3137, %v6794
        %v6796 = vpop.f32.mrb[0].mxu0
        %v6797 = vadd.f32 %v3133, %v6796
        %v6798 = vpop.f32.mrb[0].mxu0
        %v6799 = vadd.f32 %v3137, %v6798
        %6800 = vdwg.mxu0
        %6801 = vmatprep.subr.bf16.mxu0 %v4397
        %6802 = vmatpush1.bf16.msra.mxu0 %v4396
        %6803 = vmatprep.subr.bf16.mxu0 %v4403
        %6804 = vmatpush1.bf16.msra.mxu0 %v4402
        %6805 = vmatprep.subr.bf16.mxu0 %v4409
        %6806 = vmatpush1.bf16.msra.mxu0 %v4408
        %6807 = vmatprep.subr.bf16.mxu0 %v4415
        %6808 = vmatpush1.bf16.msra.mxu0 %v4414
        %6809 = vmatprep.subr.bf16.mxu0 %v4421
        %6810 = vmatpush1.bf16.msra.mxu0 %v4420
        %6811 = vmatprep.subr.bf16.mxu0 %v4427
        %6812 = vmatpush1.bf16.msra.mxu0 %v4426
        %6813 = vmatprep.subr.bf16.mxu0 %v4433
        %6814 = vmatpush1.bf16.msra.mxu0 %v4432
        %6815 = vmatprep.subr.bf16.mxu0 %v4439
        %6816 = vmatpush1.bf16.msra.mxu0 %v4438
        %6817 = vmatprep.subr.bf16.mxu0 %v4445
        %6818 = vmatpush1.bf16.msra.mxu0 %v4444
        %6819 = vmatprep.subr.bf16.mxu0 %v4451
        %6820 = vmatpush1.bf16.msra.mxu0 %v4450
        %6821 = vmatprep.subr.bf16.mxu0 %v4457
        %6822 = vmatpush1.bf16.msra.mxu0 %v4456
        %6823 = vmatprep.subr.bf16.mxu0 %v4463
        %6824 = vmatpush1.bf16.msra.mxu0 %v4462
        %6825 = vmatprep.subr.bf16.mxu0 %v4469
        %6826 = vmatpush1.bf16.msra.mxu0 %v4468
        %6827 = vmatprep.subr.bf16.mxu0 %v4475
        %6828 = vmatpush1.bf16.msra.mxu0 %v4474
        %6829 = vmatprep.subr.bf16.mxu0 %v4481
        %6830 = vmatpush1.bf16.msra.mxu0 %v4480
        %6831 = vmatprep.subr.bf16.mxu0 %v4487
        %6832 = vmatpush1.bf16.msra.mxu0 %v4486
        %6833 = vmatprep.mubr.bf16.mxu0 %v2603
        %6834 = vmatmul.mubr.bf16.gmra.mrb[0].mxu0 %v2602
        %v6835 = vpop.f32.mrb[0].mxu0
        %v6836 = vadd.f32 %v6643, %v6835
        %v6837 = vpop.f32.mrb[0].mxu0
        %v6838 = vadd.f32 %v6645, %v6837
        %v6839 = vpop.f32.mrb[0].mxu0
        %v6840 = vadd.f32 %v6647, %v6839
        %v6841 = vpop.f32.mrb[0].mxu0
        %v6842 = vadd.f32 %v6649, %v6841
        %6843 = vmatprep.mubr.bf16.mxu0 %v2611
        %6844 = vmatmul.mubr.bf16.gmra.mrb[0].mxu0 %v2610
        %v6845 = vpop.f32.mrb[0].mxu0
        %v6846 = vadd.f32 %v6653, %v6845
        %v6847 = vpop.f32.mrb[0].mxu0
        %v6848 = vadd.f32 %v6655, %v6847
        %v6849 = vpop.f32.mrb[0].mxu0
        %v6850 = vadd.f32 %v6657, %v6849
        %v6851 = vpop.f32.mrb[0].mxu0
        %v6852 = vadd.f32 %v6659, %v6851
        %6853 = vmatprep.mubr.bf16.mxu0 %v2619
        %6854 = vmatmul.mubr.bf16.gmra.mrb[0].mxu0 %v2618
        %v6855 = vpop.f32.mrb[0].mxu0
        %v6856 = vadd.f32 %v6663, %v6855
        %v6857 = vpop.f32.mrb[0].mxu0
        %v6858 = vadd.f32 %v6665, %v6857
        %v6859 = vpop.f32.mrb[0].mxu0
        %v6860 = vadd.f32 %v6667, %v6859
        %v6861 = vpop.f32.mrb[0].mxu0
        %v6862 = vadd.f32 %v6669, %v6861
        %6863 = vmatprep.mubr.bf16.mxu0 %v2627
        %6864 = vmatmul.mubr.bf16.gmra.mrb[0].mxu0 %v2626
        %v6865 = vpop.f32.mrb[0].mxu0
        %v6866 = vadd.f32 %v6673, %v6865
        %v6867 = vpop.f32.mrb[0].mxu0
        %v6868 = vadd.f32 %v6675, %v6867
        %v6869 = vpop.f32.mrb[0].mxu0
        %v6870 = vadd.f32 %v6677, %v6869
        %v6871 = vpop.f32.mrb[0].mxu0
        %v6872 = vadd.f32 %v6679, %v6871
        %6873 = vmatprep.mubr.bf16.mxu0 %v2635
        %6874 = vmatmul.mubr.bf16.gmra.mrb[0].mxu0 %v2634
        %v6875 = vpop.f32.mrb[0].mxu0
        %v6876 = vadd.f32 %v6683, %v6875
        %v6877 = vpop.f32.mrb[0].mxu0
        %v6878 = vadd.f32 %v6685, %v6877
        %v6879 = vpop.f32.mrb[0].mxu0
        %v6880 = vadd.f32 %v6687, %v6879
        %v6881 = vpop.f32.mrb[0].mxu0
        %v6882 = vadd.f32 %v6689, %v6881
        %6883 = vmatprep.mubr.bf16.mxu0 %v2643
        %6884 = vmatmul.mubr.bf16.gmra.mrb[0].mxu0 %v2642
        %v6885 = vpop.f32.mrb[0].mxu0
        %v6886 = vadd.f32 %v6693, %v6885
        %v6887 = vpop.f32.mrb[0].mxu0
        %v6888 = vadd.f32 %v6695, %v6887
        %v6889 = vpop.f32.mrb[0].mxu0
        %v6890 = vadd.f32 %v6697, %v6889
        %v6891 = vpop.f32.mrb[0].mxu0
        %v6892 = vadd.f32 %v6699, %v6891
        %6893 = vmatprep.mubr.bf16.mxu0 %v2651
        %6894 = vmatmul.mubr.bf16.gmra.mrb[0].mxu0 %v2650
        %v6895 = vpop.f32.mrb[0].mxu0
        %v6896 = vadd.f32 %v6703, %v6895
        %v6897 = vpop.f32.mrb[0].mxu0
        %v6898 = vadd.f32 %v6705, %v6897
        %v6899 = vpop.f32.mrb[0].mxu0
        %v6900 = vadd.f32 %v6707, %v6899
        %v6901 = vpop.f32.mrb[0].mxu0
        %v6902 = vadd.f32 %v6709, %v6901
        %6903 = vmatprep.mubr.bf16.mxu0 %v2659
        %6904 = vmatmul.mubr.bf16.gmra.mrb[0].mxu0 %v2658
        %v6905 = vpop.f32.mrb[0].mxu0
        %v6906 = vadd.f32 %v6713, %v6905
        %v6907 = vpop.f32.mrb[0].mxu0
        %v6908 = vadd.f32 %v6715, %v6907
        %v6909 = vpop.f32.mrb[0].mxu0
        %v6910 = vadd.f32 %v6717, %v6909
        %v6911 = vpop.f32.mrb[0].mxu0
        %v6912 = vadd.f32 %v6719, %v6911
        %6913 = vmatprep.mubr.bf16.mxu0 %v2667
        %6914 = vmatmul.mubr.bf16.gmra.mrb[0].mxu0 %v2666
        %v6915 = vpop.f32.mrb[0].mxu0
        %v6916 = vadd.f32 %v6723, %v6915
        %v6917 = vpop.f32.mrb[0].mxu0
        %v6918 = vadd.f32 %v6725, %v6917
        %v6919 = vpop.f32.mrb[0].mxu0
        %v6920 = vadd.f32 %v6727, %v6919
        %v6921 = vpop.f32.mrb[0].mxu0
        %v6922 = vadd.f32 %v6729, %v6921
        %6923 = vmatprep.mubr.bf16.mxu0 %v2675
        %6924 = vmatmul.mubr.bf16.gmra.mrb[0].mxu0 %v2674
        %v6925 = vpop.f32.mrb[0].mxu0
        %v6926 = vadd.f32 %v6733, %v6925
        %v6927 = vpop.f32.mrb[0].mxu0
        %v6928 = vadd.f32 %v6735, %v6927
        %v6929 = vpop.f32.mrb[0].mxu0
        %v6930 = vadd.f32 %v6737, %v6929
        %v6931 = vpop.f32.mrb[0].mxu0
        %v6932 = vadd.f32 %v6739, %v6931
        %6933 = vmatprep.mubr.bf16.mxu0 %v2683
        %6934 = vmatmul.mubr.bf16.gmra.mrb[0].mxu0 %v2682
        %v6935 = vpop.f32.mrb[0].mxu0
        %v6936 = vadd.f32 %v6743, %v6935
        %v6937 = vpop.f32.mrb[0].mxu0
        %v6938 = vadd.f32 %v6745, %v6937
        %v6939 = vpop.f32.mrb[0].mxu0
        %v6940 = vadd.f32 %v6747, %v6939
        %v6941 = vpop.f32.mrb[0].mxu0
        %v6942 = vadd.f32 %v6749, %v6941
        %6943 = vmatprep.mubr.bf16.mxu0 %v2691
        %6944 = vmatmul.mubr.bf16.gmra.mrb[0].mxu0 %v2690
        %v6945 = vpop.f32.mrb[0].mxu0
        %v6946 = vadd.f32 %v6753, %v6945
        %v6947 = vpop.f32.mrb[0].mxu0
        %v6948 = vadd.f32 %v6755, %v6947
        %v6949 = vpop.f32.mrb[0].mxu0
        %v6950 = vadd.f32 %v6757, %v6949
        %v6951 = vpop.f32.mrb[0].mxu0
        %v6952 = vadd.f32 %v6759, %v6951
        %6953 = vmatprep.mubr.bf16.mxu0 %v2699
        %6954 = vmatmul.mubr.bf16.gmra.mrb[0].mxu0 %v2698
        %v6955 = vpop.f32.mrb[0].mxu0
        %v6956 = vadd.f32 %v6763, %v6955
        %v6957 = vpop.f32.mrb[0].mxu0
        %v6958 = vadd.f32 %v6765, %v6957
        %v6959 = vpop.f32.mrb[0].mxu0
        %v6960 = vadd.f32 %v6767, %v6959
        %v6961 = vpop.f32.mrb[0].mxu0
        %v6962 = vadd.f32 %v6769, %v6961
        %6963 = vmatprep.mubr.bf16.mxu0 %v2707
        %6964 = vmatmul.mubr.bf16.gmra.mrb[0].mxu0 %v2706
        %v6965 = vpop.f32.mrb[0].mxu0
        %v6966 = vadd.f32 %v6773, %v6965
        %v6967 = vpop.f32.mrb[0].mxu0
        %v6968 = vadd.f32 %v6775, %v6967
        %v6969 = vpop.f32.mrb[0].mxu0
        %v6970 = vadd.f32 %v6777, %v6969
        %v6971 = vpop.f32.mrb[0].mxu0
        %v6972 = vadd.f32 %v6779, %v6971
        %6973 = vmatprep.mubr.bf16.mxu0 %v2715
        %6974 = vmatmul.mubr.bf16.gmra.mrb[0].mxu0 %v2714
        %v6975 = vpop.f32.mrb[0].mxu0
        %v6976 = vadd.f32 %v6783, %v6975
        %v6977 = vpop.f32.mrb[0].mxu0
        %v6978 = vadd.f32 %v6785, %v6977
        %v6979 = vpop.f32.mrb[0].mxu0
        %v6980 = vadd.f32 %v6787, %v6979
        %v6981 = vpop.f32.mrb[0].mxu0
        %v6982 = vadd.f32 %v6789, %v6981
        %6983 = vmatprep.mubr.bf16.mxu0 %v2723
        %6984 = vmatmul.mubr.bf16.gmra.mrb[0].mxu0 %v2722
        %v6985 = vpop.f32.mrb[0].mxu0
        %v6986 = vadd.f32 %v6793, %v6985
        %v6987 = vpop.f32.mrb[0].mxu0
        %v6988 = vadd.f32 %v6795, %v6987
        %v6989 = vpop.f32.mrb[0].mxu0
        %v6990 = vadd.f32 %v6797, %v6989
        %v6991 = vpop.f32.mrb[0].mxu0
        %v6992 = vadd.f32 %v6799, %v6991
        %6993 = vdwg.mxu0
        %6994 = vmatprep.subr.bf16.mxu0 %v4493
        %6995 = vmatpush1.bf16.msra.mxu0 %v4492
        %6996 = vmatprep.subr.bf16.mxu0 %v4499
        %6997 = vmatpush1.bf16.msra.mxu0 %v4498
        %6998 = vmatprep.subr.bf16.mxu0 %v4505
        %6999 = vmatpush1.bf16.msra.mxu0 %v4504
        %7000 = vmatprep.subr.bf16.mxu0 %v4511
        %7001 = vmatpush1.bf16.msra.mxu0 %v4510
        %7002 = vmatprep.subr.bf16.mxu0 %v4517
        %7003 = vmatpush1.bf16.msra.mxu0 %v4516
        %7004 = vmatprep.subr.bf16.mxu0 %v4523
        %7005 = vmatpush1.bf16.msra.mxu0 %v4522
        %7006 = vmatprep.subr.bf16.mxu0 %v4529
        %7007 = vmatpush1.bf16.msra.mxu0 %v4528
        %7008 = vmatprep.subr.bf16.mxu0 %v4535
        %7009 = vmatpush1.bf16.msra.mxu0 %v4534
        %7010 = vmatprep.subr.bf16.mxu0 %v4541
        %7011 = vmatpush1.bf16.msra.mxu0 %v4540
        %7012 = vmatprep.subr.bf16.mxu0 %v4547
        %7013 = vmatpush1.bf16.msra.mxu0 %v4546
        %7014 = vmatprep.subr.bf16.mxu0 %v4553
        %7015 = vmatpush1.bf16.msra.mxu0 %v4552
        %7016 = vmatprep.subr.bf16.mxu0 %v4559
        %7017 = vmatpush1.bf16.msra.mxu0 %v4558
        %7018 = vmatprep.subr.bf16.mxu0 %v4565
        %7019 = vmatpush1.bf16.msra.mxu0 %v4564
        %7020 = vmatprep.subr.bf16.mxu0 %v4571
        %7021 = vmatpush1.bf16.msra.mxu0 %v4570
        %7022 = vmatprep.subr.bf16.mxu0 %v4577
        %7023 = vmatpush1.bf16.msra.mxu0 %v4576
        %7024 = vmatprep.subr.bf16.mxu0 %v4583
        %7025 = vmatpush1.bf16.msra.mxu0 %v4582
        %7026 = vmatprep.mubr.bf16.mxu0 %v2605
        %7027 = vmatmul.mubr.bf16.gmra.mrb[0].mxu0 %v2604
        %v7028 = vpop.f32.mrb[0].mxu0
        %v7029 = vadd.f32 %v6836, %v7028
        %v7030 = vpop.f32.mrb[0].mxu0
        %v7031 = vadd.f32 %v6838, %v7030
        %v7032 = vpop.f32.mrb[0].mxu0
        %v7033 = vadd.f32 %v6840, %v7032
        %v7034 = vpop.f32.mrb[0].mxu0
        %v7035 = vadd.f32 %v6842, %v7034
        %7036 = vmatprep.mubr.bf16.mxu0 %v2613
        %7037 = vmatmul.mubr.bf16.gmra.mrb[0].mxu0 %v2612
        %v7038 = vpop.f32.mrb[0].mxu0
        %v7039 = vadd.f32 %v6846, %v7038
        %v7040 = vpop.f32.mrb[0].mxu0
        %v7041 = vadd.f32 %v6848, %v7040
        %v7042 = vpop.f32.mrb[0].mxu0
        %v7043 = vadd.f32 %v6850, %v7042
        %v7044 = vpop.f32.mrb[0].mxu0
        %v7045 = vadd.f32 %v6852, %v7044
        %7046 = vmatprep.mubr.bf16.mxu0 %v2621
        %7047 = vmatmul.mubr.bf16.gmra.mrb[0].mxu0 %v2620
        %v7048 = vpop.f32.mrb[0].mxu0
        %v7049 = vadd.f32 %v6856, %v7048
        %v7050 = vpop.f32.mrb[0].mxu0
        %v7051 = vadd.f32 %v6858, %v7050
        %v7052 = vpop.f32.mrb[0].mxu0
        %v7053 = vadd.f32 %v6860, %v7052
        %v7054 = vpop.f32.mrb[0].mxu0
        %v7055 = vadd.f32 %v6862, %v7054
        %7056 = vmatprep.mubr.bf16.mxu0 %v2629
        %7057 = vmatmul.mubr.bf16.gmra.mrb[0].mxu0 %v2628
        %v7058 = vpop.f32.mrb[0].mxu0
        %v7059 = vadd.f32 %v6866, %v7058
        %v7060 = vpop.f32.mrb[0].mxu0
        %v7061 = vadd.f32 %v6868, %v7060
        %v7062 = vpop.f32.mrb[0].mxu0
        %v7063 = vadd.f32 %v6870, %v7062
        %v7064 = vpop.f32.mrb[0].mxu0
        %v7065 = vadd.f32 %v6872, %v7064
        %7066 = vmatprep.mubr.bf16.mxu0 %v2637
        %7067 = vmatmul.mubr.bf16.gmra.mrb[0].mxu0 %v2636
        %v7068 = vpop.f32.mrb[0].mxu0
        %v7069 = vadd.f32 %v6876, %v7068
        %v7070 = vpop.f32.mrb[0].mxu0
        %v7071 = vadd.f32 %v6878, %v7070
        %v7072 = vpop.f32.mrb[0].mxu0
        %v7073 = vadd.f32 %v6880, %v7072
        %v7074 = vpop.f32.mrb[0].mxu0
        %v7075 = vadd.f32 %v6882, %v7074
        %7076 = vmatprep.mubr.bf16.mxu0 %v2645
        %7077 = vmatmul.mubr.bf16.gmra.mrb[0].mxu0 %v2644
        %v7078 = vpop.f32.mrb[0].mxu0
        %v7079 = vadd.f32 %v6886, %v7078
        %v7080 = vpop.f32.mrb[0].mxu0
        %v7081 = vadd.f32 %v6888, %v7080
        %v7082 = vpop.f32.mrb[0].mxu0
        %v7083 = vadd.f32 %v6890, %v7082
        %v7084 = vpop.f32.mrb[0].mxu0
        %v7085 = vadd.f32 %v6892, %v7084
        %7086 = vmatprep.mubr.bf16.mxu0 %v2653
        %7087 = vmatmul.mubr.bf16.gmra.mrb[0].mxu0 %v2652
        %v7088 = vpop.f32.mrb[0].mxu0
        %v7089 = vadd.f32 %v6896, %v7088
        %v7090 = vpop.f32.mrb[0].mxu0
        %v7091 = vadd.f32 %v6898, %v7090
        %v7092 = vpop.f32.mrb[0].mxu0
        %v7093 = vadd.f32 %v6900, %v7092
        %v7094 = vpop.f32.mrb[0].mxu0
        %v7095 = vadd.f32 %v6902, %v7094
        %7096 = vmatprep.mubr.bf16.mxu0 %v2661
        %7097 = vmatmul.mubr.bf16.gmra.mrb[0].mxu0 %v2660
        %v7098 = vpop.f32.mrb[0].mxu0
        %v7099 = vadd.f32 %v6906, %v7098
        %v7100 = vpop.f32.mrb[0].mxu0
        %v7101 = vadd.f32 %v6908, %v7100
        %v7102 = vpop.f32.mrb[0].mxu0
        %v7103 = vadd.f32 %v6910, %v7102
        %v7104 = vpop.f32.mrb[0].mxu0
        %v7105 = vadd.f32 %v6912, %v7104
        %7106 = vmatprep.mubr.bf16.mxu0 %v2669
        %7107 = vmatmul.mubr.bf16.gmra.mrb[0].mxu0 %v2668
        %v7108 = vpop.f32.mrb[0].mxu0
        %v7109 = vadd.f32 %v6916, %v7108
        %v7110 = vpop.f32.mrb[0].mxu0
        %v7111 = vadd.f32 %v6918, %v7110
        %v7112 = vpop.f32.mrb[0].mxu0
        %v7113 = vadd.f32 %v6920, %v7112
        %v7114 = vpop.f32.mrb[0].mxu0
        %v7115 = vadd.f32 %v6922, %v7114
        %7116 = vmatprep.mubr.bf16.mxu0 %v2677
        %7117 = vmatmul.mubr.bf16.gmra.mrb[0].mxu0 %v2676
        %v7118 = vpop.f32.mrb[0].mxu0
        %v7119 = vadd.f32 %v6926, %v7118
        %v7120 = vpop.f32.mrb[0].mxu0
        %v7121 = vadd.f32 %v6928, %v7120
        %v7122 = vpop.f32.mrb[0].mxu0
        %v7123 = vadd.f32 %v6930, %v7122
        %v7124 = vpop.f32.mrb[0].mxu0
        %v7125 = vadd.f32 %v6932, %v7124
        %7126 = vmatprep.mubr.bf16.mxu0 %v2685
        %7127 = vmatmul.mubr.bf16.gmra.mrb[0].mxu0 %v2684
        %v7128 = vpop.f32.mrb[0].mxu0
        %v7129 = vadd.f32 %v6936, %v7128
        %v7130 = vpop.f32.mrb[0].mxu0
        %v7131 = vadd.f32 %v6938, %v7130
        %v7132 = vpop.f32.mrb[0].mxu0
        %v7133 = vadd.f32 %v6940, %v7132
        %v7134 = vpop.f32.mrb[0].mxu0
        %v7135 = vadd.f32 %v6942, %v7134
        %7136 = vmatprep.mubr.bf16.mxu0 %v2693
        %7137 = vmatmul.mubr.bf16.gmra.mrb[0].mxu0 %v2692
        %v7138 = vpop.f32.mrb[0].mxu0
        %v7139 = vadd.f32 %v6946, %v7138
        %v7140 = vpop.f32.mrb[0].mxu0
        %v7141 = vadd.f32 %v6948, %v7140
        %v7142 = vpop.f32.mrb[0].mxu0
        %v7143 = vadd.f32 %v6950, %v7142
        %v7144 = vpop.f32.mrb[0].mxu0
        %v7145 = vadd.f32 %v6952, %v7144
        %7146 = vmatprep.mubr.bf16.mxu0 %v2701
        %7147 = vmatmul.mubr.bf16.gmra.mrb[0].mxu0 %v2700
        %v7148 = vpop.f32.mrb[0].mxu0
        %v7149 = vadd.f32 %v6956, %v7148
        %v7150 = vpop.f32.mrb[0].mxu0
        %v7151 = vadd.f32 %v6958, %v7150
        %v7152 = vpop.f32.mrb[0].mxu0
        %v7153 = vadd.f32 %v6960, %v7152
        %v7154 = vpop.f32.mrb[0].mxu0
        %v7155 = vadd.f32 %v6962, %v7154
        %7156 = vmatprep.mubr.bf16.mxu0 %v2709
        %7157 = vmatmul.mubr.bf16.gmra.mrb[0].mxu0 %v2708
        %v7158 = vpop.f32.mrb[0].mxu0
        %v7159 = vadd.f32 %v6966, %v7158
        %v7160 = vpop.f32.mrb[0].mxu0
        %v7161 = vadd.f32 %v6968, %v7160
        %v7162 = vpop.f32.mrb[0].mxu0
        %v7163 = vadd.f32 %v6970, %v7162
        %v7164 = vpop.f32.mrb[0].mxu0
        %v7165 = vadd.f32 %v6972, %v7164
        %7166 = vmatprep.mubr.bf16.mxu0 %v2717
        %7167 = vmatmul.mubr.bf16.gmra.mrb[0].mxu0 %v2716
        %v7168 = vpop.f32.mrb[0].mxu0
        %v7169 = vadd.f32 %v6976, %v7168
        %v7170 = vpop.f32.mrb[0].mxu0
        %v7171 = vadd.f32 %v6978, %v7170
        %v7172 = vpop.f32.mrb[0].mxu0
        %v7173 = vadd.f32 %v6980, %v7172
        %v7174 = vpop.f32.mrb[0].mxu0
        %v7175 = vadd.f32 %v6982, %v7174
        %7176 = vmatprep.mubr.bf16.mxu0 %v2725
        %7177 = vmatmul.mubr.bf16.gmra.mrb[0].mxu0 %v2724
        %v7178 = vpop.f32.mrb[0].mxu0
        %v7179 = vadd.f32 %v6986, %v7178
        %v7180 = vpop.f32.mrb[0].mxu0
        %v7181 = vadd.f32 %v6988, %v7180
        %v7182 = vpop.f32.mrb[0].mxu0
        %v7183 = vadd.f32 %v6990, %v7182
        %v7184 = vpop.f32.mrb[0].mxu0
        %v7185 = vadd.f32 %v6992, %v7184
        %7186 = vdwg.mxu0
        %7187 = vmatprep.subr.bf16.mxu0 %v4589
        %7188 = vmatpush1.bf16.msra.mxu0 %v4588
        %7189 = vmatprep.subr.bf16.mxu0 %v4595
        %7190 = vmatpush1.bf16.msra.mxu0 %v4594
        %7191 = vmatprep.subr.bf16.mxu0 %v4601
        %7192 = vmatpush1.bf16.msra.mxu0 %v4600
        %7193 = vmatprep.subr.bf16.mxu0 %v4607
        %7194 = vmatpush1.bf16.msra.mxu0 %v4606
        %7195 = vmatprep.subr.bf16.mxu0 %v4613
        %7196 = vmatpush1.bf16.msra.mxu0 %v4612
        %7197 = vmatprep.subr.bf16.mxu0 %v4619
        %7198 = vmatpush1.bf16.msra.mxu0 %v4618
        %7199 = vmatprep.subr.bf16.mxu0 %v4625
        %7200 = vmatpush1.bf16.msra.mxu0 %v4624
        %7201 = vmatprep.subr.bf16.mxu0 %v4631
        %7202 = vmatpush1.bf16.msra.mxu0 %v4630
        %7203 = vmatprep.subr.bf16.mxu0 %v4637
        %7204 = vmatpush1.bf16.msra.mxu0 %v4636
        %7205 = vmatprep.subr.bf16.mxu0 %v4643
        %7206 = vmatpush1.bf16.msra.mxu0 %v4642
        %7207 = vmatprep.subr.bf16.mxu0 %v4649
        %7208 = vmatpush1.bf16.msra.mxu0 %v4648
        %7209 = vmatprep.subr.bf16.mxu0 %v4655
        %7210 = vmatpush1.bf16.msra.mxu0 %v4654
        %7211 = vmatprep.subr.bf16.mxu0 %v4661
        %7212 = vmatpush1.bf16.msra.mxu0 %v4660
        %7213 = vmatprep.subr.bf16.mxu0 %v4667
        %7214 = vmatpush1.bf16.msra.mxu0 %v4666
        %7215 = vmatprep.subr.bf16.mxu0 %v4673
        %7216 = vmatpush1.bf16.msra.mxu0 %v4672
        %7217 = vmatprep.subr.bf16.mxu0 %v4679
        %7218 = vmatpush1.bf16.msra.mxu0 %v4678
        %7219 = vmatprep.mubr.bf16.mxu0 %v2607
        %7220 = vmatmul.mubr.bf16.gmra.mrb[0].mxu0 %v2606
        %v7221 = vpop.f32.mrb[0].mxu0
        %v7222 = vadd.f32 %v7029, %v7221
        %v7223 = vpop.f32.mrb[0].mxu0
        %v7224 = vadd.f32 %v7031, %v7223
        %v7225 = vpop.f32.mrb[0].mxu0
        %v7226 = vadd.f32 %v7033, %v7225
        %v7227 = vpop.f32.mrb[0].mxu0
        %v7228 = vadd.f32 %v7035, %v7227
        %7229 = vmatprep.mubr.bf16.mxu0 %v2615
        %7230 = vmatmul.mubr.bf16.gmra.mrb[0].mxu0 %v2614
        %v7231 = vpop.f32.mrb[0].mxu0
        %v7232 = vadd.f32 %v7039, %v7231
        %v7233 = vpop.f32.mrb[0].mxu0
        %v7234 = vadd.f32 %v7041, %v7233
        %v7235 = vpop.f32.mrb[0].mxu0
        %v7236 = vadd.f32 %v7043, %v7235
        %v7237 = vpop.f32.mrb[0].mxu0
        %v7238 = vadd.f32 %v7045, %v7237
        %7239 = vmatprep.mubr.bf16.mxu0 %v2623
        %7240 = vmatmul.mubr.bf16.gmra.mrb[0].mxu0 %v2622
        %v7241 = vpop.f32.mrb[0].mxu0
        %v7242 = vadd.f32 %v7049, %v7241
        %v7243 = vpop.f32.mrb[0].mxu0
        %v7244 = vadd.f32 %v7051, %v7243
        %v7245 = vpop.f32.mrb[0].mxu0
        %v7246 = vadd.f32 %v7053, %v7245
        %v7247 = vpop.f32.mrb[0].mxu0
        %v7248 = vadd.f32 %v7055, %v7247
        %7249 = vmatprep.mubr.bf16.mxu0 %v2631
        %7250 = vmatmul.mubr.bf16.gmra.mrb[0].mxu0 %v2630
        %v7251 = vpop.f32.mrb[0].mxu0
        %v7252 = vadd.f32 %v7059, %v7251
        %v7253 = vpop.f32.mrb[0].mxu0
        %v7254 = vadd.f32 %v7061, %v7253
        %v7255 = vpop.f32.mrb[0].mxu0
        %v7256 = vadd.f32 %v7063, %v7255
        %v7257 = vpop.f32.mrb[0].mxu0
        %v7258 = vadd.f32 %v7065, %v7257
        %7259 = vmatprep.mubr.bf16.mxu0 %v2639
        %7260 = vmatmul.mubr.bf16.gmra.mrb[0].mxu0 %v2638
        %v7261 = vpop.f32.mrb[0].mxu0
        %v7262 = vadd.f32 %v7069, %v7261
        %v7263 = vpop.f32.mrb[0].mxu0
        %v7264 = vadd.f32 %v7071, %v7263
        %v7265 = vpop.f32.mrb[0].mxu0
        %v7266 = vadd.f32 %v7073, %v7265
        %v7267 = vpop.f32.mrb[0].mxu0
        %v7268 = vadd.f32 %v7075, %v7267
        %7269 = vmatprep.mubr.bf16.mxu0 %v2647
        %7270 = vmatmul.mubr.bf16.gmra.mrb[0].mxu0 %v2646
        %v7271 = vpop.f32.mrb[0].mxu0
        %v7272 = vadd.f32 %v7079, %v7271
        %v7273 = vpop.f32.mrb[0].mxu0
        %v7274 = vadd.f32 %v7081, %v7273
        %v7275 = vpop.f32.mrb[0].mxu0
        %v7276 = vadd.f32 %v7083, %v7275
        %v7277 = vpop.f32.mrb[0].mxu0
        %v7278 = vadd.f32 %v7085, %v7277
        %7279 = vmatprep.mubr.bf16.mxu0 %v2655
        %7280 = vmatmul.mubr.bf16.gmra.mrb[0].mxu0 %v2654
        %v7281 = vpop.f32.mrb[0].mxu0
        %v7282 = vadd.f32 %v7089, %v7281
        %v7283 = vpop.f32.mrb[0].mxu0
        %v7284 = vadd.f32 %v7091, %v7283
        %v7285 = vpop.f32.mrb[0].mxu0
        %v7286 = vadd.f32 %v7093, %v7285
        %v7287 = vpop.f32.mrb[0].mxu0
        %v7288 = vadd.f32 %v7095, %v7287
        %7289 = vmatprep.mubr.bf16.mxu0 %v2663
        %7290 = vmatmul.mubr.bf16.gmra.mrb[0].mxu0 %v2662
        %v7291 = vpop.f32.mrb[0].mxu0
        %v7292 = vadd.f32 %v7099, %v7291
        %v7293 = vpop.f32.mrb[0].mxu0
        %v7294 = vadd.f32 %v7101, %v7293
        %v7295 = vpop.f32.mrb[0].mxu0
        %v7296 = vadd.f32 %v7103, %v7295
        %v7297 = vpop.f32.mrb[0].mxu0
        %v7298 = vadd.f32 %v7105, %v7297
        %7299 = vmatprep.mubr.bf16.mxu0 %v2671
        %7300 = vmatmul.mubr.bf16.gmra.mrb[0].mxu0 %v2670
        %v7301 = vpop.f32.mrb[0].mxu0
        %v7302 = vadd.f32 %v7109, %v7301
        %v7303 = vpop.f32.mrb[0].mxu0
        %v7304 = vadd.f32 %v7111, %v7303
        %v7305 = vpop.f32.mrb[0].mxu0
        %v7306 = vadd.f32 %v7113, %v7305
        %v7307 = vpop.f32.mrb[0].mxu0
        %v7308 = vadd.f32 %v7115, %v7307
        %7309 = vmatprep.mubr.bf16.mxu0 %v2679
        %7310 = vmatmul.mubr.bf16.gmra.mrb[0].mxu0 %v2678
        %v7311 = vpop.f32.mrb[0].mxu0
        %v7312 = vadd.f32 %v7119, %v7311
        %v7313 = vpop.f32.mrb[0].mxu0
        %v7314 = vadd.f32 %v7121, %v7313
        %v7315 = vpop.f32.mrb[0].mxu0
        %v7316 = vadd.f32 %v7123, %v7315
        %v7317 = vpop.f32.mrb[0].mxu0
        %v7318 = vadd.f32 %v7125, %v7317
        %7319 = vmatprep.mubr.bf16.mxu0 %v2687
        %7320 = vmatmul.mubr.bf16.gmra.mrb[0].mxu0 %v2686
        %v7321 = vpop.f32.mrb[0].mxu0
        %v7322 = vadd.f32 %v7129, %v7321
        %v7323 = vpop.f32.mrb[0].mxu0
        %v7324 = vadd.f32 %v7131, %v7323
        %v7325 = vpop.f32.mrb[0].mxu0
        %v7326 = vadd.f32 %v7133, %v7325
        %v7327 = vpop.f32.mrb[0].mxu0
        %v7328 = vadd.f32 %v7135, %v7327
        %7329 = vmatprep.mubr.bf16.mxu0 %v2695
        %7330 = vmatmul.mubr.bf16.gmra.mrb[0].mxu0 %v2694
        %v7331 = vpop.f32.mrb[0].mxu0
        %v7332 = vadd.f32 %v7139, %v7331
        %v7333 = vpop.f32.mrb[0].mxu0
        %v7334 = vadd.f32 %v7141, %v7333
        %v7335 = vpop.f32.mrb[0].mxu0
        %v7336 = vadd.f32 %v7143, %v7335
        %v7337 = vpop.f32.mrb[0].mxu0
        %v7338 = vadd.f32 %v7145, %v7337
        %7339 = vmatprep.mubr.bf16.mxu0 %v2703
        %7340 = vmatmul.mubr.bf16.gmra.mrb[0].mxu0 %v2702
        %v7341 = vpop.f32.mrb[0].mxu0
        %v7342 = vadd.f32 %v7149, %v7341
        %v7343 = vpop.f32.mrb[0].mxu0
        %v7344 = vadd.f32 %v7151, %v7343
        %v7345 = vpop.f32.mrb[0].mxu0
        %v7346 = vadd.f32 %v7153, %v7345
        %v7347 = vpop.f32.mrb[0].mxu0
        %v7348 = vadd.f32 %v7155, %v7347
        %7349 = vmatprep.mubr.bf16.mxu0 %v2711
        %7350 = vmatmul.mubr.bf16.gmra.mrb[0].mxu0 %v2710
        %v7351 = vpop.f32.mrb[0].mxu0
        %v7352 = vadd.f32 %v7159, %v7351
        %v7353 = vpop.f32.mrb[0].mxu0
        %v7354 = vadd.f32 %v7161, %v7353
        %v7355 = vpop.f32.mrb[0].mxu0
        %v7356 = vadd.f32 %v7163, %v7355
        %v7357 = vpop.f32.mrb[0].mxu0
        %v7358 = vadd.f32 %v7165, %v7357
        %7359 = vmatprep.mubr.bf16.mxu0 %v2719
        %7360 = vmatmul.mubr.bf16.gmra.mrb[0].mxu0 %v2718
        %v7361 = vpop.f32.mrb[0].mxu0
        %v7362 = vadd.f32 %v7169, %v7361
        %v7363 = vpop.f32.mrb[0].mxu0
        %v7364 = vadd.f32 %v7171, %v7363
        %v7365 = vpop.f32.mrb[0].mxu0
        %v7366 = vadd.f32 %v7173, %v7365
        %v7367 = vpop.f32.mrb[0].mxu0
        %v7368 = vadd.f32 %v7175, %v7367
        %7369 = vmatprep.mubr.bf16.mxu0 %v2727
        %7370 = vmatmul.mubr.bf16.gmra.mrb[0].mxu0 %v2726
        %v7371 = vpop.f32.mrb[0].mxu0
        %v7372 = vadd.f32 %v7179, %v7371
        %v7373 = vpop.f32.mrb[0].mxu0
        %v7374 = vadd.f32 %v7181, %v7373
        %v7375 = vpop.f32.mrb[0].mxu0
        %v7376 = vadd.f32 %v7183, %v7375
        %v7377 = vpop.f32.mrb[0].mxu0
        %v7378 = vadd.f32 %v7185, %v7377
        %7379 = vdwg.mxu0
        %v7380 = vmax.f32 %v5678, 0.0
        %v7381 = vmax.f32 %v5680, 0.0
        %v7382 = vmax.f32 %v5682, 0.0
        %v7383 = vmax.f32 %v5684, 0.0
        %v7384 = vmax.f32 %v5688, 0.0
        %v7385 = vmax.f32 %v5690, 0.0
        %v7386 = vmax.f32 %v5692, 0.0
        %v7387 = vmax.f32 %v5694, 0.0
        %v7388 = vmax.f32 %v5698, 0.0
        %v7389 = vmax.f32 %v5700, 0.0
        %v7390 = vmax.f32 %v5702, 0.0
        %v7391 = vmax.f32 %v5704, 0.0
        %v7392 = vmax.f32 %v5708, 0.0
        %v7393 = vmax.f32 %v5710, 0.0
        %v7394 = vmax.f32 %v5712, 0.0
        %v7395 = vmax.f32 %v5714, 0.0
        %v7396 = vmax.f32 %v5718, 0.0
        %v7397 = vmax.f32 %v5720, 0.0
        %v7398 = vmax.f32 %v5722, 0.0
        %v7399 = vmax.f32 %v5724, 0.0
        %v7400 = vmax.f32 %v5728, 0.0
        %v7401 = vmax.f32 %v5730, 0.0
        %v7402 = vmax.f32 %v5732, 0.0
        %v7403 = vmax.f32 %v5734, 0.0
        %v7404 = vmax.f32 %v5738, 0.0
        %v7405 = vmax.f32 %v5740, 0.0
        %v7406 = vmax.f32 %v5742, 0.0
        %v7407 = vmax.f32 %v5744, 0.0
        %v7408 = vmax.f32 %v5748, 0.0
        %v7409 = vmax.f32 %v5750, 0.0
        %v7410 = vmax.f32 %v5752, 0.0
        %v7411 = vmax.f32 %v5754, 0.0
        %v7412 = vmax.f32 %v5758, 0.0
        %v7413 = vmax.f32 %v5760, 0.0
        %v7414 = vmax.f32 %v5762, 0.0
        %v7415 = vmax.f32 %v5764, 0.0
        %v7416 = vmax.f32 %v5768, 0.0
        %v7417 = vmax.f32 %v5770, 0.0
        %v7418 = vmax.f32 %v5772, 0.0
        %v7419 = vmax.f32 %v5774, 0.0
        %v7420 = vmax.f32 %v5778, 0.0
        %v7421 = vmax.f32 %v5780, 0.0
        %v7422 = vmax.f32 %v5782, 0.0
        %v7423 = vmax.f32 %v5784, 0.0
        %v7424 = vmax.f32 %v5788, 0.0
        %v7425 = vmax.f32 %v5790, 0.0
        %v7426 = vmax.f32 %v5792, 0.0
        %v7427 = vmax.f32 %v5794, 0.0
        %v7428 = vmax.f32 %v5798, 0.0
        %v7429 = vmax.f32 %v5800, 0.0
        %v7430 = vmax.f32 %v5802, 0.0
        %v7431 = vmax.f32 %v5804, 0.0
        %v7432 = vmax.f32 %v5808, 0.0
        %v7433 = vmax.f32 %v5810, 0.0
        %v7434 = vmax.f32 %v5812, 0.0
        %v7435 = vmax.f32 %v5814, 0.0
        %v7436 = vmax.f32 %v5818, 0.0
        %v7437 = vmax.f32 %v5820, 0.0
        %v7438 = vmax.f32 %v5822, 0.0
        %v7439 = vmax.f32 %v5824, 0.0
        %v7440 = vmax.f32 %v5828, 0.0
        %v7441 = vmax.f32 %v5830, 0.0
        %v7442 = vmax.f32 %v5832, 0.0
        %v7443 = vmax.f32 %v5834, 0.0
        %v7444 = vmax.f32 %v6450, 0.0
        %v7445 = vmax.f32 %v6452, 0.0
        %v7446 = vmax.f32 %v7222, 0.0
        %v7447 = vmax.f32 %v7224, 0.0
        %v7448 = vmax.f32 %v6454, 0.0
        %v7449 = vmax.f32 %v6456, 0.0
        %v7450 = vmax.f32 %v7226, 0.0
        %v7451 = vmax.f32 %v7228, 0.0
        %v7452 = vmax.f32 %v6460, 0.0
        %v7453 = vmax.f32 %v6462, 0.0
        %v7454 = vmax.f32 %v7232, 0.0
        %v7455 = vmax.f32 %v7234, 0.0
        %v7456 = vmax.f32 %v6464, 0.0
        %v7457 = vmax.f32 %v6466, 0.0
        %v7458 = vmax.f32 %v7236, 0.0
        %v7459 = vmax.f32 %v7238, 0.0
        %v7460 = vmax.f32 %v6470, 0.0
        %v7461 = vmax.f32 %v6472, 0.0
        %v7462 = vmax.f32 %v7242, 0.0
        %v7463 = vmax.f32 %v7244, 0.0
        %v7464 = vmax.f32 %v6474, 0.0
        %v7465 = vmax.f32 %v6476, 0.0
        %v7466 = vmax.f32 %v7246, 0.0
        %v7467 = vmax.f32 %v7248, 0.0
        %v7468 = vmax.f32 %v6480, 0.0
        %v7469 = vmax.f32 %v6482, 0.0
        %v7470 = vmax.f32 %v7252, 0.0
        %v7471 = vmax.f32 %v7254, 0.0
        %v7472 = vmax.f32 %v6484, 0.0
        %v7473 = vmax.f32 %v6486, 0.0
        %v7474 = vmax.f32 %v7256, 0.0
        %v7475 = vmax.f32 %v7258, 0.0
        %v7476 = vmax.f32 %v6490, 0.0
        %v7477 = vmax.f32 %v6492, 0.0
        %v7478 = vmax.f32 %v7262, 0.0
        %v7479 = vmax.f32 %v7264, 0.0
        %v7480 = vmax.f32 %v6494, 0.0
        %v7481 = vmax.f32 %v6496, 0.0
        %v7482 = vmax.f32 %v7266, 0.0
        %v7483 = vmax.f32 %v7268, 0.0
        %v7484 = vmax.f32 %v6500, 0.0
        %v7485 = vmax.f32 %v6502, 0.0
        %v7486 = vmax.f32 %v7272, 0.0
        %v7487 = vmax.f32 %v7274, 0.0
        %v7488 = vmax.f32 %v6504, 0.0
        %v7489 = vmax.f32 %v6506, 0.0
        %v7490 = vmax.f32 %v7276, 0.0
        %v7491 = vmax.f32 %v7278, 0.0
        %v7492 = vmax.f32 %v6510, 0.0
        %v7493 = vmax.f32 %v6512, 0.0
        %v7494 = vmax.f32 %v7282, 0.0
        %v7495 = vmax.f32 %v7284, 0.0
        %v7496 = vmax.f32 %v6514, 0.0
        %v7497 = vmax.f32 %v6516, 0.0
        %v7498 = vmax.f32 %v7286, 0.0
        %v7499 = vmax.f32 %v7288, 0.0
        %v7500 = vmax.f32 %v6520, 0.0
        %v7501 = vmax.f32 %v6522, 0.0
        %v7502 = vmax.f32 %v7292, 0.0
        %v7503 = vmax.f32 %v7294, 0.0
        %v7504 = vmax.f32 %v6524, 0.0
        %v7505 = vmax.f32 %v6526, 0.0
        %v7506 = vmax.f32 %v7296, 0.0
        %v7507 = vmax.f32 %v7298, 0.0
        %v7508 = vmax.f32 %v6530, 0.0
        %v7509 = vmax.f32 %v6532, 0.0
        %v7510 = vmax.f32 %v7302, 0.0
        %v7511 = vmax.f32 %v7304, 0.0
        %v7512 = vmax.f32 %v6534, 0.0
        %v7513 = vmax.f32 %v6536, 0.0
        %v7514 = vmax.f32 %v7306, 0.0
        %v7515 = vmax.f32 %v7308, 0.0
        %v7516 = vmax.f32 %v6540, 0.0
        %v7517 = vmax.f32 %v6542, 0.0
        %v7518 = vmax.f32 %v7312, 0.0
        %v7519 = vmax.f32 %v7314, 0.0
        %v7520 = vmax.f32 %v6544, 0.0
        %v7521 = vmax.f32 %v6546, 0.0
        %v7522 = vmax.f32 %v7316, 0.0
        %v7523 = vmax.f32 %v7318, 0.0
        %v7524 = vmax.f32 %v6550, 0.0
        %v7525 = vmax.f32 %v6552, 0.0
        %v7526 = vmax.f32 %v7322, 0.0
        %v7527 = vmax.f32 %v7324, 0.0
        %v7528 = vmax.f32 %v6554, 0.0
        %v7529 = vmax.f32 %v6556, 0.0
        %v7530 = vmax.f32 %v7326, 0.0
        %v7531 = vmax.f32 %v7328, 0.0
        %v7532 = vmax.f32 %v6560, 0.0
        %v7533 = vmax.f32 %v6562, 0.0
        %v7534 = vmax.f32 %v7332, 0.0
        %v7535 = vmax.f32 %v7334, 0.0
        %v7536 = vmax.f32 %v6564, 0.0
        %v7537 = vmax.f32 %v6566, 0.0
        %v7538 = vmax.f32 %v7336, 0.0
        %v7539 = vmax.f32 %v7338, 0.0
        %v7540 = vmax.f32 %v6570, 0.0
        %v7541 = vmax.f32 %v6572, 0.0
        %v7542 = vmax.f32 %v7342, 0.0
        %v7543 = vmax.f32 %v7344, 0.0
        %v7544 = vmax.f32 %v6574, 0.0
        %v7545 = vmax.f32 %v6576, 0.0
        %v7546 = vmax.f32 %v7346, 0.0
        %v7547 = vmax.f32 %v7348, 0.0
        %v7548 = vmax.f32 %v6580, 0.0
        %v7549 = vmax.f32 %v6582, 0.0
        %v7550 = vmax.f32 %v7352, 0.0
        %v7551 = vmax.f32 %v7354, 0.0
        %v7552 = vmax.f32 %v6584, 0.0
        %v7553 = vmax.f32 %v6586, 0.0
        %v7554 = vmax.f32 %v7356, 0.0
        %v7555 = vmax.f32 %v7358, 0.0
        %v7556 = vmax.f32 %v6590, 0.0
        %v7557 = vmax.f32 %v6592, 0.0
        %v7558 = vmax.f32 %v7362, 0.0
        %v7559 = vmax.f32 %v7364, 0.0
        %v7560 = vmax.f32 %v6594, 0.0
        %v7561 = vmax.f32 %v6596, 0.0
        %v7562 = vmax.f32 %v7366, 0.0
        %v7563 = vmax.f32 %v7368, 0.0
        %v7564 = vmax.f32 %v6600, 0.0
        %v7565 = vmax.f32 %v6602, 0.0
        %v7566 = vmax.f32 %v7372, 0.0
        %v7567 = vmax.f32 %v7374, 0.0
        %v7568 = vmax.f32 %v6604, 0.0
        %v7569 = vmax.f32 %v6606, 0.0
        %v7570 = vmax.f32 %v7376, 0.0
        %v7571 = vmax.f32 %v7378, 0.0
        %v7572 = vpack.c.bf16 %v7448, %v7444
        %v7573 = vpack.c.bf16 %v7449, %v7445
        %v7574 = vpack.c.bf16 %v7450, %v7446
        %v7575 = vpack.c.bf16 %v7451, %v7447
        %v7576 = vpack.c.bf16 %v7456, %v7452
        %v7577 = vpack.c.bf16 %v7457, %v7453
        %v7578 = vpack.c.bf16 %v7458, %v7454
        %v7579 = vpack.c.bf16 %v7459, %v7455
        %v7580 = vpack.c.bf16 %v7464, %v7460
        %v7581 = vpack.c.bf16 %v7465, %v7461
        %v7582 = vpack.c.bf16 %v7466, %v7462
        %v7583 = vpack.c.bf16 %v7467, %v7463
        %v7584 = vpack.c.bf16 %v7472, %v7468
        %v7585 = vpack.c.bf16 %v7473, %v7469
        %v7586 = vpack.c.bf16 %v7474, %v7470
        %v7587 = vpack.c.bf16 %v7475, %v7471
        %v7588 = vpack.c.bf16 %v7480, %v7476
        %v7589 = vpack.c.bf16 %v7481, %v7477
        %v7590 = vpack.c.bf16 %v7482, %v7478
        %v7591 = vpack.c.bf16 %v7483, %v7479
        %v7592 = vpack.c.bf16 %v7488, %v7484
        %v7593 = vpack.c.bf16 %v7489, %v7485
        %v7594 = vpack.c.bf16 %v7490, %v7486
        %v7595 = vpack.c.bf16 %v7491, %v7487
        %v7596 = vpack.c.bf16 %v7496, %v7492
        %v7597 = vpack.c.bf16 %v7497, %v7493
        %v7598 = vpack.c.bf16 %v7498, %v7494
        %v7599 = vpack.c.bf16 %v7499, %v7495
        %v7600 = vpack.c.bf16 %v7504, %v7500
        %v7601 = vpack.c.bf16 %v7505, %v7501
        %v7602 = vpack.c.bf16 %v7506, %v7502
        %v7603 = vpack.c.bf16 %v7507, %v7503
        %v7604 = vpack.c.bf16 %v7512, %v7508
        %v7605 = vpack.c.bf16 %v7513, %v7509
        %v7606 = vpack.c.bf16 %v7514, %v7510
        %v7607 = vpack.c.bf16 %v7515, %v7511
        %v7608 = vpack.c.bf16 %v7520, %v7516
        %v7609 = vpack.c.bf16 %v7521, %v7517
        %v7610 = vpack.c.bf16 %v7522, %v7518
        %v7611 = vpack.c.bf16 %v7523, %v7519
        %v7612 = vpack.c.bf16 %v7528, %v7524
        %v7613 = vpack.c.bf16 %v7529, %v7525
        %v7614 = vpack.c.bf16 %v7530, %v7526
        %v7615 = vpack.c.bf16 %v7531, %v7527
        %v7616 = vpack.c.bf16 %v7536, %v7532
        %v7617 = vpack.c.bf16 %v7537, %v7533
        %v7618 = vpack.c.bf16 %v7538, %v7534
        %v7619 = vpack.c.bf16 %v7539, %v7535
        %v7620 = vpack.c.bf16 %v7544, %v7540
        %v7621 = vpack.c.bf16 %v7545, %v7541
        %v7622 = vpack.c.bf16 %v7546, %v7542
        %v7623 = vpack.c.bf16 %v7547, %v7543
        %v7624 = vpack.c.bf16 %v7552, %v7548
        %v7625 = vpack.c.bf16 %v7553, %v7549
        %v7626 = vpack.c.bf16 %v7554, %v7550
        %v7627 = vpack.c.bf16 %v7555, %v7551
        %v7628 = vpack.c.bf16 %v7560, %v7556
        %v7629 = vpack.c.bf16 %v7561, %v7557
        %v7630 = vpack.c.bf16 %v7562, %v7558
        %v7631 = vpack.c.bf16 %v7563, %v7559
        %v7632 = vpack.c.bf16 %v7568, %v7564
        %v7633 = vpack.c.bf16 %v7569, %v7565
        %v7634 = vpack.c.bf16 %v7570, %v7566
        %v7635 = vpack.c.bf16 %v7571, %v7567
        %v7636 = vld [vmem:[#allocation10] sm:$0xff]
        %v7637 = vld [vmem:[#allocation10 + $0x8] sm:$0xff]
        %v7638 = vld [vmem:[#allocation10 + $0x10] sm:$0xff]
        %v7639 = vld [vmem:[#allocation10 + $0x18] sm:$0xff]
        %v7640 = vld [vmem:[#allocation10 + $0x20] sm:$0xff]
        %v7641 = vld [vmem:[#allocation10 + $0x28] sm:$0xff]
        %v7642 = vld [vmem:[#allocation10 + $0x30] sm:$0xff]
        %v7643 = vld [vmem:[#allocation10 + $0x38] sm:$0xff]
        %v7644 = vld [vmem:[#allocation10 + $0x40] sm:$0xff]
        %v7645 = vld [vmem:[#allocation10 + $0x48] sm:$0xff]
        %v7646 = vld [vmem:[#allocation10 + $0x50] sm:$0xff]
        %v7647 = vld [vmem:[#allocation10 + $0x58] sm:$0xff]
        %v7648 = vld [vmem:[#allocation10 + $0x60] sm:$0xff]
        %v7649 = vld [vmem:[#allocation10 + $0x68] sm:$0xff]
        %v7650 = vld [vmem:[#allocation10 + $0x70] sm:$0xff]
        %v7651 = vld [vmem:[#allocation10 + $0x78] sm:$0xff]
        %v7652 = vld [vmem:[#allocation10 + $0x80] sm:$0xff]
        %v7653 = vld [vmem:[#allocation10 + $0x88] sm:$0xff]
        %v7654 = vld [vmem:[#allocation10 + $0x90] sm:$0xff]
        %v7655 = vld [vmem:[#allocation10 + $0x98] sm:$0xff]
        %v7656 = vld [vmem:[#allocation10 + $0xa0] sm:$0xff]
        %v7657 = vld [vmem:[#allocation10 + $0xa8] sm:$0xff]
        %v7658 = vld [vmem:[#allocation10 + $0xb0] sm:$0xff]
        %v7659 = vld [vmem:[#allocation10 + $0xb8] sm:$0xff]
        %v7660 = vld [vmem:[#allocation10 + $0xc0] sm:$0xff]
        %v7661 = vld [vmem:[#allocation10 + $0xc8] sm:$0xff]
        %v7662 = vld [vmem:[#allocation10 + $0xd0] sm:$0xff]
        %v7663 = vld [vmem:[#allocation10 + $0xd8] sm:$0xff]
        %v7664 = vld [vmem:[#allocation10 + $0xe0] sm:$0xff]
        %v7665 = vld [vmem:[#allocation10 + $0xe8] sm:$0xff]
        %v7666 = vld [vmem:[#allocation10 + $0xf0] sm:$0xff]
        %v7667 = vld [vmem:[#allocation10 + $0xf8] sm:$0xff]
        %v7668 = vld [vmem:[#allocation10 + $0x100] sm:$0xff]
        %v7669 = vld [vmem:[#allocation10 + $0x108] sm:$0xff]
        %v7670 = vld [vmem:[#allocation10 + $0x110] sm:$0xff]
        %v7671 = vld [vmem:[#allocation10 + $0x118] sm:$0xff]
        %v7672 = vld [vmem:[#allocation10 + $0x120] sm:$0xff]
        %v7673 = vld [vmem:[#allocation10 + $0x128] sm:$0xff]
        %v7674 = vld [vmem:[#allocation10 + $0x130] sm:$0xff]
        %v7675 = vld [vmem:[#allocation10 + $0x138] sm:$0xff]
        %v7676 = vld [vmem:[#allocation10 + $0x140] sm:$0xff]
        %v7677 = vld [vmem:[#allocation10 + $0x148] sm:$0xff]
        %v7678 = vld [vmem:[#allocation10 + $0x150] sm:$0xff]
        %v7679 = vld [vmem:[#allocation10 + $0x158] sm:$0xff]
        %v7680 = vld [vmem:[#allocation10 + $0x160] sm:$0xff]
        %v7681 = vld [vmem:[#allocation10 + $0x168] sm:$0xff]
        %v7682 = vld [vmem:[#allocation10 + $0x170] sm:$0xff]
        %v7683 = vld [vmem:[#allocation10 + $0x178] sm:$0xff]
        %v7684 = vld [vmem:[#allocation10 + $0x180] sm:$0xff]
        %v7685 = vld [vmem:[#allocation10 + $0x188] sm:$0xff]
        %v7686 = vld [vmem:[#allocation10 + $0x190] sm:$0xff]
        %v7687 = vld [vmem:[#allocation10 + $0x198] sm:$0xff]
        %v7688 = vld [vmem:[#allocation10 + $0x1a0] sm:$0xff]
        %v7689 = vld [vmem:[#allocation10 + $0x1a8] sm:$0xff]
        %v7690 = vld [vmem:[#allocation10 + $0x1b0] sm:$0xff]
        %v7691 = vld [vmem:[#allocation10 + $0x1b8] sm:$0xff]
        %v7692 = vld [vmem:[#allocation10 + $0x1c0] sm:$0xff]
        %v7693 = vld [vmem:[#allocation10 + $0x1c8] sm:$0xff]
        %v7694 = vld [vmem:[#allocation10 + $0x1d0] sm:$0xff]
        %v7695 = vld [vmem:[#allocation10 + $0x1d8] sm:$0xff]
        %v7696 = vld [vmem:[#allocation10 + $0x1e0] sm:$0xff]
        %v7697 = vld [vmem:[#allocation10 + $0x1e8] sm:$0xff]
        %v7698 = vld [vmem:[#allocation10 + $0x1f0] sm:$0xff]
        %v7699 = vld [vmem:[#allocation10 + $0x1f8] sm:$0xff]
        %v7700 = vld [vmem:[#allocation11] sm:$0x3]
        %v7702 = vlaneseq
        %v7703 = vshrl.u32 %v7702, 7
        %v7704 = vsub.s32 0, %v7703
        %v7705 = vrot.slane %v7700, %v7704
        %v7706 = vlaneseq
        %v7707 = vshrl.u32 %v7706, 7
        %v7708 = vsub.s32 1, %v7707
        %v7709 = vrot.slane %v7700, %v7708
        %v7776 = vunpack.c.l.b16 %v7636
        %v7777 = vunpack.c.h.b16 %v7636
        %v7778 = vunpack.c.l.b16 %v7637
        %v7779 = vunpack.c.h.b16 %v7637
        %v7780 = vunpack.c.l.b16 %v7638
        %v7781 = vunpack.c.h.b16 %v7638
        %v7782 = vunpack.c.l.b16 %v7639
        %v7783 = vunpack.c.h.b16 %v7639
        %v7784 = vunpack.c.l.b16 %v7640
        %v7785 = vunpack.c.h.b16 %v7640
        %v7786 = vunpack.c.l.b16 %v7641
        %v7787 = vunpack.c.h.b16 %v7641
        %v7788 = vunpack.c.l.b16 %v7642
        %v7789 = vunpack.c.h.b16 %v7642
        %v7790 = vunpack.c.l.b16 %v7643
        %v7791 = vunpack.c.h.b16 %v7643
        %v7792 = vunpack.c.l.b16 %v7644
        %v7793 = vunpack.c.h.b16 %v7644
        %v7794 = vunpack.c.l.b16 %v7645
        %v7795 = vunpack.c.h.b16 %v7645
        %v7796 = vunpack.c.l.b16 %v7646
        %v7797 = vunpack.c.h.b16 %v7646
        %v7798 = vunpack.c.l.b16 %v7647
        %v7799 = vunpack.c.h.b16 %v7647
        %v7800 = vunpack.c.l.b16 %v7648
        %v7801 = vunpack.c.h.b16 %v7648
        %v7802 = vunpack.c.l.b16 %v7649
        %v7803 = vunpack.c.h.b16 %v7649
        %v7804 = vunpack.c.l.b16 %v7650
        %v7805 = vunpack.c.h.b16 %v7650
        %v7806 = vunpack.c.l.b16 %v7651
        %v7807 = vunpack.c.h.b16 %v7651
        %v7808 = vunpack.c.l.b16 %v7652
        %v7809 = vunpack.c.h.b16 %v7652
        %v7810 = vunpack.c.l.b16 %v7653
        %v7811 = vunpack.c.h.b16 %v7653
        %v7812 = vunpack.c.l.b16 %v7654
        %v7813 = vunpack.c.h.b16 %v7654
        %v7814 = vunpack.c.l.b16 %v7655
        %v7815 = vunpack.c.h.b16 %v7655
        %v7816 = vunpack.c.l.b16 %v7656
        %v7817 = vunpack.c.h.b16 %v7656
        %v7818 = vunpack.c.l.b16 %v7657
        %v7819 = vunpack.c.h.b16 %v7657
        %v7820 = vunpack.c.l.b16 %v7658
        %v7821 = vunpack.c.h.b16 %v7658
        %v7822 = vunpack.c.l.b16 %v7659
        %v7823 = vunpack.c.h.b16 %v7659
        %v7824 = vunpack.c.l.b16 %v7660
        %v7825 = vunpack.c.h.b16 %v7660
        %v7826 = vunpack.c.l.b16 %v7661
        %v7827 = vunpack.c.h.b16 %v7661
        %v7828 = vunpack.c.l.b16 %v7662
        %v7829 = vunpack.c.h.b16 %v7662
        %v7830 = vunpack.c.l.b16 %v7663
        %v7831 = vunpack.c.h.b16 %v7663
        %v7832 = vunpack.c.l.b16 %v7664
        %v7833 = vunpack.c.h.b16 %v7664
        %v7834 = vunpack.c.l.b16 %v7665
        %v7835 = vunpack.c.h.b16 %v7665
        %v7836 = vunpack.c.l.b16 %v7666
        %v7837 = vunpack.c.h.b16 %v7666
        %v7838 = vunpack.c.l.b16 %v7667
        %v7839 = vunpack.c.h.b16 %v7667
        %v7840 = vunpack.c.l.b16 %v7668
        %v7841 = vunpack.c.h.b16 %v7668
        %v7842 = vunpack.c.l.b16 %v7669
        %v7843 = vunpack.c.h.b16 %v7669
        %v7844 = vunpack.c.l.b16 %v7670
        %v7845 = vunpack.c.h.b16 %v7670
        %v7846 = vunpack.c.l.b16 %v7671
        %v7847 = vunpack.c.h.b16 %v7671
        %v7848 = vunpack.c.l.b16 %v7672
        %v7849 = vunpack.c.h.b16 %v7672
        %v7850 = vunpack.c.l.b16 %v7673
        %v7851 = vunpack.c.h.b16 %v7673
        %v7852 = vunpack.c.l.b16 %v7674
        %v7853 = vunpack.c.h.b16 %v7674
        %v7854 = vunpack.c.l.b16 %v7675
        %v7855 = vunpack.c.h.b16 %v7675
        %v7856 = vunpack.c.l.b16 %v7676
        %v7857 = vunpack.c.h.b16 %v7676
        %v7858 = vunpack.c.l.b16 %v7677
        %v7859 = vunpack.c.h.b16 %v7677
        %v7860 = vunpack.c.l.b16 %v7678
        %v7861 = vunpack.c.h.b16 %v7678
        %v7862 = vunpack.c.l.b16 %v7679
        %v7863 = vunpack.c.h.b16 %v7679
        %v7864 = vunpack.c.l.b16 %v7680
        %v7865 = vunpack.c.h.b16 %v7680
        %v7866 = vunpack.c.l.b16 %v7681
        %v7867 = vunpack.c.h.b16 %v7681
        %v7868 = vunpack.c.l.b16 %v7682
        %v7869 = vunpack.c.h.b16 %v7682
        %v7870 = vunpack.c.l.b16 %v7683
        %v7871 = vunpack.c.h.b16 %v7683
        %v7872 = vunpack.c.l.b16 %v7684
        %v7873 = vunpack.c.h.b16 %v7684
        %v7874 = vunpack.c.l.b16 %v7685
        %v7875 = vunpack.c.h.b16 %v7685
        %v7876 = vunpack.c.l.b16 %v7686
        %v7877 = vunpack.c.h.b16 %v7686
        %v7878 = vunpack.c.l.b16 %v7687
        %v7879 = vunpack.c.h.b16 %v7687
        %v7880 = vunpack.c.l.b16 %v7688
        %v7881 = vunpack.c.h.b16 %v7688
        %v7882 = vunpack.c.l.b16 %v7689
        %v7883 = vunpack.c.h.b16 %v7689
        %v7884 = vunpack.c.l.b16 %v7690
        %v7885 = vunpack.c.h.b16 %v7690
        %v7886 = vunpack.c.l.b16 %v7691
        %v7887 = vunpack.c.h.b16 %v7691
        %v7888 = vunpack.c.l.b16 %v7692
        %v7889 = vunpack.c.h.b16 %v7692
        %v7890 = vunpack.c.l.b16 %v7693
        %v7891 = vunpack.c.h.b16 %v7693
        %v7892 = vunpack.c.l.b16 %v7694
        %v7893 = vunpack.c.h.b16 %v7694
        %v7894 = vunpack.c.l.b16 %v7695
        %v7895 = vunpack.c.h.b16 %v7695
        %v7896 = vunpack.c.l.b16 %v7696
        %v7897 = vunpack.c.h.b16 %v7696
        %v7898 = vunpack.c.l.b16 %v7697
        %v7899 = vunpack.c.h.b16 %v7697
        %v7900 = vunpack.c.l.b16 %v7698
        %v7901 = vunpack.c.h.b16 %v7698
        %v7902 = vunpack.c.l.b16 %v7699
        %v7903 = vunpack.c.h.b16 %v7699
        %v7904 = vpack.c.b16 %v7778, %v7776
        %v7905 = vpack.c.b16 %v7779, %v7777
        %v7906 = vpack.c.b16 %v7782, %v7780
        %v7907 = vpack.c.b16 %v7783, %v7781
        %v7908 = vpack.c.b16 %v7786, %v7784
        %v7909 = vpack.c.b16 %v7787, %v7785
        %v7910 = vpack.c.b16 %v7790, %v7788
        %v7911 = vpack.c.b16 %v7791, %v7789
        %v7912 = vpack.c.b16 %v7794, %v7792
        %v7913 = vpack.c.b16 %v7795, %v7793
        %v7914 = vpack.c.b16 %v7798, %v7796
        %v7915 = vpack.c.b16 %v7799, %v7797
        %v7916 = vpack.c.b16 %v7802, %v7800
        %v7917 = vpack.c.b16 %v7803, %v7801
        %v7918 = vpack.c.b16 %v7806, %v7804
        %v7919 = vpack.c.b16 %v7807, %v7805
        %v7920 = vpack.c.b16 %v7810, %v7808
        %v7921 = vpack.c.b16 %v7811, %v7809
        %v7922 = vpack.c.b16 %v7814, %v7812
        %v7923 = vpack.c.b16 %v7815, %v7813
        %v7924 = vpack.c.b16 %v7818, %v7816
        %v7925 = vpack.c.b16 %v7819, %v7817
        %v7926 = vpack.c.b16 %v7822, %v7820
        %v7927 = vpack.c.b16 %v7823, %v7821
        %v7928 = vpack.c.b16 %v7826, %v7824
        %v7929 = vpack.c.b16 %v7827, %v7825
        %v7930 = vpack.c.b16 %v7830, %v7828
        %v7931 = vpack.c.b16 %v7831, %v7829
        %v7932 = vpack.c.b16 %v7834, %v7832
        %v7933 = vpack.c.b16 %v7835, %v7833
        %v7934 = vpack.c.b16 %v7838, %v7836
        %v7935 = vpack.c.b16 %v7839, %v7837
        %v7936 = vpack.c.b16 %v7842, %v7840
        %v7937 = vpack.c.b16 %v7843, %v7841
        %v7938 = vpack.c.b16 %v7846, %v7844
        %v7939 = vpack.c.b16 %v7847, %v7845
        %v7940 = vpack.c.b16 %v7850, %v7848
        %v7941 = vpack.c.b16 %v7851, %v7849
        %v7942 = vpack.c.b16 %v7854, %v7852
        %v7943 = vpack.c.b16 %v7855, %v7853
        %v7944 = vpack.c.b16 %v7858, %v7856
        %v7945 = vpack.c.b16 %v7859, %v7857
        %v7946 = vpack.c.b16 %v7862, %v7860
        %v7947 = vpack.c.b16 %v7863, %v7861
        %v7948 = vpack.c.b16 %v7866, %v7864
        %v7949 = vpack.c.b16 %v7867, %v7865
        %v7950 = vpack.c.b16 %v7870, %v7868
        %v7951 = vpack.c.b16 %v7871, %v7869
        %v7952 = vpack.c.b16 %v7874, %v7872
        %v7953 = vpack.c.b16 %v7875, %v7873
        %v7954 = vpack.c.b16 %v7878, %v7876
        %v7955 = vpack.c.b16 %v7879, %v7877
        %v7956 = vpack.c.b16 %v7882, %v7880
        %v7957 = vpack.c.b16 %v7883, %v7881
        %v7958 = vpack.c.b16 %v7886, %v7884
        %v7959 = vpack.c.b16 %v7887, %v7885
        %v7960 = vpack.c.b16 %v7890, %v7888
        %v7961 = vpack.c.b16 %v7891, %v7889
        %v7962 = vpack.c.b16 %v7894, %v7892
        %v7963 = vpack.c.b16 %v7895, %v7893
        %v7964 = vpack.c.b16 %v7898, %v7896
        %v7965 = vpack.c.b16 %v7899, %v7897
        %v7966 = vpack.c.b16 %v7902, %v7900
        %v7967 = vpack.c.b16 %v7903, %v7901
        %8032 = vmatprep.subr.bf16.mxu0 %v7905
        %8033 = vmatpush1.bf16.msra.mxu0 %v7904
        %8034 = vmatprep.subr.bf16.mxu0 %v7907
        %8035 = vmatpush1.bf16.msra.mxu0 %v7906
        %8036 = vmatprep.subr.bf16.mxu0 %v7909
        %8037 = vmatpush1.bf16.msra.mxu0 %v7908
        %8038 = vmatprep.subr.bf16.mxu0 %v7911
        %8039 = vmatpush1.bf16.msra.mxu0 %v7910
        %8040 = vmatprep.subr.bf16.mxu0 %v7913
        %8041 = vmatpush1.bf16.msra.mxu0 %v7912
        %8042 = vmatprep.subr.bf16.mxu0 %v7915
        %8043 = vmatpush1.bf16.msra.mxu0 %v7914
        %8044 = vmatprep.subr.bf16.mxu0 %v7917
        %8045 = vmatpush1.bf16.msra.mxu0 %v7916
        %8046 = vmatprep.subr.bf16.mxu0 %v7919
        %8047 = vmatpush1.bf16.msra.mxu0 %v7918
        %8048 = vmatprep.subr.bf16.mxu0 %v7921
        %8049 = vmatpush1.bf16.msra.mxu0 %v7920
        %8050 = vmatprep.subr.bf16.mxu0 %v7923
        %8051 = vmatpush1.bf16.msra.mxu0 %v7922
        %8052 = vmatprep.subr.bf16.mxu0 %v7925
        %8053 = vmatpush1.bf16.msra.mxu0 %v7924
        %8054 = vmatprep.subr.bf16.mxu0 %v7927
        %8055 = vmatpush1.bf16.msra.mxu0 %v7926
        %8056 = vmatprep.subr.bf16.mxu0 %v7929
        %8057 = vmatpush1.bf16.msra.mxu0 %v7928
        %8058 = vmatprep.subr.bf16.mxu0 %v7931
        %8059 = vmatpush1.bf16.msra.mxu0 %v7930
        %8060 = vmatprep.subr.bf16.mxu0 %v7933
        %8061 = vmatpush1.bf16.msra.mxu0 %v7932
        %8062 = vmatprep.subr.bf16.mxu0 %v7935
        %8063 = vmatpush1.bf16.msra.mxu0 %v7934
        %8064 = vmatprep.mubr.bf16.mxu0 %v7573
        %8065 = vmatmul.mubr.bf16.gmra.mrb[0].mxu0 %v7572
        %v8066 = vpop.f32.mrb[0].mxu0
        %v8067 = vadd.f32 %v7705, %v8066
        %v8068 = vpop.f32.mrb[0].mxu0
        %v8069 = vadd.f32 %v7709, %v8068
        %v8070 = vpop.f32.mrb[0].mxu0
        %v8071 = vadd.f32 %v7705, %v8070
        %v8072 = vpop.f32.mrb[0].mxu0
        %v8073 = vadd.f32 %v7709, %v8072
        %8074 = vmatprep.mubr.bf16.mxu0 %v7577
        %8075 = vmatmul.mubr.bf16.gmra.mrb[0].mxu0 %v7576
        %v8076 = vpop.f32.mrb[0].mxu0
        %v8077 = vadd.f32 %v7705, %v8076
        %v8078 = vpop.f32.mrb[0].mxu0
        %v8079 = vadd.f32 %v7709, %v8078
        %v8080 = vpop.f32.mrb[0].mxu0
        %v8081 = vadd.f32 %v7705, %v8080
        %v8082 = vpop.f32.mrb[0].mxu0
        %v8083 = vadd.f32 %v7709, %v8082
        %8084 = vmatprep.mubr.bf16.mxu0 %v7581
        %8085 = vmatmul.mubr.bf16.gmra.mrb[0].mxu0 %v7580
        %v8086 = vpop.f32.mrb[0].mxu0
        %v8087 = vadd.f32 %v7705, %v8086
        %v8088 = vpop.f32.mrb[0].mxu0
        %v8089 = vadd.f32 %v7709, %v8088
        %v8090 = vpop.f32.mrb[0].mxu0
        %v8091 = vadd.f32 %v7705, %v8090
        %v8092 = vpop.f32.mrb[0].mxu0
        %v8093 = vadd.f32 %v7709, %v8092
        %8094 = vmatprep.mubr.bf16.mxu0 %v7585
        %8095 = vmatmul.mubr.bf16.gmra.mrb[0].mxu0 %v7584
        %v8096 = vpop.f32.mrb[0].mxu0
        %v8097 = vadd.f32 %v7705, %v8096
        %v8098 = vpop.f32.mrb[0].mxu0
        %v8099 = vadd.f32 %v7709, %v8098
        %v8100 = vpop.f32.mrb[0].mxu0
        %v8101 = vadd.f32 %v7705, %v8100
        %v8102 = vpop.f32.mrb[0].mxu0
        %v8103 = vadd.f32 %v7709, %v8102
        %8104 = vmatprep.mubr.bf16.mxu0 %v7589
        %8105 = vmatmul.mubr.bf16.gmra.mrb[0].mxu0 %v7588
        %v8106 = vpop.f32.mrb[0].mxu0
        %v8107 = vadd.f32 %v7705, %v8106
        %v8108 = vpop.f32.mrb[0].mxu0
        %v8109 = vadd.f32 %v7709, %v8108
        %v8110 = vpop.f32.mrb[0].mxu0
        %v8111 = vadd.f32 %v7705, %v8110
        %v8112 = vpop.f32.mrb[0].mxu0
        %v8113 = vadd.f32 %v7709, %v8112
        %8114 = vmatprep.mubr.bf16.mxu0 %v7593
        %8115 = vmatmul.mubr.bf16.gmra.mrb[0].mxu0 %v7592
        %v8116 = vpop.f32.mrb[0].mxu0
        %v8117 = vadd.f32 %v7705, %v8116
        %v8118 = vpop.f32.mrb[0].mxu0
        %v8119 = vadd.f32 %v7709, %v8118
        %v8120 = vpop.f32.mrb[0].mxu0
        %v8121 = vadd.f32 %v7705, %v8120
        %v8122 = vpop.f32.mrb[0].mxu0
        %v8123 = vadd.f32 %v7709, %v8122
        %8124 = vmatprep.mubr.bf16.mxu0 %v7597
        %8125 = vmatmul.mubr.bf16.gmra.mrb[0].mxu0 %v7596
        %v8126 = vpop.f32.mrb[0].mxu0
        %v8127 = vadd.f32 %v7705, %v8126
        %v8128 = vpop.f32.mrb[0].mxu0
        %v8129 = vadd.f32 %v7709, %v8128
        %v8130 = vpop.f32.mrb[0].mxu0
        %v8131 = vadd.f32 %v7705, %v8130
        %v8132 = vpop.f32.mrb[0].mxu0
        %v8133 = vadd.f32 %v7709, %v8132
        %8134 = vmatprep.mubr.bf16.mxu0 %v7601
        %8135 = vmatmul.mubr.bf16.gmra.mrb[0].mxu0 %v7600
        %v8136 = vpop.f32.mrb[0].mxu0
        %v8137 = vadd.f32 %v7705, %v8136
        %v8138 = vpop.f32.mrb[0].mxu0
        %v8139 = vadd.f32 %v7709, %v8138
        %v8140 = vpop.f32.mrb[0].mxu0
        %v8141 = vadd.f32 %v7705, %v8140
        %v8142 = vpop.f32.mrb[0].mxu0
        %v8143 = vadd.f32 %v7709, %v8142
        %8144 = vmatprep.mubr.bf16.mxu0 %v7605
        %8145 = vmatmul.mubr.bf16.gmra.mrb[0].mxu0 %v7604
        %v8146 = vpop.f32.mrb[0].mxu0
        %v8147 = vadd.f32 %v7705, %v8146
        %v8148 = vpop.f32.mrb[0].mxu0
        %v8149 = vadd.f32 %v7709, %v8148
        %v8150 = vpop.f32.mrb[0].mxu0
        %v8151 = vadd.f32 %v7705, %v8150
        %v8152 = vpop.f32.mrb[0].mxu0
        %v8153 = vadd.f32 %v7709, %v8152
        %8154 = vmatprep.mubr.bf16.mxu0 %v7609
        %8155 = vmatmul.mubr.bf16.gmra.mrb[0].mxu0 %v7608
        %v8156 = vpop.f32.mrb[0].mxu0
        %v8157 = vadd.f32 %v7705, %v8156
        %v8158 = vpop.f32.mrb[0].mxu0
        %v8159 = vadd.f32 %v7709, %v8158
        %v8160 = vpop.f32.mrb[0].mxu0
        %v8161 = vadd.f32 %v7705, %v8160
        %v8162 = vpop.f32.mrb[0].mxu0
        %v8163 = vadd.f32 %v7709, %v8162
        %8164 = vmatprep.mubr.bf16.mxu0 %v7613
        %8165 = vmatmul.mubr.bf16.gmra.mrb[0].mxu0 %v7612
        %v8166 = vpop.f32.mrb[0].mxu0
        %v8167 = vadd.f32 %v7705, %v8166
        %v8168 = vpop.f32.mrb[0].mxu0
        %v8169 = vadd.f32 %v7709, %v8168
        %v8170 = vpop.f32.mrb[0].mxu0
        %v8171 = vadd.f32 %v7705, %v8170
        %v8172 = vpop.f32.mrb[0].mxu0
        %v8173 = vadd.f32 %v7709, %v8172
        %8174 = vmatprep.mubr.bf16.mxu0 %v7617
        %8175 = vmatmul.mubr.bf16.gmra.mrb[0].mxu0 %v7616
        %v8176 = vpop.f32.mrb[0].mxu0
        %v8177 = vadd.f32 %v7705, %v8176
        %v8178 = vpop.f32.mrb[0].mxu0
        %v8179 = vadd.f32 %v7709, %v8178
        %v8180 = vpop.f32.mrb[0].mxu0
        %v8181 = vadd.f32 %v7705, %v8180
        %v8182 = vpop.f32.mrb[0].mxu0
        %v8183 = vadd.f32 %v7709, %v8182
        %8184 = vmatprep.mubr.bf16.mxu0 %v7621
        %8185 = vmatmul.mubr.bf16.gmra.mrb[0].mxu0 %v7620
        %v8186 = vpop.f32.mrb[0].mxu0
        %v8187 = vadd.f32 %v7705, %v8186
        %v8188 = vpop.f32.mrb[0].mxu0
        %v8189 = vadd.f32 %v7709, %v8188
        %v8190 = vpop.f32.mrb[0].mxu0
        %v8191 = vadd.f32 %v7705, %v8190
        %v8192 = vpop.f32.mrb[0].mxu0
        %v8193 = vadd.f32 %v7709, %v8192
        %8194 = vmatprep.mubr.bf16.mxu0 %v7625
        %8195 = vmatmul.mubr.bf16.gmra.mrb[0].mxu0 %v7624
        %v8196 = vpop.f32.mrb[0].mxu0
        %v8197 = vadd.f32 %v7705, %v8196
        %v8198 = vpop.f32.mrb[0].mxu0
        %v8199 = vadd.f32 %v7709, %v8198
        %v8200 = vpop.f32.mrb[0].mxu0
        %v8201 = vadd.f32 %v7705, %v8200
        %v8202 = vpop.f32.mrb[0].mxu0
        %v8203 = vadd.f32 %v7709, %v8202
        %8204 = vmatprep.mubr.bf16.mxu0 %v7629
        %8205 = vmatmul.mubr.bf16.gmra.mrb[0].mxu0 %v7628
        %v8206 = vpop.f32.mrb[0].mxu0
        %v8207 = vadd.f32 %v7705, %v8206
        %v8208 = vpop.f32.mrb[0].mxu0
        %v8209 = vadd.f32 %v7709, %v8208
        %v8210 = vpop.f32.mrb[0].mxu0
        %v8211 = vadd.f32 %v7705, %v8210
        %v8212 = vpop.f32.mrb[0].mxu0
        %v8213 = vadd.f32 %v7709, %v8212
        %8214 = vmatprep.mubr.bf16.mxu0 %v7633
        %8215 = vmatmul.mubr.bf16.gmra.mrb[0].mxu0 %v7632
        %v8216 = vpop.f32.mrb[0].mxu0
        %v8217 = vadd.f32 %v7705, %v8216
        %v8218 = vpop.f32.mrb[0].mxu0
        %v8219 = vadd.f32 %v7709, %v8218
        %v8220 = vpop.f32.mrb[0].mxu0
        %v8221 = vadd.f32 %v7705, %v8220
        %v8222 = vpop.f32.mrb[0].mxu0
        %v8223 = vadd.f32 %v7709, %v8222
        %8224 = vdwg.mxu0
        %8225 = vmatprep.subr.bf16.mxu0 %v7937
        %8226 = vmatpush1.bf16.msra.mxu0 %v7936
        %8227 = vmatprep.subr.bf16.mxu0 %v7939
        %8228 = vmatpush1.bf16.msra.mxu0 %v7938
        %8229 = vmatprep.subr.bf16.mxu0 %v7941
        %8230 = vmatpush1.bf16.msra.mxu0 %v7940
        %8231 = vmatprep.subr.bf16.mxu0 %v7943
        %8232 = vmatpush1.bf16.msra.mxu0 %v7942
        %8233 = vmatprep.subr.bf16.mxu0 %v7945
        %8234 = vmatpush1.bf16.msra.mxu0 %v7944
        %8235 = vmatprep.subr.bf16.mxu0 %v7947
        %8236 = vmatpush1.bf16.msra.mxu0 %v7946
        %8237 = vmatprep.subr.bf16.mxu0 %v7949
        %8238 = vmatpush1.bf16.msra.mxu0 %v7948
        %8239 = vmatprep.subr.bf16.mxu0 %v7951
        %8240 = vmatpush1.bf16.msra.mxu0 %v7950
        %8241 = vmatprep.subr.bf16.mxu0 %v7953
        %8242 = vmatpush1.bf16.msra.mxu0 %v7952
        %8243 = vmatprep.subr.bf16.mxu0 %v7955
        %8244 = vmatpush1.bf16.msra.mxu0 %v7954
        %8245 = vmatprep.subr.bf16.mxu0 %v7957
        %8246 = vmatpush1.bf16.msra.mxu0 %v7956
        %8247 = vmatprep.subr.bf16.mxu0 %v7959
        %8248 = vmatpush1.bf16.msra.mxu0 %v7958
        %8249 = vmatprep.subr.bf16.mxu0 %v7961
        %8250 = vmatpush1.bf16.msra.mxu0 %v7960
        %8251 = vmatprep.subr.bf16.mxu0 %v7963
        %8252 = vmatpush1.bf16.msra.mxu0 %v7962
        %8253 = vmatprep.subr.bf16.mxu0 %v7965
        %8254 = vmatpush1.bf16.msra.mxu0 %v7964
        %8255 = vmatprep.subr.bf16.mxu0 %v7967
        %8256 = vmatpush1.bf16.msra.mxu0 %v7966
        %8257 = vmatprep.mubr.bf16.mxu0 %v7575
        %8258 = vmatmul.mubr.bf16.gmra.mrb[0].mxu0 %v7574
        %v8259 = vpop.f32.mrb[0].mxu0
        %v8260 = vadd.f32 %v8067, %v8259
        %v8261 = vpop.f32.mrb[0].mxu0
        %v8262 = vadd.f32 %v8069, %v8261
        %v8263 = vpop.f32.mrb[0].mxu0
        %v8264 = vadd.f32 %v8071, %v8263
        %v8265 = vpop.f32.mrb[0].mxu0
        %v8266 = vadd.f32 %v8073, %v8265
        %8267 = vmatprep.mubr.bf16.mxu0 %v7579
        %8268 = vmatmul.mubr.bf16.gmra.mrb[0].mxu0 %v7578
        %v8269 = vpop.f32.mrb[0].mxu0
        %v8270 = vadd.f32 %v8077, %v8269
        %v8271 = vpop.f32.mrb[0].mxu0
        %v8272 = vadd.f32 %v8079, %v8271
        %v8273 = vpop.f32.mrb[0].mxu0
        %v8274 = vadd.f32 %v8081, %v8273
        %v8275 = vpop.f32.mrb[0].mxu0
        %v8276 = vadd.f32 %v8083, %v8275
        %8277 = vmatprep.mubr.bf16.mxu0 %v7583
        %8278 = vmatmul.mubr.bf16.gmra.mrb[0].mxu0 %v7582
        %v8279 = vpop.f32.mrb[0].mxu0
        %v8280 = vadd.f32 %v8087, %v8279
        %v8281 = vpop.f32.mrb[0].mxu0
        %v8282 = vadd.f32 %v8089, %v8281
        %v8283 = vpop.f32.mrb[0].mxu0
        %v8284 = vadd.f32 %v8091, %v8283
        %v8285 = vpop.f32.mrb[0].mxu0
        %v8286 = vadd.f32 %v8093, %v8285
        %8287 = vmatprep.mubr.bf16.mxu0 %v7587
        %8288 = vmatmul.mubr.bf16.gmra.mrb[0].mxu0 %v7586
        %v8289 = vpop.f32.mrb[0].mxu0
        %v8290 = vadd.f32 %v8097, %v8289
        %v8291 = vpop.f32.mrb[0].mxu0
        %v8292 = vadd.f32 %v8099, %v8291
        %v8293 = vpop.f32.mrb[0].mxu0
        %v8294 = vadd.f32 %v8101, %v8293
        %v8295 = vpop.f32.mrb[0].mxu0
        %v8296 = vadd.f32 %v8103, %v8295
        %8297 = vmatprep.mubr.bf16.mxu0 %v7591
        %8298 = vmatmul.mubr.bf16.gmra.mrb[0].mxu0 %v7590
        %v8299 = vpop.f32.mrb[0].mxu0
        %v8300 = vadd.f32 %v8107, %v8299
        %v8301 = vpop.f32.mrb[0].mxu0
        %v8302 = vadd.f32 %v8109, %v8301
        %v8303 = vpop.f32.mrb[0].mxu0
        %v8304 = vadd.f32 %v8111, %v8303
        %v8305 = vpop.f32.mrb[0].mxu0
        %v8306 = vadd.f32 %v8113, %v8305
        %8307 = vmatprep.mubr.bf16.mxu0 %v7595
        %8308 = vmatmul.mubr.bf16.gmra.mrb[0].mxu0 %v7594
        %v8309 = vpop.f32.mrb[0].mxu0
        %v8310 = vadd.f32 %v8117, %v8309
        %v8311 = vpop.f32.mrb[0].mxu0
        %v8312 = vadd.f32 %v8119, %v8311
        %v8313 = vpop.f32.mrb[0].mxu0
        %v8314 = vadd.f32 %v8121, %v8313
        %v8315 = vpop.f32.mrb[0].mxu0
        %v8316 = vadd.f32 %v8123, %v8315
        %8317 = vmatprep.mubr.bf16.mxu0 %v7599
        %8318 = vmatmul.mubr.bf16.gmra.mrb[0].mxu0 %v7598
        %v8319 = vpop.f32.mrb[0].mxu0
        %v8320 = vadd.f32 %v8127, %v8319
        %v8321 = vpop.f32.mrb[0].mxu0
        %v8322 = vadd.f32 %v8129, %v8321
        %v8323 = vpop.f32.mrb[0].mxu0
        %v8324 = vadd.f32 %v8131, %v8323
        %v8325 = vpop.f32.mrb[0].mxu0
        %v8326 = vadd.f32 %v8133, %v8325
        %8327 = vmatprep.mubr.bf16.mxu0 %v7603
        %8328 = vmatmul.mubr.bf16.gmra.mrb[0].mxu0 %v7602
        %v8329 = vpop.f32.mrb[0].mxu0
        %v8330 = vadd.f32 %v8137, %v8329
        %v8331 = vpop.f32.mrb[0].mxu0
        %v8332 = vadd.f32 %v8139, %v8331
        %v8333 = vpop.f32.mrb[0].mxu0
        %v8334 = vadd.f32 %v8141, %v8333
        %v8335 = vpop.f32.mrb[0].mxu0
        %v8336 = vadd.f32 %v8143, %v8335
        %8337 = vmatprep.mubr.bf16.mxu0 %v7607
        %8338 = vmatmul.mubr.bf16.gmra.mrb[0].mxu0 %v7606
        %v8339 = vpop.f32.mrb[0].mxu0
        %v8340 = vadd.f32 %v8147, %v8339
        %v8341 = vpop.f32.mrb[0].mxu0
        %v8342 = vadd.f32 %v8149, %v8341
        %v8343 = vpop.f32.mrb[0].mxu0
        %v8344 = vadd.f32 %v8151, %v8343
        %v8345 = vpop.f32.mrb[0].mxu0
        %v8346 = vadd.f32 %v8153, %v8345
        %8347 = vmatprep.mubr.bf16.mxu0 %v7611
        %8348 = vmatmul.mubr.bf16.gmra.mrb[0].mxu0 %v7610
        %v8349 = vpop.f32.mrb[0].mxu0
        %v8350 = vadd.f32 %v8157, %v8349
        %v8351 = vpop.f32.mrb[0].mxu0
        %v8352 = vadd.f32 %v8159, %v8351
        %v8353 = vpop.f32.mrb[0].mxu0
        %v8354 = vadd.f32 %v8161, %v8353
        %v8355 = vpop.f32.mrb[0].mxu0
        %v8356 = vadd.f32 %v8163, %v8355
        %8357 = vmatprep.mubr.bf16.mxu0 %v7615
        %8358 = vmatmul.mubr.bf16.gmra.mrb[0].mxu0 %v7614
        %v8359 = vpop.f32.mrb[0].mxu0
        %v8360 = vadd.f32 %v8167, %v8359
        %v8361 = vpop.f32.mrb[0].mxu0
        %v8362 = vadd.f32 %v8169, %v8361
        %v8363 = vpop.f32.mrb[0].mxu0
        %v8364 = vadd.f32 %v8171, %v8363
        %v8365 = vpop.f32.mrb[0].mxu0
        %v8366 = vadd.f32 %v8173, %v8365
        %8367 = vmatprep.mubr.bf16.mxu0 %v7619
        %8368 = vmatmul.mubr.bf16.gmra.mrb[0].mxu0 %v7618
        %v8369 = vpop.f32.mrb[0].mxu0
        %v8370 = vadd.f32 %v8177, %v8369
        %v8371 = vpop.f32.mrb[0].mxu0
        %v8372 = vadd.f32 %v8179, %v8371
        %v8373 = vpop.f32.mrb[0].mxu0
        %v8374 = vadd.f32 %v8181, %v8373
        %v8375 = vpop.f32.mrb[0].mxu0
        %v8376 = vadd.f32 %v8183, %v8375
        %8377 = vmatprep.mubr.bf16.mxu0 %v7623
        %8378 = vmatmul.mubr.bf16.gmra.mrb[0].mxu0 %v7622
        %v8379 = vpop.f32.mrb[0].mxu0
        %v8380 = vadd.f32 %v8187, %v8379
        %v8381 = vpop.f32.mrb[0].mxu0
        %v8382 = vadd.f32 %v8189, %v8381
        %v8383 = vpop.f32.mrb[0].mxu0
        %v8384 = vadd.f32 %v8191, %v8383
        %v8385 = vpop.f32.mrb[0].mxu0
        %v8386 = vadd.f32 %v8193, %v8385
        %8387 = vmatprep.mubr.bf16.mxu0 %v7627
        %8388 = vmatmul.mubr.bf16.gmra.mrb[0].mxu0 %v7626
        %v8389 = vpop.f32.mrb[0].mxu0
        %v8390 = vadd.f32 %v8197, %v8389
        %v8391 = vpop.f32.mrb[0].mxu0
        %v8392 = vadd.f32 %v8199, %v8391
        %v8393 = vpop.f32.mrb[0].mxu0
        %v8394 = vadd.f32 %v8201, %v8393
        %v8395 = vpop.f32.mrb[0].mxu0
        %v8396 = vadd.f32 %v8203, %v8395
        %8397 = vmatprep.mubr.bf16.mxu0 %v7631
        %8398 = vmatmul.mubr.bf16.gmra.mrb[0].mxu0 %v7630
        %v8399 = vpop.f32.mrb[0].mxu0
        %v8400 = vadd.f32 %v8207, %v8399
        %v8401 = vpop.f32.mrb[0].mxu0
        %v8402 = vadd.f32 %v8209, %v8401
        %v8403 = vpop.f32.mrb[0].mxu0
        %v8404 = vadd.f32 %v8211, %v8403
        %v8405 = vpop.f32.mrb[0].mxu0
        %v8406 = vadd.f32 %v8213, %v8405
        %8407 = vmatprep.mubr.bf16.mxu0 %v7635
        %8408 = vmatmul.mubr.bf16.gmra.mrb[0].mxu0 %v7634
        %v8409 = vpop.f32.mrb[0].mxu0
        %v8410 = vadd.f32 %v8217, %v8409
        %v8411 = vpop.f32.mrb[0].mxu0
        %v8412 = vadd.f32 %v8219, %v8411
        %v8413 = vpop.f32.mrb[0].mxu0
        %v8414 = vadd.f32 %v8221, %v8413
        %v8415 = vpop.f32.mrb[0].mxu0
        %v8416 = vadd.f32 %v8223, %v8415
        %8417 = vdwg.mxu0
        %v8418 = vmax.f32 %v8260, 0.0
        %v8419 = vmax.f32 %v8262, 0.0
        %v8420 = vmax.f32 %v8264, 0.0
        %v8421 = vmax.f32 %v8266, 0.0
        %v8422 = vmax.f32 %v8270, 0.0
        %v8423 = vmax.f32 %v8272, 0.0
        %v8424 = vmax.f32 %v8274, 0.0
        %v8425 = vmax.f32 %v8276, 0.0
        %v8426 = vmax.f32 %v8280, 0.0
        %v8427 = vmax.f32 %v8282, 0.0
        %v8428 = vmax.f32 %v8284, 0.0
        %v8429 = vmax.f32 %v8286, 0.0
        %v8430 = vmax.f32 %v8290, 0.0
        %v8431 = vmax.f32 %v8292, 0.0
        %v8432 = vmax.f32 %v8294, 0.0
        %v8433 = vmax.f32 %v8296, 0.0
        %v8434 = vmax.f32 %v8300, 0.0
        %v8435 = vmax.f32 %v8302, 0.0
        %v8436 = vmax.f32 %v8304, 0.0
        %v8437 = vmax.f32 %v8306, 0.0
        %v8438 = vmax.f32 %v8310, 0.0
        %v8439 = vmax.f32 %v8312, 0.0
        %v8440 = vmax.f32 %v8314, 0.0
        %v8441 = vmax.f32 %v8316, 0.0
        %v8442 = vmax.f32 %v8320, 0.0
        %v8443 = vmax.f32 %v8322, 0.0
        %v8444 = vmax.f32 %v8324, 0.0
        %v8445 = vmax.f32 %v8326, 0.0
        %v8446 = vmax.f32 %v8330, 0.0
        %v8447 = vmax.f32 %v8332, 0.0
        %v8448 = vmax.f32 %v8334, 0.0
        %v8449 = vmax.f32 %v8336, 0.0
        %v8450 = vmax.f32 %v8340, 0.0
        %v8451 = vmax.f32 %v8342, 0.0
        %v8452 = vmax.f32 %v8344, 0.0
        %v8453 = vmax.f32 %v8346, 0.0
        %v8454 = vmax.f32 %v8350, 0.0
        %v8455 = vmax.f32 %v8352, 0.0
        %v8456 = vmax.f32 %v8354, 0.0
        %v8457 = vmax.f32 %v8356, 0.0
        %v8458 = vmax.f32 %v8360, 0.0
        %v8459 = vmax.f32 %v8362, 0.0
        %v8460 = vmax.f32 %v8364, 0.0
        %v8461 = vmax.f32 %v8366, 0.0
        %v8462 = vmax.f32 %v8370, 0.0
        %v8463 = vmax.f32 %v8372, 0.0
        %v8464 = vmax.f32 %v8374, 0.0
        %v8465 = vmax.f32 %v8376, 0.0
        %v8466 = vmax.f32 %v8380, 0.0
        %v8467 = vmax.f32 %v8382, 0.0
        %v8468 = vmax.f32 %v8384, 0.0
        %v8469 = vmax.f32 %v8386, 0.0
        %v8470 = vmax.f32 %v8390, 0.0
        %v8471 = vmax.f32 %v8392, 0.0
        %v8472 = vmax.f32 %v8394, 0.0
        %v8473 = vmax.f32 %v8396, 0.0
        %v8474 = vmax.f32 %v8400, 0.0
        %v8475 = vmax.f32 %v8402, 0.0
        %v8476 = vmax.f32 %v8404, 0.0
        %v8477 = vmax.f32 %v8406, 0.0
        %v8478 = vmax.f32 %v8410, 0.0
        %v8479 = vmax.f32 %v8412, 0.0
        %v8480 = vmax.f32 %v8414, 0.0
        %v8481 = vmax.f32 %v8416, 0.0
        %v8482 = vadd.f32 %v8418, %v7380
        %v8483 = vadd.f32 %v8419, %v7381
        %v8484 = vadd.f32 %v8420, %v7382
        %v8485 = vadd.f32 %v8421, %v7383
        %v8486 = vadd.f32 %v8422, %v7384
        %v8487 = vadd.f32 %v8423, %v7385
        %v8488 = vadd.f32 %v8424, %v7386
        %v8489 = vadd.f32 %v8425, %v7387
        %v8490 = vadd.f32 %v8426, %v7388
        %v8491 = vadd.f32 %v8427, %v7389
        %v8492 = vadd.f32 %v8428, %v7390
        %v8493 = vadd.f32 %v8429, %v7391
        %v8494 = vadd.f32 %v8430, %v7392
        %v8495 = vadd.f32 %v8431, %v7393
        %v8496 = vadd.f32 %v8432, %v7394
        %v8497 = vadd.f32 %v8433, %v7395
        %v8498 = vadd.f32 %v8434, %v7396
        %v8499 = vadd.f32 %v8435, %v7397
        %v8500 = vadd.f32 %v8436, %v7398
        %v8501 = vadd.f32 %v8437, %v7399
        %v8502 = vadd.f32 %v8438, %v7400
        %v8503 = vadd.f32 %v8439, %v7401
        %v8504 = vadd.f32 %v8440, %v7402
        %v8505 = vadd.f32 %v8441, %v7403
        %v8506 = vadd.f32 %v8442, %v7404
        %v8507 = vadd.f32 %v8443, %v7405
        %v8508 = vadd.f32 %v8444, %v7406
        %v8509 = vadd.f32 %v8445, %v7407
        %v8510 = vadd.f32 %v8446, %v7408
        %v8511 = vadd.f32 %v8447, %v7409
        %v8512 = vadd.f32 %v8448, %v7410
        %v8513 = vadd.f32 %v8449, %v7411
        %v8514 = vadd.f32 %v8450, %v7412
        %v8515 = vadd.f32 %v8451, %v7413
        %v8516 = vadd.f32 %v8452, %v7414
        %v8517 = vadd.f32 %v8453, %v7415
        %v8518 = vadd.f32 %v8454, %v7416
        %v8519 = vadd.f32 %v8455, %v7417
        %v8520 = vadd.f32 %v8456, %v7418
        %v8521 = vadd.f32 %v8457, %v7419
        %v8522 = vadd.f32 %v8458, %v7420
        %v8523 = vadd.f32 %v8459, %v7421
        %v8524 = vadd.f32 %v8460, %v7422
        %v8525 = vadd.f32 %v8461, %v7423
        %v8526 = vadd.f32 %v8462, %v7424
        %v8527 = vadd.f32 %v8463, %v7425
        %v8528 = vadd.f32 %v8464, %v7426
        %v8529 = vadd.f32 %v8465, %v7427
        %v8530 = vadd.f32 %v8466, %v7428
        %v8531 = vadd.f32 %v8467, %v7429
        %v8532 = vadd.f32 %v8468, %v7430
        %v8533 = vadd.f32 %v8469, %v7431
        %v8534 = vadd.f32 %v8470, %v7432
        %v8535 = vadd.f32 %v8471, %v7433
        %v8536 = vadd.f32 %v8472, %v7434
        %v8537 = vadd.f32 %v8473, %v7435
        %v8538 = vadd.f32 %v8474, %v7436
        %v8539 = vadd.f32 %v8475, %v7437
        %v8540 = vadd.f32 %v8476, %v7438
        %v8541 = vadd.f32 %v8477, %v7439
        %v8542 = vadd.f32 %v8478, %v7440
        %v8543 = vadd.f32 %v8479, %v7441
        %v8544 = vadd.f32 %v8480, %v7442
        %v8545 = vadd.f32 %v8481, %v7443
        %v8546 = vpack.c.bf16 %v8484, %v8482
        %v8547 = vpack.c.bf16 %v8485, %v8483
        %v8548 = vpack.c.bf16 %v8488, %v8486
        %v8549 = vpack.c.bf16 %v8489, %v8487
        %v8550 = vpack.c.bf16 %v8492, %v8490
        %v8551 = vpack.c.bf16 %v8493, %v8491
        %v8552 = vpack.c.bf16 %v8496, %v8494
        %v8553 = vpack.c.bf16 %v8497, %v8495
        %v8554 = vpack.c.bf16 %v8500, %v8498
        %v8555 = vpack.c.bf16 %v8501, %v8499
        %v8556 = vpack.c.bf16 %v8504, %v8502
        %v8557 = vpack.c.bf16 %v8505, %v8503
        %v8558 = vpack.c.bf16 %v8508, %v8506
        %v8559 = vpack.c.bf16 %v8509, %v8507
        %v8560 = vpack.c.bf16 %v8512, %v8510
        %v8561 = vpack.c.bf16 %v8513, %v8511
        %v8562 = vpack.c.bf16 %v8516, %v8514
        %v8563 = vpack.c.bf16 %v8517, %v8515
        %v8564 = vpack.c.bf16 %v8520, %v8518
        %v8565 = vpack.c.bf16 %v8521, %v8519
        %v8566 = vpack.c.bf16 %v8524, %v8522
        %v8567 = vpack.c.bf16 %v8525, %v8523
        %v8568 = vpack.c.bf16 %v8528, %v8526
        %v8569 = vpack.c.bf16 %v8529, %v8527
        %v8570 = vpack.c.bf16 %v8532, %v8530
        %v8571 = vpack.c.bf16 %v8533, %v8531
        %v8572 = vpack.c.bf16 %v8536, %v8534
        %v8573 = vpack.c.bf16 %v8537, %v8535
        %v8574 = vpack.c.bf16 %v8540, %v8538
        %v8575 = vpack.c.bf16 %v8541, %v8539
        %v8576 = vpack.c.bf16 %v8544, %v8542
        %v8577 = vpack.c.bf16 %v8545, %v8543
        %v8578 = vld [vmem:[#allocation13] sm:$0xff]
        %v8579 = vld [vmem:[#allocation13 + $0x8] sm:$0xf]
        %v8580 = vld [vmem:[#allocation13 + $0xc] sm:$0xff]
        %v8581 = vld [vmem:[#allocation13 + $0x14] sm:$0xf]
        %v8582 = vld [vmem:[#allocation13 + $0x18] sm:$0xff]
        %v8583 = vld [vmem:[#allocation13 + $0x20] sm:$0xf]
        %v8584 = vld [vmem:[#allocation13 + $0x24] sm:$0xff]
        %v8585 = vld [vmem:[#allocation13 + $0x2c] sm:$0xf]
        %v8586 = vld [vmem:[#allocation13 + $0x30] sm:$0xff]
        %v8587 = vld [vmem:[#allocation13 + $0x38] sm:$0xf]
        %v8588 = vld [vmem:[#allocation13 + $0x3c] sm:$0xff]
        %v8589 = vld [vmem:[#allocation13 + $0x44] sm:$0xf]
        %v8590 = vld [vmem:[#allocation13 + $0x48] sm:$0xff]
        %v8591 = vld [vmem:[#allocation13 + $0x50] sm:$0xf]
        %v8592 = vld [vmem:[#allocation13 + $0x54] sm:$0xff]
        %v8593 = vld [vmem:[#allocation13 + $0x5c] sm:$0xf]
        %v8594 = vld [vmem:[#allocation13 + $0x60] sm:$0xff]
        %v8595 = vld [vmem:[#allocation13 + $0x68] sm:$0xf]
        %v8596 = vld [vmem:[#allocation13 + $0x6c] sm:$0xff]
        %v8597 = vld [vmem:[#allocation13 + $0x74] sm:$0xf]
        %v8598 = vld [vmem:[#allocation13 + $0x78] sm:$0xff]
        %v8599 = vld [vmem:[#allocation13 + $0x80] sm:$0xf]
        %v8600 = vld [vmem:[#allocation13 + $0x84] sm:$0xff]
        %v8601 = vld [vmem:[#allocation13 + $0x8c] sm:$0xf]
        %v8602 = vld [vmem:[#allocation13 + $0x90] sm:$0xff]
        %v8603 = vld [vmem:[#allocation13 + $0x98] sm:$0xf]
        %v8604 = vld [vmem:[#allocation13 + $0x9c] sm:$0xff]
        %v8605 = vld [vmem:[#allocation13 + $0xa4] sm:$0xf]
        %v8606 = vld [vmem:[#allocation13 + $0xa8] sm:$0xff]
        %v8607 = vld [vmem:[#allocation13 + $0xb0] sm:$0xf]
        %v8608 = vld [vmem:[#allocation13 + $0xb4] sm:$0xff]
        %v8609 = vld [vmem:[#allocation13 + $0xbc] sm:$0xf]
        %v8610 = vld [vmem:[#allocation13 + $0xc0] sm:$0xff]
        %v8611 = vld [vmem:[#allocation13 + $0xc8] sm:$0xf]
        %v8612 = vld [vmem:[#allocation13 + $0xcc] sm:$0xff]
        %v8613 = vld [vmem:[#allocation13 + $0xd4] sm:$0xf]
        %v8614 = vld [vmem:[#allocation13 + $0xd8] sm:$0xff]
        %v8615 = vld [vmem:[#allocation13 + $0xe0] sm:$0xf]
        %v8616 = vld [vmem:[#allocation13 + $0xe4] sm:$0xff]
        %v8617 = vld [vmem:[#allocation13 + $0xec] sm:$0xf]
        %v8618 = vld [vmem:[#allocation13 + $0xf0] sm:$0xff]
        %v8619 = vld [vmem:[#allocation13 + $0xf8] sm:$0xf]
        %v8620 = vld [vmem:[#allocation13 + $0xfc] sm:$0xff]
        %v8621 = vld [vmem:[#allocation13 + $0x104] sm:$0xf]
        %v8622 = vld [vmem:[#allocation13 + $0x108] sm:$0xff]
        %v8623 = vld [vmem:[#allocation13 + $0x110] sm:$0xf]
        %v8624 = vld [vmem:[#allocation13 + $0x114] sm:$0xff]
        %v8625 = vld [vmem:[#allocation13 + $0x11c] sm:$0xf]
        %v8626 = vld [vmem:[#allocation13 + $0x120] sm:$0xff]
        %v8627 = vld [vmem:[#allocation13 + $0x128] sm:$0xf]
        %v8628 = vld [vmem:[#allocation13 + $0x12c] sm:$0xff]
        %v8629 = vld [vmem:[#allocation13 + $0x134] sm:$0xf]
        %v8630 = vld [vmem:[#allocation13 + $0x138] sm:$0xff]
        %v8631 = vld [vmem:[#allocation13 + $0x140] sm:$0xf]
        %v8632 = vld [vmem:[#allocation13 + $0x144] sm:$0xff]
        %v8633 = vld [vmem:[#allocation13 + $0x14c] sm:$0xf]
        %v8634 = vld [vmem:[#allocation13 + $0x150] sm:$0xff]
        %v8635 = vld [vmem:[#allocation13 + $0x158] sm:$0xf]
        %v8636 = vld [vmem:[#allocation13 + $0x15c] sm:$0xff]
        %v8637 = vld [vmem:[#allocation13 + $0x164] sm:$0xf]
        %v8638 = vld [vmem:[#allocation13 + $0x168] sm:$0xff]
        %v8639 = vld [vmem:[#allocation13 + $0x170] sm:$0xf]
        %v8640 = vld [vmem:[#allocation13 + $0x174] sm:$0xff]
        %v8641 = vld [vmem:[#allocation13 + $0x17c] sm:$0xf]
        %v8642 = vld [vmem:[#allocation14] sm:$0xff]
        %v8643 = vld [vmem:[#allocation14 + $0x8] sm:$0xf]
        %v8676 = vunpack.c.l.b16 %v729
        %v8677 = vunpack.c.l.b16 %v730
        %v8678 = vunpack.c.l.b16 %v731
        %v8679 = vunpack.c.l.b16 %v732
        %v8680 = vunpack.c.l.b16 %v733
        %v8681 = vunpack.c.l.b16 %v734
        %v8682 = vunpack.c.l.b16 %v735
        %v8683 = vunpack.c.l.b16 %v736
        %v8684 = vunpack.c.l.b16 %v737
        %v8685 = vunpack.c.l.b16 %v738
        %v8686 = vunpack.c.l.b16 %v739
        %v8687 = vunpack.c.l.b16 %v740
        %v8688 = vunpack.c.l.b16 %v741
        %v8689 = vunpack.c.l.b16 %v742
        %v8690 = vunpack.c.l.b16 %v743
        %v8691 = vunpack.c.l.b16 %v744
        %v8692 = vunpack.c.l.b16 %v745
        %v8693 = vunpack.c.l.b16 %v746
        %v8694 = vunpack.c.l.b16 %v747
        %v8695 = vunpack.c.l.b16 %v748
        %v8696 = vunpack.c.l.b16 %v749
        %v8697 = vunpack.c.l.b16 %v750
        %v8698 = vunpack.c.l.b16 %v751
        %v8699 = vunpack.c.l.b16 %v752
        %v8700 = vunpack.c.l.b16 %v753
        %v8701 = vunpack.c.l.b16 %v754
        %v8702 = vunpack.c.l.b16 %v755
        %v8703 = vunpack.c.l.b16 %v756
        %v8704 = vunpack.c.l.b16 %v757
        %v8705 = vunpack.c.l.b16 %v758
        %v8706 = vunpack.c.l.b16 %v759
        %v8707 = vunpack.c.l.b16 %v760
        %v8708 = vpack.c.b16 %v8677, %v8676
        %v8709 = vpack.c.b16 %v8679, %v8678
        %v8710 = vpack.c.b16 %v8681, %v8680
        %v8711 = vpack.c.b16 %v8683, %v8682
        %v8712 = vpack.c.b16 %v8685, %v8684
        %v8713 = vpack.c.b16 %v8687, %v8686
        %v8714 = vpack.c.b16 %v8689, %v8688
        %v8715 = vpack.c.b16 %v8691, %v8690
        %v8716 = vpack.c.b16 %v8693, %v8692
        %v8717 = vpack.c.b16 %v8695, %v8694
        %v8718 = vpack.c.b16 %v8697, %v8696
        %v8719 = vpack.c.b16 %v8699, %v8698
        %v8720 = vpack.c.b16 %v8701, %v8700
        %v8721 = vpack.c.b16 %v8703, %v8702
        %v8722 = vpack.c.b16 %v8705, %v8704
        %v8723 = vpack.c.b16 %v8707, %v8706
        %v8726 = vunpack.c.l.b16 %v8642
        %v8727 = vunpack.c.h.b16 %v8642
        %v8728 = vunpack.c.l.b16 %v8643
        %v8729 = vpack.c.b16 %v8726, %v8726
        %v8730 = vpack.c.b16 %v8727, %v8727
        %v8731 = vpack.c.b16 %v8728, %v8728
        %vm8732 = vcmask 64512
        %v8734 = vsel %vm8732, %v8708, 0
        %v8737 = vsel %vm8732, %v8709, 0
        %v8740 = vsel %vm8732, %v8710, 0
        %v8743 = vsel %vm8732, %v8711, 0
        %v8746 = vsel %vm8732, %v8712, 0
        %v8749 = vsel %vm8732, %v8713, 0
        %v8752 = vsel %vm8732, %v8714, 0
        %v8755 = vsel %vm8732, %v8715, 0
        %v8758 = vsel %vm8732, %v8716, 0
        %v8761 = vsel %vm8732, %v8717, 0
        %v8764 = vsel %vm8732, %v8718, 0
        %v8767 = vsel %vm8732, %v8719, 0
        %v8770 = vsel %vm8732, %v8720, 0
        %v8773 = vsel %vm8732, %v8721, 0
        %v8776 = vsel %vm8732, %v8722, 0
        %v8779 = vsel %vm8732, %v8723, 0
        %vm8781 = vcmask 1043456
        %v8783 = vsel %vm8781, %v8729, 0
        %v8786 = vsel %vm8781, %v8730, 0
        %v8789 = vsel %vm8781, %v8731, 0
        %8791 = vmatprep.subr.bf16.mxu0 %v8786
        %8792 = vmatpush1.bf16.msra.mxu0 %v8783
        %8793 = vmatprep.subr.bf16.mxu0 0
        %8794 = vmatpush1.bf16.msra.mxu0 0
        %8795 = vmatprep.subr.bf16.mxu0 0
        %8796 = vmatpush1.bf16.msra.mxu0 0
        %8797 = vmatprep.subr.bf16.mxu0 0
        %8798 = vmatpush1.bf16.msra.mxu0 0
        %8799 = vmatprep.subr.bf16.mxu0 0
        %8800 = vmatpush1.bf16.msra.mxu0 0
        %8801 = vmatprep.subr.bf16.mxu0 0
        %8802 = vmatpush1.bf16.msra.mxu0 0
        %8803 = vmatprep.subr.bf16.mxu0 0
        %8804 = vmatpush1.bf16.msra.mxu0 0
        %8805 = vmatprep.subr.bf16.mxu0 0
        %8806 = vmatpush1.bf16.msra.mxu0 0
        %8807 = vmatprep.subr.bf16.mxu0 0
        %8808 = vmatpush1.bf16.msra.mxu0 0
        %8809 = vmatprep.subr.bf16.mxu0 0
        %8810 = vmatpush1.bf16.msra.mxu0 0
        %8811 = vmatprep.subr.bf16.mxu0 0
        %8812 = vmatpush1.bf16.msra.mxu0 0
        %8813 = vmatprep.subr.bf16.mxu0 0
        %8814 = vmatpush1.bf16.msra.mxu0 0
        %8815 = vmatprep.subr.bf16.mxu0 0
        %8816 = vmatpush1.bf16.msra.mxu0 0
        %8817 = vmatprep.subr.bf16.mxu0 0
        %8818 = vmatpush1.bf16.msra.mxu0 0
        %8819 = vmatprep.subr.bf16.mxu0 0
        %8820 = vmatpush1.bf16.msra.mxu0 0
        %8821 = vmatprep.subr.bf16.mxu0 0
        %8822 = vmatpush1.bf16.msra.mxu0 0
        %8823 = vmatprep.mubr.bf16.mxu0 0
        %8824 = vmatmul.mubr.bf16.gmra.mrb[0].mxu0 %v8734
        %v8825 = vpop.f32.mrb[0].mxu0
        %v8826 = vadd.f32 0.0, %v8825
        %v8827 = vpop.f32.mrb[0].mxu0
        %v8828 = vadd.f32 0.0, %v8827
        %v8829 = vpop.f32.mrb[0].mxu0
        %v8830 = vadd.f32 0.0, %v8829
        %v8831 = vpop.f32.mrb[0].mxu0
        %v8832 = vadd.f32 0.0, %v8831
        %8833 = vmatprep.mubr.bf16.mxu0 0
        %8834 = vmatmul.mubr.bf16.gmra.mrb[0].mxu0 %v8737
        %v8835 = vpop.f32.mrb[0].mxu0
        %v8836 = vadd.f32 0.0, %v8835
        %v8837 = vpop.f32.mrb[0].mxu0
        %v8838 = vadd.f32 0.0, %v8837
        %v8839 = vpop.f32.mrb[0].mxu0
        %v8840 = vadd.f32 0.0, %v8839
        %v8841 = vpop.f32.mrb[0].mxu0
        %v8842 = vadd.f32 0.0, %v8841
        %8843 = vmatprep.mubr.bf16.mxu0 0
        %8844 = vmatmul.mubr.bf16.gmra.mrb[0].mxu0 %v8740
        %v8845 = vpop.f32.mrb[0].mxu0
        %v8846 = vadd.f32 0.0, %v8845
        %v8847 = vpop.f32.mrb[0].mxu0
        %v8848 = vadd.f32 0.0, %v8847
        %v8849 = vpop.f32.mrb[0].mxu0
        %v8850 = vadd.f32 0.0, %v8849
        %v8851 = vpop.f32.mrb[0].mxu0
        %v8852 = vadd.f32 0.0, %v8851
        %8853 = vmatprep.mubr.bf16.mxu0 0
        %8854 = vmatmul.mubr.bf16.gmra.mrb[0].mxu0 %v8743
        %v8855 = vpop.f32.mrb[0].mxu0
        %v8856 = vadd.f32 0.0, %v8855
        %v8857 = vpop.f32.mrb[0].mxu0
        %v8858 = vadd.f32 0.0, %v8857
        %v8859 = vpop.f32.mrb[0].mxu0
        %v8860 = vadd.f32 0.0, %v8859
        %v8861 = vpop.f32.mrb[0].mxu0
        %v8862 = vadd.f32 0.0, %v8861
        %8863 = vmatprep.mubr.bf16.mxu0 0
        %8864 = vmatmul.mubr.bf16.gmra.mrb[0].mxu0 %v8746
        %v8865 = vpop.f32.mrb[0].mxu0
        %v8866 = vadd.f32 0.0, %v8865
        %v8867 = vpop.f32.mrb[0].mxu0
        %v8868 = vadd.f32 0.0, %v8867
        %v8869 = vpop.f32.mrb[0].mxu0
        %v8870 = vadd.f32 0.0, %v8869
        %v8871 = vpop.f32.mrb[0].mxu0
        %v8872 = vadd.f32 0.0, %v8871
        %8873 = vmatprep.mubr.bf16.mxu0 0
        %8874 = vmatmul.mubr.bf16.gmra.mrb[0].mxu0 %v8749
        %v8875 = vpop.f32.mrb[0].mxu0
        %v8876 = vadd.f32 0.0, %v8875
        %v8877 = vpop.f32.mrb[0].mxu0
        %v8878 = vadd.f32 0.0, %v8877
        %v8879 = vpop.f32.mrb[0].mxu0
        %v8880 = vadd.f32 0.0, %v8879
        %v8881 = vpop.f32.mrb[0].mxu0
        %v8882 = vadd.f32 0.0, %v8881
        %8883 = vmatprep.mubr.bf16.mxu0 0
        %8884 = vmatmul.mubr.bf16.gmra.mrb[0].mxu0 %v8752
        %v8885 = vpop.f32.mrb[0].mxu0
        %v8886 = vadd.f32 0.0, %v8885
        %v8887 = vpop.f32.mrb[0].mxu0
        %v8888 = vadd.f32 0.0, %v8887
        %v8889 = vpop.f32.mrb[0].mxu0
        %v8890 = vadd.f32 0.0, %v8889
        %v8891 = vpop.f32.mrb[0].mxu0
        %v8892 = vadd.f32 0.0, %v8891
        %8893 = vmatprep.mubr.bf16.mxu0 0
        %8894 = vmatmul.mubr.bf16.gmra.mrb[0].mxu0 %v8755
        %v8895 = vpop.f32.mrb[0].mxu0
        %v8896 = vadd.f32 0.0, %v8895
        %v8897 = vpop.f32.mrb[0].mxu0
        %v8898 = vadd.f32 0.0, %v8897
        %v8899 = vpop.f32.mrb[0].mxu0
        %v8900 = vadd.f32 0.0, %v8899
        %v8901 = vpop.f32.mrb[0].mxu0
        %v8902 = vadd.f32 0.0, %v8901
        %8903 = vmatprep.mubr.bf16.mxu0 0
        %8904 = vmatmul.mubr.bf16.gmra.mrb[0].mxu0 %v8758
        %v8905 = vpop.f32.mrb[0].mxu0
        %v8906 = vadd.f32 0.0, %v8905
        %v8907 = vpop.f32.mrb[0].mxu0
        %v8908 = vadd.f32 0.0, %v8907
        %v8909 = vpop.f32.mrb[0].mxu0
        %v8910 = vadd.f32 0.0, %v8909
        %v8911 = vpop.f32.mrb[0].mxu0
        %v8912 = vadd.f32 0.0, %v8911
        %8913 = vmatprep.mubr.bf16.mxu0 0
        %8914 = vmatmul.mubr.bf16.gmra.mrb[0].mxu0 %v8761
        %v8915 = vpop.f32.mrb[0].mxu0
        %v8916 = vadd.f32 0.0, %v8915
        %v8917 = vpop.f32.mrb[0].mxu0
        %v8918 = vadd.f32 0.0, %v8917
        %v8919 = vpop.f32.mrb[0].mxu0
        %v8920 = vadd.f32 0.0, %v8919
        %v8921 = vpop.f32.mrb[0].mxu0
        %v8922 = vadd.f32 0.0, %v8921
        %8923 = vmatprep.mubr.bf16.mxu0 0
        %8924 = vmatmul.mubr.bf16.gmra.mrb[0].mxu0 %v8764
        %v8925 = vpop.f32.mrb[0].mxu0
        %v8926 = vadd.f32 0.0, %v8925
        %v8927 = vpop.f32.mrb[0].mxu0
        %v8928 = vadd.f32 0.0, %v8927
        %v8929 = vpop.f32.mrb[0].mxu0
        %v8930 = vadd.f32 0.0, %v8929
        %v8931 = vpop.f32.mrb[0].mxu0
        %v8932 = vadd.f32 0.0, %v8931
        %8933 = vmatprep.mubr.bf16.mxu0 0
        %8934 = vmatmul.mubr.bf16.gmra.mrb[0].mxu0 %v8767
        %v8935 = vpop.f32.mrb[0].mxu0
        %v8936 = vadd.f32 0.0, %v8935
        %v8937 = vpop.f32.mrb[0].mxu0
        %v8938 = vadd.f32 0.0, %v8937
        %v8939 = vpop.f32.mrb[0].mxu0
        %v8940 = vadd.f32 0.0, %v8939
        %v8941 = vpop.f32.mrb[0].mxu0
        %v8942 = vadd.f32 0.0, %v8941
        %8943 = vmatprep.mubr.bf16.mxu0 0
        %8944 = vmatmul.mubr.bf16.gmra.mrb[0].mxu0 %v8770
        %v8945 = vpop.f32.mrb[0].mxu0
        %v8946 = vadd.f32 0.0, %v8945
        %v8947 = vpop.f32.mrb[0].mxu0
        %v8948 = vadd.f32 0.0, %v8947
        %v8949 = vpop.f32.mrb[0].mxu0
        %v8950 = vadd.f32 0.0, %v8949
        %v8951 = vpop.f32.mrb[0].mxu0
        %v8952 = vadd.f32 0.0, %v8951
        %8953 = vmatprep.mubr.bf16.mxu0 0
        %8954 = vmatmul.mubr.bf16.gmra.mrb[0].mxu0 %v8773
        %v8955 = vpop.f32.mrb[0].mxu0
        %v8956 = vadd.f32 0.0, %v8955
        %v8957 = vpop.f32.mrb[0].mxu0
        %v8958 = vadd.f32 0.0, %v8957
        %v8959 = vpop.f32.mrb[0].mxu0
        %v8960 = vadd.f32 0.0, %v8959
        %v8961 = vpop.f32.mrb[0].mxu0
        %v8962 = vadd.f32 0.0, %v8961
        %8963 = vmatprep.mubr.bf16.mxu0 0
        %8964 = vmatmul.mubr.bf16.gmra.mrb[0].mxu0 %v8776
        %v8965 = vpop.f32.mrb[0].mxu0
        %v8966 = vadd.f32 0.0, %v8965
        %v8967 = vpop.f32.mrb[0].mxu0
        %v8968 = vadd.f32 0.0, %v8967
        %v8969 = vpop.f32.mrb[0].mxu0
        %v8970 = vadd.f32 0.0, %v8969
        %v8971 = vpop.f32.mrb[0].mxu0
        %v8972 = vadd.f32 0.0, %v8971
        %8973 = vmatprep.mubr.bf16.mxu0 0
        %8974 = vmatmul.mubr.bf16.gmra.mrb[0].mxu0 %v8779
        %v8975 = vpop.f32.mrb[0].mxu0
        %v8976 = vadd.f32 0.0, %v8975
        %v8977 = vpop.f32.mrb[0].mxu0
        %v8978 = vadd.f32 0.0, %v8977
        %v8979 = vpop.f32.mrb[0].mxu0
        %v8980 = vadd.f32 0.0, %v8979
        %v8981 = vpop.f32.mrb[0].mxu0
        %v8982 = vadd.f32 0.0, %v8981
        %8983 = vdwg.mxu0
        %8984 = vmatprep.subr.bf16.mxu0 0
        %8985 = vmatpush1.bf16.msra.mxu0 %v8789
        %8986 = vmatprep.subr.bf16.mxu0 0
        %8987 = vmatpush1.bf16.msra.mxu0 0
        %8988 = vmatprep.subr.bf16.mxu0 0
        %8989 = vmatpush1.bf16.msra.mxu0 0
        %8990 = vmatprep.subr.bf16.mxu0 0
        %8991 = vmatpush1.bf16.msra.mxu0 0
        %8992 = vmatprep.subr.bf16.mxu0 0
        %8993 = vmatpush1.bf16.msra.mxu0 0
        %8994 = vmatprep.subr.bf16.mxu0 0
        %8995 = vmatpush1.bf16.msra.mxu0 0
        %8996 = vmatprep.subr.bf16.mxu0 0
        %8997 = vmatpush1.bf16.msra.mxu0 0
        %8998 = vmatprep.subr.bf16.mxu0 0
        %8999 = vmatpush1.bf16.msra.mxu0 0
        %9000 = vmatprep.subr.bf16.mxu0 0
        %9001 = vmatpush1.bf16.msra.mxu0 0
        %9002 = vmatprep.subr.bf16.mxu0 0
        %9003 = vmatpush1.bf16.msra.mxu0 0
        %9004 = vmatprep.subr.bf16.mxu0 0
        %9005 = vmatpush1.bf16.msra.mxu0 0
        %9006 = vmatprep.subr.bf16.mxu0 0
        %9007 = vmatpush1.bf16.msra.mxu0 0
        %9008 = vmatprep.subr.bf16.mxu0 0
        %9009 = vmatpush1.bf16.msra.mxu0 0
        %9010 = vmatprep.subr.bf16.mxu0 0
        %9011 = vmatpush1.bf16.msra.mxu0 0
        %9012 = vmatprep.subr.bf16.mxu0 0
        %9013 = vmatpush1.bf16.msra.mxu0 0
        %9014 = vmatprep.subr.bf16.mxu0 0
        %9015 = vmatpush1.bf16.msra.mxu0 0
        %9016 = vmatprep.mubr.bf16.mxu0 0
        %9017 = vmatmul.mubr.bf16.gmra.mrb[0].mxu0 %v8734
        %v9018 = vpop.f32.mrb[0].mxu0
        %v9019 = vadd.f32 0.0, %v9018
        %v9020 = vpop.f32.mrb[0].mxu0
        %v9021 = vpop.f32.mrb[0].mxu0
        %v9022 = vadd.f32 0.0, %v9021
        %v9023 = vpop.f32.mrb[0].mxu0
        %9024 = vmatprep.mubr.bf16.mxu0 0
        %9025 = vmatmul.mubr.bf16.gmra.mrb[0].mxu0 %v8737
        %v9026 = vpop.f32.mrb[0].mxu0
        %v9027 = vadd.f32 0.0, %v9026
        %v9028 = vpop.f32.mrb[0].mxu0
        %v9029 = vpop.f32.mrb[0].mxu0
        %v9030 = vadd.f32 0.0, %v9029
        %v9031 = vpop.f32.mrb[0].mxu0
        %9032 = vmatprep.mubr.bf16.mxu0 0
        %9033 = vmatmul.mubr.bf16.gmra.mrb[0].mxu0 %v8740
        %v9034 = vpop.f32.mrb[0].mxu0
        %v9035 = vadd.f32 0.0, %v9034
        %v9036 = vpop.f32.mrb[0].mxu0
        %v9037 = vpop.f32.mrb[0].mxu0
        %v9038 = vadd.f32 0.0, %v9037
        %v9039 = vpop.f32.mrb[0].mxu0
        %9040 = vmatprep.mubr.bf16.mxu0 0
        %9041 = vmatmul.mubr.bf16.gmra.mrb[0].mxu0 %v8743
        %v9042 = vpop.f32.mrb[0].mxu0
        %v9043 = vadd.f32 0.0, %v9042
        %v9044 = vpop.f32.mrb[0].mxu0
        %v9045 = vpop.f32.mrb[0].mxu0
        %v9046 = vadd.f32 0.0, %v9045
        %v9047 = vpop.f32.mrb[0].mxu0
        %9048 = vmatprep.mubr.bf16.mxu0 0
        %9049 = vmatmul.mubr.bf16.gmra.mrb[0].mxu0 %v8746
        %v9050 = vpop.f32.mrb[0].mxu0
        %v9051 = vadd.f32 0.0, %v9050
        %v9052 = vpop.f32.mrb[0].mxu0
        %v9053 = vpop.f32.mrb[0].mxu0
        %v9054 = vadd.f32 0.0, %v9053
        %v9055 = vpop.f32.mrb[0].mxu0
        %9056 = vmatprep.mubr.bf16.mxu0 0
        %9057 = vmatmul.mubr.bf16.gmra.mrb[0].mxu0 %v8749
        %v9058 = vpop.f32.mrb[0].mxu0
        %v9059 = vadd.f32 0.0, %v9058
        %v9060 = vpop.f32.mrb[0].mxu0
        %v9061 = vpop.f32.mrb[0].mxu0
        %v9062 = vadd.f32 0.0, %v9061
        %v9063 = vpop.f32.mrb[0].mxu0
        %9064 = vmatprep.mubr.bf16.mxu0 0
        %9065 = vmatmul.mubr.bf16.gmra.mrb[0].mxu0 %v8752
        %v9066 = vpop.f32.mrb[0].mxu0
        %v9067 = vadd.f32 0.0, %v9066
        %v9068 = vpop.f32.mrb[0].mxu0
        %v9069 = vpop.f32.mrb[0].mxu0
        %v9070 = vadd.f32 0.0, %v9069
        %v9071 = vpop.f32.mrb[0].mxu0
        %9072 = vmatprep.mubr.bf16.mxu0 0
        %9073 = vmatmul.mubr.bf16.gmra.mrb[0].mxu0 %v8755
        %v9074 = vpop.f32.mrb[0].mxu0
        %v9075 = vadd.f32 0.0, %v9074
        %v9076 = vpop.f32.mrb[0].mxu0
        %v9077 = vpop.f32.mrb[0].mxu0
        %v9078 = vadd.f32 0.0, %v9077
        %v9079 = vpop.f32.mrb[0].mxu0
        %9080 = vmatprep.mubr.bf16.mxu0 0
        %9081 = vmatmul.mubr.bf16.gmra.mrb[0].mxu0 %v8758
        %v9082 = vpop.f32.mrb[0].mxu0
        %v9083 = vadd.f32 0.0, %v9082
        %v9084 = vpop.f32.mrb[0].mxu0
        %v9085 = vpop.f32.mrb[0].mxu0
        %v9086 = vadd.f32 0.0, %v9085
        %v9087 = vpop.f32.mrb[0].mxu0
        %9088 = vmatprep.mubr.bf16.mxu0 0
        %9089 = vmatmul.mubr.bf16.gmra.mrb[0].mxu0 %v8761
        %v9090 = vpop.f32.mrb[0].mxu0
        %v9091 = vadd.f32 0.0, %v9090
        %v9092 = vpop.f32.mrb[0].mxu0
        %v9093 = vpop.f32.mrb[0].mxu0
        %v9094 = vadd.f32 0.0, %v9093
        %v9095 = vpop.f32.mrb[0].mxu0
        %9096 = vmatprep.mubr.bf16.mxu0 0
        %9097 = vmatmul.mubr.bf16.gmra.mrb[0].mxu0 %v8764
        %v9098 = vpop.f32.mrb[0].mxu0
        %v9099 = vadd.f32 0.0, %v9098
        %v9100 = vpop.f32.mrb[0].mxu0
        %v9101 = vpop.f32.mrb[0].mxu0
        %v9102 = vadd.f32 0.0, %v9101
        %v9103 = vpop.f32.mrb[0].mxu0
        %9104 = vmatprep.mubr.bf16.mxu0 0
        %9105 = vmatmul.mubr.bf16.gmra.mrb[0].mxu0 %v8767
        %v9106 = vpop.f32.mrb[0].mxu0
        %v9107 = vadd.f32 0.0, %v9106
        %v9108 = vpop.f32.mrb[0].mxu0
        %v9109 = vpop.f32.mrb[0].mxu0
        %v9110 = vadd.f32 0.0, %v9109
        %v9111 = vpop.f32.mrb[0].mxu0
        %9112 = vmatprep.mubr.bf16.mxu0 0
        %9113 = vmatmul.mubr.bf16.gmra.mrb[0].mxu0 %v8770
        %v9114 = vpop.f32.mrb[0].mxu0
        %v9115 = vadd.f32 0.0, %v9114
        %v9116 = vpop.f32.mrb[0].mxu0
        %v9117 = vpop.f32.mrb[0].mxu0
        %v9118 = vadd.f32 0.0, %v9117
        %v9119 = vpop.f32.mrb[0].mxu0
        %9120 = vmatprep.mubr.bf16.mxu0 0
        %9121 = vmatmul.mubr.bf16.gmra.mrb[0].mxu0 %v8773
        %v9122 = vpop.f32.mrb[0].mxu0
        %v9123 = vadd.f32 0.0, %v9122
        %v9124 = vpop.f32.mrb[0].mxu0
        %v9125 = vpop.f32.mrb[0].mxu0
        %v9126 = vadd.f32 0.0, %v9125
        %v9127 = vpop.f32.mrb[0].mxu0
        %9128 = vmatprep.mubr.bf16.mxu0 0
        %9129 = vmatmul.mubr.bf16.gmra.mrb[0].mxu0 %v8776
        %v9130 = vpop.f32.mrb[0].mxu0
        %v9131 = vadd.f32 0.0, %v9130
        %v9132 = vpop.f32.mrb[0].mxu0
        %v9133 = vpop.f32.mrb[0].mxu0
        %v9134 = vadd.f32 0.0, %v9133
        %v9135 = vpop.f32.mrb[0].mxu0
        %9136 = vmatprep.mubr.bf16.mxu0 0
        %9137 = vmatmul.mubr.bf16.gmra.mrb[0].mxu0 %v8779
        %v9138 = vpop.f32.mrb[0].mxu0
        %v9139 = vadd.f32 0.0, %v9138
        %v9140 = vpop.f32.mrb[0].mxu0
        %v9141 = vpop.f32.mrb[0].mxu0
        %v9142 = vadd.f32 0.0, %v9141
        %v9143 = vpop.f32.mrb[0].mxu0
        %9144 = vdwg.mxu0
        %v9209 = vunpack.c.l.b16 %v8578
        %v9210 = vunpack.c.h.b16 %v8578
        %v9211 = vunpack.c.l.b16 %v8579
        %v9212 = vunpack.c.l.b16 %v8580
        %v9213 = vunpack.c.h.b16 %v8580
        %v9214 = vunpack.c.l.b16 %v8581
        %v9215 = vunpack.c.l.b16 %v8582
        %v9216 = vunpack.c.h.b16 %v8582
        %v9217 = vunpack.c.l.b16 %v8583
        %v9218 = vunpack.c.l.b16 %v8584
        %v9219 = vunpack.c.h.b16 %v8584
        %v9220 = vunpack.c.l.b16 %v8585
        %v9221 = vunpack.c.l.b16 %v8586
        %v9222 = vunpack.c.h.b16 %v8586
        %v9223 = vunpack.c.l.b16 %v8587
        %v9224 = vunpack.c.l.b16 %v8588
        %v9225 = vunpack.c.h.b16 %v8588
        %v9226 = vunpack.c.l.b16 %v8589
        %v9227 = vunpack.c.l.b16 %v8590
        %v9228 = vunpack.c.h.b16 %v8590
        %v9229 = vunpack.c.l.b16 %v8591
        %v9230 = vunpack.c.l.b16 %v8592
        %v9231 = vunpack.c.h.b16 %v8592
        %v9232 = vunpack.c.l.b16 %v8593
        %v9233 = vunpack.c.l.b16 %v8594
        %v9234 = vunpack.c.h.b16 %v8594
        %v9235 = vunpack.c.l.b16 %v8595
        %v9236 = vunpack.c.l.b16 %v8596
        %v9237 = vunpack.c.h.b16 %v8596
        %v9238 = vunpack.c.l.b16 %v8597
        %v9239 = vunpack.c.l.b16 %v8598
        %v9240 = vunpack.c.h.b16 %v8598
        %v9241 = vunpack.c.l.b16 %v8599
        %v9242 = vunpack.c.l.b16 %v8600
        %v9243 = vunpack.c.h.b16 %v8600
        %v9244 = vunpack.c.l.b16 %v8601
        %v9245 = vunpack.c.l.b16 %v8602
        %v9246 = vunpack.c.h.b16 %v8602
        %v9247 = vunpack.c.l.b16 %v8603
        %v9248 = vunpack.c.l.b16 %v8604
        %v9249 = vunpack.c.h.b16 %v8604
        %v9250 = vunpack.c.l.b16 %v8605
        %v9251 = vunpack.c.l.b16 %v8606
        %v9252 = vunpack.c.h.b16 %v8606
        %v9253 = vunpack.c.l.b16 %v8607
        %v9254 = vunpack.c.l.b16 %v8608
        %v9255 = vunpack.c.h.b16 %v8608
        %v9256 = vunpack.c.l.b16 %v8609
        %v9257 = vunpack.c.l.b16 %v8610
        %v9258 = vunpack.c.h.b16 %v8610
        %v9259 = vunpack.c.l.b16 %v8611
        %v9260 = vunpack.c.l.b16 %v8612
        %v9261 = vunpack.c.h.b16 %v8612
        %v9262 = vunpack.c.l.b16 %v8613
        %v9263 = vunpack.c.l.b16 %v8614
        %v9264 = vunpack.c.h.b16 %v8614
        %v9265 = vunpack.c.l.b16 %v8615
        %v9266 = vunpack.c.l.b16 %v8616
        %v9267 = vunpack.c.h.b16 %v8616
        %v9268 = vunpack.c.l.b16 %v8617
        %v9269 = vunpack.c.l.b16 %v8618
        %v9270 = vunpack.c.h.b16 %v8618
        %v9271 = vunpack.c.l.b16 %v8619
        %v9272 = vunpack.c.l.b16 %v8620
        %v9273 = vunpack.c.h.b16 %v8620
        %v9274 = vunpack.c.l.b16 %v8621
        %v9275 = vunpack.c.l.b16 %v8622
        %v9276 = vunpack.c.h.b16 %v8622
        %v9277 = vunpack.c.l.b16 %v8623
        %v9278 = vunpack.c.l.b16 %v8624
        %v9279 = vunpack.c.h.b16 %v8624
        %v9280 = vunpack.c.l.b16 %v8625
        %v9281 = vunpack.c.l.b16 %v8626
        %v9282 = vunpack.c.h.b16 %v8626
        %v9283 = vunpack.c.l.b16 %v8627
        %v9284 = vunpack.c.l.b16 %v8628
        %v9285 = vunpack.c.h.b16 %v8628
        %v9286 = vunpack.c.l.b16 %v8629
        %v9287 = vunpack.c.l.b16 %v8630
        %v9288 = vunpack.c.h.b16 %v8630
        %v9289 = vunpack.c.l.b16 %v8631
        %v9290 = vunpack.c.l.b16 %v8632
        %v9291 = vunpack.c.h.b16 %v8632
        %v9292 = vunpack.c.l.b16 %v8633
        %v9293 = vunpack.c.l.b16 %v8634
        %v9294 = vunpack.c.h.b16 %v8634
        %v9295 = vunpack.c.l.b16 %v8635
        %v9296 = vunpack.c.l.b16 %v8636
        %v9297 = vunpack.c.h.b16 %v8636
        %v9298 = vunpack.c.l.b16 %v8637
        %v9299 = vunpack.c.l.b16 %v8638
        %v9300 = vunpack.c.h.b16 %v8638
        %v9301 = vunpack.c.l.b16 %v8639
        %v9302 = vunpack.c.l.b16 %v8640
        %v9303 = vunpack.c.h.b16 %v8640
        %v9304 = vunpack.c.l.b16 %v8641
        %v9305 = vpack.c.b16 %v9212, %v9209
        %v9306 = vpack.c.b16 %v9213, %v9210
        %v9307 = vpack.c.b16 %v9214, %v9211
        %v9308 = vpack.c.b16 %v9218, %v9215
        %v9309 = vpack.c.b16 %v9219, %v9216
        %v9310 = vpack.c.b16 %v9220, %v9217
        %v9311 = vpack.c.b16 %v9224, %v9221
        %v9312 = vpack.c.b16 %v9225, %v9222
        %v9313 = vpack.c.b16 %v9226, %v9223
        %v9314 = vpack.c.b16 %v9230, %v9227
        %v9315 = vpack.c.b16 %v9231, %v9228
        %v9316 = vpack.c.b16 %v9232, %v9229
        %v9317 = vpack.c.b16 %v9236, %v9233
        %v9318 = vpack.c.b16 %v9237, %v9234
        %v9319 = vpack.c.b16 %v9238, %v9235
        %v9320 = vpack.c.b16 %v9242, %v9239
        %v9321 = vpack.c.b16 %v9243, %v9240
        %v9322 = vpack.c.b16 %v9244, %v9241
        %v9323 = vpack.c.b16 %v9248, %v9245
        %v9324 = vpack.c.b16 %v9249, %v9246
        %v9325 = vpack.c.b16 %v9250, %v9247
        %v9326 = vpack.c.b16 %v9254, %v9251
        %v9327 = vpack.c.b16 %v9255, %v9252
        %v9328 = vpack.c.b16 %v9256, %v9253
        %v9329 = vpack.c.b16 %v9260, %v9257
        %v9330 = vpack.c.b16 %v9261, %v9258
        %v9331 = vpack.c.b16 %v9262, %v9259
        %v9332 = vpack.c.b16 %v9266, %v9263
        %v9333 = vpack.c.b16 %v9267, %v9264
        %v9334 = vpack.c.b16 %v9268, %v9265
        %v9335 = vpack.c.b16 %v9272, %v9269
        %v9336 = vpack.c.b16 %v9273, %v9270
        %v9337 = vpack.c.b16 %v9274, %v9271
        %v9338 = vpack.c.b16 %v9278, %v9275
        %v9339 = vpack.c.b16 %v9279, %v9276
        %v9340 = vpack.c.b16 %v9280, %v9277
        %v9341 = vpack.c.b16 %v9284, %v9281
        %v9342 = vpack.c.b16 %v9285, %v9282
        %v9343 = vpack.c.b16 %v9286, %v9283
        %v9344 = vpack.c.b16 %v9290, %v9287
        %v9345 = vpack.c.b16 %v9291, %v9288
        %v9346 = vpack.c.b16 %v9292, %v9289
        %v9347 = vpack.c.b16 %v9296, %v9293
        %v9348 = vpack.c.b16 %v9297, %v9294
        %v9349 = vpack.c.b16 %v9298, %v9295
        %v9350 = vpack.c.b16 %v9302, %v9299
        %v9351 = vpack.c.b16 %v9303, %v9300
        %v9352 = vpack.c.b16 %v9304, %v9301
        %9401 = vmatprep.subr.bf16.mxu0 %v9306
        %9402 = vmatpush1.bf16.msra.mxu0 %v9305
        %9403 = vmatprep.subr.bf16.mxu0 %v9309
        %9404 = vmatpush1.bf16.msra.mxu0 %v9308
        %9405 = vmatprep.subr.bf16.mxu0 %v9312
        %9406 = vmatpush1.bf16.msra.mxu0 %v9311
        %9407 = vmatprep.subr.bf16.mxu0 %v9315
        %9408 = vmatpush1.bf16.msra.mxu0 %v9314
        %9409 = vmatprep.subr.bf16.mxu0 %v9318
        %9410 = vmatpush1.bf16.msra.mxu0 %v9317
        %9411 = vmatprep.subr.bf16.mxu0 %v9321
        %9412 = vmatpush1.bf16.msra.mxu0 %v9320
        %9413 = vmatprep.subr.bf16.mxu0 %v9324
        %9414 = vmatpush1.bf16.msra.mxu0 %v9323
        %9415 = vmatprep.subr.bf16.mxu0 %v9327
        %9416 = vmatpush1.bf16.msra.mxu0 %v9326
        %9417 = vmatprep.subr.bf16.mxu0 %v9330
        %9418 = vmatpush1.bf16.msra.mxu0 %v9329
        %9419 = vmatprep.subr.bf16.mxu0 %v9333
        %9420 = vmatpush1.bf16.msra.mxu0 %v9332
        %9421 = vmatprep.subr.bf16.mxu0 %v9336
        %9422 = vmatpush1.bf16.msra.mxu0 %v9335
        %9423 = vmatprep.subr.bf16.mxu0 %v9339
        %9424 = vmatpush1.bf16.msra.mxu0 %v9338
        %9425 = vmatprep.subr.bf16.mxu0 %v9342
        %9426 = vmatpush1.bf16.msra.mxu0 %v9341
        %9427 = vmatprep.subr.bf16.mxu0 %v9345
        %9428 = vmatpush1.bf16.msra.mxu0 %v9344
        %9429 = vmatprep.subr.bf16.mxu0 %v9348
        %9430 = vmatpush1.bf16.msra.mxu0 %v9347
        %9431 = vmatprep.subr.bf16.mxu0 %v9351
        %9432 = vmatpush1.bf16.msra.mxu0 %v9350
        %9433 = vmatprep.mubr.bf16.mxu0 %v8547
        %9434 = vmatmul.mubr.bf16.gmra.mrb[0].mxu0 %v8546
        %v9435 = vpop.f32.mrb[0].mxu0
        %v9436 = vadd.f32 %v8826, %v9435
        %v9437 = vpop.f32.mrb[0].mxu0
        %v9438 = vadd.f32 %v8828, %v9437
        %v9439 = vpop.f32.mrb[0].mxu0
        %v9440 = vadd.f32 %v8830, %v9439
        %v9441 = vpop.f32.mrb[0].mxu0
        %v9442 = vadd.f32 %v8832, %v9441
        %9443 = vmatprep.mubr.bf16.mxu0 %v8549
        %9444 = vmatmul.mubr.bf16.gmra.mrb[0].mxu0 %v8548
        %v9445 = vpop.f32.mrb[0].mxu0
        %v9446 = vadd.f32 %v8836, %v9445
        %v9447 = vpop.f32.mrb[0].mxu0
        %v9448 = vadd.f32 %v8838, %v9447
        %v9449 = vpop.f32.mrb[0].mxu0
        %v9450 = vadd.f32 %v8840, %v9449
        %v9451 = vpop.f32.mrb[0].mxu0
        %v9452 = vadd.f32 %v8842, %v9451
        %9453 = vmatprep.mubr.bf16.mxu0 %v8551
        %9454 = vmatmul.mubr.bf16.gmra.mrb[0].mxu0 %v8550
        %v9455 = vpop.f32.mrb[0].mxu0
        %v9456 = vadd.f32 %v8846, %v9455
        %v9457 = vpop.f32.mrb[0].mxu0
        %v9458 = vadd.f32 %v8848, %v9457
        %v9459 = vpop.f32.mrb[0].mxu0
        %v9460 = vadd.f32 %v8850, %v9459
        %v9461 = vpop.f32.mrb[0].mxu0
        %v9462 = vadd.f32 %v8852, %v9461
        %9463 = vmatprep.mubr.bf16.mxu0 %v8553
        %9464 = vmatmul.mubr.bf16.gmra.mrb[0].mxu0 %v8552
        %v9465 = vpop.f32.mrb[0].mxu0
        %v9466 = vadd.f32 %v8856, %v9465
        %v9467 = vpop.f32.mrb[0].mxu0
        %v9468 = vadd.f32 %v8858, %v9467
        %v9469 = vpop.f32.mrb[0].mxu0
        %v9470 = vadd.f32 %v8860, %v9469
        %v9471 = vpop.f32.mrb[0].mxu0
        %v9472 = vadd.f32 %v8862, %v9471
        %9473 = vmatprep.mubr.bf16.mxu0 %v8555
        %9474 = vmatmul.mubr.bf16.gmra.mrb[0].mxu0 %v8554
        %v9475 = vpop.f32.mrb[0].mxu0
        %v9476 = vadd.f32 %v8866, %v9475
        %v9477 = vpop.f32.mrb[0].mxu0
        %v9478 = vadd.f32 %v8868, %v9477
        %v9479 = vpop.f32.mrb[0].mxu0
        %v9480 = vadd.f32 %v8870, %v9479
        %v9481 = vpop.f32.mrb[0].mxu0
        %v9482 = vadd.f32 %v8872, %v9481
        %9483 = vmatprep.mubr.bf16.mxu0 %v8557
        %9484 = vmatmul.mubr.bf16.gmra.mrb[0].mxu0 %v8556
        %v9485 = vpop.f32.mrb[0].mxu0
        %v9486 = vadd.f32 %v8876, %v9485
        %v9487 = vpop.f32.mrb[0].mxu0
        %v9488 = vadd.f32 %v8878, %v9487
        %v9489 = vpop.f32.mrb[0].mxu0
        %v9490 = vadd.f32 %v8880, %v9489
        %v9491 = vpop.f32.mrb[0].mxu0
        %v9492 = vadd.f32 %v8882, %v9491
        %9493 = vmatprep.mubr.bf16.mxu0 %v8559
        %9494 = vmatmul.mubr.bf16.gmra.mrb[0].mxu0 %v8558
        %v9495 = vpop.f32.mrb[0].mxu0
        %v9496 = vadd.f32 %v8886, %v9495
        %v9497 = vpop.f32.mrb[0].mxu0
        %v9498 = vadd.f32 %v8888, %v9497
        %v9499 = vpop.f32.mrb[0].mxu0
        %v9500 = vadd.f32 %v8890, %v9499
        %v9501 = vpop.f32.mrb[0].mxu0
        %v9502 = vadd.f32 %v8892, %v9501
        %9503 = vmatprep.mubr.bf16.mxu0 %v8561
        %9504 = vmatmul.mubr.bf16.gmra.mrb[0].mxu0 %v8560
        %v9505 = vpop.f32.mrb[0].mxu0
        %v9506 = vadd.f32 %v8896, %v9505
        %v9507 = vpop.f32.mrb[0].mxu0
        %v9508 = vadd.f32 %v8898, %v9507
        %v9509 = vpop.f32.mrb[0].mxu0
        %v9510 = vadd.f32 %v8900, %v9509
        %v9511 = vpop.f32.mrb[0].mxu0
        %v9512 = vadd.f32 %v8902, %v9511
        %9513 = vmatprep.mubr.bf16.mxu0 %v8563
        %9514 = vmatmul.mubr.bf16.gmra.mrb[0].mxu0 %v8562
        %v9515 = vpop.f32.mrb[0].mxu0
        %v9516 = vadd.f32 %v8906, %v9515
        %v9517 = vpop.f32.mrb[0].mxu0
        %v9518 = vadd.f32 %v8908, %v9517
        %v9519 = vpop.f32.mrb[0].mxu0
        %v9520 = vadd.f32 %v8910, %v9519
        %v9521 = vpop.f32.mrb[0].mxu0
        %v9522 = vadd.f32 %v8912, %v9521
        %9523 = vmatprep.mubr.bf16.mxu0 %v8565
        %9524 = vmatmul.mubr.bf16.gmra.mrb[0].mxu0 %v8564
        %v9525 = vpop.f32.mrb[0].mxu0
        %v9526 = vadd.f32 %v8916, %v9525
        %v9527 = vpop.f32.mrb[0].mxu0
        %v9528 = vadd.f32 %v8918, %v9527
        %v9529 = vpop.f32.mrb[0].mxu0
        %v9530 = vadd.f32 %v8920, %v9529
        %v9531 = vpop.f32.mrb[0].mxu0
        %v9532 = vadd.f32 %v8922, %v9531
        %9533 = vmatprep.mubr.bf16.mxu0 %v8567
        %9534 = vmatmul.mubr.bf16.gmra.mrb[0].mxu0 %v8566
        %v9535 = vpop.f32.mrb[0].mxu0
        %v9536 = vadd.f32 %v8926, %v9535
        %v9537 = vpop.f32.mrb[0].mxu0
        %v9538 = vadd.f32 %v8928, %v9537
        %v9539 = vpop.f32.mrb[0].mxu0
        %v9540 = vadd.f32 %v8930, %v9539
        %v9541 = vpop.f32.mrb[0].mxu0
        %v9542 = vadd.f32 %v8932, %v9541
        %9543 = vmatprep.mubr.bf16.mxu0 %v8569
        %9544 = vmatmul.mubr.bf16.gmra.mrb[0].mxu0 %v8568
        %v9545 = vpop.f32.mrb[0].mxu0
        %v9546 = vadd.f32 %v8936, %v9545
        %v9547 = vpop.f32.mrb[0].mxu0
        %v9548 = vadd.f32 %v8938, %v9547
        %v9549 = vpop.f32.mrb[0].mxu0
        %v9550 = vadd.f32 %v8940, %v9549
        %v9551 = vpop.f32.mrb[0].mxu0
        %v9552 = vadd.f32 %v8942, %v9551
        %9553 = vmatprep.mubr.bf16.mxu0 %v8571
        %9554 = vmatmul.mubr.bf16.gmra.mrb[0].mxu0 %v8570
        %v9555 = vpop.f32.mrb[0].mxu0
        %v9556 = vadd.f32 %v8946, %v9555
        %v9557 = vpop.f32.mrb[0].mxu0
        %v9558 = vadd.f32 %v8948, %v9557
        %v9559 = vpop.f32.mrb[0].mxu0
        %v9560 = vadd.f32 %v8950, %v9559
        %v9561 = vpop.f32.mrb[0].mxu0
        %v9562 = vadd.f32 %v8952, %v9561
        %9563 = vmatprep.mubr.bf16.mxu0 %v8573
        %9564 = vmatmul.mubr.bf16.gmra.mrb[0].mxu0 %v8572
        %v9565 = vpop.f32.mrb[0].mxu0
        %v9566 = vadd.f32 %v8956, %v9565
        %v9567 = vpop.f32.mrb[0].mxu0
        %v9568 = vadd.f32 %v8958, %v9567
        %v9569 = vpop.f32.mrb[0].mxu0
        %v9570 = vadd.f32 %v8960, %v9569
        %v9571 = vpop.f32.mrb[0].mxu0
        %v9572 = vadd.f32 %v8962, %v9571
        %9573 = vmatprep.mubr.bf16.mxu0 %v8575
        %9574 = vmatmul.mubr.bf16.gmra.mrb[0].mxu0 %v8574
        %v9575 = vpop.f32.mrb[0].mxu0
        %v9576 = vadd.f32 %v8966, %v9575
        %v9577 = vpop.f32.mrb[0].mxu0
        %v9578 = vadd.f32 %v8968, %v9577
        %v9579 = vpop.f32.mrb[0].mxu0
        %v9580 = vadd.f32 %v8970, %v9579
        %v9581 = vpop.f32.mrb[0].mxu0
        %v9582 = vadd.f32 %v8972, %v9581
        %9583 = vmatprep.mubr.bf16.mxu0 %v8577
        %9584 = vmatmul.mubr.bf16.gmra.mrb[0].mxu0 %v8576
        %v9585 = vpop.f32.mrb[0].mxu0
        %v9586 = vadd.f32 %v8976, %v9585
        %v9587 = vpop.f32.mrb[0].mxu0
        %v9588 = vadd.f32 %v8978, %v9587
        %v9589 = vpop.f32.mrb[0].mxu0
        %v9590 = vadd.f32 %v8980, %v9589
        %v9591 = vpop.f32.mrb[0].mxu0
        %v9592 = vadd.f32 %v8982, %v9591
        %9593 = vdwg.mxu0
        %9594 = vmatprep.subr.bf16.mxu0 0
        %9595 = vmatpush1.bf16.msra.mxu0 %v9307
        %9596 = vmatprep.subr.bf16.mxu0 0
        %9597 = vmatpush1.bf16.msra.mxu0 %v9310
        %9598 = vmatprep.subr.bf16.mxu0 0
        %9599 = vmatpush1.bf16.msra.mxu0 %v9313
        %9600 = vmatprep.subr.bf16.mxu0 0
        %9601 = vmatpush1.bf16.msra.mxu0 %v9316
        %9602 = vmatprep.subr.bf16.mxu0 0
        %9603 = vmatpush1.bf16.msra.mxu0 %v9319
        %9604 = vmatprep.subr.bf16.mxu0 0
        %9605 = vmatpush1.bf16.msra.mxu0 %v9322
        %9606 = vmatprep.subr.bf16.mxu0 0
        %9607 = vmatpush1.bf16.msra.mxu0 %v9325
        %9608 = vmatprep.subr.bf16.mxu0 0
        %9609 = vmatpush1.bf16.msra.mxu0 %v9328
        %9610 = vmatprep.subr.bf16.mxu0 0
        %9611 = vmatpush1.bf16.msra.mxu0 %v9331
        %9612 = vmatprep.subr.bf16.mxu0 0
        %9613 = vmatpush1.bf16.msra.mxu0 %v9334
        %9614 = vmatprep.subr.bf16.mxu0 0
        %9615 = vmatpush1.bf16.msra.mxu0 %v9337
        %9616 = vmatprep.subr.bf16.mxu0 0
        %9617 = vmatpush1.bf16.msra.mxu0 %v9340
        %9618 = vmatprep.subr.bf16.mxu0 0
        %9619 = vmatpush1.bf16.msra.mxu0 %v9343
        %9620 = vmatprep.subr.bf16.mxu0 0
        %9621 = vmatpush1.bf16.msra.mxu0 %v9346
        %9622 = vmatprep.subr.bf16.mxu0 0
        %9623 = vmatpush1.bf16.msra.mxu0 %v9349
        %9624 = vmatprep.subr.bf16.mxu0 0
        %9625 = vmatpush1.bf16.msra.mxu0 %v9352
        %9626 = vmatprep.mubr.bf16.mxu0 %v8547
        %9627 = vmatmul.mubr.bf16.gmra.mrb[0].mxu0 %v8546
        %v9628 = vpop.f32.mrb[0].mxu0
        %v9629 = vadd.f32 %v9019, %v9628
        %v9630 = vpop.f32.mrb[0].mxu0
        %v9631 = vpop.f32.mrb[0].mxu0
        %v9632 = vadd.f32 %v9022, %v9631
        %v9633 = vpop.f32.mrb[0].mxu0
        %9634 = vmatprep.mubr.bf16.mxu0 %v8549
        %9635 = vmatmul.mubr.bf16.gmra.mrb[0].mxu0 %v8548
        %v9636 = vpop.f32.mrb[0].mxu0
        %v9637 = vadd.f32 %v9027, %v9636
        %v9638 = vpop.f32.mrb[0].mxu0
        %v9639 = vpop.f32.mrb[0].mxu0
        %v9640 = vadd.f32 %v9030, %v9639
        %v9641 = vpop.f32.mrb[0].mxu0
        %9642 = vmatprep.mubr.bf16.mxu0 %v8551
        %9643 = vmatmul.mubr.bf16.gmra.mrb[0].mxu0 %v8550
        %v9644 = vpop.f32.mrb[0].mxu0
        %v9645 = vadd.f32 %v9035, %v9644
        %v9646 = vpop.f32.mrb[0].mxu0
        %v9647 = vpop.f32.mrb[0].mxu0
        %v9648 = vadd.f32 %v9038, %v9647
        %v9649 = vpop.f32.mrb[0].mxu0
        %9650 = vmatprep.mubr.bf16.mxu0 %v8553
        %9651 = vmatmul.mubr.bf16.gmra.mrb[0].mxu0 %v8552
        %v9652 = vpop.f32.mrb[0].mxu0
        %v9653 = vadd.f32 %v9043, %v9652
        %v9654 = vpop.f32.mrb[0].mxu0
        %v9655 = vpop.f32.mrb[0].mxu0
        %v9656 = vadd.f32 %v9046, %v9655
        %v9657 = vpop.f32.mrb[0].mxu0
        %9658 = vmatprep.mubr.bf16.mxu0 %v8555
        %9659 = vmatmul.mubr.bf16.gmra.mrb[0].mxu0 %v8554
        %v9660 = vpop.f32.mrb[0].mxu0
        %v9661 = vadd.f32 %v9051, %v9660
        %v9662 = vpop.f32.mrb[0].mxu0
        %v9663 = vpop.f32.mrb[0].mxu0
        %v9664 = vadd.f32 %v9054, %v9663
        %v9665 = vpop.f32.mrb[0].mxu0
        %9666 = vmatprep.mubr.bf16.mxu0 %v8557
        %9667 = vmatmul.mubr.bf16.gmra.mrb[0].mxu0 %v8556
        %v9668 = vpop.f32.mrb[0].mxu0
        %v9669 = vadd.f32 %v9059, %v9668
        %v9670 = vpop.f32.mrb[0].mxu0
        %v9671 = vpop.f32.mrb[0].mxu0
        %v9672 = vadd.f32 %v9062, %v9671
        %v9673 = vpop.f32.mrb[0].mxu0
        %9674 = vmatprep.mubr.bf16.mxu0 %v8559
        %9675 = vmatmul.mubr.bf16.gmra.mrb[0].mxu0 %v8558
        %v9676 = vpop.f32.mrb[0].mxu0
        %v9677 = vadd.f32 %v9067, %v9676
        %v9678 = vpop.f32.mrb[0].mxu0
        %v9679 = vpop.f32.mrb[0].mxu0
        %v9680 = vadd.f32 %v9070, %v9679
        %v9681 = vpop.f32.mrb[0].mxu0
        %9682 = vmatprep.mubr.bf16.mxu0 %v8561
        %9683 = vmatmul.mubr.bf16.gmra.mrb[0].mxu0 %v8560
        %v9684 = vpop.f32.mrb[0].mxu0
        %v9685 = vadd.f32 %v9075, %v9684
        %v9686 = vpop.f32.mrb[0].mxu0
        %v9687 = vpop.f32.mrb[0].mxu0
        %v9688 = vadd.f32 %v9078, %v9687
        %v9689 = vpop.f32.mrb[0].mxu0
        %9690 = vmatprep.mubr.bf16.mxu0 %v8563
        %9691 = vmatmul.mubr.bf16.gmra.mrb[0].mxu0 %v8562
        %v9692 = vpop.f32.mrb[0].mxu0
        %v9693 = vadd.f32 %v9083, %v9692
        %v9694 = vpop.f32.mrb[0].mxu0
        %v9695 = vpop.f32.mrb[0].mxu0
        %v9696 = vadd.f32 %v9086, %v9695
        %v9697 = vpop.f32.mrb[0].mxu0
        %9698 = vmatprep.mubr.bf16.mxu0 %v8565
        %9699 = vmatmul.mubr.bf16.gmra.mrb[0].mxu0 %v8564
        %v9700 = vpop.f32.mrb[0].mxu0
        %v9701 = vadd.f32 %v9091, %v9700
        %v9702 = vpop.f32.mrb[0].mxu0
        %v9703 = vpop.f32.mrb[0].mxu0
        %v9704 = vadd.f32 %v9094, %v9703
        %v9705 = vpop.f32.mrb[0].mxu0
        %9706 = vmatprep.mubr.bf16.mxu0 %v8567
        %9707 = vmatmul.mubr.bf16.gmra.mrb[0].mxu0 %v8566
        %v9708 = vpop.f32.mrb[0].mxu0
        %v9709 = vadd.f32 %v9099, %v9708
        %v9710 = vpop.f32.mrb[0].mxu0
        %v9711 = vpop.f32.mrb[0].mxu0
        %v9712 = vadd.f32 %v9102, %v9711
        %v9713 = vpop.f32.mrb[0].mxu0
        %9714 = vmatprep.mubr.bf16.mxu0 %v8569
        %9715 = vmatmul.mubr.bf16.gmra.mrb[0].mxu0 %v8568
        %v9716 = vpop.f32.mrb[0].mxu0
        %v9717 = vadd.f32 %v9107, %v9716
        %v9718 = vpop.f32.mrb[0].mxu0
        %v9719 = vpop.f32.mrb[0].mxu0
        %v9720 = vadd.f32 %v9110, %v9719
        %v9721 = vpop.f32.mrb[0].mxu0
        %9722 = vmatprep.mubr.bf16.mxu0 %v8571
        %9723 = vmatmul.mubr.bf16.gmra.mrb[0].mxu0 %v8570
        %v9724 = vpop.f32.mrb[0].mxu0
        %v9725 = vadd.f32 %v9115, %v9724
        %v9726 = vpop.f32.mrb[0].mxu0
        %v9727 = vpop.f32.mrb[0].mxu0
        %v9728 = vadd.f32 %v9118, %v9727
        %v9729 = vpop.f32.mrb[0].mxu0
        %9730 = vmatprep.mubr.bf16.mxu0 %v8573
        %9731 = vmatmul.mubr.bf16.gmra.mrb[0].mxu0 %v8572
        %v9732 = vpop.f32.mrb[0].mxu0
        %v9733 = vadd.f32 %v9123, %v9732
        %v9734 = vpop.f32.mrb[0].mxu0
        %v9735 = vpop.f32.mrb[0].mxu0
        %v9736 = vadd.f32 %v9126, %v9735
        %v9737 = vpop.f32.mrb[0].mxu0
        %9738 = vmatprep.mubr.bf16.mxu0 %v8575
        %9739 = vmatmul.mubr.bf16.gmra.mrb[0].mxu0 %v8574
        %v9740 = vpop.f32.mrb[0].mxu0
        %v9741 = vadd.f32 %v9131, %v9740
        %v9742 = vpop.f32.mrb[0].mxu0
        %v9743 = vpop.f32.mrb[0].mxu0
        %v9744 = vadd.f32 %v9134, %v9743
        %v9745 = vpop.f32.mrb[0].mxu0
        %9746 = vmatprep.mubr.bf16.mxu0 %v8577
        %9747 = vmatmul.mubr.bf16.gmra.mrb[0].mxu0 %v8576
        %v9748 = vpop.f32.mrb[0].mxu0
        %v9749 = vadd.f32 %v9139, %v9748
        %v9750 = vpop.f32.mrb[0].mxu0
        %v9751 = vpop.f32.mrb[0].mxu0
        %v9752 = vadd.f32 %v9142, %v9751
        %v9753 = vpop.f32.mrb[0].mxu0
        %9754 = vdwg.mxu0
        %v9755 = vld [vmem:[#allocation16] sm:$0x7]
        %v9757 = vlaneseq
        %v9758 = vshrl.u32 %v9757, 7
        %v9759 = vsub.s32 0, %v9758
        %v9760 = vrot.slane %v9755, %v9759
        %v9761 = vlaneseq
        %v9762 = vshrl.u32 %v9761, 7
        %v9763 = vsub.s32 1, %v9762
        %v9764 = vrot.slane %v9755, %v9763
        %v9765 = vlaneseq
        %v9766 = vshrl.u32 %v9765, 7
        %v9767 = vsub.s32 2, %v9766
        %v9768 = vrot.slane %v9755, %v9767
        %v9772 = vadd.f32 %v9436, %v9760
        %v9773 = vadd.f32 %v9438, %v9764
        %v9774 = vadd.f32 %v9629, %v9768
        %v9775 = vadd.f32 %v9440, %v9760
        %v9776 = vadd.f32 %v9442, %v9764
        %v9777 = vadd.f32 %v9632, %v9768
        %v9778 = vadd.f32 %v9446, %v9760
        %v9779 = vadd.f32 %v9448, %v9764
        %v9780 = vadd.f32 %v9637, %v9768
        %v9781 = vadd.f32 %v9450, %v9760
        %v9782 = vadd.f32 %v9452, %v9764
        %v9783 = vadd.f32 %v9640, %v9768
        %v9784 = vadd.f32 %v9456, %v9760
        %v9785 = vadd.f32 %v9458, %v9764
        %v9786 = vadd.f32 %v9645, %v9768
        %v9787 = vadd.f32 %v9460, %v9760
        %v9788 = vadd.f32 %v9462, %v9764
        %v9789 = vadd.f32 %v9648, %v9768
        %v9790 = vadd.f32 %v9466, %v9760
        %v9791 = vadd.f32 %v9468, %v9764
        %v9792 = vadd.f32 %v9653, %v9768
        %v9793 = vadd.f32 %v9470, %v9760
        %v9794 = vadd.f32 %v9472, %v9764
        %v9795 = vadd.f32 %v9656, %v9768
        %v9796 = vadd.f32 %v9476, %v9760
        %v9797 = vadd.f32 %v9478, %v9764
        %v9798 = vadd.f32 %v9661, %v9768
        %v9799 = vadd.f32 %v9480, %v9760
        %v9800 = vadd.f32 %v9482, %v9764
        %v9801 = vadd.f32 %v9664, %v9768
        %v9802 = vadd.f32 %v9486, %v9760
        %v9803 = vadd.f32 %v9488, %v9764
        %v9804 = vadd.f32 %v9669, %v9768
        %v9805 = vadd.f32 %v9490, %v9760
        %v9806 = vadd.f32 %v9492, %v9764
        %v9807 = vadd.f32 %v9672, %v9768
        %v9808 = vadd.f32 %v9496, %v9760
        %v9809 = vadd.f32 %v9498, %v9764
        %v9810 = vadd.f32 %v9677, %v9768
        %v9811 = vadd.f32 %v9500, %v9760
        %v9812 = vadd.f32 %v9502, %v9764
        %v9813 = vadd.f32 %v9680, %v9768
        %v9814 = vadd.f32 %v9506, %v9760
        %v9815 = vadd.f32 %v9508, %v9764
        %v9816 = vadd.f32 %v9685, %v9768
        %v9817 = vadd.f32 %v9510, %v9760
        %v9818 = vadd.f32 %v9512, %v9764
        %v9819 = vadd.f32 %v9688, %v9768
        %v9820 = vadd.f32 %v9516, %v9760
        %v9821 = vadd.f32 %v9518, %v9764
        %v9822 = vadd.f32 %v9693, %v9768
        %v9823 = vadd.f32 %v9520, %v9760
        %v9824 = vadd.f32 %v9522, %v9764
        %v9825 = vadd.f32 %v9696, %v9768
        %v9826 = vadd.f32 %v9526, %v9760
        %v9827 = vadd.f32 %v9528, %v9764
        %v9828 = vadd.f32 %v9701, %v9768
        %v9829 = vadd.f32 %v9530, %v9760
        %v9830 = vadd.f32 %v9532, %v9764
        %v9831 = vadd.f32 %v9704, %v9768
        %v9832 = vadd.f32 %v9536, %v9760
        %v9833 = vadd.f32 %v9538, %v9764
        %v9834 = vadd.f32 %v9709, %v9768
        %v9835 = vadd.f32 %v9540, %v9760
        %v9836 = vadd.f32 %v9542, %v9764
        %v9837 = vadd.f32 %v9712, %v9768
        %v9838 = vadd.f32 %v9546, %v9760
        %v9839 = vadd.f32 %v9548, %v9764
        %v9840 = vadd.f32 %v9717, %v9768
        %v9841 = vadd.f32 %v9550, %v9760
        %v9842 = vadd.f32 %v9552, %v9764
        %v9843 = vadd.f32 %v9720, %v9768
        %v9844 = vadd.f32 %v9556, %v9760
        %v9845 = vadd.f32 %v9558, %v9764
        %v9846 = vadd.f32 %v9725, %v9768
        %v9847 = vadd.f32 %v9560, %v9760
        %v9848 = vadd.f32 %v9562, %v9764
        %v9849 = vadd.f32 %v9728, %v9768
        %v9850 = vadd.f32 %v9566, %v9760
        %v9851 = vadd.f32 %v9568, %v9764
        %v9852 = vadd.f32 %v9733, %v9768
        %v9853 = vadd.f32 %v9570, %v9760
        %v9854 = vadd.f32 %v9572, %v9764
        %v9855 = vadd.f32 %v9736, %v9768
        %v9856 = vadd.f32 %v9576, %v9760
        %v9857 = vadd.f32 %v9578, %v9764
        %v9858 = vadd.f32 %v9741, %v9768
        %v9859 = vadd.f32 %v9580, %v9760
        %v9860 = vadd.f32 %v9582, %v9764
        %v9861 = vadd.f32 %v9744, %v9768
        %v9862 = vadd.f32 %v9586, %v9760
        %v9863 = vadd.f32 %v9588, %v9764
        %v9864 = vadd.f32 %v9749, %v9768
        %v9865 = vadd.f32 %v9590, %v9760
        %v9866 = vadd.f32 %v9592, %v9764
        %v9867 = vadd.f32 %v9752, %v9768
        %v9868 = vmax.f32 %v9772, 0.0
        %v9869 = vmax.f32 %v9773, 0.0
        %v9870 = vmax.f32 %v9775, 0.0
        %v9871 = vmax.f32 %v9776, 0.0
        %v9872 = vmax.f32 %v9778, 0.0
        %v9873 = vmax.f32 %v9779, 0.0
        %v9874 = vmax.f32 %v9781, 0.0
        %v9875 = vmax.f32 %v9782, 0.0
        %v9876 = vmax.f32 %v9784, 0.0
        %v9877 = vmax.f32 %v9785, 0.0
        %v9878 = vmax.f32 %v9787, 0.0
        %v9879 = vmax.f32 %v9788, 0.0
        %v9880 = vmax.f32 %v9790, 0.0
        %v9881 = vmax.f32 %v9791, 0.0
        %v9882 = vmax.f32 %v9793, 0.0
        %v9883 = vmax.f32 %v9794, 0.0
        %v9884 = vmax.f32 %v9796, 0.0
        %v9885 = vmax.f32 %v9797, 0.0
        %v9886 = vmax.f32 %v9799, 0.0
        %v9887 = vmax.f32 %v9800, 0.0
        %v9888 = vmax.f32 %v9802, 0.0
        %v9889 = vmax.f32 %v9803, 0.0
        %v9890 = vmax.f32 %v9805, 0.0
        %v9891 = vmax.f32 %v9806, 0.0
        %v9892 = vmax.f32 %v9808, 0.0
        %v9893 = vmax.f32 %v9809, 0.0
        %v9894 = vmax.f32 %v9811, 0.0
        %v9895 = vmax.f32 %v9812, 0.0
        %v9896 = vmax.f32 %v9814, 0.0
        %v9897 = vmax.f32 %v9815, 0.0
        %v9898 = vmax.f32 %v9817, 0.0
        %v9899 = vmax.f32 %v9818, 0.0
        %v9900 = vmax.f32 %v9820, 0.0
        %v9901 = vmax.f32 %v9821, 0.0
        %v9902 = vmax.f32 %v9823, 0.0
        %v9903 = vmax.f32 %v9824, 0.0
        %v9904 = vmax.f32 %v9826, 0.0
        %v9905 = vmax.f32 %v9827, 0.0
        %v9906 = vmax.f32 %v9829, 0.0
        %v9907 = vmax.f32 %v9830, 0.0
        %v9908 = vmax.f32 %v9832, 0.0
        %v9909 = vmax.f32 %v9833, 0.0
        %v9910 = vmax.f32 %v9835, 0.0
        %v9911 = vmax.f32 %v9836, 0.0
        %v9912 = vmax.f32 %v9838, 0.0
        %v9913 = vmax.f32 %v9839, 0.0
        %v9914 = vmax.f32 %v9841, 0.0
        %v9915 = vmax.f32 %v9842, 0.0
        %v9916 = vmax.f32 %v9844, 0.0
        %v9917 = vmax.f32 %v9845, 0.0
        %v9918 = vmax.f32 %v9847, 0.0
        %v9919 = vmax.f32 %v9848, 0.0
        %v9920 = vmax.f32 %v9850, 0.0
        %v9921 = vmax.f32 %v9851, 0.0
        %v9922 = vmax.f32 %v9853, 0.0
        %v9923 = vmax.f32 %v9854, 0.0
        %v9924 = vmax.f32 %v9856, 0.0
        %v9925 = vmax.f32 %v9857, 0.0
        %v9926 = vmax.f32 %v9859, 0.0
        %v9927 = vmax.f32 %v9860, 0.0
        %v9928 = vmax.f32 %v9862, 0.0
        %v9929 = vmax.f32 %v9863, 0.0
        %v9930 = vmax.f32 %v9865, 0.0
        %v9931 = vmax.f32 %v9866, 0.0
        %v9932 = vmax.f32 %v9774, 0.0
        %v9933 = vmax.f32 %v9777, 0.0
        %v9934 = vmax.f32 %v9780, 0.0
        %v9935 = vmax.f32 %v9783, 0.0
        %v9936 = vmax.f32 %v9786, 0.0
        %v9937 = vmax.f32 %v9789, 0.0
        %v9938 = vmax.f32 %v9792, 0.0
        %v9939 = vmax.f32 %v9795, 0.0
        %v9940 = vmax.f32 %v9798, 0.0
        %v9941 = vmax.f32 %v9801, 0.0
        %v9942 = vmax.f32 %v9804, 0.0
        %v9943 = vmax.f32 %v9807, 0.0
        %v9944 = vmax.f32 %v9810, 0.0
        %v9945 = vmax.f32 %v9813, 0.0
        %v9946 = vmax.f32 %v9816, 0.0
        %v9947 = vmax.f32 %v9819, 0.0
        %v9948 = vmax.f32 %v9822, 0.0
        %v9949 = vmax.f32 %v9825, 0.0
        %v9950 = vmax.f32 %v9828, 0.0
        %v9951 = vmax.f32 %v9831, 0.0
        %v9952 = vmax.f32 %v9834, 0.0
        %v9953 = vmax.f32 %v9837, 0.0
        %v9954 = vmax.f32 %v9840, 0.0
        %v9955 = vmax.f32 %v9843, 0.0
        %v9956 = vmax.f32 %v9846, 0.0
        %v9957 = vmax.f32 %v9849, 0.0
        %v9958 = vmax.f32 %v9852, 0.0
        %v9959 = vmax.f32 %v9855, 0.0
        %v9960 = vmax.f32 %v9858, 0.0
        %v9961 = vmax.f32 %v9861, 0.0
        %v9962 = vmax.f32 %v9864, 0.0
        %v9963 = vmax.f32 %v9867, 0.0
        %v9964 = vpack.c.bf16 %v9933, %v9932
        %v9965 = vpack.c.bf16 %v9935, %v9934
        %v9966 = vpack.c.bf16 %v9937, %v9936
        %v9967 = vpack.c.bf16 %v9939, %v9938
        %v9968 = vpack.c.bf16 %v9941, %v9940
        %v9969 = vpack.c.bf16 %v9943, %v9942
        %v9970 = vpack.c.bf16 %v9945, %v9944
        %v9971 = vpack.c.bf16 %v9947, %v9946
        %v9972 = vpack.c.bf16 %v9949, %v9948
        %v9973 = vpack.c.bf16 %v9951, %v9950
        %v9974 = vpack.c.bf16 %v9953, %v9952
        %v9975 = vpack.c.bf16 %v9955, %v9954
        %v9976 = vpack.c.bf16 %v9957, %v9956
        %v9977 = vpack.c.bf16 %v9959, %v9958
        %v9978 = vpack.c.bf16 %v9961, %v9960
        %v9979 = vpack.c.bf16 %v9963, %v9962
        %v9980 = vld [vmem:[#allocation17] sm:$0xff]
        %v9981 = vld [vmem:[#allocation17 + $0x8] sm:$0xff]
        %v9982 = vld [vmem:[#allocation17 + $0x10] sm:$0xff]
        %v9983 = vld [vmem:[#allocation17 + $0x18] sm:$0xff]
        %v9984 = vld [vmem:[#allocation17 + $0x20] sm:$0xff]
        %v9985 = vld [vmem:[#allocation17 + $0x28] sm:$0xff]
        %v9986 = vld [vmem:[#allocation17 + $0x30] sm:$0xff]
        %v9987 = vld [vmem:[#allocation17 + $0x38] sm:$0xff]
        %v9988 = vld [vmem:[#allocation17 + $0x40] sm:$0xff]
        %v9989 = vld [vmem:[#allocation17 + $0x48] sm:$0xff]
        %v9990 = vld [vmem:[#allocation17 + $0x50] sm:$0xff]
        %v9991 = vld [vmem:[#allocation17 + $0x58] sm:$0xff]
        %v9992 = vld [vmem:[#allocation17 + $0x60] sm:$0xff]
        %v9993 = vld [vmem:[#allocation17 + $0x68] sm:$0xff]
        %v9994 = vld [vmem:[#allocation17 + $0x70] sm:$0xff]
        %v9995 = vld [vmem:[#allocation17 + $0x78] sm:$0xff]
        %v9996 = vld [vmem:[#allocation19] sm:$0x3]
        %v9998 = vlaneseq
        %v9999 = vshrl.u32 %v9998, 7
        %v10000 = vsub.s32 0, %v9999
        %v10001 = vrot.slane %v9996, %v10000
        %v10002 = vlaneseq
        %v10003 = vshrl.u32 %v10002, 7
        %v10004 = vsub.s32 1, %v10003
        %v10005 = vrot.slane %v9996, %v10004
        %v10024 = vunpack.c.l.b16 %v9980
        %v10025 = vunpack.c.h.b16 %v9980
        %v10026 = vunpack.c.l.b16 %v9981
        %v10027 = vunpack.c.h.b16 %v9981
        %v10028 = vunpack.c.l.b16 %v9982
        %v10029 = vunpack.c.h.b16 %v9982
        %v10030 = vunpack.c.l.b16 %v9983
        %v10031 = vunpack.c.h.b16 %v9983
        %v10032 = vunpack.c.l.b16 %v9984
        %v10033 = vunpack.c.h.b16 %v9984
        %v10034 = vunpack.c.l.b16 %v9985
        %v10035 = vunpack.c.h.b16 %v9985
        %v10036 = vunpack.c.l.b16 %v9986
        %v10037 = vunpack.c.h.b16 %v9986
        %v10038 = vunpack.c.l.b16 %v9987
        %v10039 = vunpack.c.h.b16 %v9987
        %v10040 = vunpack.c.l.b16 %v9988
        %v10041 = vunpack.c.h.b16 %v9988
        %v10042 = vunpack.c.l.b16 %v9989
        %v10043 = vunpack.c.h.b16 %v9989
        %v10044 = vunpack.c.l.b16 %v9990
        %v10045 = vunpack.c.h.b16 %v9990
        %v10046 = vunpack.c.l.b16 %v9991
        %v10047 = vunpack.c.h.b16 %v9991
        %v10048 = vunpack.c.l.b16 %v9992
        %v10049 = vunpack.c.h.b16 %v9992
        %v10050 = vunpack.c.l.b16 %v9993
        %v10051 = vunpack.c.h.b16 %v9993
        %v10052 = vunpack.c.l.b16 %v9994
        %v10053 = vunpack.c.h.b16 %v9994
        %v10054 = vunpack.c.l.b16 %v9995
        %v10055 = vunpack.c.h.b16 %v9995
        %v10056 = vpack.c.b16 %v10026, %v10024
        %v10057 = vpack.c.b16 %v10027, %v10025
        %v10058 = vpack.c.b16 %v10030, %v10028
        %v10059 = vpack.c.b16 %v10031, %v10029
        %v10060 = vpack.c.b16 %v10034, %v10032
        %v10061 = vpack.c.b16 %v10035, %v10033
        %v10062 = vpack.c.b16 %v10038, %v10036
        %v10063 = vpack.c.b16 %v10039, %v10037
        %v10064 = vpack.c.b16 %v10042, %v10040
        %v10065 = vpack.c.b16 %v10043, %v10041
        %v10066 = vpack.c.b16 %v10046, %v10044
        %v10067 = vpack.c.b16 %v10047, %v10045
        %v10068 = vpack.c.b16 %v10050, %v10048
        %v10069 = vpack.c.b16 %v10051, %v10049
        %v10070 = vpack.c.b16 %v10054, %v10052
        %v10071 = vpack.c.b16 %v10055, %v10053
        %10088 = vmatprep.subr.bf16.mxu0 %v10057
        %10089 = vmatpush1.bf16.msra.mxu0 %v10056
        %10090 = vmatprep.subr.bf16.mxu0 %v10059
        %10091 = vmatpush1.bf16.msra.mxu0 %v10058
        %10092 = vmatprep.subr.bf16.mxu0 %v10061
        %10093 = vmatpush1.bf16.msra.mxu0 %v10060
        %10094 = vmatprep.subr.bf16.mxu0 %v10063
        %10095 = vmatpush1.bf16.msra.mxu0 %v10062
        %10096 = vmatprep.subr.bf16.mxu0 %v10065
        %10097 = vmatpush1.bf16.msra.mxu0 %v10064
        %10098 = vmatprep.subr.bf16.mxu0 %v10067
        %10099 = vmatpush1.bf16.msra.mxu0 %v10066
        %10100 = vmatprep.subr.bf16.mxu0 %v10069
        %10101 = vmatpush1.bf16.msra.mxu0 %v10068
        %10102 = vmatprep.subr.bf16.mxu0 %v10071
        %10103 = vmatpush1.bf16.msra.mxu0 %v10070
        %10104 = vmatprep.subr.bf16.mxu0 0
        %10105 = vmatpush1.bf16.msra.mxu0 0
        %10106 = vmatprep.subr.bf16.mxu0 0
        %10107 = vmatpush1.bf16.msra.mxu0 0
        %10108 = vmatprep.subr.bf16.mxu0 0
        %10109 = vmatpush1.bf16.msra.mxu0 0
        %10110 = vmatprep.subr.bf16.mxu0 0
        %10111 = vmatpush1.bf16.msra.mxu0 0
        %10112 = vmatprep.subr.bf16.mxu0 0
        %10113 = vmatpush1.bf16.msra.mxu0 0
        %10114 = vmatprep.subr.bf16.mxu0 0
        %10115 = vmatpush1.bf16.msra.mxu0 0
        %10116 = vmatprep.subr.bf16.mxu0 0
        %10117 = vmatpush1.bf16.msra.mxu0 0
        %10118 = vmatprep.subr.bf16.mxu0 0
        %10119 = vmatpush1.bf16.msra.mxu0 0
        %10120 = vmatprep.mubr.bf16.mxu0 0
        %10121 = vmatmul.mubr.bf16.gmra.mrb[0].mxu0 %v9964
        %v10122 = vpop.f32.mrb[0].mxu0
        %v10123 = vadd.f32 %v10001, %v10122
        %v10124 = vpop.f32.mrb[0].mxu0
        %v10125 = vadd.f32 %v10005, %v10124
        %v10126 = vpop.f32.mrb[0].mxu0
        %v10127 = vadd.f32 %v10001, %v10126
        %v10128 = vpop.f32.mrb[0].mxu0
        %v10129 = vadd.f32 %v10005, %v10128
        %10130 = vmatprep.mubr.bf16.mxu0 0
        %10131 = vmatmul.mubr.bf16.gmra.mrb[0].mxu0 %v9965
        %v10132 = vpop.f32.mrb[0].mxu0
        %v10133 = vadd.f32 %v10001, %v10132
        %v10134 = vpop.f32.mrb[0].mxu0
        %v10135 = vadd.f32 %v10005, %v10134
        %v10136 = vpop.f32.mrb[0].mxu0
        %v10137 = vadd.f32 %v10001, %v10136
        %v10138 = vpop.f32.mrb[0].mxu0
        %v10139 = vadd.f32 %v10005, %v10138
        %10140 = vmatprep.mubr.bf16.mxu0 0
        %10141 = vmatmul.mubr.bf16.gmra.mrb[0].mxu0 %v9966
        %v10142 = vpop.f32.mrb[0].mxu0
        %v10143 = vadd.f32 %v10001, %v10142
        %v10144 = vpop.f32.mrb[0].mxu0
        %v10145 = vadd.f32 %v10005, %v10144
        %v10146 = vpop.f32.mrb[0].mxu0
        %v10147 = vadd.f32 %v10001, %v10146
        %v10148 = vpop.f32.mrb[0].mxu0
        %v10149 = vadd.f32 %v10005, %v10148
        %10150 = vmatprep.mubr.bf16.mxu0 0
        %10151 = vmatmul.mubr.bf16.gmra.mrb[0].mxu0 %v9967
        %v10152 = vpop.f32.mrb[0].mxu0
        %v10153 = vadd.f32 %v10001, %v10152
        %v10154 = vpop.f32.mrb[0].mxu0
        %v10155 = vadd.f32 %v10005, %v10154
        %v10156 = vpop.f32.mrb[0].mxu0
        %v10157 = vadd.f32 %v10001, %v10156
        %v10158 = vpop.f32.mrb[0].mxu0
        %v10159 = vadd.f32 %v10005, %v10158
        %10160 = vmatprep.mubr.bf16.mxu0 0
        %10161 = vmatmul.mubr.bf16.gmra.mrb[0].mxu0 %v9968
        %v10162 = vpop.f32.mrb[0].mxu0
        %v10163 = vadd.f32 %v10001, %v10162
        %v10164 = vpop.f32.mrb[0].mxu0
        %v10165 = vadd.f32 %v10005, %v10164
        %v10166 = vpop.f32.mrb[0].mxu0
        %v10167 = vadd.f32 %v10001, %v10166
        %v10168 = vpop.f32.mrb[0].mxu0
        %v10169 = vadd.f32 %v10005, %v10168
        %10170 = vmatprep.mubr.bf16.mxu0 0
        %10171 = vmatmul.mubr.bf16.gmra.mrb[0].mxu0 %v9969
        %v10172 = vpop.f32.mrb[0].mxu0
        %v10173 = vadd.f32 %v10001, %v10172
        %v10174 = vpop.f32.mrb[0].mxu0
        %v10175 = vadd.f32 %v10005, %v10174
        %v10176 = vpop.f32.mrb[0].mxu0
        %v10177 = vadd.f32 %v10001, %v10176
        %v10178 = vpop.f32.mrb[0].mxu0
        %v10179 = vadd.f32 %v10005, %v10178
        %10180 = vmatprep.mubr.bf16.mxu0 0
        %10181 = vmatmul.mubr.bf16.gmra.mrb[0].mxu0 %v9970
        %v10182 = vpop.f32.mrb[0].mxu0
        %v10183 = vadd.f32 %v10001, %v10182
        %v10184 = vpop.f32.mrb[0].mxu0
        %v10185 = vadd.f32 %v10005, %v10184
        %v10186 = vpop.f32.mrb[0].mxu0
        %v10187 = vadd.f32 %v10001, %v10186
        %v10188 = vpop.f32.mrb[0].mxu0
        %v10189 = vadd.f32 %v10005, %v10188
        %10190 = vmatprep.mubr.bf16.mxu0 0
        %10191 = vmatmul.mubr.bf16.gmra.mrb[0].mxu0 %v9971
        %v10192 = vpop.f32.mrb[0].mxu0
        %v10193 = vadd.f32 %v10001, %v10192
        %v10194 = vpop.f32.mrb[0].mxu0
        %v10195 = vadd.f32 %v10005, %v10194
        %v10196 = vpop.f32.mrb[0].mxu0
        %v10197 = vadd.f32 %v10001, %v10196
        %v10198 = vpop.f32.mrb[0].mxu0
        %v10199 = vadd.f32 %v10005, %v10198
        %10200 = vmatprep.mubr.bf16.mxu0 0
        %10201 = vmatmul.mubr.bf16.gmra.mrb[0].mxu0 %v9972
        %v10202 = vpop.f32.mrb[0].mxu0
        %v10203 = vadd.f32 %v10001, %v10202
        %v10204 = vpop.f32.mrb[0].mxu0
        %v10205 = vadd.f32 %v10005, %v10204
        %v10206 = vpop.f32.mrb[0].mxu0
        %v10207 = vadd.f32 %v10001, %v10206
        %v10208 = vpop.f32.mrb[0].mxu0
        %v10209 = vadd.f32 %v10005, %v10208
        %10210 = vmatprep.mubr.bf16.mxu0 0
        %10211 = vmatmul.mubr.bf16.gmra.mrb[0].mxu0 %v9973
        %v10212 = vpop.f32.mrb[0].mxu0
        %v10213 = vadd.f32 %v10001, %v10212
        %v10214 = vpop.f32.mrb[0].mxu0
        %v10215 = vadd.f32 %v10005, %v10214
        %v10216 = vpop.f32.mrb[0].mxu0
        %v10217 = vadd.f32 %v10001, %v10216
        %v10218 = vpop.f32.mrb[0].mxu0
        %v10219 = vadd.f32 %v10005, %v10218
        %10220 = vmatprep.mubr.bf16.mxu0 0
        %10221 = vmatmul.mubr.bf16.gmra.mrb[0].mxu0 %v9974
        %v10222 = vpop.f32.mrb[0].mxu0
        %v10223 = vadd.f32 %v10001, %v10222
        %v10224 = vpop.f32.mrb[0].mxu0
        %v10225 = vadd.f32 %v10005, %v10224
        %v10226 = vpop.f32.mrb[0].mxu0
        %v10227 = vadd.f32 %v10001, %v10226
        %v10228 = vpop.f32.mrb[0].mxu0
        %v10229 = vadd.f32 %v10005, %v10228
        %10230 = vmatprep.mubr.bf16.mxu0 0
        %10231 = vmatmul.mubr.bf16.gmra.mrb[0].mxu0 %v9975
        %v10232 = vpop.f32.mrb[0].mxu0
        %v10233 = vadd.f32 %v10001, %v10232
        %v10234 = vpop.f32.mrb[0].mxu0
        %v10235 = vadd.f32 %v10005, %v10234
        %v10236 = vpop.f32.mrb[0].mxu0
        %v10237 = vadd.f32 %v10001, %v10236
        %v10238 = vpop.f32.mrb[0].mxu0
        %v10239 = vadd.f32 %v10005, %v10238
        %10240 = vmatprep.mubr.bf16.mxu0 0
        %10241 = vmatmul.mubr.bf16.gmra.mrb[0].mxu0 %v9976
        %v10242 = vpop.f32.mrb[0].mxu0
        %v10243 = vadd.f32 %v10001, %v10242
        %v10244 = vpop.f32.mrb[0].mxu0
        %v10245 = vadd.f32 %v10005, %v10244
        %v10246 = vpop.f32.mrb[0].mxu0
        %v10247 = vadd.f32 %v10001, %v10246
        %v10248 = vpop.f32.mrb[0].mxu0
        %v10249 = vadd.f32 %v10005, %v10248
        %10250 = vmatprep.mubr.bf16.mxu0 0
        %10251 = vmatmul.mubr.bf16.gmra.mrb[0].mxu0 %v9977
        %v10252 = vpop.f32.mrb[0].mxu0
        %v10253 = vadd.f32 %v10001, %v10252
        %v10254 = vpop.f32.mrb[0].mxu0
        %v10255 = vadd.f32 %v10005, %v10254
        %v10256 = vpop.f32.mrb[0].mxu0
        %v10257 = vadd.f32 %v10001, %v10256
        %v10258 = vpop.f32.mrb[0].mxu0
        %v10259 = vadd.f32 %v10005, %v10258
        %10260 = vmatprep.mubr.bf16.mxu0 0
        %10261 = vmatmul.mubr.bf16.gmra.mrb[0].mxu0 %v9978
        %v10262 = vpop.f32.mrb[0].mxu0
        %v10263 = vadd.f32 %v10001, %v10262
        %v10264 = vpop.f32.mrb[0].mxu0
        %v10265 = vadd.f32 %v10005, %v10264
        %v10266 = vpop.f32.mrb[0].mxu0
        %v10267 = vadd.f32 %v10001, %v10266
        %v10268 = vpop.f32.mrb[0].mxu0
        %v10269 = vadd.f32 %v10005, %v10268
        %10270 = vmatprep.mubr.bf16.mxu0 0
        %10271 = vmatmul.mubr.bf16.gmra.mrb[0].mxu0 %v9979
        %v10272 = vpop.f32.mrb[0].mxu0
        %v10273 = vadd.f32 %v10001, %v10272
        %v10274 = vpop.f32.mrb[0].mxu0
        %v10275 = vadd.f32 %v10005, %v10274
        %v10276 = vpop.f32.mrb[0].mxu0
        %v10277 = vadd.f32 %v10001, %v10276
        %v10278 = vpop.f32.mrb[0].mxu0
        %v10279 = vadd.f32 %v10005, %v10278
        %10280 = vdwg.mxu0
        %v10281 = vmax.f32 %v10123, 0.0
        %v10282 = vmax.f32 %v10125, 0.0
        %v10283 = vmax.f32 %v10127, 0.0
        %v10284 = vmax.f32 %v10129, 0.0
        %v10285 = vmax.f32 %v10133, 0.0
        %v10286 = vmax.f32 %v10135, 0.0
        %v10287 = vmax.f32 %v10137, 0.0
        %v10288 = vmax.f32 %v10139, 0.0
        %v10289 = vmax.f32 %v10143, 0.0
        %v10290 = vmax.f32 %v10145, 0.0
        %v10291 = vmax.f32 %v10147, 0.0
        %v10292 = vmax.f32 %v10149, 0.0
        %v10293 = vmax.f32 %v10153, 0.0
        %v10294 = vmax.f32 %v10155, 0.0
        %v10295 = vmax.f32 %v10157, 0.0
        %v10296 = vmax.f32 %v10159, 0.0
        %v10297 = vmax.f32 %v10163, 0.0
        %v10298 = vmax.f32 %v10165, 0.0
        %v10299 = vmax.f32 %v10167, 0.0
        %v10300 = vmax.f32 %v10169, 0.0
        %v10301 = vmax.f32 %v10173, 0.0
        %v10302 = vmax.f32 %v10175, 0.0
        %v10303 = vmax.f32 %v10177, 0.0
        %v10304 = vmax.f32 %v10179, 0.0
        %v10305 = vmax.f32 %v10183, 0.0
        %v10306 = vmax.f32 %v10185, 0.0
        %v10307 = vmax.f32 %v10187, 0.0
        %v10308 = vmax.f32 %v10189, 0.0
        %v10309 = vmax.f32 %v10193, 0.0
        %v10310 = vmax.f32 %v10195, 0.0
        %v10311 = vmax.f32 %v10197, 0.0
        %v10312 = vmax.f32 %v10199, 0.0
        %v10313 = vmax.f32 %v10203, 0.0
        %v10314 = vmax.f32 %v10205, 0.0
        %v10315 = vmax.f32 %v10207, 0.0
        %v10316 = vmax.f32 %v10209, 0.0
        %v10317 = vmax.f32 %v10213, 0.0
        %v10318 = vmax.f32 %v10215, 0.0
        %v10319 = vmax.f32 %v10217, 0.0
        %v10320 = vmax.f32 %v10219, 0.0
        %v10321 = vmax.f32 %v10223, 0.0
        %v10322 = vmax.f32 %v10225, 0.0
        %v10323 = vmax.f32 %v10227, 0.0
        %v10324 = vmax.f32 %v10229, 0.0
        %v10325 = vmax.f32 %v10233, 0.0
        %v10326 = vmax.f32 %v10235, 0.0
        %v10327 = vmax.f32 %v10237, 0.0
        %v10328 = vmax.f32 %v10239, 0.0
        %v10329 = vmax.f32 %v10243, 0.0
        %v10330 = vmax.f32 %v10245, 0.0
        %v10331 = vmax.f32 %v10247, 0.0
        %v10332 = vmax.f32 %v10249, 0.0
        %v10333 = vmax.f32 %v10253, 0.0
        %v10334 = vmax.f32 %v10255, 0.0
        %v10335 = vmax.f32 %v10257, 0.0
        %v10336 = vmax.f32 %v10259, 0.0
        %v10337 = vmax.f32 %v10263, 0.0
        %v10338 = vmax.f32 %v10265, 0.0
        %v10339 = vmax.f32 %v10267, 0.0
        %v10340 = vmax.f32 %v10269, 0.0
        %v10341 = vmax.f32 %v10273, 0.0
        %v10342 = vmax.f32 %v10275, 0.0
        %v10343 = vmax.f32 %v10277, 0.0
        %v10344 = vmax.f32 %v10279, 0.0
        %v10345 = vadd.f32 %v10281, %v9868
        %v10346 = vadd.f32 %v10282, %v9869
        %v10347 = vadd.f32 %v10283, %v9870
        %v10348 = vadd.f32 %v10284, %v9871
        %v10349 = vadd.f32 %v10285, %v9872
        %v10350 = vadd.f32 %v10286, %v9873
        %v10351 = vadd.f32 %v10287, %v9874
        %v10352 = vadd.f32 %v10288, %v9875
        %v10353 = vadd.f32 %v10289, %v9876
        %v10354 = vadd.f32 %v10290, %v9877
        %v10355 = vadd.f32 %v10291, %v9878
        %v10356 = vadd.f32 %v10292, %v9879
        %v10357 = vadd.f32 %v10293, %v9880
        %v10358 = vadd.f32 %v10294, %v9881
        %v10359 = vadd.f32 %v10295, %v9882
        %v10360 = vadd.f32 %v10296, %v9883
        %v10361 = vadd.f32 %v10297, %v9884
        %v10362 = vadd.f32 %v10298, %v9885
        %v10363 = vadd.f32 %v10299, %v9886
        %v10364 = vadd.f32 %v10300, %v9887
        %v10365 = vadd.f32 %v10301, %v9888
        %v10366 = vadd.f32 %v10302, %v9889
        %v10367 = vadd.f32 %v10303, %v9890
        %v10368 = vadd.f32 %v10304, %v9891
        %v10369 = vadd.f32 %v10305, %v9892
        %v10370 = vadd.f32 %v10306, %v9893
        %v10371 = vadd.f32 %v10307, %v9894
        %v10372 = vadd.f32 %v10308, %v9895
        %v10373 = vadd.f32 %v10309, %v9896
        %v10374 = vadd.f32 %v10310, %v9897
        %v10375 = vadd.f32 %v10311, %v9898
        %v10376 = vadd.f32 %v10312, %v9899
        %v10377 = vadd.f32 %v10313, %v9900
        %v10378 = vadd.f32 %v10314, %v9901
        %v10379 = vadd.f32 %v10315, %v9902
        %v10380 = vadd.f32 %v10316, %v9903
        %v10381 = vadd.f32 %v10317, %v9904
        %v10382 = vadd.f32 %v10318, %v9905
        %v10383 = vadd.f32 %v10319, %v9906
        %v10384 = vadd.f32 %v10320, %v9907
        %v10385 = vadd.f32 %v10321, %v9908
        %v10386 = vadd.f32 %v10322, %v9909
        %v10387 = vadd.f32 %v10323, %v9910
        %v10388 = vadd.f32 %v10324, %v9911
        %v10389 = vadd.f32 %v10325, %v9912
        %v10390 = vadd.f32 %v10326, %v9913
        %v10391 = vadd.f32 %v10327, %v9914
        %v10392 = vadd.f32 %v10328, %v9915
        %v10393 = vadd.f32 %v10329, %v9916
        %v10394 = vadd.f32 %v10330, %v9917
        %v10395 = vadd.f32 %v10331, %v9918
        %v10396 = vadd.f32 %v10332, %v9919
        %v10397 = vadd.f32 %v10333, %v9920
        %v10398 = vadd.f32 %v10334, %v9921
        %v10399 = vadd.f32 %v10335, %v9922
        %v10400 = vadd.f32 %v10336, %v9923
        %v10401 = vadd.f32 %v10337, %v9924
        %v10402 = vadd.f32 %v10338, %v9925
        %v10403 = vadd.f32 %v10339, %v9926
        %v10404 = vadd.f32 %v10340, %v9927
        %v10405 = vadd.f32 %v10341, %v9928
        %v10406 = vadd.f32 %v10342, %v9929
        %v10407 = vadd.f32 %v10343, %v9930
        %v10408 = vadd.f32 %v10344, %v9931
        %v10409 = vpack.c.bf16 %v10347, %v10345
        %v10410 = vpack.c.bf16 %v10348, %v10346
        %v10411 = vpack.c.bf16 %v10351, %v10349
        %v10412 = vpack.c.bf16 %v10352, %v10350
        %v10413 = vpack.c.bf16 %v10355, %v10353
        %v10414 = vpack.c.bf16 %v10356, %v10354
        %v10415 = vpack.c.bf16 %v10359, %v10357
        %v10416 = vpack.c.bf16 %v10360, %v10358
        %v10417 = vpack.c.bf16 %v10363, %v10361
        %v10418 = vpack.c.bf16 %v10364, %v10362
        %v10419 = vpack.c.bf16 %v10367, %v10365
        %v10420 = vpack.c.bf16 %v10368, %v10366
        %v10421 = vpack.c.bf16 %v10371, %v10369
        %v10422 = vpack.c.bf16 %v10372, %v10370
        %v10423 = vpack.c.bf16 %v10375, %v10373
        %v10424 = vpack.c.bf16 %v10376, %v10374
        %v10425 = vpack.c.bf16 %v10379, %v10377
        %v10426 = vpack.c.bf16 %v10380, %v10378
        %v10427 = vpack.c.bf16 %v10383, %v10381
        %v10428 = vpack.c.bf16 %v10384, %v10382
        %v10429 = vpack.c.bf16 %v10387, %v10385
        %v10430 = vpack.c.bf16 %v10388, %v10386
        %v10431 = vpack.c.bf16 %v10391, %v10389
        %v10432 = vpack.c.bf16 %v10392, %v10390
        %v10433 = vpack.c.bf16 %v10395, %v10393
        %v10434 = vpack.c.bf16 %v10396, %v10394
        %v10435 = vpack.c.bf16 %v10399, %v10397
        %v10436 = vpack.c.bf16 %v10400, %v10398
        %v10437 = vpack.c.bf16 %v10403, %v10401
        %v10438 = vpack.c.bf16 %v10404, %v10402
        %v10439 = vpack.c.bf16 %v10407, %v10405
        %v10440 = vpack.c.bf16 %v10408, %v10406
        %v10441 = vld [vmem:[#allocation20] sm:$0xf]
        %v10442 = vld [vmem:[#allocation20 + $0x4] sm:$0xf]
        %v10443 = vld [vmem:[#allocation20 + $0x8] sm:$0xf]
        %v10444 = vld [vmem:[#allocation20 + $0xc] sm:$0xf]
        %v10445 = vld [vmem:[#allocation20 + $0x10] sm:$0xf]
        %v10446 = vld [vmem:[#allocation20 + $0x14] sm:$0xf]
        %v10447 = vld [vmem:[#allocation20 + $0x18] sm:$0xf]
        %v10448 = vld [vmem:[#allocation20 + $0x1c] sm:$0xf]
        %v10449 = vld [vmem:[#allocation20 + $0x20] sm:$0xf]
        %v10450 = vld [vmem:[#allocation20 + $0x24] sm:$0xf]
        %v10451 = vld [vmem:[#allocation20 + $0x28] sm:$0xf]
        %v10452 = vld [vmem:[#allocation20 + $0x2c] sm:$0xf]
        %v10453 = vld [vmem:[#allocation20 + $0x30] sm:$0xf]
        %v10454 = vld [vmem:[#allocation20 + $0x34] sm:$0xf]
        %v10455 = vld [vmem:[#allocation20 + $0x38] sm:$0xf]
        %v10456 = vld [vmem:[#allocation20 + $0x3c] sm:$0xf]
        %v10457 = vld [vmem:[#allocation20 + $0x40] sm:$0xf]
        %v10458 = vld [vmem:[#allocation20 + $0x44] sm:$0xf]
        %v10459 = vld [vmem:[#allocation20 + $0x48] sm:$0xf]
        %v10460 = vld [vmem:[#allocation20 + $0x4c] sm:$0xf]
        %v10461 = vld [vmem:[#allocation20 + $0x50] sm:$0xf]
        %v10462 = vld [vmem:[#allocation20 + $0x54] sm:$0xf]
        %v10463 = vld [vmem:[#allocation20 + $0x58] sm:$0xf]
        %v10464 = vld [vmem:[#allocation20 + $0x5c] sm:$0xf]
        %v10465 = vld [vmem:[#allocation20 + $0x60] sm:$0xf]
        %v10466 = vld [vmem:[#allocation20 + $0x64] sm:$0xf]
        %v10467 = vld [vmem:[#allocation20 + $0x68] sm:$0xf]
        %v10468 = vld [vmem:[#allocation20 + $0x6c] sm:$0xf]
        %v10469 = vld [vmem:[#allocation20 + $0x70] sm:$0xf]
        %v10470 = vld [vmem:[#allocation20 + $0x74] sm:$0xf]
        %v10471 = vld [vmem:[#allocation20 + $0x78] sm:$0xf]
        %v10472 = vld [vmem:[#allocation20 + $0x7c] sm:$0xf]
        %v10473 = vld [vmem:[#allocation22] sm:$0x1]
        %v10475 = vlaneseq
        %v10476 = vshrl.u32 %v10475, 7
        %v10477 = vsub.s32 0, %v10476
        %v10478 = vrot.slane %v10473, %v10477
        %v10512 = vunpack.c.l.b16 %v10441
        %v10513 = vunpack.c.l.b16 %v10442
        %v10514 = vunpack.c.l.b16 %v10443
        %v10515 = vunpack.c.l.b16 %v10444
        %v10516 = vunpack.c.l.b16 %v10445
        %v10517 = vunpack.c.l.b16 %v10446
        %v10518 = vunpack.c.l.b16 %v10447
        %v10519 = vunpack.c.l.b16 %v10448
        %v10520 = vunpack.c.l.b16 %v10449
        %v10521 = vunpack.c.l.b16 %v10450
        %v10522 = vunpack.c.l.b16 %v10451
        %v10523 = vunpack.c.l.b16 %v10452
        %v10524 = vunpack.c.l.b16 %v10453
        %v10525 = vunpack.c.l.b16 %v10454
        %v10526 = vunpack.c.l.b16 %v10455
        %v10527 = vunpack.c.l.b16 %v10456
        %v10528 = vunpack.c.l.b16 %v10457
        %v10529 = vunpack.c.l.b16 %v10458
        %v10530 = vunpack.c.l.b16 %v10459
        %v10531 = vunpack.c.l.b16 %v10460
        %v10532 = vunpack.c.l.b16 %v10461
        %v10533 = vunpack.c.l.b16 %v10462
        %v10534 = vunpack.c.l.b16 %v10463
        %v10535 = vunpack.c.l.b16 %v10464
        %v10536 = vunpack.c.l.b16 %v10465
        %v10537 = vunpack.c.l.b16 %v10466
        %v10538 = vunpack.c.l.b16 %v10467
        %v10539 = vunpack.c.l.b16 %v10468
        %v10540 = vunpack.c.l.b16 %v10469
        %v10541 = vunpack.c.l.b16 %v10470
        %v10542 = vunpack.c.l.b16 %v10471
        %v10543 = vunpack.c.l.b16 %v10472
        %v10544 = vpack.c.b16 %v10513, %v10512
        %v10545 = vpack.c.b16 %v10515, %v10514
        %v10546 = vpack.c.b16 %v10517, %v10516
        %v10547 = vpack.c.b16 %v10519, %v10518
        %v10548 = vpack.c.b16 %v10521, %v10520
        %v10549 = vpack.c.b16 %v10523, %v10522
        %v10550 = vpack.c.b16 %v10525, %v10524
        %v10551 = vpack.c.b16 %v10527, %v10526
        %v10552 = vpack.c.b16 %v10529, %v10528
        %v10553 = vpack.c.b16 %v10531, %v10530
        %v10554 = vpack.c.b16 %v10533, %v10532
        %v10555 = vpack.c.b16 %v10535, %v10534
        %v10556 = vpack.c.b16 %v10537, %v10536
        %v10557 = vpack.c.b16 %v10539, %v10538
        %v10558 = vpack.c.b16 %v10541, %v10540
        %v10559 = vpack.c.b16 %v10543, %v10542
        %10576 = vmatprep.subr.bf16.mxu0 0
        %10577 = vmatpush1.bf16.msra.mxu0 %v10544
        %10578 = vmatprep.subr.bf16.mxu0 0
        %10579 = vmatpush1.bf16.msra.mxu0 %v10545
        %10580 = vmatprep.subr.bf16.mxu0 0
        %10581 = vmatpush1.bf16.msra.mxu0 %v10546
        %10582 = vmatprep.subr.bf16.mxu0 0
        %10583 = vmatpush1.bf16.msra.mxu0 %v10547
        %10584 = vmatprep.subr.bf16.mxu0 0
        %10585 = vmatpush1.bf16.msra.mxu0 %v10548
        %10586 = vmatprep.subr.bf16.mxu0 0
        %10587 = vmatpush1.bf16.msra.mxu0 %v10549
        %10588 = vmatprep.subr.bf16.mxu0 0
        %10589 = vmatpush1.bf16.msra.mxu0 %v10550
        %10590 = vmatprep.subr.bf16.mxu0 0
        %10591 = vmatpush1.bf16.msra.mxu0 %v10551
        %10592 = vmatprep.subr.bf16.mxu0 0
        %10593 = vmatpush1.bf16.msra.mxu0 %v10552
        %10594 = vmatprep.subr.bf16.mxu0 0
        %10595 = vmatpush1.bf16.msra.mxu0 %v10553
        %10596 = vmatprep.subr.bf16.mxu0 0
        %10597 = vmatpush1.bf16.msra.mxu0 %v10554
        %10598 = vmatprep.subr.bf16.mxu0 0
        %10599 = vmatpush1.bf16.msra.mxu0 %v10555
        %10600 = vmatprep.subr.bf16.mxu0 0
        %10601 = vmatpush1.bf16.msra.mxu0 %v10556
        %10602 = vmatprep.subr.bf16.mxu0 0
        %10603 = vmatpush1.bf16.msra.mxu0 %v10557
        %10604 = vmatprep.subr.bf16.mxu0 0
        %10605 = vmatpush1.bf16.msra.mxu0 %v10558
        %10606 = vmatprep.subr.bf16.mxu0 0
        %10607 = vmatpush1.bf16.msra.mxu0 %v10559
        %10608 = vmatprep.mubr.bf16.mxu0 %v10410
        %10609 = vmatmul.mubr.bf16.gmra.mrb[0].mxu0 %v10409
        %v10610 = vpop.f32.mrb[0].mxu0
        %v10611 = vadd.f32 %v10478, %v10610
        %v10612 = vpop.f32.mrb[0].mxu0
        %v10613 = vpop.f32.mrb[0].mxu0
        %v10614 = vadd.f32 %v10478, %v10613
        %v10615 = vpop.f32.mrb[0].mxu0
        %10616 = vmatprep.mubr.bf16.mxu0 %v10412
        %10617 = vmatmul.mubr.bf16.gmra.mrb[0].mxu0 %v10411
        %v10618 = vpop.f32.mrb[0].mxu0
        %v10619 = vadd.f32 %v10478, %v10618
        %v10620 = vpop.f32.mrb[0].mxu0
        %v10621 = vpop.f32.mrb[0].mxu0
        %v10622 = vadd.f32 %v10478, %v10621
        %v10623 = vpop.f32.mrb[0].mxu0
        %10624 = vmatprep.mubr.bf16.mxu0 %v10414
        %10625 = vmatmul.mubr.bf16.gmra.mrb[0].mxu0 %v10413
        %v10626 = vpop.f32.mrb[0].mxu0
        %v10627 = vadd.f32 %v10478, %v10626
        %v10628 = vpop.f32.mrb[0].mxu0
        %v10629 = vpop.f32.mrb[0].mxu0
        %v10630 = vadd.f32 %v10478, %v10629
        %v10631 = vpop.f32.mrb[0].mxu0
        %10632 = vmatprep.mubr.bf16.mxu0 %v10416
        %10633 = vmatmul.mubr.bf16.gmra.mrb[0].mxu0 %v10415
        %v10634 = vpop.f32.mrb[0].mxu0
        %v10635 = vadd.f32 %v10478, %v10634
        %v10636 = vpop.f32.mrb[0].mxu0
        %v10637 = vpop.f32.mrb[0].mxu0
        %v10638 = vadd.f32 %v10478, %v10637
        %v10639 = vpop.f32.mrb[0].mxu0
        %10640 = vmatprep.mubr.bf16.mxu0 %v10418
        %10641 = vmatmul.mubr.bf16.gmra.mrb[0].mxu0 %v10417
        %v10642 = vpop.f32.mrb[0].mxu0
        %v10643 = vadd.f32 %v10478, %v10642
        %v10644 = vpop.f32.mrb[0].mxu0
        %v10645 = vpop.f32.mrb[0].mxu0
        %v10646 = vadd.f32 %v10478, %v10645
        %v10647 = vpop.f32.mrb[0].mxu0
        %10648 = vmatprep.mubr.bf16.mxu0 %v10420
        %10649 = vmatmul.mubr.bf16.gmra.mrb[0].mxu0 %v10419
        %v10650 = vpop.f32.mrb[0].mxu0
        %v10651 = vadd.f32 %v10478, %v10650
        %v10652 = vpop.f32.mrb[0].mxu0
        %v10653 = vpop.f32.mrb[0].mxu0
        %v10654 = vadd.f32 %v10478, %v10653
        %v10655 = vpop.f32.mrb[0].mxu0
        %10656 = vmatprep.mubr.bf16.mxu0 %v10422
        %10657 = vmatmul.mubr.bf16.gmra.mrb[0].mxu0 %v10421
        %v10658 = vpop.f32.mrb[0].mxu0
        %v10659 = vadd.f32 %v10478, %v10658
        %v10660 = vpop.f32.mrb[0].mxu0
        %v10661 = vpop.f32.mrb[0].mxu0
        %v10662 = vadd.f32 %v10478, %v10661
        %v10663 = vpop.f32.mrb[0].mxu0
        %10664 = vmatprep.mubr.bf16.mxu0 %v10424
        %10665 = vmatmul.mubr.bf16.gmra.mrb[0].mxu0 %v10423
        %v10666 = vpop.f32.mrb[0].mxu0
        %v10667 = vadd.f32 %v10478, %v10666
        %v10668 = vpop.f32.mrb[0].mxu0
        %v10669 = vpop.f32.mrb[0].mxu0
        %v10670 = vadd.f32 %v10478, %v10669
        %v10671 = vpop.f32.mrb[0].mxu0
        %10672 = vmatprep.mubr.bf16.mxu0 %v10426
        %10673 = vmatmul.mubr.bf16.gmra.mrb[0].mxu0 %v10425
        %v10674 = vpop.f32.mrb[0].mxu0
        %v10675 = vadd.f32 %v10478, %v10674
        %v10676 = vpop.f32.mrb[0].mxu0
        %v10677 = vpop.f32.mrb[0].mxu0
        %v10678 = vadd.f32 %v10478, %v10677
        %v10679 = vpop.f32.mrb[0].mxu0
        %10680 = vmatprep.mubr.bf16.mxu0 %v10428
        %10681 = vmatmul.mubr.bf16.gmra.mrb[0].mxu0 %v10427
        %v10682 = vpop.f32.mrb[0].mxu0
        %v10683 = vadd.f32 %v10478, %v10682
        %v10684 = vpop.f32.mrb[0].mxu0
        %v10685 = vpop.f32.mrb[0].mxu0
        %v10686 = vadd.f32 %v10478, %v10685
        %v10687 = vpop.f32.mrb[0].mxu0
        %10688 = vmatprep.mubr.bf16.mxu0 %v10430
        %10689 = vmatmul.mubr.bf16.gmra.mrb[0].mxu0 %v10429
        %v10690 = vpop.f32.mrb[0].mxu0
        %v10691 = vadd.f32 %v10478, %v10690
        %v10692 = vpop.f32.mrb[0].mxu0
        %v10693 = vpop.f32.mrb[0].mxu0
        %v10694 = vadd.f32 %v10478, %v10693
        %v10695 = vpop.f32.mrb[0].mxu0
        %10696 = vmatprep.mubr.bf16.mxu0 %v10432
        %10697 = vmatmul.mubr.bf16.gmra.mrb[0].mxu0 %v10431
        %v10698 = vpop.f32.mrb[0].mxu0
        %v10699 = vadd.f32 %v10478, %v10698
        %v10700 = vpop.f32.mrb[0].mxu0
        %v10701 = vpop.f32.mrb[0].mxu0
        %v10702 = vadd.f32 %v10478, %v10701
        %v10703 = vpop.f32.mrb[0].mxu0
        %10704 = vmatprep.mubr.bf16.mxu0 %v10434
        %10705 = vmatmul.mubr.bf16.gmra.mrb[0].mxu0 %v10433
        %v10706 = vpop.f32.mrb[0].mxu0
        %v10707 = vadd.f32 %v10478, %v10706
        %v10708 = vpop.f32.mrb[0].mxu0
        %v10709 = vpop.f32.mrb[0].mxu0
        %v10710 = vadd.f32 %v10478, %v10709
        %v10711 = vpop.f32.mrb[0].mxu0
        %10712 = vmatprep.mubr.bf16.mxu0 %v10436
        %10713 = vmatmul.mubr.bf16.gmra.mrb[0].mxu0 %v10435
        %v10714 = vpop.f32.mrb[0].mxu0
        %v10715 = vadd.f32 %v10478, %v10714
        %v10716 = vpop.f32.mrb[0].mxu0
        %v10717 = vpop.f32.mrb[0].mxu0
        %v10718 = vadd.f32 %v10478, %v10717
        %v10719 = vpop.f32.mrb[0].mxu0
        %10720 = vmatprep.mubr.bf16.mxu0 %v10438
        %10721 = vmatmul.mubr.bf16.gmra.mrb[0].mxu0 %v10437
        %v10722 = vpop.f32.mrb[0].mxu0
        %v10723 = vadd.f32 %v10478, %v10722
        %v10724 = vpop.f32.mrb[0].mxu0
        %v10725 = vpop.f32.mrb[0].mxu0
        %v10726 = vadd.f32 %v10478, %v10725
        %v10727 = vpop.f32.mrb[0].mxu0
        %10728 = vmatprep.mubr.bf16.mxu0 %v10440
        %10729 = vmatmul.mubr.bf16.gmra.mrb[0].mxu0 %v10439
        %v10730 = vpop.f32.mrb[0].mxu0
        %v10731 = vadd.f32 %v10478, %v10730
        %v10732 = vpop.f32.mrb[0].mxu0
        %v10733 = vpop.f32.mrb[0].mxu0
        %v10734 = vadd.f32 %v10478, %v10733
        %v10735 = vpop.f32.mrb[0].mxu0
        %10736 = vdwg.mxu0
        %v10737 = vmax.f32 %v10611, 0.0
        %v10738 = vmax.f32 %v10614, 0.0
        %v10739 = vmax.f32 %v10619, 0.0
        %v10740 = vmax.f32 %v10622, 0.0
        %v10741 = vmax.f32 %v10627, 0.0
        %v10742 = vmax.f32 %v10630, 0.0
        %v10743 = vmax.f32 %v10635, 0.0
        %v10744 = vmax.f32 %v10638, 0.0
        %v10745 = vmax.f32 %v10643, 0.0
        %v10746 = vmax.f32 %v10646, 0.0
        %v10747 = vmax.f32 %v10651, 0.0
        %v10748 = vmax.f32 %v10654, 0.0
        %v10749 = vmax.f32 %v10659, 0.0
        %v10750 = vmax.f32 %v10662, 0.0
        %v10751 = vmax.f32 %v10667, 0.0
        %v10752 = vmax.f32 %v10670, 0.0
        %v10753 = vmax.f32 %v10675, 0.0
        %v10754 = vmax.f32 %v10678, 0.0
        %v10755 = vmax.f32 %v10683, 0.0
        %v10756 = vmax.f32 %v10686, 0.0
        %v10757 = vmax.f32 %v10691, 0.0
        %v10758 = vmax.f32 %v10694, 0.0
        %v10759 = vmax.f32 %v10699, 0.0
        %v10760 = vmax.f32 %v10702, 0.0
        %v10761 = vmax.f32 %v10707, 0.0
        %v10762 = vmax.f32 %v10710, 0.0
        %v10763 = vmax.f32 %v10715, 0.0
        %v10764 = vmax.f32 %v10718, 0.0
        %v10765 = vmax.f32 %v10723, 0.0
        %v10766 = vmax.f32 %v10726, 0.0
        %v10767 = vmax.f32 %v10731, 0.0
        %v10768 = vmax.f32 %v10734, 0.0
        %10769 = vst [vmem:[%s681] sm:$0xff] %v10737
        %10770 = vst [vmem:[%s681 + $0x8] sm:$0xff] %v10738
        %10771 = vst [vmem:[%s681 + $0x10] sm:$0xff] %v10739
        %10772 = vst [vmem:[%s681 + $0x18] sm:$0xff] %v10740
        %10773 = vst [vmem:[%s681 + $0x20] sm:$0xff] %v10741
        %10774 = vst [vmem:[%s681 + $0x28] sm:$0xff] %v10742
        %10775 = vst [vmem:[%s681 + $0x30] sm:$0xff] %v10743
        %10776 = vst [vmem:[%s681 + $0x38] sm:$0xff] %v10744
        %10777 = vst [vmem:[%s681 + $0x40] sm:$0xff] %v10745
        %10778 = vst [vmem:[%s681 + $0x48] sm:$0xff] %v10746
        %10779 = vst [vmem:[%s681 + $0x50] sm:$0xff] %v10747
        %10780 = vst [vmem:[%s681 + $0x58] sm:$0xff] %v10748
        %10781 = vst [vmem:[%s681 + $0x60] sm:$0xff] %v10749
        %10782 = vst [vmem:[%s681 + $0x68] sm:$0xff] %v10750
        %10783 = vst [vmem:[%s681 + $0x70] sm:$0xff] %v10751
        %10784 = vst [vmem:[%s681 + $0x78] sm:$0xff] %v10752
        %10785 = vst [vmem:[%s681 + $0x80] sm:$0xff] %v10753
        %10786 = vst [vmem:[%s681 + $0x88] sm:$0xff] %v10754
        %10787 = vst [vmem:[%s681 + $0x90] sm:$0xff] %v10755
        %10788 = vst [vmem:[%s681 + $0x98] sm:$0xff] %v10756
        %10789 = vst [vmem:[%s681 + $0xa0] sm:$0xff] %v10757
        %10790 = vst [vmem:[%s681 + $0xa8] sm:$0xff] %v10758
        %10791 = vst [vmem:[%s681 + $0xb0] sm:$0xff] %v10759
        %10792 = vst [vmem:[%s681 + $0xb8] sm:$0xff] %v10760
        %10793 = vst [vmem:[%s681 + $0xc0] sm:$0xff] %v10761
        %10794 = vst [vmem:[%s681 + $0xc8] sm:$0xff] %v10762
        %10795 = vst [vmem:[%s681 + $0xd0] sm:$0xff] %v10763
        %10796 = vst [vmem:[%s681 + $0xd8] sm:$0xff] %v10764
        %10797 = vst [vmem:[%s681 + $0xe0] sm:$0xff] %v10765
        %10798 = vst [vmem:[%s681 + $0xe8] sm:$0xff] %v10766
        %10799 = vst [vmem:[%s681 + $0xf0] sm:$0xff] %v10767
        %10800 = vst [vmem:[%s681 + $0xf8] sm:$0xff] %v10768
        %s10801 = sand.u32 %s369, 1
        %s10802 = scalar_lea.sflag [#allocation4], %s10801
        %s10803 = sand.u32 %s369, 1
        %s10804 = smul.addr %s10803, 256
        %s10805 = scalar_lea.vmem [#allocation23], %s10804
        // Predicated region
        $region133: #{tpu_custom_call.1} parent=79 // pred_check
          %p10806 = pneg %p379
        $region134: #{tpu_custom_call.1} parent=79 // pred_check_branch
          %10808 = sbr.rel (%p10806) target = $region136
        $region135: #{tpu_custom_call.1} parent=79 // pred_region
          %s10809 = smul.u32 32, %s36
          %s10811 = ssub.s32 4096, 4096
          %10812 = vsyncadd %s10802, %s10811
          %s10813 = smul.addr %s10809, 128
          %s10814 = scalar_lea.hbm %s15, %s10813
          %s10815 = sshll.u32 %s10805, 4
          %s10816 = int_to_ptr.vmem [resolvable:$true] %s10815
          %10821 = dma.vmem_to_hbm [thread:$0]  %s10816, 4096, %s10814, %s10802, 128, 128, 8
        $region136: #{tpu_custom_call.1} parent=79 // pred_fallthru
          _
      $region80: #{tpu_custom_call.1} parent=5 // pred_fallthru
        _
      %p10822 = scmp.le.s32.totalorder 2, %s31
      // Predicated region
      $region137: #{tpu_custom_call.1} parent=5 // pred_check
        %p10823 = pneg %p10822
      $region138: #{tpu_custom_call.1} parent=5 // pred_check_branch
        %10825 = sbr.rel (%p10823) target = $region140
      $region139: #{tpu_custom_call.1} parent=5 // pred_region
        %s10826 = ssub.s32 %s31, 2
        // Predicated region
        $region141: #{tpu_custom_call.1} parent=139 // pred_check
          %p10827 = pneg %p385
        $region142: #{tpu_custom_call.1} parent=139 // pred_check_branch
          %10829 = sbr.rel (%p10827) target = $region144
        $region143: #{tpu_custom_call.1} parent=139 // pred_region
          %s10830 = sand.u32 %s370, 1
          %s10831 = scalar_lea.sflag [#allocation4], %s10830
          %s10832 = sand.u32 %s370, 1
          %s10833 = smul.addr %s10832, 256
          %s10834 = scalar_lea.vmem [#allocation23], %s10833
          %10835 = dma.done %s10831, 4096
        $region144: #{tpu_custom_call.1} parent=139 // pred_fallthru
          _
      $region140: #{tpu_custom_call.1} parent=5 // pred_fallthru
        _
    $region6: #{tpu_custom_call.1} parent=1 // loop_footer
      %s35 = sadd.s32 1, %s31
    $region7: #{tpu_custom_call.1} parent=1 // loop_footer_branch
      %30 = sbr.rel target = $region3
    $region8: #{tpu_custom_call.1} parent=1 // loop_exit
      _
    %10836 = vsyncpa [#allocation3], 1
    %s10837 = scalar_lea.sflag [#allocation3], 1
    %10838 = vsyncpa %s10837, 1
    %10839 = vsyncpa [#allocation6], 1
    %10840 = vsyncpa [#allocation9], 1
    %10841 = vsyncpa [#allocation12], 1
    %10842 = vsyncpa [#allocation15], 1
    %10843 = vsyncpa [#allocation18], 1
    %10844 = vsyncpa [#allocation21], 1
    %10845 = vsyncpa [#allocation4], 1
    %s10846 = scalar_lea.sflag [#allocation4], 1
    %10847 = vsyncpa %s10846, 1

</llo_original>
